<compile_context>
chip_gen: v6e
topology: v6e:2x2x1
jax: 0.10.0
libtpu: 0.0.40
codegen_flags: <defaults>
</compile_context>

<pallas_src>
import functools

import jax
import jax.numpy as jnp
from jax.experimental import pallas as pl
from jax.experimental.pallas import tpu as pltpu

LRN_PARAMS = dict(size=5, alpha=1e-4, beta=0.75, k=1.0)


def _round_up(v, m):
    return ((v + m - 1) // m) * m


def _pick_tm(m):
    """Row-tile size: big tiles for big layers, >=2 grid blocks when m >= 128."""
    if m >= 1024:
        return 512
    if m >= 128:
        return _round_up(pl.cdiv(m, 2), 32)   # two blocks (v7x megacore)
    return _round_up(m, 32)                   # single block for tiny layers


def _band_matrix(c, size):
    idx = jnp.arange(c)
    return (jnp.abs(idx[:, None] - idx[None, :]) <= size // 2).astype(jnp.float32)


def _lrn_normalize(x, band, *, size, alpha, beta, k):
    # torch LocalResponseNorm: x / (k + alpha/size * window_sum(x^2))^beta.
    # Channel-window sum via a band matmul (MXU); the power via EUP exp/log
    # (denom >= k = 1, so the log is safe).
    s = jnp.dot(x * x, band, preferred_element_type=jnp.float32)
    denom = k + (alpha / size) * s
    return x * jnp.exp(-beta * jnp.log(denom))


# ----------------------------------------------------------------------------
# Pallas kernels
# ----------------------------------------------------------------------------
def _gemm_kernel(x_ref, w_ref, b_ref, o_ref, *, relu):
    acc = jnp.dot(x_ref[...], w_ref[...], preferred_element_type=jnp.float32)
    acc = acc + b_ref[...]
    if relu:
        acc = jnp.maximum(acc, 0.0)
    o_ref[...] = acc.astype(o_ref.dtype)


def _gemm_lrn_kernel(x_ref, w_ref, b_ref, band_ref, o_ref, *, size, alpha, beta, k):
    acc = jnp.dot(x_ref[...], w_ref[...], preferred_element_type=jnp.float32)
    acc = jnp.maximum(acc + b_ref[...], 0.0)
    o_ref[...] = _lrn_normalize(acc, band_ref[...], size=size, alpha=alpha,
                                beta=beta, k=k).astype(o_ref.dtype)


def _dual_gemm_kernel(x1_ref, x2_ref, w1_ref, w2_ref, b_ref, o_ref, *, relu):
    acc = jnp.dot(x1_ref[...], w1_ref[...], preferred_element_type=jnp.float32)
    acc = acc + jnp.dot(x2_ref[...], w2_ref[...], preferred_element_type=jnp.float32)
    acc = acc + b_ref[...]
    if relu:
        acc = jnp.maximum(acc, 0.0)
    o_ref[...] = acc.astype(o_ref.dtype)


def _inception_head_kernel(x_ref, p_ref, wx_ref, wp_ref, b_ref, o_ref):
    # 3x3/s1 max-pool (branch4 input) + two dots: x @ Wx covers the b1/b2a/b3a
    # 1x1 convs, pooled @ Wp covers the branch4 1x1 conv (weights zero-padded
    # along N so both dots hit the full output tile -> no in-kernel concat).
    pooled = p_ref[0]
    for i in range(1, p_ref.shape[0]):
        pooled = jnp.maximum(pooled, p_ref[i])
    acc = jnp.dot(x_ref[...], wx_ref[...], preferred_element_type=jnp.float32)
    acc = acc + jnp.dot(pooled, wp_ref[...], preferred_element_type=jnp.float32)
    o_ref[...] = jnp.maximum(acc + b_ref[...], 0.0).astype(o_ref.dtype)


def _maxpool_kernel(p_ref, o_ref):
    acc = p_ref[0]
    for i in range(1, p_ref.shape[0]):
        acc = jnp.maximum(acc, p_ref[i])
    o_ref[...] = acc.astype(o_ref.dtype)


def _maxpool_lrn_conv_kernel(p_ref, band_ref, w_ref, b_ref, o_ref,
                             *, size, alpha, beta, k):
    acc = p_ref[0]
    for i in range(1, p_ref.shape[0]):
        acc = jnp.maximum(acc, p_ref[i])
    xn = _lrn_normalize(acc, band_ref[...], size=size, alpha=alpha, beta=beta, k=k)
    y = jnp.dot(xn, w_ref[...], preferred_element_type=jnp.float32) + b_ref[...]
    o_ref[...] = jnp.maximum(y, 0.0).astype(o_ref.dtype)


# ----------------------------------------------------------------------------
# Wrappers
# ----------------------------------------------------------------------------
def _gemm(x, w, b, *, relu=True, lrn_params=None):
    """(M,K)@(K,N) with fused bias + ReLU (+ LRN).  bf16 inputs, f32 math."""
    m, kdim = x.shape
    n = w.shape[-1]
    tm = _pick_tm(m)
    grid = (pl.cdiv(m, tm),)
    xb = x.astype(jnp.bfloat16)
    wb = w.reshape(kdim, n).astype(jnp.bfloat16)
    bb = b.reshape(1, n).astype(jnp.float32)
    if lrn_params is None:
        kern = functools.partial(_gemm_kernel, relu=relu)
        in_specs = [pl.BlockSpec((tm, kdim), lambda i: (i, 0)),
                    pl.BlockSpec((kdim, n), lambda i: (0, 0)),
                    pl.BlockSpec((1, n), lambda i: (0, 0))]
        args = (xb, wb, bb)
    else:
        band = _band_matrix(n, lrn_params['size'])
        kern = functools.partial(_gemm_lrn_kernel, **lrn_params)
        in_specs = [pl.BlockSpec((tm, kdim), lambda i: (i, 0)),
                    pl.BlockSpec((kdim, n), lambda i: (0, 0)),
                    pl.BlockSpec((1, n), lambda i: (0, 0)),
                    pl.BlockSpec((n, n), lambda i: (0, 0))]
        args = (xb, wb, bb, band)
    return pl.pallas_call(
        kern,
        out_shape=jax.ShapeDtypeStruct((m, n), jnp.float32),
        grid_spec=pltpu.PrefetchScalarGridSpec(
            num_scalar_prefetch=0, grid=grid,
            in_specs=in_specs,
            out_specs=pl.BlockSpec((tm, n), lambda i: (i, 0))),
        compiler_params=pltpu.CompilerParams(dimension_semantics=("parallel",)),
    )(*args)


def _conv_patches(x, kh, kw, stride=1, padding=0):
    """im2col: NHWC -> (N*OH*OW, KH*KW*C), tap-major / channel-minor."""
    if padding:
        x = jnp.pad(x, ((0, 0), (padding, padding), (padding, padding), (0, 0)))
    n, h, w, c = x.shape
    oh = (h - kh) // stride + 1
    ow = (w - kw) // stride + 1
    cols = []
    for di in range(kh):
        for dj in range(kw):
            cols.append(x[:, di:di + stride * (oh - 1) + 1:stride,
                            dj:dj + stride * (ow - 1) + 1:stride, :])
    patches = jnp.concatenate(cols, axis=-1).reshape(n * oh * ow, kh * kw * c)
    # TODO(synk): move the tap windowing in-kernel (halo blocks) to kill the
    # kh*kw HBM duplication for large inputs; at these activation sizes it is a
    # few hundred KB (bf16-halved) and launch count dominates instead.
    return patches, (n, oh, ow)


def conv2d(x, w, b, stride=1, padding=0, relu=True, lrn_params=None):
    """torch Conv2d + ReLU, optionally fused with the following LRN."""
    kh, kw, cin, cout = w.shape
    patches, (n, oh, ow) = _conv_patches(x, kh, kw, stride, padding)
    y = _gemm(patches, w.reshape(kh * kw * cin, cout), b,
              relu=relu, lrn_params=lrn_params)
    return y.reshape(n, oh, ow, cout)


def _pool_planes(x, ksize, stride, padding):
    if padding:
        neg = jnp.finfo(x.dtype).min                  # torch pads with -inf
        x = jnp.pad(x, ((0, 0), (padding, padding), (padding, padding), (0, 0)),
                    constant_values=neg)
    n, h, w, c = x.shape
    oh = (h - ksize) // stride + 1
    ow = (w - ksize) // stride + 1
    planes = [x[:, di:di + stride * (oh - 1) + 1:stride,
                  dj:dj + stride * (ow - 1) + 1:stride, :]
              for di in range(ksize) for dj in range(ksize)]
    return jnp.stack(planes, axis=0), (n, oh, ow, c)


def maxpool2d(x, ksize=3, stride=2, padding=0):
    """Plain max-pool.  rows = N*OH, lanes = OW*C  ->  lane-dense stores."""
    p, (n, oh, ow, c) = _pool_planes(x, ksize, stride, padding)
    kk = ksize * ksize
    rows, lanes = n * oh, ow * c
    p = p.reshape(kk, rows, lanes)
    tm = _pick_tm(rows)
    out = pl.pallas_call(
        _maxpool_kernel,
        out_shape=jax.ShapeDtypeStruct((rows, lanes), jnp.float32),
        grid_spec=pltpu.PrefetchScalarGridSpec(
            num_scalar_prefetch=0, grid=(pl.cdiv(rows, tm),),
            in_specs=[pl.BlockSpec((kk, tm, lanes), lambda i: (0, i, 0))],
            out_specs=pl.BlockSpec((tm, lanes), lambda i: (i, 0))),
        compiler_params=pltpu.CompilerParams(dimension_semantics=("parallel",)),
    )(p)
    return out.reshape(n, oh, ow, c)


def maxpool2d_lrn_conv1x1(x, w, b, *, ksize, stride, padding, lrn_params):
    """Stem fusion: max-pool -> LRN -> 1x1 conv + bias + ReLU, one kernel."""
    p, (n, oh, ow, c) = _pool_planes(x, ksize, stride, padding)
    kk = ksize * ksize
    m = n * oh * ow
    p = p.reshape(kk, m, c)
    cout = w.shape[-1]
    wb = w.reshape(c, cout).astype(jnp.float32)
    bb = b.reshape(1, cout).astype(jnp.float32)
    band = _band_matrix(c, lrn_params['size'])
    tm = _pick_tm(m)
    out = pl.pallas_call(
        functools.partial(_maxpool_lrn_conv_kernel, **lrn_params),
        out_shape=jax.ShapeDtypeStruct((m, cout), jnp.float32),
        grid_spec=pltpu.PrefetchScalarGridSpec(
            num_scalar_prefetch=0, grid=(pl.cdiv(m, tm),),
            in_specs=[pl.BlockSpec((kk, tm, c), lambda i: (0, i, 0)),
                      pl.BlockSpec((c, c), lambda i: (0, 0)),
                      pl.BlockSpec((c, cout), lambda i: (0, 0)),
                      pl.BlockSpec((1, cout), lambda i: (0, 0))],
            out_specs=pl.BlockSpec((tm, cout), lambda i: (i, 0))),
        compiler_params=pltpu.CompilerParams(dimension_semantics=("parallel",)),
    )(p, band, wb, bb)
    return out.reshape(n, oh, ow, cout)


# ----------------------------------------------------------------------------
# Inception block: 2 fused kernels (head + tail)
# ----------------------------------------------------------------------------
def inception_block(x, p):
    n, h, w, c = x.shape
    m = n * h * w
    c1 = p['b1_w'].shape[-1]
    c2a = p['b2a_w'].shape[-1]
    c3a = p['b3a_w'].shape[-1]
    c4 = p['b4_w'].shape[-1]
    nt = c1 + c2a + c3a + c4

    # ---- head: shared 1x1 convs (b1 | b2a | b3a) + pool-branch 1x1 (b4) -----
    wx = jnp.zeros((c, nt), jnp.float32)
    wx = wx.at[:, :c1].set(p['b1_w'].reshape(c, c1))
    wx = wx.at[:, c1:c1 + c2a].set(p['b2a_w'].reshape(c, c2a))
    wx = wx.at[:, c1 + c2a:c1 + c2a + c3a].set(p['b3a_w'].reshape(c, c3a))
    wp = jnp.zeros((c, nt), jnp.float32)
    wp = wp.at[:, c1 + c2a + c3a:].set(p['b4_w'].reshape(c, c4))
    bias = jnp.concatenate([p['b1_b'], p['b2a_b'], p['b3a_b'],
                            p['b4_b']]).reshape(1, nt).astype(jnp.float32)

    planes, _ = _pool_planes(x, 3, 1, 1)               # (9, n, h, w, c)
    kk = planes.shape[0]
    planes = planes.reshape(kk, m, c)
    xf = x.reshape(m, c)

    tm = _pick_tm(m)
    head = pl.pallas_call(
        _inception_head_kernel,
        out_shape=jax.ShapeDtypeStruct((m, nt), jnp.float32),
        grid_spec=pltpu.PrefetchScalarGridSpec(
            num_scalar_prefetch=0, grid=(pl.cdiv(m, tm),),
            in_specs=[pl.BlockSpec((tm, c), lambda i: (i, 0)),
                      pl.BlockSpec((kk, tm, c), lambda i: (0, i, 0)),
                      pl.BlockSpec((c, nt), lambda i: (0, 0)),
                      pl.BlockSpec((c, nt), lambda i: (0, 0)),
                      pl.BlockSpec((1, nt), lambda i: (0, 0))],
            out_specs=pl.BlockSpec((tm, nt), lambda i: (i, 0))),
        compiler_params=pltpu.CompilerParams(dimension_semantics=("parallel",)),
    )(xf, planes, wx, wp, bias)

    b1 = head[:, :c1].reshape(n, h, w, c1)
    b2a = head[:, c1:c1 + c2a].reshape(n, h, w, c2a)
    b3a = head[:, c1 + c2a:c1 + c2a + c3a].reshape(n, h, w, c3a)
    b4 = head[:, c1 + c2a + c3a:].reshape(n, h, w, c4)

    # ---- tail: 3x3 conv on b2a + 5x5 conv on b3a as one dual GEMM -----------
    p2, (_, oh, ow) = _conv_patches(b2a, 3, 3, 1, 1)   # (m, 9*c2a)
    p3, _ = _conv_patches(b3a, 5, 5, 1, 2)             # (m, 25*c3a)
    c2 = p['b2b_w'].shape[-1]
    c3 = p['b3b_w'].shape[-1]
    nout = c2 + c3
    k2, k3 = p2.shape[1], p3.shape[1]
    w2 = jnp.zeros((k2, nout), jnp.float32).at[:, :c2].set(
        p['b2b_w'].reshape(k2, c2))
    w3 = jnp.zeros((k3, nout), jnp.float32).at[:, c2:].set(
        p['b3b_w'].reshape(k3, c3))
    b23 = jnp.concatenate([p['b2b_b'], p['b3b_b']]).reshape(1, nout).astype(jnp.float32)

    tail = pl.pallas_call(
        functools.partial(_dual_gemm_kernel, relu=True),
        out_shape=jax.ShapeDtypeStruct((m, nout), jnp.float32),
        grid_spec=pltpu.PrefetchScalarGridSpec(
            num_scalar_prefetch=0, grid=(pl.cdiv(m, tm),),
            in_specs=[pl.BlockSpec((tm, k2), lambda i: (i, 0)),
                      pl.BlockSpec((tm, k3), lambda i: (i, 0)),
                      pl.BlockSpec((k2, nout), lambda i: (0, 0)),
                      pl.BlockSpec((k3, nout), lambda i: (0, 0)),
                      pl.BlockSpec((1, nout), lambda i: (0, 0))],
            out_specs=pl.BlockSpec((tm, nout), lambda i: (i, 0))),
        compiler_params=pltpu.CompilerParams(dimension_semantics=("parallel",)),
    )(p2.astype(jnp.bfloat16), p3.astype(jnp.bfloat16),
      w2.astype(jnp.bfloat16), w3.astype(jnp.bfloat16), b23)

    b2 = tail[:, :c2].reshape(n, oh, ow, c2)
    b3 = tail[:, c2:].reshape(n, oh, ow, c3)
    return jnp.concatenate([b1, b2, b3, b4], axis=-1)   # torch cat(dim=1)


# ----------------------------------------------------------------------------
# Model glue (parameter init + forward composition)
# ----------------------------------------------------------------------------
def init_params(key, ps=1):
    keys = iter(jax.random.split(key, 64))

    def conv_p(kh, kw, cin, cout):
        w = jax.random.normal(next(keys), (kh, kw, cin, cout), jnp.float32) * 0.05
        b = jax.random.normal(next(keys), (cout,), jnp.float32) * 0.01
        return w, b

    def inception_p(cin):
        d = {}
        d['b1_w'], d['b1_b'] = conv_p(1, 1, cin, ps * 16)
        d['b2a_w'], d['b2a_b'] = conv_p(1, 1, cin, ps * 24)
        d['b2b_w'], d['b2b_b'] = conv_p(3, 3, ps * 24, ps * 32)
        d['b3a_w'], d['b3a_b'] = conv_p(1, 1, cin, ps * 4)
        d['b3b_w'], d['b3b_b'] = conv_p(5, 5, ps * 4, ps * 8)
        d['b4_w'], d['b4_b'] = conv_p(1, 1, cin, ps * 8)
        return d

    p = {}
    p['conv7_w'], p['conv7_b'] = conv_p(7, 7, 1, ps * 16)
    p['conv1_w'], p['conv1_b'] = conv_p(1, 1, ps * 16, ps * 16)
    p['conv3_w'], p['conv3_b'] = conv_p(3, 3, ps * 16, ps * 64)
    p['inc3a'] = inception_p(ps * 64)
    p['inc3b'] = inception_p(ps * 64)
    p['inc4a'] = inception_p(ps * 64)
    return p


def x_model_forward(params, x_nchw):
    x = jnp.transpose(x_nchw, (0, 2, 3, 1))                      # NCHW -> NHWC
    # conv7x7/s2 + relu
    x = conv2d(x, params['conv7_w'], params['conv7_b'], stride=2)
    # maxpool -> LRN -> conv1x1 + relu           (one fused kernel)
    x = maxpool2d_lrn_conv1x1(x, params['conv1_w'], params['conv1_b'],
                              ksize=3, stride=2, padding=0, lrn_params=LRN_PARAMS)
    # conv3x3 + relu -> LRN                      (one fused kernel)
    x = conv2d(x, params['conv3_w'], params['conv3_b'], lrn_params=LRN_PARAMS)
    x = maxpool2d(x, 3, 2)
    x = inception_block(x, params['inc3a'])
    x = inception_block(x, params['inc3b'])
    x = maxpool2d(x, 3, 2)
    x = inception_block(x, params['inc4a'])
    return jnp.transpose(x, (0, 3, 1, 2))                        # NHWC -> NCHW


if __name__ == "__main__":
    param_scale = 1
    key = jax.random.PRNGKey(0)
    k_in, k_par = jax.random.split(key)
    # torch-convention NCHW input, 1 channel (63x63 is the small size that
    # survives the stem's downsampling and yields a 2x2 final feature map).
    x = jax.random.normal(k_in, (2, 1, 63, 63), jnp.float32)
    params = init_params(k_par, ps=param_scale)

    fwd = jax.jit(functools.partial(x_model_forward, params))
    out = fwd(x)
    jax.block_until_ready(out)
    assert out.shape == (2, param_scale * 64, 2, 2), out.shape
    print("KERNEL_OK")
</pallas_src>

<mosaic_0001>
module attributes {stable_mosaic.version = 11 : i64} {
  func.func @_gemm_kernel(%arg0: i32, %arg1: memref<512x49xbf16, #tpu.memory_space<vmem>>, %arg2: memref<49x16xbf16, #tpu.memory_space<vmem>>, %arg3: memref<1x16xf32, #tpu.memory_space<vmem>>, %arg4: memref<512x16xf32, #tpu.memory_space<vmem>>) attributes {dimension_semantics = [#tpu.dimension_semantics<parallel>], iteration_bounds = array<i64: 4>, scalar_prefetch = 0 : i64, scratch_operands = 0 : i64, tpu.core_type = #tpu.core_type<tc>, window_params = [{transform_indices = @transform_0, window_bounds = array<i64: 512, 49>}, {pipeline_mode = #tpu.pipeline_mode<synchronous>, transform_indices = @transform_1, window_bounds = array<i64: 49, 16>}, {pipeline_mode = #tpu.pipeline_mode<synchronous>, transform_indices = @transform_2, window_bounds = array<i64: 1, 16>}, {transform_indices = @transform_3, window_bounds = array<i64: 512, 16>}]} {
    %c0 = arith.constant 0 : index
    %c0_0 = arith.constant 0 : index
    %0 = vector.load %arg1[%c0, %c0_0] : memref<512x49xbf16, #tpu.memory_space<vmem>>, vector<512x49xbf16>
    %c0_1 = arith.constant 0 : index
    %c0_2 = arith.constant 0 : index
    %1 = vector.load %arg2[%c0_1, %c0_2] : memref<49x16xbf16, #tpu.memory_space<vmem>>, vector<49x16xbf16>
    %cst = arith.constant dense<0.000000e+00> : vector<512x16xf32>
    %2 = tpu.matmul %0, %1, %cst {dimension_numbers = #tpu.dot_dimension_numbers<[1], [0], [0], [1], [0, 0, 1, 1], [], []>} : vector<512x49xbf16>, vector<49x16xbf16>, vector<512x16xf32> -> vector<512x16xf32>
    %c0_3 = arith.constant 0 : index
    %c0_4 = arith.constant 0 : index
    %3 = vector.load %arg3[%c0_3, %c0_4] : memref<1x16xf32, #tpu.memory_space<vmem>>, vector<1x16xf32>
    %4 = vector.broadcast %3 : vector<1x16xf32> to vector<512x16xf32>
    %5 = arith.addf %2, %4 : vector<512x16xf32>
    %cst_5 = arith.constant 0.000000e+00 : f32
    %6 = vector.broadcast %cst_5 : f32 to vector<512x16xf32>
    %7 = arith.maximumf %5, %6 : vector<512x16xf32>
    %c0_6 = arith.constant 0 : index
    %c0_7 = arith.constant 0 : index
    %8 = vector.load %arg4[%c0_6, %c0_7] : memref<512x16xf32, #tpu.memory_space<vmem>>, vector<512x16xf32>
    tpu.vector_store %arg4[%c0_6, %c0_7], %7 {strides = array<i32>} : memref<512x16xf32, #tpu.memory_space<vmem>>, vector<512x16xf32>,
    return
  }
  func.func @transform_0(%arg0: i32) -> (i32, i32) {
    %c0_i32 = arith.constant 0 : i32
    %c0_i32_0 = arith.constant 0 : i32
    return %arg0, %c0_i32 : i32, i32
  }
  func.func @transform_1(%arg0: i32) -> (i32, i32) {
    %c0_i32 = arith.constant 0 : i32
    %c0_i32_0 = arith.constant 0 : i32
    %c0_i32_1 = arith.constant 0 : i32
    return %c0_i32, %c0_i32_0 : i32, i32
  }
  func.func @transform_2(%arg0: i32) -> (i32, i32) {
    %c0_i32 = arith.constant 0 : i32
    %c0_i32_0 = arith.constant 0 : i32
    %c0_i32_1 = arith.constant 0 : i32
    return %c0_i32, %c0_i32_0 : i32, i32
  }
  func.func @transform_3(%arg0: i32) -> (i32, i32) {
    %c0_i32 = arith.constant 0 : i32
    %c0_i32_0 = arith.constant 0 : i32
    return %arg0, %c0_i32 : i32, i32
  }
}

module attributes {stable_mosaic.version = 11 : i64} {
  func.func @_maxpool_lrn_conv_kernel(%arg0: i32, %arg1: memref<9x224x16xf32, #tpu.memory_space<vmem>>, %arg2: memref<16x16xf32, #tpu.memory_space<vmem>>, %arg3: memref<16x16xf32, #tpu.memory_space<vmem>>, %arg4: memref<1x16xf32, #tpu.memory_space<vmem>>, %arg5: memref<224x16xf32, #tpu.memory_space<vmem>>) attributes {dimension_semantics = [#tpu.dimension_semantics<parallel>], iteration_bounds = array<i64: 2>, scalar_prefetch = 0 : i64, scratch_operands = 0 : i64, tpu.core_type = #tpu.core_type<tc>, window_params = [{transform_indices = @transform_0, window_bounds = array<i64: 9, 224, 16>}, {pipeline_mode = #tpu.pipeline_mode<synchronous>, transform_indices = @transform_1, window_bounds = array<i64: 16, 16>}, {pipeline_mode = #tpu.pipeline_mode<synchronous>, transform_indices = @transform_2, window_bounds = array<i64: 16, 16>}, {pipeline_mode = #tpu.pipeline_mode<synchronous>, transform_indices = @transform_3, window_bounds = array<i64: 1, 16>}, {transform_indices = @transform_4, window_bounds = array<i64: 224, 16>}]} {
    %c0 = arith.constant 0 : index
    %c0_0 = arith.constant 0 : index
    %c0_1 = arith.constant 0 : index
    %0 = vector.load %arg1[%c0, %c0_0, %c0_1] : memref<9x224x16xf32, #tpu.memory_space<vmem>>, vector<1x224x16xf32>
    %1 = vector.shape_cast %0 : vector<1x224x16xf32> to vector<224x16xf32>
    %c1 = arith.constant 1 : index
    %c0_2 = arith.constant 0 : index
    %c0_3 = arith.constant 0 : index
    %2 = vector.load %arg1[%c1, %c0_2, %c0_3] : memref<9x224x16xf32, #tpu.memory_space<vmem>>, vector<1x224x16xf32>
    %3 = vector.shape_cast %2 : vector<1x224x16xf32> to vector<224x16xf32>
    %4 = arith.maximumf %1, %3 : vector<224x16xf32>
    %c2 = arith.constant 2 : index
    %c0_4 = arith.constant 0 : index
    %c0_5 = arith.constant 0 : index
    %5 = vector.load %arg1[%c2, %c0_4, %c0_5] : memref<9x224x16xf32, #tpu.memory_space<vmem>>, vector<1x224x16xf32>
    %6 = vector.shape_cast %5 : vector<1x224x16xf32> to vector<224x16xf32>
    %7 = arith.maximumf %4, %6 : vector<224x16xf32>
    %c3 = arith.constant 3 : index
    %c0_6 = arith.constant 0 : index
    %c0_7 = arith.constant 0 : index
    %8 = vector.load %arg1[%c3, %c0_6, %c0_7] : memref<9x224x16xf32, #tpu.memory_space<vmem>>, vector<1x224x16xf32>
    %9 = vector.shape_cast %8 : vector<1x224x16xf32> to vector<224x16xf32>
    %10 = arith.maximumf %7, %9 : vector<224x16xf32>
    %c4 = arith.constant 4 : index
    %c0_8 = arith.constant 0 : index
    %c0_9 = arith.constant 0 : index
    %11 = vector.load %arg1[%c4, %c0_8, %c0_9] : memref<9x224x16xf32, #tpu.memory_space<vmem>>, vector<1x224x16xf32>
    %12 = vector.shape_cast %11 : vector<1x224x16xf32> to vector<224x16xf32>
    %13 = arith.maximumf %10, %12 : vector<224x16xf32>
    %c5 = arith.constant 5 : index
    %c0_10 = arith.constant 0 : index
    %c0_11 = arith.constant 0 : index
    %14 = vector.load %arg1[%c5, %c0_10, %c0_11] : memref<9x224x16xf32, #tpu.memory_space<vmem>>, vector<1x224x16xf32>
    %15 = vector.shape_cast %14 : vector<1x224x16xf32> to vector<224x16xf32>
    %16 = arith.maximumf %13, %15 : vector<224x16xf32>
    %c6 = arith.constant 6 : index
    %c0_12 = arith.constant 0 : index
    %c0_13 = arith.constant 0 : index
    %17 = vector.load %arg1[%c6, %c0_12, %c0_13] : memref<9x224x16xf32, #tpu.memory_space<vmem>>, vector<1x224x16xf32>
    %18 = vector.shape_cast %17 : vector<1x224x16xf32> to vector<224x16xf32>
    %19 = arith.maximumf %16, %18 : vector<224x16xf32>
    %c7 = arith.constant 7 : index
    %c0_14 = arith.constant 0 : index
    %c0_15 = arith.constant 0 : index
    %20 = vector.load %arg1[%c7, %c0_14, %c0_15] : memref<9x224x16xf32, #tpu.memory_space<vmem>>, vector<1x224x16xf32>
    %21 = vector.shape_cast %20 : vector<1x224x16xf32> to vector<224x16xf32>
    %22 = arith.maximumf %19, %21 : vector<224x16xf32>
    %c8 = arith.constant 8 : index
    %c0_16 = arith.constant 0 : index
    %c0_17 = arith.constant 0 : index
    %23 = vector.load %arg1[%c8, %c0_16, %c0_17] : memref<9x224x16xf32, #tpu.memory_space<vmem>>, vector<1x224x16xf32>
    %24 = vector.shape_cast %23 : vector<1x224x16xf32> to vector<224x16xf32>
    %25 = arith.maximumf %22, %24 : vector<224x16xf32>
    %c0_18 = arith.constant 0 : index
    %c0_19 = arith.constant 0 : index
    %26 = vector.load %arg2[%c0_18, %c0_19] : memref<16x16xf32, #tpu.memory_space<vmem>>, vector<16x16xf32>
    %27 = arith.mulf %25, %25 : vector<224x16xf32>
    %cst = arith.constant dense<0.000000e+00> : vector<224x16xf32>
    %28 = tpu.matmul %27, %26, %cst {dimension_numbers = #tpu.dot_dimension_numbers<[1], [0], [0], [1], [0, 0, 1, 1], [], []>} : vector<224x16xf32>, vector<16x16xf32>, vector<224x16xf32> -> vector<224x16xf32>
    %cst_20 = arith.constant 2.000000e-05 : f32
    %29 = vector.broadcast %cst_20 : f32 to vector<224x16xf32>
    %30 = arith.mulf %29, %28 : vector<224x16xf32>
    %cst_21 = arith.constant 1.000000e+00 : f32
    %31 = vector.broadcast %cst_21 : f32 to vector<224x16xf32>
    %32 = arith.addf %31, %30 : vector<224x16xf32>
    %33 = math.log %32 : vector<224x16xf32>
    %cst_22 = arith.constant -7.500000e-01 : f32
    %34 = vector.broadcast %cst_22 : f32 to vector<224x16xf32>
    %35 = arith.mulf %34, %33 : vector<224x16xf32>
    %36 = math.exp %35 : vector<224x16xf32>
    %37 = arith.mulf %25, %36 : vector<224x16xf32>
    %c0_23 = arith.constant 0 : index
    %c0_24 = arith.constant 0 : index
    %38 = vector.load %arg3[%c0_23, %c0_24] : memref<16x16xf32, #tpu.memory_space<vmem>>, vector<16x16xf32>
    %cst_25 = arith.constant dense<0.000000e+00> : vector<224x16xf32>
    %39 = tpu.matmul %37, %38, %cst_25 {dimension_numbers = #tpu.dot_dimension_numbers<[1], [0], [0], [1], [0, 0, 1, 1], [], []>} : vector<224x16xf32>, vector<16x16xf32>, vector<224x16xf32> -> vector<224x16xf32>
    %c0_26 = arith.constant 0 : index
    %c0_27 = arith.constant 0 : index
    %40 = vector.load %arg4[%c0_26, %c0_27] : memref<1x16xf32, #tpu.memory_space<vmem>>, vector<1x16xf32>
    %41 = vector.broadcast %40 : vector<1x16xf32> to vector<224x16xf32>
    %42 = arith.addf %39, %41 : vector<224x16xf32>
    %cst_28 = arith.constant 0.000000e+00 : f32
    %43 = vector.broadcast %cst_28 : f32 to vector<224x16xf32>
    %44 = arith.maximumf %42, %43 : vector<224x16xf32>
    %c0_29 = arith.constant 0 : index
    %c0_30 = arith.constant 0 : index
    %45 = vector.load %arg5[%c0_29, %c0_30] : memref<224x16xf32, #tpu.memory_space<vmem>>, vector<224x16xf32>
    tpu.vector_store %arg5[%c0_29, %c0_30], %44 {strides = array<i32>} : memref<224x16xf32, #tpu.memory_space<vmem>>, vector<224x16xf32>,
    return
  }
  func.func @transform_0(%arg0: i32) -> (i32, i32, i32) {
    %c0_i32 = arith.constant 0 : i32
    %c0_i32_0 = arith.constant 0 : i32
    %c0_i32_1 = arith.constant 0 : i32
    return %c0_i32, %arg0, %c0_i32_0 : i32, i32, i32
  }
  func.func @transform_1(%arg0: i32) -> (i32, i32) {
    %c0_i32 = arith.constant 0 : i32
    %c0_i32_0 = arith.constant 0 : i32
    %c0_i32_1 = arith.constant 0 : i32
    return %c0_i32, %c0_i32_0 : i32, i32
  }
  func.func @transform_2(%arg0: i32) -> (i32, i32) {
    %c0_i32 = arith.constant 0 : i32
    %c0_i32_0 = arith.constant 0 : i32
    %c0_i32_1 = arith.constant 0 : i32
    return %c0_i32, %c0_i32_0 : i32, i32
  }
  func.func @transform_3(%arg0: i32) -> (i32, i32) {
    %c0_i32 = arith.constant 0 : i32
    %c0_i32_0 = arith.constant 0 : i32
    %c0_i32_1 = arith.constant 0 : i32
    return %c0_i32, %c0_i32_0 : i32, i32
  }
  func.func @transform_4(%arg0: i32) -> (i32, i32) {
    %c0_i32 = arith.constant 0 : i32
    %c0_i32_0 = arith.constant 0 : i32
    return %arg0, %c0_i32 : i32, i32
  }
}

module attributes {stable_mosaic.version = 11 : i64} {
  func.func @_gemm_lrn_kernel(%arg0: i32, %arg1: memref<160x144xbf16, #tpu.memory_space<vmem>>, %arg2: memref<144x64xbf16, #tpu.memory_space<vmem>>, %arg3: memref<1x64xf32, #tpu.memory_space<vmem>>, %arg4: memref<64x64xf32, #tpu.memory_space<vmem>>, %arg5: memref<160x64xf32, #tpu.memory_space<vmem>>) attributes {dimension_semantics = [#tpu.dimension_semantics<parallel>], iteration_bounds = array<i64: 2>, scalar_prefetch = 0 : i64, scratch_operands = 0 : i64, tpu.core_type = #tpu.core_type<tc>, window_params = [{transform_indices = @transform_0, window_bounds = array<i64: 160, 144>}, {pipeline_mode = #tpu.pipeline_mode<synchronous>, transform_indices = @transform_1, window_bounds = array<i64: 144, 64>}, {pipeline_mode = #tpu.pipeline_mode<synchronous>, transform_indices = @transform_2, window_bounds = array<i64: 1, 64>}, {pipeline_mode = #tpu.pipeline_mode<synchronous>, transform_indices = @transform_3, window_bounds = array<i64: 64, 64>}, {transform_indices = @transform_4, window_bounds = array<i64: 160, 64>}]} {
    %c0 = arith.constant 0 : index
    %c0_0 = arith.constant 0 : index
    %0 = vector.load %arg1[%c0, %c0_0] : memref<160x144xbf16, #tpu.memory_space<vmem>>, vector<160x144xbf16>
    %c0_1 = arith.constant 0 : index
    %c0_2 = arith.constant 0 : index
    %1 = vector.load %arg2[%c0_1, %c0_2] : memref<144x64xbf16, #tpu.memory_space<vmem>>, vector<144x64xbf16>
    %cst = arith.constant dense<0.000000e+00> : vector<160x64xf32>
    %2 = tpu.matmul %0, %1, %cst {dimension_numbers = #tpu.dot_dimension_numbers<[1], [0], [0], [1], [0, 0, 1, 1], [], []>} : vector<160x144xbf16>, vector<144x64xbf16>, vector<160x64xf32> -> vector<160x64xf32>
    %c0_3 = arith.constant 0 : index
    %c0_4 = arith.constant 0 : index
    %3 = vector.load %arg3[%c0_3, %c0_4] : memref<1x64xf32, #tpu.memory_space<vmem>>, vector<1x64xf32>
    %4 = vector.broadcast %3 : vector<1x64xf32> to vector<160x64xf32>
    %5 = arith.addf %2, %4 : vector<160x64xf32>
    %cst_5 = arith.constant 0.000000e+00 : f32
    %6 = vector.broadcast %cst_5 : f32 to vector<160x64xf32>
    %7 = arith.maximumf %5, %6 : vector<160x64xf32>
    %c0_6 = arith.constant 0 : index
    %c0_7 = arith.constant 0 : index
    %8 = vector.load %arg4[%c0_6, %c0_7] : memref<64x64xf32, #tpu.memory_space<vmem>>, vector<64x64xf32>
    %9 = arith.mulf %7, %7 : vector<160x64xf32>
    %cst_8 = arith.constant dense<0.000000e+00> : vector<160x64xf32>
    %10 = tpu.matmul %9, %8, %cst_8 {dimension_numbers = #tpu.dot_dimension_numbers<[1], [0], [0], [1], [0, 0, 1, 1], [], []>} : vector<160x64xf32>, vector<64x64xf32>, vector<160x64xf32> -> vector<160x64xf32>
    %cst_9 = arith.constant 2.000000e-05 : f32
    %11 = vector.broadcast %cst_9 : f32 to vector<160x64xf32>
    %12 = arith.mulf %11, %10 : vector<160x64xf32>
    %cst_10 = arith.constant 1.000000e+00 : f32
    %13 = vector.broadcast %cst_10 : f32 to vector<160x64xf32>
    %14 = arith.addf %13, %12 : vector<160x64xf32>
    %15 = math.log %14 : vector<160x64xf32>
    %cst_11 = arith.constant -7.500000e-01 : f32
    %16 = vector.broadcast %cst_11 : f32 to vector<160x64xf32>
    %17 = arith.mulf %16, %15 : vector<160x64xf32>
    %18 = math.exp %17 : vector<160x64xf32>
    %19 = arith.mulf %7, %18 : vector<160x64xf32>
    %c0_12 = arith.constant 0 : index
    %c0_13 = arith.constant 0 : index
    %20 = vector.load %arg5[%c0_12, %c0_13] : memref<160x64xf32, #tpu.memory_space<vmem>>, vector<160x64xf32>
    tpu.vector_store %arg5[%c0_12, %c0_13], %19 {strides = array<i32>} : memref<160x64xf32, #tpu.memory_space<vmem>>, vector<160x64xf32>,
    return
  }
  func.func @transform_0(%arg0: i32) -> (i32, i32) {
    %c0_i32 = arith.constant 0 : i32
    %c0_i32_0 = arith.constant 0 : i32
    return %arg0, %c0_i32 : i32, i32
  }
  func.func @transform_1(%arg0: i32) -> (i32, i32) {
    %c0_i32 = arith.constant 0 : i32
    %c0_i32_0 = arith.constant 0 : i32
    %c0_i32_1 = arith.constant 0 : i32
    return %c0_i32, %c0_i32_0 : i32, i32
  }
  func.func @transform_2(%arg0: i32) -> (i32, i32) {
    %c0_i32 = arith.constant 0 : i32
    %c0_i32_0 = arith.constant 0 : i32
    %c0_i32_1 = arith.constant 0 : i32
    return %c0_i32, %c0_i32_0 : i32, i32
  }
  func.func @transform_3(%arg0: i32) -> (i32, i32) {
    %c0_i32 = arith.constant 0 : i32
    %c0_i32_0 = arith.constant 0 : i32
    %c0_i32_1 = arith.constant 0 : i32
    return %c0_i32, %c0_i32_0 : i32, i32
  }
  func.func @transform_4(%arg0: i32) -> (i32, i32) {
    %c0_i32 = arith.constant 0 : i32
    %c0_i32_0 = arith.constant 0 : i32
    return %arg0, %c0_i32 : i32, i32
  }
}

module attributes {stable_mosaic.version = 11 : i64} {
  func.func @_maxpool_kernel(%arg0: i32, %arg1: memref<9x32x320xf32, #tpu.memory_space<vmem>>, %arg2: memref<32x320xf32, #tpu.memory_space<vmem>>) attributes {dimension_semantics = [#tpu.dimension_semantics<parallel>], iteration_bounds = array<i64: 1>, scalar_prefetch = 0 : i64, scratch_operands = 0 : i64, tpu.core_type = #tpu.core_type<tc>, window_params = [{transform_indices = @transform_0, window_bounds = array<i64: 9, 32, 320>}, {transform_indices = @transform_1, window_bounds = array<i64: 32, 320>}]} {
    %c0 = arith.constant 0 : index
    %c0_0 = arith.constant 0 : index
    %c0_1 = arith.constant 0 : index
    %0 = vector.load %arg1[%c0, %c0_0, %c0_1] : memref<9x32x320xf32, #tpu.memory_space<vmem>>, vector<1x32x320xf32>
    %1 = vector.shape_cast %0 : vector<1x32x320xf32> to vector<32x320xf32>
    %c1 = arith.constant 1 : index
    %c0_2 = arith.constant 0 : index
    %c0_3 = arith.constant 0 : index
    %2 = vector.load %arg1[%c1, %c0_2, %c0_3] : memref<9x32x320xf32, #tpu.memory_space<vmem>>, vector<1x32x320xf32>
    %3 = vector.shape_cast %2 : vector<1x32x320xf32> to vector<32x320xf32>
    %4 = arith.maximumf %1, %3 : vector<32x320xf32>
    %c2 = arith.constant 2 : index
    %c0_4 = arith.constant 0 : index
    %c0_5 = arith.constant 0 : index
    %5 = vector.load %arg1[%c2, %c0_4, %c0_5] : memref<9x32x320xf32, #tpu.memory_space<vmem>>, vector<1x32x320xf32>
    %6 = vector.shape_cast %5 : vector<1x32x320xf32> to vector<32x320xf32>
    %7 = arith.maximumf %4, %6 : vector<32x320xf32>
    %c3 = arith.constant 3 : index
    %c0_6 = arith.constant 0 : index
    %c0_7 = arith.constant 0 : index
    %8 = vector.load %arg1[%c3, %c0_6, %c0_7] : memref<9x32x320xf32, #tpu.memory_space<vmem>>, vector<1x32x320xf32>
    %9 = vector.shape_cast %8 : vector<1x32x320xf32> to vector<32x320xf32>
    %10 = arith.maximumf %7, %9 : vector<32x320xf32>
    %c4 = arith.constant 4 : index
    %c0_8 = arith.constant 0 : index
    %c0_9 = arith.constant 0 : index
    %11 = vector.load %arg1[%c4, %c0_8, %c0_9] : memref<9x32x320xf32, #tpu.memory_space<vmem>>, vector<1x32x320xf32>
    %12 = vector.shape_cast %11 : vector<1x32x320xf32> to vector<32x320xf32>
    %13 = arith.maximumf %10, %12 : vector<32x320xf32>
    %c5 = arith.constant 5 : index
    %c0_10 = arith.constant 0 : index
    %c0_11 = arith.constant 0 : index
    %14 = vector.load %arg1[%c5, %c0_10, %c0_11] : memref<9x32x320xf32, #tpu.memory_space<vmem>>, vector<1x32x320xf32>
    %15 = vector.shape_cast %14 : vector<1x32x320xf32> to vector<32x320xf32>
    %16 = arith.maximumf %13, %15 : vector<32x320xf32>
    %c6 = arith.constant 6 : index
    %c0_12 = arith.constant 0 : index
    %c0_13 = arith.constant 0 : index
    %17 = vector.load %arg1[%c6, %c0_12, %c0_13] : memref<9x32x320xf32, #tpu.memory_space<vmem>>, vector<1x32x320xf32>
    %18 = vector.shape_cast %17 : vector<1x32x320xf32> to vector<32x320xf32>
    %19 = arith.maximumf %16, %18 : vector<32x320xf32>
    %c7 = arith.constant 7 : index
    %c0_14 = arith.constant 0 : index
    %c0_15 = arith.constant 0 : index
    %20 = vector.load %arg1[%c7, %c0_14, %c0_15] : memref<9x32x320xf32, #tpu.memory_space<vmem>>, vector<1x32x320xf32>
    %21 = vector.shape_cast %20 : vector<1x32x320xf32> to vector<32x320xf32>
    %22 = arith.maximumf %19, %21 : vector<32x320xf32>
    %c8 = arith.constant 8 : index
    %c0_16 = arith.constant 0 : index
    %c0_17 = arith.constant 0 : index
    %23 = vector.load %arg1[%c8, %c0_16, %c0_17] : memref<9x32x320xf32, #tpu.memory_space<vmem>>, vector<1x32x320xf32>
    %24 = vector.shape_cast %23 : vector<1x32x320xf32> to vector<32x320xf32>
    %25 = arith.maximumf %22, %24 : vector<32x320xf32>
    %c0_18 = arith.constant 0 : index
    %c0_19 = arith.constant 0 : index
    %26 = vector.load %arg2[%c0_18, %c0_19] : memref<32x320xf32, #tpu.memory_space<vmem>>, vector<32x320xf32>
    tpu.vector_store %arg2[%c0_18, %c0_19], %25 {strides = array<i32>} : memref<32x320xf32, #tpu.memory_space<vmem>>, vector<32x320xf32>,
    return
  }
  func.func @transform_0(%arg0: i32) -> (i32, i32, i32) {
    %c0_i32 = arith.constant 0 : i32
    %c0_i32_0 = arith.constant 0 : i32
    %c0_i32_1 = arith.constant 0 : i32
    return %c0_i32, %arg0, %c0_i32_0 : i32, i32, i32
  }
  func.func @transform_1(%arg0: i32) -> (i32, i32) {
    %c0_i32 = arith.constant 0 : i32
    %c0_i32_0 = arith.constant 0 : i32
    return %arg0, %c0_i32 : i32, i32
  }
}

module attributes {stable_mosaic.version = 11 : i64} {
  func.func @_inception_head_kernel(%arg0: i32, %arg1: memref<64x64xf32, #tpu.memory_space<vmem>>, %arg2: memref<9x64x64xf32, #tpu.memory_space<vmem>>, %arg3: memref<64x52xf32, #tpu.memory_space<vmem>>, %arg4: memref<64x52xf32, #tpu.memory_space<vmem>>, %arg5: memref<1x52xf32, #tpu.memory_space<vmem>>, %arg6: memref<64x52xf32, #tpu.memory_space<vmem>>) attributes {dimension_semantics = [#tpu.dimension_semantics<parallel>], iteration_bounds = array<i64: 1>, scalar_prefetch = 0 : i64, scratch_operands = 0 : i64, tpu.core_type = #tpu.core_type<tc>, window_params = [{transform_indices = @transform_0, window_bounds = array<i64: 64, 64>}, {transform_indices = @transform_1, window_bounds = array<i64: 9, 64, 64>}, {pipeline_mode = #tpu.pipeline_mode<synchronous>, transform_indices = @transform_2, window_bounds = array<i64: 64, 52>}, {pipeline_mode = #tpu.pipeline_mode<synchronous>, transform_indices = @transform_3, window_bounds = array<i64: 64, 52>}, {pipeline_mode = #tpu.pipeline_mode<synchronous>, transform_indices = @transform_4, window_bounds = array<i64: 1, 52>}, {transform_indices = @transform_5, window_bounds = array<i64: 64, 52>}]} {
    %c0 = arith.constant 0 : index
    %c0_0 = arith.constant 0 : index
    %c0_1 = arith.constant 0 : index
    %0 = vector.load %arg2[%c0, %c0_0, %c0_1] : memref<9x64x64xf32, #tpu.memory_space<vmem>>, vector<1x64x64xf32>
    %1 = vector.shape_cast %0 : vector<1x64x64xf32> to vector<64x64xf32>
    %c1 = arith.constant 1 : index
    %c0_2 = arith.constant 0 : index
    %c0_3 = arith.constant 0 : index
    %2 = vector.load %arg2[%c1, %c0_2, %c0_3] : memref<9x64x64xf32, #tpu.memory_space<vmem>>, vector<1x64x64xf32>
    %3 = vector.shape_cast %2 : vector<1x64x64xf32> to vector<64x64xf32>
    %4 = arith.maximumf %1, %3 : vector<64x64xf32>
    %c2 = arith.constant 2 : index
    %c0_4 = arith.constant 0 : index
    %c0_5 = arith.constant 0 : index
    %5 = vector.load %arg2[%c2, %c0_4, %c0_5] : memref<9x64x64xf32, #tpu.memory_space<vmem>>, vector<1x64x64xf32>
    %6 = vector.shape_cast %5 : vector<1x64x64xf32> to vector<64x64xf32>
    %7 = arith.maximumf %4, %6 : vector<64x64xf32>
    %c3 = arith.constant 3 : index
    %c0_6 = arith.constant 0 : index
    %c0_7 = arith.constant 0 : index
    %8 = vector.load %arg2[%c3, %c0_6, %c0_7] : memref<9x64x64xf32, #tpu.memory_space<vmem>>, vector<1x64x64xf32>
    %9 = vector.shape_cast %8 : vector<1x64x64xf32> to vector<64x64xf32>
    %10 = arith.maximumf %7, %9 : vector<64x64xf32>
    %c4 = arith.constant 4 : index
    %c0_8 = arith.constant 0 : index
    %c0_9 = arith.constant 0 : index
    %11 = vector.load %arg2[%c4, %c0_8, %c0_9] : memref<9x64x64xf32, #tpu.memory_space<vmem>>, vector<1x64x64xf32>
    %12 = vector.shape_cast %11 : vector<1x64x64xf32> to vector<64x64xf32>
    %13 = arith.maximumf %10, %12 : vector<64x64xf32>
    %c5 = arith.constant 5 : index
    %c0_10 = arith.constant 0 : index
    %c0_11 = arith.constant 0 : index
    %14 = vector.load %arg2[%c5, %c0_10, %c0_11] : memref<9x64x64xf32, #tpu.memory_space<vmem>>, vector<1x64x64xf32>
    %15 = vector.shape_cast %14 : vector<1x64x64xf32> to vector<64x64xf32>
    %16 = arith.maximumf %13, %15 : vector<64x64xf32>
    %c6 = arith.constant 6 : index
    %c0_12 = arith.constant 0 : index
    %c0_13 = arith.constant 0 : index
    %17 = vector.load %arg2[%c6, %c0_12, %c0_13] : memref<9x64x64xf32, #tpu.memory_space<vmem>>, vector<1x64x64xf32>
    %18 = vector.shape_cast %17 : vector<1x64x64xf32> to vector<64x64xf32>
    %19 = arith.maximumf %16, %18 : vector<64x64xf32>
    %c7 = arith.constant 7 : index
    %c0_14 = arith.constant 0 : index
    %c0_15 = arith.constant 0 : index
    %20 = vector.load %arg2[%c7, %c0_14, %c0_15] : memref<9x64x64xf32, #tpu.memory_space<vmem>>, vector<1x64x64xf32>
    %21 = vector.shape_cast %20 : vector<1x64x64xf32> to vector<64x64xf32>
    %22 = arith.maximumf %19, %21 : vector<64x64xf32>
    %c8 = arith.constant 8 : index
    %c0_16 = arith.constant 0 : index
    %c0_17 = arith.constant 0 : index
    %23 = vector.load %arg2[%c8, %c0_16, %c0_17] : memref<9x64x64xf32, #tpu.memory_space<vmem>>, vector<1x64x64xf32>
    %24 = vector.shape_cast %23 : vector<1x64x64xf32> to vector<64x64xf32>
    %25 = arith.maximumf %22, %24 : vector<64x64xf32>
    %c0_18 = arith.constant 0 : index
    %c0_19 = arith.constant 0 : index
    %26 = vector.load %arg1[%c0_18, %c0_19] : memref<64x64xf32, #tpu.memory_space<vmem>>, vector<64x64xf32>
    %c0_20 = arith.constant 0 : index
    %c0_21 = arith.constant 0 : index
    %27 = vector.load %arg3[%c0_20, %c0_21] : memref<64x52xf32, #tpu.memory_space<vmem>>, vector<64x52xf32>
    %cst = arith.constant dense<0.000000e+00> : vector<64x52xf32>
    %28 = tpu.matmul %26, %27, %cst {dimension_numbers = #tpu.dot_dimension_numbers<[1], [0], [0], [1], [0, 0, 1, 1], [], []>} : vector<64x64xf32>, vector<64x52xf32>, vector<64x52xf32> -> vector<64x52xf32>
    %c0_22 = arith.constant 0 : index
    %c0_23 = arith.constant 0 : index
    %29 = vector.load %arg4[%c0_22, %c0_23] : memref<64x52xf32, #tpu.memory_space<vmem>>, vector<64x52xf32>
    %cst_24 = arith.constant dense<0.000000e+00> : vector<64x52xf32>
    %30 = tpu.matmul %25, %29, %cst_24 {dimension_numbers = #tpu.dot_dimension_numbers<[1], [0], [0], [1], [0, 0, 1, 1], [], []>} : vector<64x64xf32>, vector<64x52xf32>, vector<64x52xf32> -> vector<64x52xf32>
    %31 = arith.addf %28, %30 : vector<64x52xf32>
    %c0_25 = arith.constant 0 : index
    %c0_26 = arith.constant 0 : index
    %32 = vector.load %arg5[%c0_25, %c0_26] : memref<1x52xf32, #tpu.memory_space<vmem>>, vector<1x52xf32>
    %33 = vector.broadcast %32 : vector<1x52xf32> to vector<64x52xf32>
    %34 = arith.addf %31, %33 : vector<64x52xf32>
    %cst_27 = arith.constant 0.000000e+00 : f32
    %35 = vector.broadcast %cst_27 : f32 to vector<64x52xf32>
    %36 = arith.maximumf %34, %35 : vector<64x52xf32>
    %c0_28 = arith.constant 0 : index
    %c0_29 = arith.constant 0 : index
    %37 = vector.load %arg6[%c0_28, %c0_29] : memref<64x52xf32, #tpu.memory_space<vmem>>, vector<64x52xf32>
    tpu.vector_store %arg6[%c0_28, %c0_29], %36 {strides = array<i32>} : memref<64x52xf32, #tpu.memory_space<vmem>>, vector<64x52xf32>,
    return
  }
  func.func @transform_0(%arg0: i32) -> (i32, i32) {
    %c0_i32 = arith.constant 0 : i32
    %c0_i32_0 = arith.constant 0 : i32
    return %arg0, %c0_i32 : i32, i32
  }
  func.func @transform_1(%arg0: i32) -> (i32, i32, i32) {
    %c0_i32 = arith.constant 0 : i32
    %c0_i32_0 = arith.constant 0 : i32
    %c0_i32_1 = arith.constant 0 : i32
    return %c0_i32, %arg0, %c0_i32_0 : i32, i32, i32
  }
  func.func @transform_2(%arg0: i32) -> (i32, i32) {
    %c0_i32 = arith.constant 0 : i32
    %c0_i32_0 = arith.constant 0 : i32
    %c0_i32_1 = arith.constant 0 : i32
    return %c0_i32, %c0_i32_0 : i32, i32
  }
  func.func @transform_3(%arg0: i32) -> (i32, i32) {
    %c0_i32 = arith.constant 0 : i32
    %c0_i32_0 = arith.constant 0 : i32
    %c0_i32_1 = arith.constant 0 : i32
    return %c0_i32, %c0_i32_0 : i32, i32
  }
  func.func @transform_4(%arg0: i32) -> (i32, i32) {
    %c0_i32 = arith.constant 0 : i32
    %c0_i32_0 = arith.constant 0 : i32
    %c0_i32_1 = arith.constant 0 : i32
    return %c0_i32, %c0_i32_0 : i32, i32
  }
  func.func @transform_5(%arg0: i32) -> (i32, i32) {
    %c0_i32 = arith.constant 0 : i32
    %c0_i32_0 = arith.constant 0 : i32
    return %arg0, %c0_i32 : i32, i32
  }
}

module attributes {stable_mosaic.version = 11 : i64} {
  func.func @_dual_gemm_kernel(%arg0: i32, %arg1: memref<64x216xbf16, #tpu.memory_space<vmem>>, %arg2: memref<64x100xbf16, #tpu.memory_space<vmem>>, %arg3: memref<216x40xbf16, #tpu.memory_space<vmem>>, %arg4: memref<100x40xbf16, #tpu.memory_space<vmem>>, %arg5: memref<1x40xf32, #tpu.memory_space<vmem>>, %arg6: memref<64x40xf32, #tpu.memory_space<vmem>>) attributes {dimension_semantics = [#tpu.dimension_semantics<parallel>], iteration_bounds = array<i64: 1>, scalar_prefetch = 0 : i64, scratch_operands = 0 : i64, tpu.core_type = #tpu.core_type<tc>, window_params = [{transform_indices = @transform_0, window_bounds = array<i64: 64, 216>}, {transform_indices = @transform_1, window_bounds = array<i64: 64, 100>}, {pipeline_mode = #tpu.pipeline_mode<synchronous>, transform_indices = @transform_2, window_bounds = array<i64: 216, 40>}, {pipeline_mode = #tpu.pipeline_mode<synchronous>, transform_indices = @transform_3, window_bounds = array<i64: 100, 40>}, {pipeline_mode = #tpu.pipeline_mode<synchronous>, transform_indices = @transform_4, window_bounds = array<i64: 1, 40>}, {transform_indices = @transform_5, window_bounds = array<i64: 64, 40>}]} {
    %c0 = arith.constant 0 : index
    %c0_0 = arith.constant 0 : index
    %0 = vector.load %arg1[%c0, %c0_0] : memref<64x216xbf16, #tpu.memory_space<vmem>>, vector<64x216xbf16>
    %c0_1 = arith.constant 0 : index
    %c0_2 = arith.constant 0 : index
    %1 = vector.load %arg3[%c0_1, %c0_2] : memref<216x40xbf16, #tpu.memory_space<vmem>>, vector<216x40xbf16>
    %cst = arith.constant dense<0.000000e+00> : vector<64x40xf32>
    %2 = tpu.matmul %0, %1, %cst {dimension_numbers = #tpu.dot_dimension_numbers<[1], [0], [0], [1], [0, 0, 1, 1], [], []>} : vector<64x216xbf16>, vector<216x40xbf16>, vector<64x40xf32> -> vector<64x40xf32>
    %c0_3 = arith.constant 0 : index
    %c0_4 = arith.constant 0 : index
    %3 = vector.load %arg2[%c0_3, %c0_4] : memref<64x100xbf16, #tpu.memory_space<vmem>>, vector<64x100xbf16>
    %c0_5 = arith.constant 0 : index
    %c0_6 = arith.constant 0 : index
    %4 = vector.load %arg4[%c0_5, %c0_6] : memref<100x40xbf16, #tpu.memory_space<vmem>>, vector<100x40xbf16>
    %cst_7 = arith.constant dense<0.000000e+00> : vector<64x40xf32>
    %5 = tpu.matmul %3, %4, %cst_7 {dimension_numbers = #tpu.dot_dimension_numbers<[1], [0], [0], [1], [0, 0, 1, 1], [], []>} : vector<64x100xbf16>, vector<100x40xbf16>, vector<64x40xf32> -> vector<64x40xf32>
    %6 = arith.addf %2, %5 : vector<64x40xf32>
    %c0_8 = arith.constant 0 : index
    %c0_9 = arith.constant 0 : index
    %7 = vector.load %arg5[%c0_8, %c0_9] : memref<1x40xf32, #tpu.memory_space<vmem>>, vector<1x40xf32>
    %8 = vector.broadcast %7 : vector<1x40xf32> to vector<64x40xf32>
    %9 = arith.addf %6, %8 : vector<64x40xf32>
    %cst_10 = arith.constant 0.000000e+00 : f32
    %10 = vector.broadcast %cst_10 : f32 to vector<64x40xf32>
    %11 = arith.maximumf %9, %10 : vector<64x40xf32>
    %c0_11 = arith.constant 0 : index
    %c0_12 = arith.constant 0 : index
    %12 = vector.load %arg6[%c0_11, %c0_12] : memref<64x40xf32, #tpu.memory_space<vmem>>, vector<64x40xf32>
    tpu.vector_store %arg6[%c0_11, %c0_12], %11 {strides = array<i32>} : memref<64x40xf32, #tpu.memory_space<vmem>>, vector<64x40xf32>,
    return
  }
  func.func @transform_0(%arg0: i32) -> (i32, i32) {
    %c0_i32 = arith.constant 0 : i32
    %c0_i32_0 = arith.constant 0 : i32
    return %arg0, %c0_i32 : i32, i32
  }
  func.func @transform_1(%arg0: i32) -> (i32, i32) {
    %c0_i32 = arith.constant 0 : i32
    %c0_i32_0 = arith.constant 0 : i32
    return %arg0, %c0_i32 : i32, i32
  }
  func.func @transform_2(%arg0: i32) -> (i32, i32) {
    %c0_i32 = arith.constant 0 : i32
    %c0_i32_0 = arith.constant 0 : i32
    %c0_i32_1 = arith.constant 0 : i32
    return %c0_i32, %c0_i32_0 : i32, i32
  }
  func.func @transform_3(%arg0: i32) -> (i32, i32) {
    %c0_i32 = arith.constant 0 : i32
    %c0_i32_0 = arith.constant 0 : i32
    %c0_i32_1 = arith.constant 0 : i32
    return %c0_i32, %c0_i32_0 : i32, i32
  }
  func.func @transform_4(%arg0: i32) -> (i32, i32) {
    %c0_i32 = arith.constant 0 : i32
    %c0_i32_0 = arith.constant 0 : i32
    %c0_i32_1 = arith.constant 0 : i32
    return %c0_i32, %c0_i32_0 : i32, i32
  }
  func.func @transform_5(%arg0: i32) -> (i32, i32) {
    %c0_i32 = arith.constant 0 : i32
    %c0_i32_0 = arith.constant 0 : i32
    return %arg0, %c0_i32 : i32, i32
  }
}

module attributes {stable_mosaic.version = 11 : i64} {
  func.func @_maxpool_kernel(%arg0: i32, %arg1: memref<9x32x128xf32, #tpu.memory_space<vmem>>, %arg2: memref<32x128xf32, #tpu.memory_space<vmem>>) attributes {dimension_semantics = [#tpu.dimension_semantics<parallel>], iteration_bounds = array<i64: 1>, scalar_prefetch = 0 : i64, scratch_operands = 0 : i64, tpu.core_type = #tpu.core_type<tc>, window_params = [{transform_indices = @transform_0, window_bounds = array<i64: 9, 32, 128>}, {transform_indices = @transform_1, window_bounds = array<i64: 32, 128>}]} {
    %c0 = arith.constant 0 : index
    %c0_0 = arith.constant 0 : index
    %c0_1 = arith.constant 0 : index
    %0 = vector.load %arg1[%c0, %c0_0, %c0_1] : memref<9x32x128xf32, #tpu.memory_space<vmem>>, vector<1x32x128xf32>
    %1 = vector.shape_cast %0 : vector<1x32x128xf32> to vector<32x128xf32>
    %c1 = arith.constant 1 : index
    %c0_2 = arith.constant 0 : index
    %c0_3 = arith.constant 0 : index
    %2 = vector.load %arg1[%c1, %c0_2, %c0_3] : memref<9x32x128xf32, #tpu.memory_space<vmem>>, vector<1x32x128xf32>
    %3 = vector.shape_cast %2 : vector<1x32x128xf32> to vector<32x128xf32>
    %4 = arith.maximumf %1, %3 : vector<32x128xf32>
    %c2 = arith.constant 2 : index
    %c0_4 = arith.constant 0 : index
    %c0_5 = arith.constant 0 : index
    %5 = vector.load %arg1[%c2, %c0_4, %c0_5] : memref<9x32x128xf32, #tpu.memory_space<vmem>>, vector<1x32x128xf32>
    %6 = vector.shape_cast %5 : vector<1x32x128xf32> to vector<32x128xf32>
    %7 = arith.maximumf %4, %6 : vector<32x128xf32>
    %c3 = arith.constant 3 : index
    %c0_6 = arith.constant 0 : index
    %c0_7 = arith.constant 0 : index
    %8 = vector.load %arg1[%c3, %c0_6, %c0_7] : memref<9x32x128xf32, #tpu.memory_space<vmem>>, vector<1x32x128xf32>
    %9 = vector.shape_cast %8 : vector<1x32x128xf32> to vector<32x128xf32>
    %10 = arith.maximumf %7, %9 : vector<32x128xf32>
    %c4 = arith.constant 4 : index
    %c0_8 = arith.constant 0 : index
    %c0_9 = arith.constant 0 : index
    %11 = vector.load %arg1[%c4, %c0_8, %c0_9] : memref<9x32x128xf32, #tpu.memory_space<vmem>>, vector<1x32x128xf32>
    %12 = vector.shape_cast %11 : vector<1x32x128xf32> to vector<32x128xf32>
    %13 = arith.maximumf %10, %12 : vector<32x128xf32>
    %c5 = arith.constant 5 : index
    %c0_10 = arith.constant 0 : index
    %c0_11 = arith.constant 0 : index
    %14 = vector.load %arg1[%c5, %c0_10, %c0_11] : memref<9x32x128xf32, #tpu.memory_space<vmem>>, vector<1x32x128xf32>
    %15 = vector.shape_cast %14 : vector<1x32x128xf32> to vector<32x128xf32>
    %16 = arith.maximumf %13, %15 : vector<32x128xf32>
    %c6 = arith.constant 6 : index
    %c0_12 = arith.constant 0 : index
    %c0_13 = arith.constant 0 : index
    %17 = vector.load %arg1[%c6, %c0_12, %c0_13] : memref<9x32x128xf32, #tpu.memory_space<vmem>>, vector<1x32x128xf32>
    %18 = vector.shape_cast %17 : vector<1x32x128xf32> to vector<32x128xf32>
    %19 = arith.maximumf %16, %18 : vector<32x128xf32>
    %c7 = arith.constant 7 : index
    %c0_14 = arith.constant 0 : index
    %c0_15 = arith.constant 0 : index
    %20 = vector.load %arg1[%c7, %c0_14, %c0_15] : memref<9x32x128xf32, #tpu.memory_space<vmem>>, vector<1x32x128xf32>
    %21 = vector.shape_cast %20 : vector<1x32x128xf32> to vector<32x128xf32>
    %22 = arith.maximumf %19, %21 : vector<32x128xf32>
    %c8 = arith.constant 8 : index
    %c0_16 = arith.constant 0 : index
    %c0_17 = arith.constant 0 : index
    %23 = vector.load %arg1[%c8, %c0_16, %c0_17] : memref<9x32x128xf32, #tpu.memory_space<vmem>>, vector<1x32x128xf32>
    %24 = vector.shape_cast %23 : vector<1x32x128xf32> to vector<32x128xf32>
    %25 = arith.maximumf %22, %24 : vector<32x128xf32>
    %c0_18 = arith.constant 0 : index
    %c0_19 = arith.constant 0 : index
    %26 = vector.load %arg2[%c0_18, %c0_19] : memref<32x128xf32, #tpu.memory_space<vmem>>, vector<32x128xf32>
    tpu.vector_store %arg2[%c0_18, %c0_19], %25 {strides = array<i32>} : memref<32x128xf32, #tpu.memory_space<vmem>>, vector<32x128xf32>,
    return
  }
  func.func @transform_0(%arg0: i32) -> (i32, i32, i32) {
    %c0_i32 = arith.constant 0 : i32
    %c0_i32_0 = arith.constant 0 : i32
    %c0_i32_1 = arith.constant 0 : i32
    return %c0_i32, %arg0, %c0_i32_0 : i32, i32, i32
  }
  func.func @transform_1(%arg0: i32) -> (i32, i32) {
    %c0_i32 = arith.constant 0 : i32
    %c0_i32_0 = arith.constant 0 : i32
    return %arg0, %c0_i32 : i32, i32
  }
}

module attributes {stable_mosaic.version = 11 : i64} {
  func.func @_inception_head_kernel(%arg0: i32, %arg1: memref<32x64xf32, #tpu.memory_space<vmem>>, %arg2: memref<9x32x64xf32, #tpu.memory_space<vmem>>, %arg3: memref<64x52xf32, #tpu.memory_space<vmem>>, %arg4: memref<64x52xf32, #tpu.memory_space<vmem>>, %arg5: memref<1x52xf32, #tpu.memory_space<vmem>>, %arg6: memref<32x52xf32, #tpu.memory_space<vmem>>) attributes {dimension_semantics = [#tpu.dimension_semantics<parallel>], iteration_bounds = array<i64: 1>, scalar_prefetch = 0 : i64, scratch_operands = 0 : i64, tpu.core_type = #tpu.core_type<tc>, window_params = [{transform_indices = @transform_0, window_bounds = array<i64: 32, 64>}, {transform_indices = @transform_1, window_bounds = array<i64: 9, 32, 64>}, {pipeline_mode = #tpu.pipeline_mode<synchronous>, transform_indices = @transform_2, window_bounds = array<i64: 64, 52>}, {pipeline_mode = #tpu.pipeline_mode<synchronous>, transform_indices = @transform_3, window_bounds = array<i64: 64, 52>}, {pipeline_mode = #tpu.pipeline_mode<synchronous>, transform_indices = @transform_4, window_bounds = array<i64: 1, 52>}, {transform_indices = @transform_5, window_bounds = array<i64: 32, 52>}]} {
    %c0 = arith.constant 0 : index
    %c0_0 = arith.constant 0 : index
    %c0_1 = arith.constant 0 : index
    %0 = vector.load %arg2[%c0, %c0_0, %c0_1] : memref<9x32x64xf32, #tpu.memory_space<vmem>>, vector<1x32x64xf32>
    %1 = vector.shape_cast %0 : vector<1x32x64xf32> to vector<32x64xf32>
    %c1 = arith.constant 1 : index
    %c0_2 = arith.constant 0 : index
    %c0_3 = arith.constant 0 : index
    %2 = vector.load %arg2[%c1, %c0_2, %c0_3] : memref<9x32x64xf32, #tpu.memory_space<vmem>>, vector<1x32x64xf32>
    %3 = vector.shape_cast %2 : vector<1x32x64xf32> to vector<32x64xf32>
    %4 = arith.maximumf %1, %3 : vector<32x64xf32>
    %c2 = arith.constant 2 : index
    %c0_4 = arith.constant 0 : index
    %c0_5 = arith.constant 0 : index
    %5 = vector.load %arg2[%c2, %c0_4, %c0_5] : memref<9x32x64xf32, #tpu.memory_space<vmem>>, vector<1x32x64xf32>
    %6 = vector.shape_cast %5 : vector<1x32x64xf32> to vector<32x64xf32>
    %7 = arith.maximumf %4, %6 : vector<32x64xf32>
    %c3 = arith.constant 3 : index
    %c0_6 = arith.constant 0 : index
    %c0_7 = arith.constant 0 : index
    %8 = vector.load %arg2[%c3, %c0_6, %c0_7] : memref<9x32x64xf32, #tpu.memory_space<vmem>>, vector<1x32x64xf32>
    %9 = vector.shape_cast %8 : vector<1x32x64xf32> to vector<32x64xf32>
    %10 = arith.maximumf %7, %9 : vector<32x64xf32>
    %c4 = arith.constant 4 : index
    %c0_8 = arith.constant 0 : index
    %c0_9 = arith.constant 0 : index
    %11 = vector.load %arg2[%c4, %c0_8, %c0_9] : memref<9x32x64xf32, #tpu.memory_space<vmem>>, vector<1x32x64xf32>
    %12 = vector.shape_cast %11 : vector<1x32x64xf32> to vector<32x64xf32>
    %13 = arith.maximumf %10, %12 : vector<32x64xf32>
    %c5 = arith.constant 5 : index
    %c0_10 = arith.constant 0 : index
    %c0_11 = arith.constant 0 : index
    %14 = vector.load %arg2[%c5, %c0_10, %c0_11] : memref<9x32x64xf32, #tpu.memory_space<vmem>>, vector<1x32x64xf32>
    %15 = vector.shape_cast %14 : vector<1x32x64xf32> to vector<32x64xf32>
    %16 = arith.maximumf %13, %15 : vector<32x64xf32>
    %c6 = arith.constant 6 : index
    %c0_12 = arith.constant 0 : index
    %c0_13 = arith.constant 0 : index
    %17 = vector.load %arg2[%c6, %c0_12, %c0_13] : memref<9x32x64xf32, #tpu.memory_space<vmem>>, vector<1x32x64xf32>
    %18 = vector.shape_cast %17 : vector<1x32x64xf32> to vector<32x64xf32>
    %19 = arith.maximumf %16, %18 : vector<32x64xf32>
    %c7 = arith.constant 7 : index
    %c0_14 = arith.constant 0 : index
    %c0_15 = arith.constant 0 : index
    %20 = vector.load %arg2[%c7, %c0_14, %c0_15] : memref<9x32x64xf32, #tpu.memory_space<vmem>>, vector<1x32x64xf32>
    %21 = vector.shape_cast %20 : vector<1x32x64xf32> to vector<32x64xf32>
    %22 = arith.maximumf %19, %21 : vector<32x64xf32>
    %c8 = arith.constant 8 : index
    %c0_16 = arith.constant 0 : index
    %c0_17 = arith.constant 0 : index
    %23 = vector.load %arg2[%c8, %c0_16, %c0_17] : memref<9x32x64xf32, #tpu.memory_space<vmem>>, vector<1x32x64xf32>
    %24 = vector.shape_cast %23 : vector<1x32x64xf32> to vector<32x64xf32>
    %25 = arith.maximumf %22, %24 : vector<32x64xf32>
    %c0_18 = arith.constant 0 : index
    %c0_19 = arith.constant 0 : index
    %26 = vector.load %arg1[%c0_18, %c0_19] : memref<32x64xf32, #tpu.memory_space<vmem>>, vector<32x64xf32>
    %c0_20 = arith.constant 0 : index
    %c0_21 = arith.constant 0 : index
    %27 = vector.load %arg3[%c0_20, %c0_21] : memref<64x52xf32, #tpu.memory_space<vmem>>, vector<64x52xf32>
    %cst = arith.constant dense<0.000000e+00> : vector<32x52xf32>
    %28 = tpu.matmul %26, %27, %cst {dimension_numbers = #tpu.dot_dimension_numbers<[1], [0], [0], [1], [0, 0, 1, 1], [], []>} : vector<32x64xf32>, vector<64x52xf32>, vector<32x52xf32> -> vector<32x52xf32>
    %c0_22 = arith.constant 0 : index
    %c0_23 = arith.constant 0 : index
    %29 = vector.load %arg4[%c0_22, %c0_23] : memref<64x52xf32, #tpu.memory_space<vmem>>, vector<64x52xf32>
    %cst_24 = arith.constant dense<0.000000e+00> : vector<32x52xf32>
    %30 = tpu.matmul %25, %29, %cst_24 {dimension_numbers = #tpu.dot_dimension_numbers<[1], [0], [0], [1], [0, 0, 1, 1], [], []>} : vector<32x64xf32>, vector<64x52xf32>, vector<32x52xf32> -> vector<32x52xf32>
    %31 = arith.addf %28, %30 : vector<32x52xf32>
    %c0_25 = arith.constant 0 : index
    %c0_26 = arith.constant 0 : index
    %32 = vector.load %arg5[%c0_25, %c0_26] : memref<1x52xf32, #tpu.memory_space<vmem>>, vector<1x52xf32>
    %33 = vector.broadcast %32 : vector<1x52xf32> to vector<32x52xf32>
    %34 = arith.addf %31, %33 : vector<32x52xf32>
    %cst_27 = arith.constant 0.000000e+00 : f32
    %35 = vector.broadcast %cst_27 : f32 to vector<32x52xf32>
    %36 = arith.maximumf %34, %35 : vector<32x52xf32>
    %c0_28 = arith.constant 0 : index
    %c0_29 = arith.constant 0 : index
    %37 = vector.load %arg6[%c0_28, %c0_29] : memref<32x52xf32, #tpu.memory_space<vmem>>, vector<32x52xf32>
    tpu.vector_store %arg6[%c0_28, %c0_29], %36 {strides = array<i32>} : memref<32x52xf32, #tpu.memory_space<vmem>>, vector<32x52xf32>,
    return
  }
  func.func @transform_0(%arg0: i32) -> (i32, i32) {
    %c0_i32 = arith.constant 0 : i32
    %c0_i32_0 = arith.constant 0 : i32
    return %arg0, %c0_i32 : i32, i32
  }
  func.func @transform_1(%arg0: i32) -> (i32, i32, i32) {
    %c0_i32 = arith.constant 0 : i32
    %c0_i32_0 = arith.constant 0 : i32
    %c0_i32_1 = arith.constant 0 : i32
    return %c0_i32, %arg0, %c0_i32_0 : i32, i32, i32
  }
  func.func @transform_2(%arg0: i32) -> (i32, i32) {
    %c0_i32 = arith.constant 0 : i32
    %c0_i32_0 = arith.constant 0 : i32
    %c0_i32_1 = arith.constant 0 : i32
    return %c0_i32, %c0_i32_0 : i32, i32
  }
  func.func @transform_3(%arg0: i32) -> (i32, i32) {
    %c0_i32 = arith.constant 0 : i32
    %c0_i32_0 = arith.constant 0 : i32
    %c0_i32_1 = arith.constant 0 : i32
    return %c0_i32, %c0_i32_0 : i32, i32
  }
  func.func @transform_4(%arg0: i32) -> (i32, i32) {
    %c0_i32 = arith.constant 0 : i32
    %c0_i32_0 = arith.constant 0 : i32
    %c0_i32_1 = arith.constant 0 : i32
    return %c0_i32, %c0_i32_0 : i32, i32
  }
  func.func @transform_5(%arg0: i32) -> (i32, i32) {
    %c0_i32 = arith.constant 0 : i32
    %c0_i32_0 = arith.constant 0 : i32
    return %arg0, %c0_i32 : i32, i32
  }
}

module attributes {stable_mosaic.version = 11 : i64} {
  func.func @_dual_gemm_kernel(%arg0: i32, %arg1: memref<32x216xbf16, #tpu.memory_space<vmem>>, %arg2: memref<32x100xbf16, #tpu.memory_space<vmem>>, %arg3: memref<216x40xbf16, #tpu.memory_space<vmem>>, %arg4: memref<100x40xbf16, #tpu.memory_space<vmem>>, %arg5: memref<1x40xf32, #tpu.memory_space<vmem>>, %arg6: memref<32x40xf32, #tpu.memory_space<vmem>>) attributes {dimension_semantics = [#tpu.dimension_semantics<parallel>], iteration_bounds = array<i64: 1>, scalar_prefetch = 0 : i64, scratch_operands = 0 : i64, tpu.core_type = #tpu.core_type<tc>, window_params = [{transform_indices = @transform_0, window_bounds = array<i64: 32, 216>}, {transform_indices = @transform_1, window_bounds = array<i64: 32, 100>}, {pipeline_mode = #tpu.pipeline_mode<synchronous>, transform_indices = @transform_2, window_bounds = array<i64: 216, 40>}, {pipeline_mode = #tpu.pipeline_mode<synchronous>, transform_indices = @transform_3, window_bounds = array<i64: 100, 40>}, {pipeline_mode = #tpu.pipeline_mode<synchronous>, transform_indices = @transform_4, window_bounds = array<i64: 1, 40>}, {transform_indices = @transform_5, window_bounds = array<i64: 32, 40>}]} {
    %c0 = arith.constant 0 : index
    %c0_0 = arith.constant 0 : index
    %0 = vector.load %arg1[%c0, %c0_0] : memref<32x216xbf16, #tpu.memory_space<vmem>>, vector<32x216xbf16>
    %c0_1 = arith.constant 0 : index
    %c0_2 = arith.constant 0 : index
    %1 = vector.load %arg3[%c0_1, %c0_2] : memref<216x40xbf16, #tpu.memory_space<vmem>>, vector<216x40xbf16>
    %cst = arith.constant dense<0.000000e+00> : vector<32x40xf32>
    %2 = tpu.matmul %0, %1, %cst {dimension_numbers = #tpu.dot_dimension_numbers<[1], [0], [0], [1], [0, 0, 1, 1], [], []>} : vector<32x216xbf16>, vector<216x40xbf16>, vector<32x40xf32> -> vector<32x40xf32>
    %c0_3 = arith.constant 0 : index
    %c0_4 = arith.constant 0 : index
    %3 = vector.load %arg2[%c0_3, %c0_4] : memref<32x100xbf16, #tpu.memory_space<vmem>>, vector<32x100xbf16>
    %c0_5 = arith.constant 0 : index
    %c0_6 = arith.constant 0 : index
    %4 = vector.load %arg4[%c0_5, %c0_6] : memref<100x40xbf16, #tpu.memory_space<vmem>>, vector<100x40xbf16>
    %cst_7 = arith.constant dense<0.000000e+00> : vector<32x40xf32>
    %5 = tpu.matmul %3, %4, %cst_7 {dimension_numbers = #tpu.dot_dimension_numbers<[1], [0], [0], [1], [0, 0, 1, 1], [], []>} : vector<32x100xbf16>, vector<100x40xbf16>, vector<32x40xf32> -> vector<32x40xf32>
    %6 = arith.addf %2, %5 : vector<32x40xf32>
    %c0_8 = arith.constant 0 : index
    %c0_9 = arith.constant 0 : index
    %7 = vector.load %arg5[%c0_8, %c0_9] : memref<1x40xf32, #tpu.memory_space<vmem>>, vector<1x40xf32>
    %8 = vector.broadcast %7 : vector<1x40xf32> to vector<32x40xf32>
    %9 = arith.addf %6, %8 : vector<32x40xf32>
    %cst_10 = arith.constant 0.000000e+00 : f32
    %10 = vector.broadcast %cst_10 : f32 to vector<32x40xf32>
    %11 = arith.maximumf %9, %10 : vector<32x40xf32>
    %c0_11 = arith.constant 0 : index
    %c0_12 = arith.constant 0 : index
    %12 = vector.load %arg6[%c0_11, %c0_12] : memref<32x40xf32, #tpu.memory_space<vmem>>, vector<32x40xf32>
    tpu.vector_store %arg6[%c0_11, %c0_12], %11 {strides = array<i32>} : memref<32x40xf32, #tpu.memory_space<vmem>>, vector<32x40xf32>,
    return
  }
  func.func @transform_0(%arg0: i32) -> (i32, i32) {
    %c0_i32 = arith.constant 0 : i32
    %c0_i32_0 = arith.constant 0 : i32
    return %arg0, %c0_i32 : i32, i32
  }
  func.func @transform_1(%arg0: i32) -> (i32, i32) {
    %c0_i32 = arith.constant 0 : i32
    %c0_i32_0 = arith.constant 0 : i32
    return %arg0, %c0_i32 : i32, i32
  }
  func.func @transform_2(%arg0: i32) -> (i32, i32) {
    %c0_i32 = arith.constant 0 : i32
    %c0_i32_0 = arith.constant 0 : i32
    %c0_i32_1 = arith.constant 0 : i32
    return %c0_i32, %c0_i32_0 : i32, i32
  }
  func.func @transform_3(%arg0: i32) -> (i32, i32) {
    %c0_i32 = arith.constant 0 : i32
    %c0_i32_0 = arith.constant 0 : i32
    %c0_i32_1 = arith.constant 0 : i32
    return %c0_i32, %c0_i32_0 : i32, i32
  }
  func.func @transform_4(%arg0: i32) -> (i32, i32) {
    %c0_i32 = arith.constant 0 : i32
    %c0_i32_0 = arith.constant 0 : i32
    %c0_i32_1 = arith.constant 0 : i32
    return %c0_i32, %c0_i32_0 : i32, i32
  }
  func.func @transform_5(%arg0: i32) -> (i32, i32) {
    %c0_i32 = arith.constant 0 : i32
    %c0_i32_0 = arith.constant 0 : i32
    return %arg0, %c0_i32 : i32, i32
  }
}

</mosaic_0001>

<llo_original>
// kernel: x_model_forward.11
$region0: #{x_model_forward.11}
  #allocation0 [shape = 'u32[]', space=smem, size = 0x4, offset = 0x4, fixed_abs, tag = 'smem constant byte address 0x4 - core index']
  #allocation1 [shape = 'u32[144,128]{1,0:T(1,128)}', space=vmem, size = 0x12000, scoped, tag = 'internal scratch']
  %s0 = inlined_call_operand.vmem [shape: bf16[1682,49], index: 0, kind: input, shape index: {}]
  %s1 = inlined_call_operand.vmem [shape: bf16[49,16], index: 1, kind: input, shape index: {}]
  %s2 = inlined_call_operand.vmem [shape: f32[1,16], index: 2, kind: input, shape index: {}]
  %s3 = inlined_call_operand.vmem [shape: f32[1682,16], index: 3, kind: output, shape index: {}]
  %s4 = sld [smem:[#allocation0]]
  $region93: #{x_model_forward.11} parent=0
    _
  %s6 = ssub.s32 1, %s4
  %s7 = scalar_select 0, %s6, %s4
  $region1: #{x_model_forward.11} parent=0
    #allocation2 [shape = 'u8[524288]{0}', space=vmem, size = 0x80000, scoped, tag = 'output window, operand 0']
    loop: start=0, step=1, limit=6
    $region2: #{x_model_forward.11} parent=1 // loop_pre_header
      _
    $region3: #{x_model_forward.11} parent=1 // loop_header
      %s9 = sphi 0, %s13
      %p10 = scmp.ge.s32.totalorder %s9, 6
      %s19 = sphi 0, %s21
      %s22 = sphi 0, %s19
      %s23 = sphi 0, %s22
      %s39 = sphi 0, %s23
      %s43 = sphi 0, %s43
      %s45 = sphi 0, %s43
      %s46 = sphi 0, %s45
      %s60 = sphi 0, %s46
      %s64 = sphi 0, %s64
      %s66 = sphi 0, %s64
      %s67 = sphi 0, %s66
      %s81 = sphi 0, %s67
      %s87 = sphi 0, %s89
      %s90 = sphi 0, %s87
      %s91 = sphi 0, %s90
      %s107 = sphi 0, %s91
    $region4: #{x_model_forward.11} parent=1 // loop_header_branch
      %12 = sbr.rel (%p10) target = $region8
    $region5: #{x_model_forward.11} parent=1 // loop_body
      %s14 = ssub.s32 %s9, 1
      %s15 = ssub.s32 %s9, 2
      %s16 = sadd.s32 %s9, 1
      %s17 = ssub.s32 %s9, %s16
      %p18 = scmp.eq.s32.totalorder %s17, 0
      %s20 = sadd.s32 %s19, 1
      %s21 = scalar_select %p18, %s19, %s20
      %p24 = pneg %p18
      %p25 = scmp.eq.s32.totalorder %s9, 3
      %p26 = por %p24, %p25
      %p27 = scmp.ne.s32.totalorder %s19, %s22
      %p28 = scmp.eq.s32.totalorder %s9, 0
      %p29 = por %p27, %p28
      %p30 = scmp.ne.s32.totalorder %s19, %s22
      %p31 = scmp.eq.s32.totalorder %s14, 3
      %p32 = por %p30, %p31
      %p33 = scmp.ne.s32.totalorder %s22, %s23
      %p34 = scmp.eq.s32.totalorder %s14, 0
      %p35 = por %p33, %p34
      %p36 = scmp.ne.s32.totalorder %s22, %s23
      %p37 = scmp.eq.s32.totalorder %s15, 3
      %p38 = por %p36, %p37
      %p40 = scmp.ne.s32.totalorder %s23, %s39
      %p41 = scmp.eq.s32.totalorder %s15, 0
      %p42 = por %p40, %p41
      %s44 = sadd.s32 %s43, 1
      %p47 = scmp.eq.s32.totalorder %s9, 3
      %p48 = scmp.ne.s32.totalorder %s43, %s45
      %p49 = scmp.eq.s32.totalorder %s9, 0
      %p50 = por %p48, %p49
      %p51 = scmp.ne.s32.totalorder %s43, %s45
      %p52 = scmp.eq.s32.totalorder %s14, 3
      %p53 = por %p51, %p52
      %p54 = scmp.ne.s32.totalorder %s45, %s46
      %p55 = scmp.eq.s32.totalorder %s14, 0
      %p56 = por %p54, %p55
      %p57 = scmp.ne.s32.totalorder %s45, %s46
      %p58 = scmp.eq.s32.totalorder %s15, 3
      %p59 = por %p57, %p58
      %p61 = scmp.ne.s32.totalorder %s46, %s60
      %p62 = scmp.eq.s32.totalorder %s15, 0
      %p63 = por %p61, %p62
      %s65 = sadd.s32 %s64, 1
      %p68 = scmp.eq.s32.totalorder %s9, 3
      %p69 = scmp.ne.s32.totalorder %s64, %s66
      %p70 = scmp.eq.s32.totalorder %s9, 0
      %p71 = por %p69, %p70
      %p72 = scmp.ne.s32.totalorder %s64, %s66
      %p73 = scmp.eq.s32.totalorder %s14, 3
      %p74 = por %p72, %p73
      %p75 = scmp.ne.s32.totalorder %s66, %s67
      %p76 = scmp.eq.s32.totalorder %s14, 0
      %p77 = por %p75, %p76
      %p78 = scmp.ne.s32.totalorder %s66, %s67
      %p79 = scmp.eq.s32.totalorder %s15, 3
      %p80 = por %p78, %p79
      %p82 = scmp.ne.s32.totalorder %s67, %s81
      %p83 = scmp.eq.s32.totalorder %s15, 0
      %p84 = por %p82, %p83
      %s85 = ssub.s32 %s9, %s16
      %p86 = scmp.eq.s32.totalorder %s85, 0
      %s88 = sadd.s32 %s87, 1
      %s89 = scalar_select %p86, %s87, %s88
      %p92 = pneg %p86
      %p93 = scmp.eq.s32.totalorder %s9, 3
      %p94 = por %p92, %p93
      %p95 = scmp.ne.s32.totalorder %s87, %s90
      %p96 = scmp.eq.s32.totalorder %s9, 0
      %p97 = por %p95, %p96
      %p98 = scmp.ne.s32.totalorder %s87, %s90
      %p99 = scmp.eq.s32.totalorder %s14, 3
      %p100 = por %p98, %p99
      %p101 = scmp.ne.s32.totalorder %s90, %s91
      %p102 = scmp.eq.s32.totalorder %s14, 0
      %p103 = por %p101, %p102
      %p104 = scmp.ne.s32.totalorder %s90, %s91
      %p105 = scmp.eq.s32.totalorder %s15, 3
      %p106 = por %p104, %p105
      %p108 = scmp.ne.s32.totalorder %s91, %s107
      %p109 = scmp.eq.s32.totalorder %s15, 0
      %p110 = por %p108, %p109
      %p111 = scmp.le.s32.totalorder 1, %s9
      %p112 = scmp.lt.s32.totalorder %s9, 5
      %p113 = pnand %p111, %p112
      %p114 = pneg %p113
      // Predicated region
      $region9: #{x_model_forward.11} parent=5 // pred_check
        _
      $region10: #{x_model_forward.11} parent=5 // pred_check_branch
        %116 = sbr.rel (%p113) target = $region12
      $region11: #{x_model_forward.11} parent=5 // pred_region
        %s117 = ssub.s32 %s9, 1
        // Predicated region
        $region13: #{x_model_forward.11} parent=11 // pred_check
          %p118 = pneg %p56
        $region14: #{x_model_forward.11} parent=11 // pred_check_branch
          %120 = sbr.rel (%p118) target = $region16
        $region15: #{x_model_forward.11} parent=11 // pred_region
          _
        $region16: #{x_model_forward.11} parent=11 // pred_fallthru
          _
        // Predicated region
        $region17: #{x_model_forward.11} parent=11 // pred_check
          %p121 = pneg %p77
        $region18: #{x_model_forward.11} parent=11 // pred_check_branch
          %123 = sbr.rel (%p121) target = $region20
        $region19: #{x_model_forward.11} parent=11 // pred_region
          _
        $region20: #{x_model_forward.11} parent=11 // pred_fallthru
          _
      $region12: #{x_model_forward.11} parent=5 // pred_fallthru
        _
      %p124 = scmp.lt.s32.totalorder %s9, 4
      // Predicated region
      $region21: #{x_model_forward.11} parent=5 // pred_check
        %p125 = pneg %p124
      $region22: #{x_model_forward.11} parent=5 // pred_check_branch
        %127 = sbr.rel (%p125) target = $region24
      $region23: #{x_model_forward.11} parent=5 // pred_region
        // Predicated region
        $region25: #{x_model_forward.11} parent=23 // pred_check
          %p128 = pneg %p29
        $region26: #{x_model_forward.11} parent=23 // pred_check_branch
          %130 = sbr.rel (%p128) target = $region28
        $region27: #{x_model_forward.11} parent=23 // pred_region
          %s131 = smul.u32 64, %s9
          %s132 = ssub.s32 211, %s131
          %p133 = scmp.lt.s32.totalorder %s132, 64
          %s134 = scalar_select %p133, %s132, 64
          %s135 = smul.u32 64, %s134
          %p136 = scmp.lt.s32.totalorder %s131, 210
          %s137 = scalar_select %p136, %s131, 210
          %s138 = smul.addr %s137, 4
          %s139 = scalar_lea.vmem %s0, %s138
          %s140 = smul.u32 64, %s9
          %s141 = ssub.s32 211, %s140
          %p142 = scmp.lt.s32.totalorder %s141, 64
          %s143 = scalar_select %p142, %s141, 64
          %s144 = smul.u32 64, %s143
        $region28: #{x_model_forward.11} parent=23 // pred_fallthru
          _
      $region24: #{x_model_forward.11} parent=5 // pred_fallthru
        _
      %p145 = scmp.le.s32.totalorder 1, %s9
      %p146 = scmp.lt.s32.totalorder %s9, 5
      %p147 = pnand %p145, %p146
      %p148 = pneg %p147
      // Predicated region
      $region29: #{x_model_forward.11} parent=5 // pred_check
        _
      $region30: #{x_model_forward.11} parent=5 // pred_check_branch
        %150 = sbr.rel (%p147) target = $region32
      $region31: #{x_model_forward.11} parent=5 // pred_region
        %s151 = ssub.s32 %s9, 1
        %s152 = smul.u32 64, %s14
        %s153 = ssub.s32 211, %s152
        %p154 = scmp.lt.s32.totalorder %s153, 64
        %s155 = scalar_select %p154, %s153, 64
        %s156 = smul.u32 64, %s155
        %p157 = scmp.lt.s32.totalorder %s152, 210
        %s158 = scalar_select %p157, %s152, 210
        %s159 = smul.addr %s158, 4
        %s160 = scalar_lea.vmem %s0, %s159
        %p161 = pneg %p35
        %p162 = pneg %p32
        %p163 = pneg %p56
        %p164 = pneg %p53
        %p165 = pneg %p77
        %p166 = pneg %p74
        %p167 = pneg %p103
        %p168 = pneg %p100
        %s169 = sand.u32 %s90, 1
        %s170 = sand.u32 %s90, 1
        %s171 = smul.addr %s170, 512
        %s172 = scalar_lea.vmem [#allocation2], %s171
        %s173 = smul.u32 64, %s14
        %s174 = ssub.s32 211, %s173
        %p175 = scmp.lt.s32.totalorder %s174, 64
        %s176 = scalar_select %p175, %s174, 64
        %s177 = smul.u32 64, %s176
        %p178 = scmp.lt.s32.totalorder %s173, 210
        %s179 = scalar_select %p178, %s173, 210
        %s180 = smul.addr %s179, 4
        %s181 = scalar_lea.vmem %s0, %s180
        %s182 = smul.u32 64, %s14
        %s183 = ssub.s32 211, %s182
        %p184 = scmp.lt.s32.totalorder %s183, 64
        %s185 = scalar_select %p184, %s183, 64
        %s186 = smul.u32 64, %s185
        %s187 = smul.u32 64, %s14
        %s188 = ssub.s32 211, %s187
        %p189 = scmp.lt.s32.totalorder %s188, 64
        %s190 = scalar_select %p189, %s188, 64
        %s191 = smul.u32 128, %s190
        %v193 = vld [vmem:[%s181] sm:$0xf]
        %v194 = vld [vmem:[%s181 + $0x4] sm:$0xf]
        %v195 = vld [vmem:[%s181 + $0x8] sm:$0xf]
        %v196 = vld [vmem:[%s181 + $0xc] sm:$0xf]
        %v197 = vld [vmem:[%s181 + $0x10] sm:$0xf]
        %v198 = vld [vmem:[%s181 + $0x14] sm:$0xf]
        %v199 = vld [vmem:[%s181 + $0x18] sm:$0xf]
        %v200 = vld [vmem:[%s181 + $0x1c] sm:$0xf]
        %v201 = vld [vmem:[%s181 + $0x20] sm:$0xf]
        %v202 = vld [vmem:[%s181 + $0x24] sm:$0xf]
        %v203 = vld [vmem:[%s181 + $0x28] sm:$0xf]
        %v204 = vld [vmem:[%s181 + $0x2c] sm:$0xf]
        %v205 = vld [vmem:[%s181 + $0x30] sm:$0xf]
        %v206 = vld [vmem:[%s181 + $0x34] sm:$0xf]
        %v207 = vld [vmem:[%s181 + $0x38] sm:$0xf]
        %v208 = vld [vmem:[%s181 + $0x3c] sm:$0xf]
        %v209 = vld [vmem:[%s181 + $0x40] sm:$0xf]
        %v210 = vld [vmem:[%s181 + $0x44] sm:$0xf]
        %v211 = vld [vmem:[%s181 + $0x48] sm:$0xf]
        %v212 = vld [vmem:[%s181 + $0x4c] sm:$0xf]
        %v213 = vld [vmem:[%s181 + $0x50] sm:$0xf]
        %v214 = vld [vmem:[%s181 + $0x54] sm:$0xf]
        %v215 = vld [vmem:[%s181 + $0x58] sm:$0xf]
        %v216 = vld [vmem:[%s181 + $0x5c] sm:$0xf]
        %v217 = vld [vmem:[%s181 + $0x60] sm:$0xf]
        %v218 = vld [vmem:[%s181 + $0x64] sm:$0xf]
        %v219 = vld [vmem:[%s181 + $0x68] sm:$0xf]
        %v220 = vld [vmem:[%s181 + $0x6c] sm:$0xf]
        %v221 = vld [vmem:[%s181 + $0x70] sm:$0xf]
        %v222 = vld [vmem:[%s181 + $0x74] sm:$0xf]
        %v223 = vld [vmem:[%s181 + $0x78] sm:$0xf]
        %v224 = vld [vmem:[%s181 + $0x7c] sm:$0xf]
        %v225 = vld [vmem:[%s181 + $0x80] sm:$0xf]
        %v226 = vld [vmem:[%s181 + $0x84] sm:$0xf]
        %v227 = vld [vmem:[%s181 + $0x88] sm:$0xf]
        %v228 = vld [vmem:[%s181 + $0x8c] sm:$0xf]
        %v229 = vld [vmem:[%s181 + $0x90] sm:$0xf]
        %v230 = vld [vmem:[%s181 + $0x94] sm:$0xf]
        %v231 = vld [vmem:[%s181 + $0x98] sm:$0xf]
        %v232 = vld [vmem:[%s181 + $0x9c] sm:$0xf]
        %v233 = vld [vmem:[%s181 + $0xa0] sm:$0xf]
        %v234 = vld [vmem:[%s181 + $0xa4] sm:$0xf]
        %v235 = vld [vmem:[%s181 + $0xa8] sm:$0xf]
        %v236 = vld [vmem:[%s181 + $0xac] sm:$0xf]
        %v237 = vld [vmem:[%s181 + $0xb0] sm:$0xf]
        %v238 = vld [vmem:[%s181 + $0xb4] sm:$0xf]
        %v239 = vld [vmem:[%s181 + $0xb8] sm:$0xf]
        %v240 = vld [vmem:[%s181 + $0xbc] sm:$0xf]
        %v241 = vld [vmem:[%s181 + $0xc0] sm:$0xf]
        %v242 = vld [vmem:[%s181 + $0xc4] sm:$0xf]
        %v243 = vld [vmem:[%s181 + $0xc8] sm:$0xf]
        %v244 = vld [vmem:[%s181 + $0xcc] sm:$0xf]
        %v245 = vld [vmem:[%s181 + $0xd0] sm:$0xf]
        %v246 = vld [vmem:[%s181 + $0xd4] sm:$0xf]
        %v247 = vld [vmem:[%s181 + $0xd8] sm:$0xf]
        %v248 = vld [vmem:[%s181 + $0xdc] sm:$0xf]
        %v249 = vld [vmem:[%s181 + $0xe0] sm:$0xf]
        %v250 = vld [vmem:[%s181 + $0xe4] sm:$0xf]
        %v251 = vld [vmem:[%s181 + $0xe8] sm:$0xf]
        %v252 = vld [vmem:[%s181 + $0xec] sm:$0xf]
        %v253 = vld [vmem:[%s181 + $0xf0] sm:$0xf]
        %v254 = vld [vmem:[%s181 + $0xf4] sm:$0xf]
        %v255 = vld [vmem:[%s181 + $0xf8] sm:$0xf]
        %v256 = vld [vmem:[%s181 + $0xfc] sm:$0xf]
        %v257 = vld [vmem:[%s1] sm:$0xf]
        %v258 = vld [vmem:[%s1 + $0x4] sm:$0xf]
        %v259 = vld [vmem:[%s1 + $0x8] sm:$0xf]
        %v260 = vld [vmem:[%s1 + $0xc] sm:$0xf]
        %v261 = vld [vmem:[%s1 + $0x10] sm:$0xf]
        %v262 = vld [vmem:[%s1 + $0x14] sm:$0xf]
        %v263 = vld [vmem:[%s1 + $0x18] sm:$0x1]
        %v264 = vld [vmem:[%s2] sm:$0x1]
        %v266 = vlaneseq
        %v267 = vshrl.u32 %v266, 7
        %v268 = vsub.s32 0, %v267
        %v269 = vrot.slane %v264, %v268
        %v335 = vunpack.c.l.b16 %v193
        %v336 = vunpack.c.l.b16 %v194
        %v337 = vunpack.c.l.b16 %v195
        %v338 = vunpack.c.l.b16 %v196
        %v339 = vunpack.c.l.b16 %v197
        %v340 = vunpack.c.l.b16 %v198
        %v341 = vunpack.c.l.b16 %v199
        %v342 = vunpack.c.l.b16 %v200
        %v343 = vunpack.c.l.b16 %v201
        %v344 = vunpack.c.l.b16 %v202
        %v345 = vunpack.c.l.b16 %v203
        %v346 = vunpack.c.l.b16 %v204
        %v347 = vunpack.c.l.b16 %v205
        %v348 = vunpack.c.l.b16 %v206
        %v349 = vunpack.c.l.b16 %v207
        %v350 = vunpack.c.l.b16 %v208
        %v351 = vunpack.c.l.b16 %v209
        %v352 = vunpack.c.l.b16 %v210
        %v353 = vunpack.c.l.b16 %v211
        %v354 = vunpack.c.l.b16 %v212
        %v355 = vunpack.c.l.b16 %v213
        %v356 = vunpack.c.l.b16 %v214
        %v357 = vunpack.c.l.b16 %v215
        %v358 = vunpack.c.l.b16 %v216
        %v359 = vunpack.c.l.b16 %v217
        %v360 = vunpack.c.l.b16 %v218
        %v361 = vunpack.c.l.b16 %v219
        %v362 = vunpack.c.l.b16 %v220
        %v363 = vunpack.c.l.b16 %v221
        %v364 = vunpack.c.l.b16 %v222
        %v365 = vunpack.c.l.b16 %v223
        %v366 = vunpack.c.l.b16 %v224
        %v367 = vunpack.c.l.b16 %v225
        %v368 = vunpack.c.l.b16 %v226
        %v369 = vunpack.c.l.b16 %v227
        %v370 = vunpack.c.l.b16 %v228
        %v371 = vunpack.c.l.b16 %v229
        %v372 = vunpack.c.l.b16 %v230
        %v373 = vunpack.c.l.b16 %v231
        %v374 = vunpack.c.l.b16 %v232
        %v375 = vunpack.c.l.b16 %v233
        %v376 = vunpack.c.l.b16 %v234
        %v377 = vunpack.c.l.b16 %v235
        %v378 = vunpack.c.l.b16 %v236
        %v379 = vunpack.c.l.b16 %v237
        %v380 = vunpack.c.l.b16 %v238
        %v381 = vunpack.c.l.b16 %v239
        %v382 = vunpack.c.l.b16 %v240
        %v383 = vunpack.c.l.b16 %v241
        %v384 = vunpack.c.l.b16 %v242
        %v385 = vunpack.c.l.b16 %v243
        %v386 = vunpack.c.l.b16 %v244
        %v387 = vunpack.c.l.b16 %v245
        %v388 = vunpack.c.l.b16 %v246
        %v389 = vunpack.c.l.b16 %v247
        %v390 = vunpack.c.l.b16 %v248
        %v391 = vunpack.c.l.b16 %v249
        %v392 = vunpack.c.l.b16 %v250
        %v393 = vunpack.c.l.b16 %v251
        %v394 = vunpack.c.l.b16 %v252
        %v395 = vunpack.c.l.b16 %v253
        %v396 = vunpack.c.l.b16 %v254
        %v397 = vunpack.c.l.b16 %v255
        %v398 = vunpack.c.l.b16 %v256
        %v399 = vpack.c.b16 %v336, %v335
        %v400 = vpack.c.b16 %v338, %v337
        %v401 = vpack.c.b16 %v340, %v339
        %v402 = vpack.c.b16 %v342, %v341
        %v403 = vpack.c.b16 %v344, %v343
        %v404 = vpack.c.b16 %v346, %v345
        %v405 = vpack.c.b16 %v348, %v347
        %v406 = vpack.c.b16 %v350, %v349
        %v407 = vpack.c.b16 %v352, %v351
        %v408 = vpack.c.b16 %v354, %v353
        %v409 = vpack.c.b16 %v356, %v355
        %v410 = vpack.c.b16 %v358, %v357
        %v411 = vpack.c.b16 %v360, %v359
        %v412 = vpack.c.b16 %v362, %v361
        %v413 = vpack.c.b16 %v364, %v363
        %v414 = vpack.c.b16 %v366, %v365
        %v415 = vpack.c.b16 %v368, %v367
        %v416 = vpack.c.b16 %v370, %v369
        %v417 = vpack.c.b16 %v372, %v371
        %v418 = vpack.c.b16 %v374, %v373
        %v419 = vpack.c.b16 %v376, %v375
        %v420 = vpack.c.b16 %v378, %v377
        %v421 = vpack.c.b16 %v380, %v379
        %v422 = vpack.c.b16 %v382, %v381
        %v423 = vpack.c.b16 %v384, %v383
        %v424 = vpack.c.b16 %v386, %v385
        %v425 = vpack.c.b16 %v388, %v387
        %v426 = vpack.c.b16 %v390, %v389
        %v427 = vpack.c.b16 %v392, %v391
        %v428 = vpack.c.b16 %v394, %v393
        %v429 = vpack.c.b16 %v396, %v395
        %v430 = vpack.c.b16 %v398, %v397
        %v438 = vunpack.c.l.b16 %v257
        %v439 = vunpack.c.l.b16 %v258
        %v440 = vunpack.c.l.b16 %v259
        %v441 = vunpack.c.l.b16 %v260
        %v442 = vunpack.c.l.b16 %v261
        %v443 = vunpack.c.l.b16 %v262
        %v444 = vunpack.c.l.b16 %v263
        %v445 = vpack.c.b16 %v439, %v438
        %v446 = vpack.c.b16 %v441, %v440
        %v447 = vpack.c.b16 %v443, %v442
        %v448 = vpack.c.b16 %v444, %v444
        %vm452 = vcmask 400384
        %v454 = vsel %vm452, %v399, 0
        %v457 = vsel %vm452, %v400, 0
        %v460 = vsel %vm452, %v401, 0
        %v463 = vsel %vm452, %v402, 0
        %v466 = vsel %vm452, %v403, 0
        %v469 = vsel %vm452, %v404, 0
        %v472 = vsel %vm452, %v405, 0
        %v475 = vsel %vm452, %v406, 0
        %v478 = vsel %vm452, %v407, 0
        %v481 = vsel %vm452, %v408, 0
        %v484 = vsel %vm452, %v409, 0
        %v487 = vsel %vm452, %v410, 0
        %v490 = vsel %vm452, %v411, 0
        %v493 = vsel %vm452, %v412, 0
        %v496 = vsel %vm452, %v413, 0
        %v499 = vsel %vm452, %v414, 0
        %v502 = vsel %vm452, %v415, 0
        %v505 = vsel %vm452, %v416, 0
        %v508 = vsel %vm452, %v417, 0
        %v511 = vsel %vm452, %v418, 0
        %v514 = vsel %vm452, %v419, 0
        %v517 = vsel %vm452, %v420, 0
        %v520 = vsel %vm452, %v421, 0
        %v523 = vsel %vm452, %v422, 0
        %v526 = vsel %vm452, %v423, 0
        %v529 = vsel %vm452, %v424, 0
        %v532 = vsel %vm452, %v425, 0
        %v535 = vsel %vm452, %v426, 0
        %v538 = vsel %vm452, %v427, 0
        %v541 = vsel %vm452, %v428, 0
        %v544 = vsel %vm452, %v429, 0
        %v547 = vsel %vm452, %v430, 0
        %vm549 = vcmask 1040384
        %v550 = vsel 0, 4294967295, 65535
        %v551 = vsel %vm549, %v550, 0
        %v553 = vand.u32 %v448, %v551
        %555 = vmatprep.subr.bf16.mxu0 0
        %556 = vmatpush1.bf16.msra.mxu0 0
        %557 = vmatprep.subr.bf16.mxu0 0
        %558 = vmatpush1.bf16.msra.mxu0 0
        %559 = vmatprep.subr.bf16.mxu0 0
        %560 = vmatpush1.bf16.msra.mxu0 0
        %561 = vmatprep.subr.bf16.mxu0 0
        %562 = vmatpush1.bf16.msra.mxu0 0
        %563 = vmatprep.subr.bf16.mxu0 0
        %564 = vmatpush1.bf16.msra.mxu0 %v553
        %565 = vmatprep.subr.bf16.mxu0 0
        %566 = vmatpush1.bf16.msra.mxu0 %v447
        %567 = vmatprep.subr.bf16.mxu0 0
        %568 = vmatpush1.bf16.msra.mxu0 %v446
        %569 = vmatprep.subr.bf16.mxu0 0
        %570 = vmatpush1.bf16.msra.mxu0 %v445
        %571 = vmatprep.subr.bf16.mxu0 0
        %572 = vmatpush2.bf16.msra.mxu0 0
        %573 = vmatprep.subr.bf16.mxu0 0
        %574 = vmatpush2.bf16.msra.mxu0 0
        %575 = vmatprep.subr.bf16.mxu0 0
        %576 = vmatpush2.bf16.msra.mxu0 0
        %577 = vmatprep.subr.bf16.mxu0 0
        %578 = vmatpush2.bf16.msra.mxu0 0
        %579 = vmatprep.subr.bf16.mxu0 0
        %580 = vmatpush2.bf16.msra.mxu0 0
        %581 = vmatprep.subr.bf16.mxu0 0
        %582 = vmatpush2.bf16.msra.mxu0 0
        %583 = vmatprep.subr.bf16.mxu0 0
        %584 = vmatpush2.bf16.msra.mxu0 0
        %585 = vmatprep.subr.bf16.mxu0 0
        %586 = vmatpush2.bf16.msra.mxu0 0
        %587 = vmatprep.mubr.bf16.mxu0 0
        %588 = vmatmul.mubr.bf16.gmra.mxu0 %v454
        %v589 = vpop.f32.mrf.mxu0
        %v590 = vadd.f32 %v269, %v589
        %v591 = vpop.f32.mrf.mxu0
        %v592 = vpop.f32.mrf.mxu0
        %v593 = vadd.f32 %v269, %v592
        %v594 = vpop.f32.mrf.mxu0
        %595 = vmatprep.mubr.bf16.mxu0 0
        %596 = vmatmul.mubr.bf16.gmra.mxu0 %v457
        %v597 = vpop.f32.mrf.mxu0
        %v598 = vadd.f32 %v269, %v597
        %v599 = vpop.f32.mrf.mxu0
        %v600 = vpop.f32.mrf.mxu0
        %v601 = vadd.f32 %v269, %v600
        %v602 = vpop.f32.mrf.mxu0
        %603 = vmatprep.mubr.bf16.mxu0 0
        %604 = vmatmul.mubr.bf16.gmra.mxu0 %v460
        %v605 = vpop.f32.mrf.mxu0
        %v606 = vadd.f32 %v269, %v605
        %v607 = vpop.f32.mrf.mxu0
        %v608 = vpop.f32.mrf.mxu0
        %v609 = vadd.f32 %v269, %v608
        %v610 = vpop.f32.mrf.mxu0
        %611 = vmatprep.mubr.bf16.mxu0 0
        %612 = vmatmul.mubr.bf16.gmra.mxu0 %v463
        %v613 = vpop.f32.mrf.mxu0
        %v614 = vadd.f32 %v269, %v613
        %v615 = vpop.f32.mrf.mxu0
        %v616 = vpop.f32.mrf.mxu0
        %v617 = vadd.f32 %v269, %v616
        %v618 = vpop.f32.mrf.mxu0
        %619 = vmatprep.mubr.bf16.mxu0 0
        %620 = vmatmul.mubr.bf16.gmra.mxu0 %v466
        %v621 = vpop.f32.mrf.mxu0
        %v622 = vadd.f32 %v269, %v621
        %v623 = vpop.f32.mrf.mxu0
        %v624 = vpop.f32.mrf.mxu0
        %v625 = vadd.f32 %v269, %v624
        %v626 = vpop.f32.mrf.mxu0
        %627 = vmatprep.mubr.bf16.mxu0 0
        %628 = vmatmul.mubr.bf16.gmra.mxu0 %v469
        %v629 = vpop.f32.mrf.mxu0
        %v630 = vadd.f32 %v269, %v629
        %v631 = vpop.f32.mrf.mxu0
        %v632 = vpop.f32.mrf.mxu0
        %v633 = vadd.f32 %v269, %v632
        %v634 = vpop.f32.mrf.mxu0
        %635 = vmatprep.mubr.bf16.mxu0 0
        %636 = vmatmul.mubr.bf16.gmra.mxu0 %v472
        %v637 = vpop.f32.mrf.mxu0
        %v638 = vadd.f32 %v269, %v637
        %v639 = vpop.f32.mrf.mxu0
        %v640 = vpop.f32.mrf.mxu0
        %v641 = vadd.f32 %v269, %v640
        %v642 = vpop.f32.mrf.mxu0
        %643 = vmatprep.mubr.bf16.mxu0 0
        %644 = vmatmul.mubr.bf16.gmra.mxu0 %v475
        %v645 = vpop.f32.mrf.mxu0
        %v646 = vadd.f32 %v269, %v645
        %v647 = vpop.f32.mrf.mxu0
        %v648 = vpop.f32.mrf.mxu0
        %v649 = vadd.f32 %v269, %v648
        %v650 = vpop.f32.mrf.mxu0
        %651 = vmatprep.mubr.bf16.mxu0 0
        %652 = vmatmul.mubr.bf16.gmra.mxu0 %v478
        %v653 = vpop.f32.mrf.mxu0
        %v654 = vadd.f32 %v269, %v653
        %v655 = vpop.f32.mrf.mxu0
        %v656 = vpop.f32.mrf.mxu0
        %v657 = vadd.f32 %v269, %v656
        %v658 = vpop.f32.mrf.mxu0
        %659 = vmatprep.mubr.bf16.mxu0 0
        %660 = vmatmul.mubr.bf16.gmra.mxu0 %v481
        %v661 = vpop.f32.mrf.mxu0
        %v662 = vadd.f32 %v269, %v661
        %v663 = vpop.f32.mrf.mxu0
        %v664 = vpop.f32.mrf.mxu0
        %v665 = vadd.f32 %v269, %v664
        %v666 = vpop.f32.mrf.mxu0
        %667 = vmatprep.mubr.bf16.mxu0 0
        %668 = vmatmul.mubr.bf16.gmra.mxu0 %v484
        %v669 = vpop.f32.mrf.mxu0
        %v670 = vadd.f32 %v269, %v669
        %v671 = vpop.f32.mrf.mxu0
        %v672 = vpop.f32.mrf.mxu0
        %v673 = vadd.f32 %v269, %v672
        %v674 = vpop.f32.mrf.mxu0
        %675 = vmatprep.mubr.bf16.mxu0 0
        %676 = vmatmul.mubr.bf16.gmra.mxu0 %v487
        %v677 = vpop.f32.mrf.mxu0
        %v678 = vadd.f32 %v269, %v677
        %v679 = vpop.f32.mrf.mxu0
        %v680 = vpop.f32.mrf.mxu0
        %v681 = vadd.f32 %v269, %v680
        %v682 = vpop.f32.mrf.mxu0
        %683 = vmatprep.mubr.bf16.mxu0 0
        %684 = vmatmul.mubr.bf16.gmra.mxu0 %v490
        %v685 = vpop.f32.mrf.mxu0
        %v686 = vadd.f32 %v269, %v685
        %v687 = vpop.f32.mrf.mxu0
        %v688 = vpop.f32.mrf.mxu0
        %v689 = vadd.f32 %v269, %v688
        %v690 = vpop.f32.mrf.mxu0
        %691 = vmatprep.mubr.bf16.mxu0 0
        %692 = vmatmul.mubr.bf16.gmra.mxu0 %v493
        %v693 = vpop.f32.mrf.mxu0
        %v694 = vadd.f32 %v269, %v693
        %v695 = vpop.f32.mrf.mxu0
        %v696 = vpop.f32.mrf.mxu0
        %v697 = vadd.f32 %v269, %v696
        %v698 = vpop.f32.mrf.mxu0
        %699 = vmatprep.mubr.bf16.mxu0 0
        %700 = vmatmul.mubr.bf16.gmra.mxu0 %v496
        %v701 = vpop.f32.mrf.mxu0
        %v702 = vadd.f32 %v269, %v701
        %v703 = vpop.f32.mrf.mxu0
        %v704 = vpop.f32.mrf.mxu0
        %v705 = vadd.f32 %v269, %v704
        %v706 = vpop.f32.mrf.mxu0
        %707 = vmatprep.mubr.bf16.mxu0 0
        %708 = vmatmul.mubr.bf16.gmra.mxu0 %v499
        %v709 = vpop.f32.mrf.mxu0
        %v710 = vadd.f32 %v269, %v709
        %v711 = vpop.f32.mrf.mxu0
        %v712 = vpop.f32.mrf.mxu0
        %v713 = vadd.f32 %v269, %v712
        %v714 = vpop.f32.mrf.mxu0
        %715 = vmatprep.mubr.bf16.mxu0 0
        %716 = vmatmul.mubr.bf16.gmra.mxu0 %v502
        %v717 = vpop.f32.mrf.mxu0
        %v718 = vadd.f32 %v269, %v717
        %v719 = vpop.f32.mrf.mxu0
        %v720 = vpop.f32.mrf.mxu0
        %v721 = vadd.f32 %v269, %v720
        %v722 = vpop.f32.mrf.mxu0
        %723 = vmatprep.mubr.bf16.mxu0 0
        %724 = vmatmul.mubr.bf16.gmra.mxu0 %v505
        %v725 = vpop.f32.mrf.mxu0
        %v726 = vadd.f32 %v269, %v725
        %v727 = vpop.f32.mrf.mxu0
        %v728 = vpop.f32.mrf.mxu0
        %v729 = vadd.f32 %v269, %v728
        %v730 = vpop.f32.mrf.mxu0
        %731 = vmatprep.mubr.bf16.mxu0 0
        %732 = vmatmul.mubr.bf16.gmra.mxu0 %v508
        %v733 = vpop.f32.mrf.mxu0
        %v734 = vadd.f32 %v269, %v733
        %v735 = vpop.f32.mrf.mxu0
        %v736 = vpop.f32.mrf.mxu0
        %v737 = vadd.f32 %v269, %v736
        %v738 = vpop.f32.mrf.mxu0
        %739 = vmatprep.mubr.bf16.mxu0 0
        %740 = vmatmul.mubr.bf16.gmra.mxu0 %v511
        %v741 = vpop.f32.mrf.mxu0
        %v742 = vadd.f32 %v269, %v741
        %v743 = vpop.f32.mrf.mxu0
        %v744 = vpop.f32.mrf.mxu0
        %v745 = vadd.f32 %v269, %v744
        %v746 = vpop.f32.mrf.mxu0
        %747 = vmatprep.mubr.bf16.mxu0 0
        %748 = vmatmul.mubr.bf16.gmra.mxu0 %v514
        %v749 = vpop.f32.mrf.mxu0
        %v750 = vadd.f32 %v269, %v749
        %v751 = vpop.f32.mrf.mxu0
        %v752 = vpop.f32.mrf.mxu0
        %v753 = vadd.f32 %v269, %v752
        %v754 = vpop.f32.mrf.mxu0
        %755 = vmatprep.mubr.bf16.mxu0 0
        %756 = vmatmul.mubr.bf16.gmra.mxu0 %v517
        %v757 = vpop.f32.mrf.mxu0
        %v758 = vadd.f32 %v269, %v757
        %v759 = vpop.f32.mrf.mxu0
        %v760 = vpop.f32.mrf.mxu0
        %v761 = vadd.f32 %v269, %v760
        %v762 = vpop.f32.mrf.mxu0
        %763 = vmatprep.mubr.bf16.mxu0 0
        %764 = vmatmul.mubr.bf16.gmra.mxu0 %v520
        %v765 = vpop.f32.mrf.mxu0
        %v766 = vadd.f32 %v269, %v765
        %v767 = vpop.f32.mrf.mxu0
        %v768 = vpop.f32.mrf.mxu0
        %v769 = vadd.f32 %v269, %v768
        %v770 = vpop.f32.mrf.mxu0
        %771 = vmatprep.mubr.bf16.mxu0 0
        %772 = vmatmul.mubr.bf16.gmra.mxu0 %v523
        %v773 = vpop.f32.mrf.mxu0
        %v774 = vadd.f32 %v269, %v773
        %v775 = vpop.f32.mrf.mxu0
        %v776 = vpop.f32.mrf.mxu0
        %v777 = vadd.f32 %v269, %v776
        %v778 = vpop.f32.mrf.mxu0
        %779 = vmatprep.mubr.bf16.mxu0 0
        %780 = vmatmul.mubr.bf16.gmra.mxu0 %v526
        %v781 = vpop.f32.mrf.mxu0
        %v782 = vadd.f32 %v269, %v781
        %v783 = vpop.f32.mrf.mxu0
        %v784 = vpop.f32.mrf.mxu0
        %v785 = vadd.f32 %v269, %v784
        %v786 = vpop.f32.mrf.mxu0
        %787 = vmatprep.mubr.bf16.mxu0 0
        %788 = vmatmul.mubr.bf16.gmra.mxu0 %v529
        %v789 = vpop.f32.mrf.mxu0
        %v790 = vadd.f32 %v269, %v789
        %v791 = vpop.f32.mrf.mxu0
        %v792 = vpop.f32.mrf.mxu0
        %v793 = vadd.f32 %v269, %v792
        %v794 = vpop.f32.mrf.mxu0
        %795 = vmatprep.mubr.bf16.mxu0 0
        %796 = vmatmul.mubr.bf16.gmra.mxu0 %v532
        %v797 = vpop.f32.mrf.mxu0
        %v798 = vadd.f32 %v269, %v797
        %v799 = vpop.f32.mrf.mxu0
        %v800 = vpop.f32.mrf.mxu0
        %v801 = vadd.f32 %v269, %v800
        %v802 = vpop.f32.mrf.mxu0
        %803 = vmatprep.mubr.bf16.mxu0 0
        %804 = vmatmul.mubr.bf16.gmra.mxu0 %v535
        %v805 = vpop.f32.mrf.mxu0
        %v806 = vadd.f32 %v269, %v805
        %v807 = vpop.f32.mrf.mxu0
        %v808 = vpop.f32.mrf.mxu0
        %v809 = vadd.f32 %v269, %v808
        %v810 = vpop.f32.mrf.mxu0
        %811 = vmatprep.mubr.bf16.mxu0 0
        %812 = vmatmul.mubr.bf16.gmra.mxu0 %v538
        %v813 = vpop.f32.mrf.mxu0
        %v814 = vadd.f32 %v269, %v813
        %v815 = vpop.f32.mrf.mxu0
        %v816 = vpop.f32.mrf.mxu0
        %v817 = vadd.f32 %v269, %v816
        %v818 = vpop.f32.mrf.mxu0
        %819 = vmatprep.mubr.bf16.mxu0 0
        %820 = vmatmul.mubr.bf16.gmra.mxu0 %v541
        %v821 = vpop.f32.mrf.mxu0
        %v822 = vadd.f32 %v269, %v821
        %v823 = vpop.f32.mrf.mxu0
        %v824 = vpop.f32.mrf.mxu0
        %v825 = vadd.f32 %v269, %v824
        %v826 = vpop.f32.mrf.mxu0
        %827 = vmatprep.mubr.bf16.mxu0 0
        %828 = vmatmul.mubr.bf16.gmra.mxu0 %v544
        %v829 = vpop.f32.mrf.mxu0
        %v830 = vadd.f32 %v269, %v829
        %v831 = vpop.f32.mrf.mxu0
        %v832 = vpop.f32.mrf.mxu0
        %v833 = vadd.f32 %v269, %v832
        %v834 = vpop.f32.mrf.mxu0
        %835 = vmatprep.mubr.bf16.mxu0 0
        %836 = vmatmul.mubr.bf16.gmra.mxu0 %v547
        %v837 = vpop.f32.mrf.mxu0
        %v838 = vadd.f32 %v269, %v837
        %v839 = vpop.f32.mrf.mxu0
        %v840 = vpop.f32.mrf.mxu0
        %v841 = vadd.f32 %v269, %v840
        %v842 = vpop.f32.mrf.mxu0
        %843 = vdwg.mxu0
        %v844 = vmax.f32 %v590, 0.0
        %v845 = vmax.f32 %v593, 0.0
        %v846 = vmax.f32 %v598, 0.0
        %v847 = vmax.f32 %v601, 0.0
        %v848 = vmax.f32 %v606, 0.0
        %v849 = vmax.f32 %v609, 0.0
        %v850 = vmax.f32 %v614, 0.0
        %v851 = vmax.f32 %v617, 0.0
        %v852 = vmax.f32 %v622, 0.0
        %v853 = vmax.f32 %v625, 0.0
        %v854 = vmax.f32 %v630, 0.0
        %v855 = vmax.f32 %v633, 0.0
        %v856 = vmax.f32 %v638, 0.0
        %v857 = vmax.f32 %v641, 0.0
        %v858 = vmax.f32 %v646, 0.0
        %v859 = vmax.f32 %v649, 0.0
        %v860 = vmax.f32 %v654, 0.0
        %v861 = vmax.f32 %v657, 0.0
        %v862 = vmax.f32 %v662, 0.0
        %v863 = vmax.f32 %v665, 0.0
        %v864 = vmax.f32 %v670, 0.0
        %v865 = vmax.f32 %v673, 0.0
        %v866 = vmax.f32 %v678, 0.0
        %v867 = vmax.f32 %v681, 0.0
        %v868 = vmax.f32 %v686, 0.0
        %v869 = vmax.f32 %v689, 0.0
        %v870 = vmax.f32 %v694, 0.0
        %v871 = vmax.f32 %v697, 0.0
        %v872 = vmax.f32 %v702, 0.0
        %v873 = vmax.f32 %v705, 0.0
        %v874 = vmax.f32 %v710, 0.0
        %v875 = vmax.f32 %v713, 0.0
        %v876 = vmax.f32 %v718, 0.0
        %v877 = vmax.f32 %v721, 0.0
        %v878 = vmax.f32 %v726, 0.0
        %v879 = vmax.f32 %v729, 0.0
        %v880 = vmax.f32 %v734, 0.0
        %v881 = vmax.f32 %v737, 0.0
        %v882 = vmax.f32 %v742, 0.0
        %v883 = vmax.f32 %v745, 0.0
        %v884 = vmax.f32 %v750, 0.0
        %v885 = vmax.f32 %v753, 0.0
        %v886 = vmax.f32 %v758, 0.0
        %v887 = vmax.f32 %v761, 0.0
        %v888 = vmax.f32 %v766, 0.0
        %v889 = vmax.f32 %v769, 0.0
        %v890 = vmax.f32 %v774, 0.0
        %v891 = vmax.f32 %v777, 0.0
        %v892 = vmax.f32 %v782, 0.0
        %v893 = vmax.f32 %v785, 0.0
        %v894 = vmax.f32 %v790, 0.0
        %v895 = vmax.f32 %v793, 0.0
        %v896 = vmax.f32 %v798, 0.0
        %v897 = vmax.f32 %v801, 0.0
        %v898 = vmax.f32 %v806, 0.0
        %v899 = vmax.f32 %v809, 0.0
        %v900 = vmax.f32 %v814, 0.0
        %v901 = vmax.f32 %v817, 0.0
        %v902 = vmax.f32 %v822, 0.0
        %v903 = vmax.f32 %v825, 0.0
        %v904 = vmax.f32 %v830, 0.0
        %v905 = vmax.f32 %v833, 0.0
        %v906 = vmax.f32 %v838, 0.0
        %v907 = vmax.f32 %v841, 0.0
        %vm908 = vcmask 130048
        %909 = vst.msk [vmem:[%s172] sm:$0xff] %vm908, %v844
        %910 = vst.msk [vmem:[%s172 + $0x8] sm:$0xff] %vm908, %v845
        %911 = vst.msk [vmem:[%s172 + $0x10] sm:$0xff] %vm908, %v846
        %912 = vst.msk [vmem:[%s172 + $0x18] sm:$0xff] %vm908, %v847
        %913 = vst.msk [vmem:[%s172 + $0x20] sm:$0xff] %vm908, %v848
        %914 = vst.msk [vmem:[%s172 + $0x28] sm:$0xff] %vm908, %v849
        %915 = vst.msk [vmem:[%s172 + $0x30] sm:$0xff] %vm908, %v850
        %916 = vst.msk [vmem:[%s172 + $0x38] sm:$0xff] %vm908, %v851
        %917 = vst.msk [vmem:[%s172 + $0x40] sm:$0xff] %vm908, %v852
        %918 = vst.msk [vmem:[%s172 + $0x48] sm:$0xff] %vm908, %v853
        %919 = vst.msk [vmem:[%s172 + $0x50] sm:$0xff] %vm908, %v854
        %920 = vst.msk [vmem:[%s172 + $0x58] sm:$0xff] %vm908, %v855
        %921 = vst.msk [vmem:[%s172 + $0x60] sm:$0xff] %vm908, %v856
        %922 = vst.msk [vmem:[%s172 + $0x68] sm:$0xff] %vm908, %v857
        %923 = vst.msk [vmem:[%s172 + $0x70] sm:$0xff] %vm908, %v858
        %924 = vst.msk [vmem:[%s172 + $0x78] sm:$0xff] %vm908, %v859
        %925 = vst.msk [vmem:[%s172 + $0x80] sm:$0xff] %vm908, %v860
        %926 = vst.msk [vmem:[%s172 + $0x88] sm:$0xff] %vm908, %v861
        %927 = vst.msk [vmem:[%s172 + $0x90] sm:$0xff] %vm908, %v862
        %928 = vst.msk [vmem:[%s172 + $0x98] sm:$0xff] %vm908, %v863
        %929 = vst.msk [vmem:[%s172 + $0xa0] sm:$0xff] %vm908, %v864
        %930 = vst.msk [vmem:[%s172 + $0xa8] sm:$0xff] %vm908, %v865
        %931 = vst.msk [vmem:[%s172 + $0xb0] sm:$0xff] %vm908, %v866
        %932 = vst.msk [vmem:[%s172 + $0xb8] sm:$0xff] %vm908, %v867
        %933 = vst.msk [vmem:[%s172 + $0xc0] sm:$0xff] %vm908, %v868
        %934 = vst.msk [vmem:[%s172 + $0xc8] sm:$0xff] %vm908, %v869
        %935 = vst.msk [vmem:[%s172 + $0xd0] sm:$0xff] %vm908, %v870
        %936 = vst.msk [vmem:[%s172 + $0xd8] sm:$0xff] %vm908, %v871
        %937 = vst.msk [vmem:[%s172 + $0xe0] sm:$0xff] %vm908, %v872
        %938 = vst.msk [vmem:[%s172 + $0xe8] sm:$0xff] %vm908, %v873
        %939 = vst.msk [vmem:[%s172 + $0xf0] sm:$0xff] %vm908, %v874
        %940 = vst.msk [vmem:[%s172 + $0xf8] sm:$0xff] %vm908, %v875
        %941 = vst.msk [vmem:[%s172 + $0x100] sm:$0xff] %vm908, %v876
        %942 = vst.msk [vmem:[%s172 + $0x108] sm:$0xff] %vm908, %v877
        %943 = vst.msk [vmem:[%s172 + $0x110] sm:$0xff] %vm908, %v878
        %944 = vst.msk [vmem:[%s172 + $0x118] sm:$0xff] %vm908, %v879
        %945 = vst.msk [vmem:[%s172 + $0x120] sm:$0xff] %vm908, %v880
        %946 = vst.msk [vmem:[%s172 + $0x128] sm:$0xff] %vm908, %v881
        %947 = vst.msk [vmem:[%s172 + $0x130] sm:$0xff] %vm908, %v882
        %948 = vst.msk [vmem:[%s172 + $0x138] sm:$0xff] %vm908, %v883
        %949 = vst.msk [vmem:[%s172 + $0x140] sm:$0xff] %vm908, %v884
        %950 = vst.msk [vmem:[%s172 + $0x148] sm:$0xff] %vm908, %v885
        %951 = vst.msk [vmem:[%s172 + $0x150] sm:$0xff] %vm908, %v886
        %952 = vst.msk [vmem:[%s172 + $0x158] sm:$0xff] %vm908, %v887
        %953 = vst.msk [vmem:[%s172 + $0x160] sm:$0xff] %vm908, %v888
        %954 = vst.msk [vmem:[%s172 + $0x168] sm:$0xff] %vm908, %v889
        %955 = vst.msk [vmem:[%s172 + $0x170] sm:$0xff] %vm908, %v890
        %956 = vst.msk [vmem:[%s172 + $0x178] sm:$0xff] %vm908, %v891
        %957 = vst.msk [vmem:[%s172 + $0x180] sm:$0xff] %vm908, %v892
        %958 = vst.msk [vmem:[%s172 + $0x188] sm:$0xff] %vm908, %v893
        %959 = vst.msk [vmem:[%s172 + $0x190] sm:$0xff] %vm908, %v894
        %960 = vst.msk [vmem:[%s172 + $0x198] sm:$0xff] %vm908, %v895
        %961 = vst.msk [vmem:[%s172 + $0x1a0] sm:$0xff] %vm908, %v896
        %962 = vst.msk [vmem:[%s172 + $0x1a8] sm:$0xff] %vm908, %v897
        %963 = vst.msk [vmem:[%s172 + $0x1b0] sm:$0xff] %vm908, %v898
        %964 = vst.msk [vmem:[%s172 + $0x1b8] sm:$0xff] %vm908, %v899
        %965 = vst.msk [vmem:[%s172 + $0x1c0] sm:$0xff] %vm908, %v900
        %966 = vst.msk [vmem:[%s172 + $0x1c8] sm:$0xff] %vm908, %v901
        %967 = vst.msk [vmem:[%s172 + $0x1d0] sm:$0xff] %vm908, %v902
        %968 = vst.msk [vmem:[%s172 + $0x1d8] sm:$0xff] %vm908, %v903
        %969 = vst.msk [vmem:[%s172 + $0x1e0] sm:$0xff] %vm908, %v904
        %970 = vst.msk [vmem:[%s172 + $0x1e8] sm:$0xff] %vm908, %v905
        %971 = vst.msk [vmem:[%s172 + $0x1f0] sm:$0xff] %vm908, %v906
        %972 = vst.msk [vmem:[%s172 + $0x1f8] sm:$0xff] %vm908, %v907
        %s973 = sand.u32 %s90, 1
        %s974 = sand.u32 %s90, 1
        %s975 = smul.addr %s974, 512
        %s976 = scalar_lea.vmem [#allocation2], %s975
        // Predicated region
        $region33: #{x_model_forward.11} parent=31 // pred_check
          %p977 = pneg %p100
        $region34: #{x_model_forward.11} parent=31 // pred_check_branch
          %979 = sbr.rel (%p977) target = $region36
        $region35: #{x_model_forward.11} parent=31 // pred_region
          %s980 = smul.u32 64, %s14
          %s981 = ssub.s32 211, %s980
          %p982 = scmp.lt.s32.totalorder %s981, 64
          %s983 = scalar_select %p982, %s981, 64
          %s984 = smul.u32 128, %s983
          %p985 = scmp.ne.s32.totalorder 0, %s984
          %s986 = smul.addr %s980, 8
          %s987 = scalar_lea.vmem %s3, %s986
          // Predicated region
          $region37: #{x_model_forward.11} parent=35 // pred_check
            %p988 = pneg %p985
          $region38: #{x_model_forward.11} parent=35 // pred_check_branch
            %990 = sbr.rel (%p988) target = $region40
          $region39: #{x_model_forward.11} parent=35 // pred_region
            // Predicated region
            $region41: #{x_model_forward.11} parent=39 // pred_check
              _
            $region42: #{x_model_forward.11} parent=39 // pred_check_branch
              %992 = sbr.rel (0) target = $region44
            $region43: #{x_model_forward.11} parent=39 // pred_region
              // Predicated region
              $region63: #{x_model_forward.11} parent=43 // pred_check
                _
              $region64: #{x_model_forward.11} parent=43 // pred_check_branch
                %1168 = sbr.rel (0) target = $region66
              $region65: #{x_model_forward.11} parent=43 // pred_region
                %s1169 = sshrl.u32 %s983, 6
                // While loop
                $region67: #{x_model_forward.11} parent=65 // loop_pre_header
                  _
                $region68: #{x_model_forward.11} parent=65 // loop_header
                  %s1171 = sphi 0, %s1173
                  %p1172 = scmp.ge.s32.totalorder %s1171, %s1169
                  %s1176 = sphi 0, %s1309
                  %s1177 = sphi %s976, %s1312
                  %s1178 = sphi %s987, %s1313
                $region69: #{x_model_forward.11} parent=65 // loop_header_branch
                  %1175 = sbr.rel (%p1172) target = $region73
                $region70: #{x_model_forward.11} parent=65 // loop_body
                  %v1179 = vld [vmem:[%s1177] sm:$0xff]
                  %1180 = vst [vmem:[%s1178] sm:$0xff] %v1179
                  %v1181 = vld [vmem:[%s1177 + $0x8] sm:$0xff]
                  %1182 = vst [vmem:[%s1178 + $0x8] sm:$0xff] %v1181
                  %v1183 = vld [vmem:[%s1177 + $0x10] sm:$0xff]
                  %1184 = vst [vmem:[%s1178 + $0x10] sm:$0xff] %v1183
                  %v1185 = vld [vmem:[%s1177 + $0x18] sm:$0xff]
                  %1186 = vst [vmem:[%s1178 + $0x18] sm:$0xff] %v1185
                  %v1187 = vld [vmem:[%s1177 + $0x20] sm:$0xff]
                  %1188 = vst [vmem:[%s1178 + $0x20] sm:$0xff] %v1187
                  %v1189 = vld [vmem:[%s1177 + $0x28] sm:$0xff]
                  %1190 = vst [vmem:[%s1178 + $0x28] sm:$0xff] %v1189
                  %v1191 = vld [vmem:[%s1177 + $0x30] sm:$0xff]
                  %1192 = vst [vmem:[%s1178 + $0x30] sm:$0xff] %v1191
                  %v1193 = vld [vmem:[%s1177 + $0x38] sm:$0xff]
                  %1194 = vst [vmem:[%s1178 + $0x38] sm:$0xff] %v1193
                  %v1195 = vld [vmem:[%s1177 + $0x40] sm:$0xff]
                  %1196 = vst [vmem:[%s1178 + $0x40] sm:$0xff] %v1195
                  %v1197 = vld [vmem:[%s1177 + $0x48] sm:$0xff]
                  %1198 = vst [vmem:[%s1178 + $0x48] sm:$0xff] %v1197
                  %v1199 = vld [vmem:[%s1177 + $0x50] sm:$0xff]
                  %1200 = vst [vmem:[%s1178 + $0x50] sm:$0xff] %v1199
                  %v1201 = vld [vmem:[%s1177 + $0x58] sm:$0xff]
                  %1202 = vst [vmem:[%s1178 + $0x58] sm:$0xff] %v1201
                  %v1203 = vld [vmem:[%s1177 + $0x60] sm:$0xff]
                  %1204 = vst [vmem:[%s1178 + $0x60] sm:$0xff] %v1203
                  %v1205 = vld [vmem:[%s1177 + $0x68] sm:$0xff]
                  %1206 = vst [vmem:[%s1178 + $0x68] sm:$0xff] %v1205
                  %v1207 = vld [vmem:[%s1177 + $0x70] sm:$0xff]
                  %1208 = vst [vmem:[%s1178 + $0x70] sm:$0xff] %v1207
                  %v1209 = vld [vmem:[%s1177 + $0x78] sm:$0xff]
                  %1210 = vst [vmem:[%s1178 + $0x78] sm:$0xff] %v1209
                  %v1211 = vld [vmem:[%s1177 + $0x80] sm:$0xff]
                  %1212 = vst [vmem:[%s1178 + $0x80] sm:$0xff] %v1211
                  %v1213 = vld [vmem:[%s1177 + $0x88] sm:$0xff]
                  %1214 = vst [vmem:[%s1178 + $0x88] sm:$0xff] %v1213
                  %v1215 = vld [vmem:[%s1177 + $0x90] sm:$0xff]
                  %1216 = vst [vmem:[%s1178 + $0x90] sm:$0xff] %v1215
                  %v1217 = vld [vmem:[%s1177 + $0x98] sm:$0xff]
                  %1218 = vst [vmem:[%s1178 + $0x98] sm:$0xff] %v1217
                  %v1219 = vld [vmem:[%s1177 + $0xa0] sm:$0xff]
                  %1220 = vst [vmem:[%s1178 + $0xa0] sm:$0xff] %v1219
                  %v1221 = vld [vmem:[%s1177 + $0xa8] sm:$0xff]
                  %1222 = vst [vmem:[%s1178 + $0xa8] sm:$0xff] %v1221
                  %v1223 = vld [vmem:[%s1177 + $0xb0] sm:$0xff]
                  %1224 = vst [vmem:[%s1178 + $0xb0] sm:$0xff] %v1223
                  %v1225 = vld [vmem:[%s1177 + $0xb8] sm:$0xff]
                  %1226 = vst [vmem:[%s1178 + $0xb8] sm:$0xff] %v1225
                  %v1227 = vld [vmem:[%s1177 + $0xc0] sm:$0xff]
                  %1228 = vst [vmem:[%s1178 + $0xc0] sm:$0xff] %v1227
                  %v1229 = vld [vmem:[%s1177 + $0xc8] sm:$0xff]
                  %1230 = vst [vmem:[%s1178 + $0xc8] sm:$0xff] %v1229
                  %v1231 = vld [vmem:[%s1177 + $0xd0] sm:$0xff]
                  %1232 = vst [vmem:[%s1178 + $0xd0] sm:$0xff] %v1231
                  %v1233 = vld [vmem:[%s1177 + $0xd8] sm:$0xff]
                  %1234 = vst [vmem:[%s1178 + $0xd8] sm:$0xff] %v1233
                  %v1235 = vld [vmem:[%s1177 + $0xe0] sm:$0xff]
                  %1236 = vst [vmem:[%s1178 + $0xe0] sm:$0xff] %v1235
                  %v1237 = vld [vmem:[%s1177 + $0xe8] sm:$0xff]
                  %1238 = vst [vmem:[%s1178 + $0xe8] sm:$0xff] %v1237
                  %v1239 = vld [vmem:[%s1177 + $0xf0] sm:$0xff]
                  %1240 = vst [vmem:[%s1178 + $0xf0] sm:$0xff] %v1239
                  %v1241 = vld [vmem:[%s1177 + $0xf8] sm:$0xff]
                  %1242 = vst [vmem:[%s1178 + $0xf8] sm:$0xff] %v1241
                  %v1243 = vld [vmem:[%s1177 + $0x100] sm:$0xff]
                  %1244 = vst [vmem:[%s1178 + $0x100] sm:$0xff] %v1243
                  %v1245 = vld [vmem:[%s1177 + $0x108] sm:$0xff]
                  %1246 = vst [vmem:[%s1178 + $0x108] sm:$0xff] %v1245
                  %v1247 = vld [vmem:[%s1177 + $0x110] sm:$0xff]
                  %1248 = vst [vmem:[%s1178 + $0x110] sm:$0xff] %v1247
                  %v1249 = vld [vmem:[%s1177 + $0x118] sm:$0xff]
                  %1250 = vst [vmem:[%s1178 + $0x118] sm:$0xff] %v1249
                  %v1251 = vld [vmem:[%s1177 + $0x120] sm:$0xff]
                  %1252 = vst [vmem:[%s1178 + $0x120] sm:$0xff] %v1251
                  %v1253 = vld [vmem:[%s1177 + $0x128] sm:$0xff]
                  %1254 = vst [vmem:[%s1178 + $0x128] sm:$0xff] %v1253
                  %v1255 = vld [vmem:[%s1177 + $0x130] sm:$0xff]
                  %1256 = vst [vmem:[%s1178 + $0x130] sm:$0xff] %v1255
                  %v1257 = vld [vmem:[%s1177 + $0x138] sm:$0xff]
                  %1258 = vst [vmem:[%s1178 + $0x138] sm:$0xff] %v1257
                  %v1259 = vld [vmem:[%s1177 + $0x140] sm:$0xff]
                  %1260 = vst [vmem:[%s1178 + $0x140] sm:$0xff] %v1259
                  %v1261 = vld [vmem:[%s1177 + $0x148] sm:$0xff]
                  %1262 = vst [vmem:[%s1178 + $0x148] sm:$0xff] %v1261
                  %v1263 = vld [vmem:[%s1177 + $0x150] sm:$0xff]
                  %1264 = vst [vmem:[%s1178 + $0x150] sm:$0xff] %v1263
                  %v1265 = vld [vmem:[%s1177 + $0x158] sm:$0xff]
                  %1266 = vst [vmem:[%s1178 + $0x158] sm:$0xff] %v1265
                  %v1267 = vld [vmem:[%s1177 + $0x160] sm:$0xff]
                  %1268 = vst [vmem:[%s1178 + $0x160] sm:$0xff] %v1267
                  %v1269 = vld [vmem:[%s1177 + $0x168] sm:$0xff]
                  %1270 = vst [vmem:[%s1178 + $0x168] sm:$0xff] %v1269
                  %v1271 = vld [vmem:[%s1177 + $0x170] sm:$0xff]
                  %1272 = vst [vmem:[%s1178 + $0x170] sm:$0xff] %v1271
                  %v1273 = vld [vmem:[%s1177 + $0x178] sm:$0xff]
                  %1274 = vst [vmem:[%s1178 + $0x178] sm:$0xff] %v1273
                  %v1275 = vld [vmem:[%s1177 + $0x180] sm:$0xff]
                  %1276 = vst [vmem:[%s1178 + $0x180] sm:$0xff] %v1275
                  %v1277 = vld [vmem:[%s1177 + $0x188] sm:$0xff]
                  %1278 = vst [vmem:[%s1178 + $0x188] sm:$0xff] %v1277
                  %v1279 = vld [vmem:[%s1177 + $0x190] sm:$0xff]
                  %1280 = vst [vmem:[%s1178 + $0x190] sm:$0xff] %v1279
                  %v1281 = vld [vmem:[%s1177 + $0x198] sm:$0xff]
                  %1282 = vst [vmem:[%s1178 + $0x198] sm:$0xff] %v1281
                  %v1283 = vld [vmem:[%s1177 + $0x1a0] sm:$0xff]
                  %1284 = vst [vmem:[%s1178 + $0x1a0] sm:$0xff] %v1283
                  %v1285 = vld [vmem:[%s1177 + $0x1a8] sm:$0xff]
                  %1286 = vst [vmem:[%s1178 + $0x1a8] sm:$0xff] %v1285
                  %v1287 = vld [vmem:[%s1177 + $0x1b0] sm:$0xff]
                  %1288 = vst [vmem:[%s1178 + $0x1b0] sm:$0xff] %v1287
                  %v1289 = vld [vmem:[%s1177 + $0x1b8] sm:$0xff]
                  %1290 = vst [vmem:[%s1178 + $0x1b8] sm:$0xff] %v1289
                  %v1291 = vld [vmem:[%s1177 + $0x1c0] sm:$0xff]
                  %1292 = vst [vmem:[%s1178 + $0x1c0] sm:$0xff] %v1291
                  %v1293 = vld [vmem:[%s1177 + $0x1c8] sm:$0xff]
                  %1294 = vst [vmem:[%s1178 + $0x1c8] sm:$0xff] %v1293
                  %v1295 = vld [vmem:[%s1177 + $0x1d0] sm:$0xff]
                  %1296 = vst [vmem:[%s1178 + $0x1d0] sm:$0xff] %v1295
                  %v1297 = vld [vmem:[%s1177 + $0x1d8] sm:$0xff]
                  %1298 = vst [vmem:[%s1178 + $0x1d8] sm:$0xff] %v1297
                  %v1299 = vld [vmem:[%s1177 + $0x1e0] sm:$0xff]
                  %1300 = vst [vmem:[%s1178 + $0x1e0] sm:$0xff] %v1299
                  %v1301 = vld [vmem:[%s1177 + $0x1e8] sm:$0xff]
                  %1302 = vst [vmem:[%s1178 + $0x1e8] sm:$0xff] %v1301
                  %v1303 = vld [vmem:[%s1177 + $0x1f0] sm:$0xff]
                  %1304 = vst [vmem:[%s1178 + $0x1f0] sm:$0xff] %v1303
                  %v1305 = vld [vmem:[%s1177 + $0x1f8] sm:$0xff]
                  %1306 = vst [vmem:[%s1178 + $0x1f8] sm:$0xff] %v1305
                  %s1307 = sadd.s32 1, %s1176
                  %p1308 = scmp.ge.s32.totalorder %s1307, %s1169
                  %s1309 = scalar_select %p1308, 0, %s1307
                  %s1310 = smul.u32 %s1309, 512
                  %s1311 = smul.u32 %s1309, 512
                  %s1312 = scalar_lea.vmem %s976, %s1310 [#allocation2]
                  %s1313 = scalar_lea.vmem %s987, %s1311
                $region71: #{x_model_forward.11} parent=65 // loop_footer
                  %s1173 = sadd.s32 %s1171, 1
                $region72: #{x_model_forward.11} parent=65 // loop_footer_branch
                  %1170 = sbr.rel target = $region68
                $region73: #{x_model_forward.11} parent=65 // loop_exit
                  _
                %s1314 = sshrl.u32 %s983, 6
                %s1315 = sand.u32 %s983, 63
                %s1316 = smul.u32 %s1314, 64
                %s1317 = smul.u32 8, %s1316
                %s1318 = scalar_lea.vmem %s976, %s1317 [#allocation2]
                %s1319 = smul.u32 8, %s1316
                %s1320 = scalar_lea.vmem %s987, %s1319
                // While loop
                $region74: #{x_model_forward.11} parent=65 // loop_pre_header
                  _
                $region75: #{x_model_forward.11} parent=65 // loop_header
                  %s1322 = sphi 0, %s1324
                  %p1323 = scmp.ge.s32.totalorder %s1322, %s1315
                  %s1327 = sphi 0, %s1334
                  %s1328 = sphi %s1318, %s1337
                  %s1329 = sphi %s1320, %s1338
                $region76: #{x_model_forward.11} parent=65 // loop_header_branch
                  %1326 = sbr.rel (%p1323) target = $region80
                $region77: #{x_model_forward.11} parent=65 // loop_body
                  %v1330 = vld [vmem:[%s1328] sm:$0xff]
                  %1331 = vst [vmem:[%s1329] sm:$0xff] %v1330
                  %s1332 = sadd.s32 1, %s1327
                  %p1333 = scmp.ge.s32.totalorder %s1332, %s1315
                  %s1334 = scalar_select %p1333, 0, %s1332
                  %s1335 = smul.u32 %s1334, 8
                  %s1336 = smul.u32 %s1334, 8
                  %s1337 = scalar_lea.vmem %s1318, %s1335 [#allocation2]
                  %s1338 = scalar_lea.vmem %s1320, %s1336
                $region78: #{x_model_forward.11} parent=65 // loop_footer
                  %s1324 = sadd.s32 %s1322, 1
                $region79: #{x_model_forward.11} parent=65 // loop_footer_branch
                  %1321 = sbr.rel target = $region75
                $region80: #{x_model_forward.11} parent=65 // loop_exit
                  _
              $region66: #{x_model_forward.11} parent=43 // pred_fallthru
                _
              // Predicated region
              $region81: #{x_model_forward.11} parent=43 // pred_check
                _
              $region82: #{x_model_forward.11} parent=43 // pred_check_branch
                %1340 = sbr.rel target = $region84
              $region83: #{x_model_forward.11} parent=43 // pred_region
                _
              $region84: #{x_model_forward.11} parent=43 // pred_fallthru
                _
            $region44: #{x_model_forward.11} parent=39 // pred_fallthru
              _
            // Predicated region
            $region45: #{x_model_forward.11} parent=39 // pred_check
              _
            $region46: #{x_model_forward.11} parent=39 // pred_check_branch
              %994 = sbr.rel target = $region48
            $region47: #{x_model_forward.11} parent=39 // pred_region
              %s996 = ssub.s32 256, 1
              %s997 = sshrl.u32 %s983, 6
              // While loop
              $region49: #{x_model_forward.11} parent=47 // loop_pre_header
                _
              $region50: #{x_model_forward.11} parent=47 // loop_header
                %s999 = sphi 0, %s1001
                %p1000 = scmp.ge.s32.totalorder %s999, %s997
                %s1004 = sphi 0, %s1137
                %s1005 = sphi %s976, %s1140
                %s1006 = sphi %s987, %s1141
              $region51: #{x_model_forward.11} parent=47 // loop_header_branch
                %1003 = sbr.rel (%p1000) target = $region55
              $region52: #{x_model_forward.11} parent=47 // loop_body
                %v1007 = vld [vmem:[%s1005] sm:%s996]
                %1008 = vst [vmem:[%s1006] sm:%s996] %v1007
                %v1009 = vld [vmem:[%s1005 + $0x8] sm:%s996]
                %1010 = vst [vmem:[%s1006 + $0x8] sm:%s996] %v1009
                %v1011 = vld [vmem:[%s1005 + $0x10] sm:%s996]
                %1012 = vst [vmem:[%s1006 + $0x10] sm:%s996] %v1011
                %v1013 = vld [vmem:[%s1005 + $0x18] sm:%s996]
                %1014 = vst [vmem:[%s1006 + $0x18] sm:%s996] %v1013
                %v1015 = vld [vmem:[%s1005 + $0x20] sm:%s996]
                %1016 = vst [vmem:[%s1006 + $0x20] sm:%s996] %v1015
                %v1017 = vld [vmem:[%s1005 + $0x28] sm:%s996]
                %1018 = vst [vmem:[%s1006 + $0x28] sm:%s996] %v1017
                %v1019 = vld [vmem:[%s1005 + $0x30] sm:%s996]
                %1020 = vst [vmem:[%s1006 + $0x30] sm:%s996] %v1019
                %v1021 = vld [vmem:[%s1005 + $0x38] sm:%s996]
                %1022 = vst [vmem:[%s1006 + $0x38] sm:%s996] %v1021
                %v1023 = vld [vmem:[%s1005 + $0x40] sm:%s996]
                %1024 = vst [vmem:[%s1006 + $0x40] sm:%s996] %v1023
                %v1025 = vld [vmem:[%s1005 + $0x48] sm:%s996]
                %1026 = vst [vmem:[%s1006 + $0x48] sm:%s996] %v1025
                %v1027 = vld [vmem:[%s1005 + $0x50] sm:%s996]
                %1028 = vst [vmem:[%s1006 + $0x50] sm:%s996] %v1027
                %v1029 = vld [vmem:[%s1005 + $0x58] sm:%s996]
                %1030 = vst [vmem:[%s1006 + $0x58] sm:%s996] %v1029
                %v1031 = vld [vmem:[%s1005 + $0x60] sm:%s996]
                %1032 = vst [vmem:[%s1006 + $0x60] sm:%s996] %v1031
                %v1033 = vld [vmem:[%s1005 + $0x68] sm:%s996]
                %1034 = vst [vmem:[%s1006 + $0x68] sm:%s996] %v1033
                %v1035 = vld [vmem:[%s1005 + $0x70] sm:%s996]
                %1036 = vst [vmem:[%s1006 + $0x70] sm:%s996] %v1035
                %v1037 = vld [vmem:[%s1005 + $0x78] sm:%s996]
                %1038 = vst [vmem:[%s1006 + $0x78] sm:%s996] %v1037
                %v1039 = vld [vmem:[%s1005 + $0x80] sm:%s996]
                %1040 = vst [vmem:[%s1006 + $0x80] sm:%s996] %v1039
                %v1041 = vld [vmem:[%s1005 + $0x88] sm:%s996]
                %1042 = vst [vmem:[%s1006 + $0x88] sm:%s996] %v1041
                %v1043 = vld [vmem:[%s1005 + $0x90] sm:%s996]
                %1044 = vst [vmem:[%s1006 + $0x90] sm:%s996] %v1043
                %v1045 = vld [vmem:[%s1005 + $0x98] sm:%s996]
                %1046 = vst [vmem:[%s1006 + $0x98] sm:%s996] %v1045
                %v1047 = vld [vmem:[%s1005 + $0xa0] sm:%s996]
                %1048 = vst [vmem:[%s1006 + $0xa0] sm:%s996] %v1047
                %v1049 = vld [vmem:[%s1005 + $0xa8] sm:%s996]
                %1050 = vst [vmem:[%s1006 + $0xa8] sm:%s996] %v1049
                %v1051 = vld [vmem:[%s1005 + $0xb0] sm:%s996]
                %1052 = vst [vmem:[%s1006 + $0xb0] sm:%s996] %v1051
                %v1053 = vld [vmem:[%s1005 + $0xb8] sm:%s996]
                %1054 = vst [vmem:[%s1006 + $0xb8] sm:%s996] %v1053
                %v1055 = vld [vmem:[%s1005 + $0xc0] sm:%s996]
                %1056 = vst [vmem:[%s1006 + $0xc0] sm:%s996] %v1055
                %v1057 = vld [vmem:[%s1005 + $0xc8] sm:%s996]
                %1058 = vst [vmem:[%s1006 + $0xc8] sm:%s996] %v1057
                %v1059 = vld [vmem:[%s1005 + $0xd0] sm:%s996]
                %1060 = vst [vmem:[%s1006 + $0xd0] sm:%s996] %v1059
                %v1061 = vld [vmem:[%s1005 + $0xd8] sm:%s996]
                %1062 = vst [vmem:[%s1006 + $0xd8] sm:%s996] %v1061
                %v1063 = vld [vmem:[%s1005 + $0xe0] sm:%s996]
                %1064 = vst [vmem:[%s1006 + $0xe0] sm:%s996] %v1063
                %v1065 = vld [vmem:[%s1005 + $0xe8] sm:%s996]
                %1066 = vst [vmem:[%s1006 + $0xe8] sm:%s996] %v1065
                %v1067 = vld [vmem:[%s1005 + $0xf0] sm:%s996]
                %1068 = vst [vmem:[%s1006 + $0xf0] sm:%s996] %v1067
                %v1069 = vld [vmem:[%s1005 + $0xf8] sm:%s996]
                %1070 = vst [vmem:[%s1006 + $0xf8] sm:%s996] %v1069
                %v1071 = vld [vmem:[%s1005 + $0x100] sm:%s996]
                %1072 = vst [vmem:[%s1006 + $0x100] sm:%s996] %v1071
                %v1073 = vld [vmem:[%s1005 + $0x108] sm:%s996]
                %1074 = vst [vmem:[%s1006 + $0x108] sm:%s996] %v1073
                %v1075 = vld [vmem:[%s1005 + $0x110] sm:%s996]
                %1076 = vst [vmem:[%s1006 + $0x110] sm:%s996] %v1075
                %v1077 = vld [vmem:[%s1005 + $0x118] sm:%s996]
                %1078 = vst [vmem:[%s1006 + $0x118] sm:%s996] %v1077
                %v1079 = vld [vmem:[%s1005 + $0x120] sm:%s996]
                %1080 = vst [vmem:[%s1006 + $0x120] sm:%s996] %v1079
                %v1081 = vld [vmem:[%s1005 + $0x128] sm:%s996]
                %1082 = vst [vmem:[%s1006 + $0x128] sm:%s996] %v1081
                %v1083 = vld [vmem:[%s1005 + $0x130] sm:%s996]
                %1084 = vst [vmem:[%s1006 + $0x130] sm:%s996] %v1083
                %v1085 = vld [vmem:[%s1005 + $0x138] sm:%s996]
                %1086 = vst [vmem:[%s1006 + $0x138] sm:%s996] %v1085
                %v1087 = vld [vmem:[%s1005 + $0x140] sm:%s996]
                %1088 = vst [vmem:[%s1006 + $0x140] sm:%s996] %v1087
                %v1089 = vld [vmem:[%s1005 + $0x148] sm:%s996]
                %1090 = vst [vmem:[%s1006 + $0x148] sm:%s996] %v1089
                %v1091 = vld [vmem:[%s1005 + $0x150] sm:%s996]
                %1092 = vst [vmem:[%s1006 + $0x150] sm:%s996] %v1091
                %v1093 = vld [vmem:[%s1005 + $0x158] sm:%s996]
                %1094 = vst [vmem:[%s1006 + $0x158] sm:%s996] %v1093
                %v1095 = vld [vmem:[%s1005 + $0x160] sm:%s996]
                %1096 = vst [vmem:[%s1006 + $0x160] sm:%s996] %v1095
                %v1097 = vld [vmem:[%s1005 + $0x168] sm:%s996]
                %1098 = vst [vmem:[%s1006 + $0x168] sm:%s996] %v1097
                %v1099 = vld [vmem:[%s1005 + $0x170] sm:%s996]
                %1100 = vst [vmem:[%s1006 + $0x170] sm:%s996] %v1099
                %v1101 = vld [vmem:[%s1005 + $0x178] sm:%s996]
                %1102 = vst [vmem:[%s1006 + $0x178] sm:%s996] %v1101
                %v1103 = vld [vmem:[%s1005 + $0x180] sm:%s996]
                %1104 = vst [vmem:[%s1006 + $0x180] sm:%s996] %v1103
                %v1105 = vld [vmem:[%s1005 + $0x188] sm:%s996]
                %1106 = vst [vmem:[%s1006 + $0x188] sm:%s996] %v1105
                %v1107 = vld [vmem:[%s1005 + $0x190] sm:%s996]
                %1108 = vst [vmem:[%s1006 + $0x190] sm:%s996] %v1107
                %v1109 = vld [vmem:[%s1005 + $0x198] sm:%s996]
                %1110 = vst [vmem:[%s1006 + $0x198] sm:%s996] %v1109
                %v1111 = vld [vmem:[%s1005 + $0x1a0] sm:%s996]
                %1112 = vst [vmem:[%s1006 + $0x1a0] sm:%s996] %v1111
                %v1113 = vld [vmem:[%s1005 + $0x1a8] sm:%s996]
                %1114 = vst [vmem:[%s1006 + $0x1a8] sm:%s996] %v1113
                %v1115 = vld [vmem:[%s1005 + $0x1b0] sm:%s996]
                %1116 = vst [vmem:[%s1006 + $0x1b0] sm:%s996] %v1115
                %v1117 = vld [vmem:[%s1005 + $0x1b8] sm:%s996]
                %1118 = vst [vmem:[%s1006 + $0x1b8] sm:%s996] %v1117
                %v1119 = vld [vmem:[%s1005 + $0x1c0] sm:%s996]
                %1120 = vst [vmem:[%s1006 + $0x1c0] sm:%s996] %v1119
                %v1121 = vld [vmem:[%s1005 + $0x1c8] sm:%s996]
                %1122 = vst [vmem:[%s1006 + $0x1c8] sm:%s996] %v1121
                %v1123 = vld [vmem:[%s1005 + $0x1d0] sm:%s996]
                %1124 = vst [vmem:[%s1006 + $0x1d0] sm:%s996] %v1123
                %v1125 = vld [vmem:[%s1005 + $0x1d8] sm:%s996]
                %1126 = vst [vmem:[%s1006 + $0x1d8] sm:%s996] %v1125
                %v1127 = vld [vmem:[%s1005 + $0x1e0] sm:%s996]
                %1128 = vst [vmem:[%s1006 + $0x1e0] sm:%s996] %v1127
                %v1129 = vld [vmem:[%s1005 + $0x1e8] sm:%s996]
                %1130 = vst [vmem:[%s1006 + $0x1e8] sm:%s996] %v1129
                %v1131 = vld [vmem:[%s1005 + $0x1f0] sm:%s996]
                %1132 = vst [vmem:[%s1006 + $0x1f0] sm:%s996] %v1131
                %v1133 = vld [vmem:[%s1005 + $0x1f8] sm:%s996]
                %1134 = vst [vmem:[%s1006 + $0x1f8] sm:%s996] %v1133
                %s1135 = sadd.s32 1, %s1004
                %p1136 = scmp.ge.s32.totalorder %s1135, %s997
                %s1137 = scalar_select %p1136, 0, %s1135
                %s1138 = smul.u32 %s1137, 512
                %s1139 = smul.u32 %s1137, 512
                %s1140 = scalar_lea.vmem %s976, %s1138 [#allocation2]
                %s1141 = scalar_lea.vmem %s987, %s1139
              $region53: #{x_model_forward.11} parent=47 // loop_footer
                %s1001 = sadd.s32 %s999, 1
              $region54: #{x_model_forward.11} parent=47 // loop_footer_branch
                %998 = sbr.rel target = $region50
              $region55: #{x_model_forward.11} parent=47 // loop_exit
                _
              %s1142 = sshrl.u32 %s983, 6
              %s1143 = sand.u32 %s983, 63
              %s1144 = smul.u32 %s1142, 64
              %s1145 = smul.u32 8, %s1144
              %s1146 = scalar_lea.vmem %s976, %s1145 [#allocation2]
              %s1147 = smul.u32 8, %s1144
              %s1148 = scalar_lea.vmem %s987, %s1147
              // While loop
              $region56: #{x_model_forward.11} parent=47 // loop_pre_header
                _
              $region57: #{x_model_forward.11} parent=47 // loop_header
                %s1150 = sphi 0, %s1152
                %p1151 = scmp.ge.s32.totalorder %s1150, %s1143
                %s1155 = sphi 0, %s1162
                %s1156 = sphi %s1146, %s1165
                %s1157 = sphi %s1148, %s1166
              $region58: #{x_model_forward.11} parent=47 // loop_header_branch
                %1154 = sbr.rel (%p1151) target = $region62
              $region59: #{x_model_forward.11} parent=47 // loop_body
                %v1158 = vld [vmem:[%s1156] sm:%s996]
                %1159 = vst [vmem:[%s1157] sm:%s996] %v1158
                %s1160 = sadd.s32 1, %s1155
                %p1161 = scmp.ge.s32.totalorder %s1160, %s1143
                %s1162 = scalar_select %p1161, 0, %s1160
                %s1163 = smul.u32 %s1162, 8
                %s1164 = smul.u32 %s1162, 8
                %s1165 = scalar_lea.vmem %s1146, %s1163 [#allocation2]
                %s1166 = scalar_lea.vmem %s1148, %s1164
              $region60: #{x_model_forward.11} parent=47 // loop_footer
                %s1152 = sadd.s32 %s1150, 1
              $region61: #{x_model_forward.11} parent=47 // loop_footer_branch
                %1149 = sbr.rel target = $region57
              $region62: #{x_model_forward.11} parent=47 // loop_exit
                _
            $region48: #{x_model_forward.11} parent=39 // pred_fallthru
              _
          $region40: #{x_model_forward.11} parent=35 // pred_fallthru
            _
          %1341 = vnop
        $region36: #{x_model_forward.11} parent=31 // pred_fallthru
          _
      $region32: #{x_model_forward.11} parent=5 // pred_fallthru
        _
      %p1342 = scmp.le.s32.totalorder 2, %s9
      // Predicated region
      $region85: #{x_model_forward.11} parent=5 // pred_check
        %p1343 = pneg %p1342
      $region86: #{x_model_forward.11} parent=5 // pred_check_branch
        %1345 = sbr.rel (%p1343) target = $region88
      $region87: #{x_model_forward.11} parent=5 // pred_region
        %s1346 = ssub.s32 %s9, 2
        // Predicated region
        $region89: #{x_model_forward.11} parent=87 // pred_check
          %p1347 = pneg %p106
        $region90: #{x_model_forward.11} parent=87 // pred_check_branch
          %1349 = sbr.rel (%p1347) target = $region92
        $region91: #{x_model_forward.11} parent=87 // pred_region
          %s1350 = sand.u32 %s91, 1
          %s1351 = sand.u32 %s91, 1
          %s1352 = smul.addr %s1351, 512
          %s1353 = scalar_lea.vmem [#allocation2], %s1352
        $region92: #{x_model_forward.11} parent=87 // pred_fallthru
          _
      $region88: #{x_model_forward.11} parent=5 // pred_fallthru
        _
    $region6: #{x_model_forward.11} parent=1 // loop_footer
      %s13 = sadd.s32 1, %s9
    $region7: #{x_model_forward.11} parent=1 // loop_footer_branch
      %8 = sbr.rel target = $region3
    $region8: #{x_model_forward.11} parent=1 // loop_exit
      _

// kernel: x_model_forward.12
$region0: #{x_model_forward.12}
  #allocation0 [shape = 'u32[]', space=smem, size = 0x4, offset = 0x4, fixed_abs, tag = 'smem constant byte address 0x4 - core index']
  #allocation1 [shape = 'u32[144,128]{1,0:T(1,128)}', space=vmem, size = 0x12000, scoped, tag = 'internal scratch']
  %s0 = inlined_call_operand.vmem [shape: f32[9,392,16], index: 0, kind: input, shape index: {}]
  %s1 = inlined_call_operand.vmem [shape: f32[16,16], index: 1, kind: input, shape index: {}]
  %s2 = inlined_call_operand.vmem [shape: f32[16,16], index: 2, kind: input, shape index: {}]
  %s3 = inlined_call_operand.vmem [shape: f32[1,16], index: 3, kind: input, shape index: {}]
  %s4 = inlined_call_operand.vmem [shape: f32[392,16], index: 4, kind: output, shape index: {}]
  %s5 = sld [smem:[#allocation0]]
  $region149: #{x_model_forward.12} parent=0
    _
  %s7 = ssub.s32 1, %s5
  %s8 = scalar_select 0, %s7, %s5
  $region1: #{x_model_forward.12} parent=0
    #allocation2 [shape = 'u8[2064384]{0}', space=vmem, size = 0x1f8000, scoped, tag = 'input window, operand 0']
    #allocation3 [shape = 'u8[229376]{0}', space=vmem, size = 0x38000, scoped, tag = 'output window, operand 0']
    loop: start=0, step=1, limit=4
    $region2: #{x_model_forward.12} parent=1 // loop_pre_header
      _
    $region3: #{x_model_forward.12} parent=1 // loop_header
      %s10 = sphi 0, %s14
      %p11 = scmp.ge.s32.totalorder %s10, 4
      %s20 = sphi 0, %s22
      %s23 = sphi 0, %s20
      %s24 = sphi 0, %s23
      %s40 = sphi 0, %s24
      %s44 = sphi 0, %s44
      %s46 = sphi 0, %s44
      %s47 = sphi 0, %s46
      %s61 = sphi 0, %s47
      %s65 = sphi 0, %s65
      %s67 = sphi 0, %s65
      %s68 = sphi 0, %s67
      %s82 = sphi 0, %s68
      %s86 = sphi 0, %s86
      %s88 = sphi 0, %s86
      %s89 = sphi 0, %s88
      %s103 = sphi 0, %s89
      %s109 = sphi 0, %s111
      %s112 = sphi 0, %s109
      %s113 = sphi 0, %s112
      %s129 = sphi 0, %s113
    $region4: #{x_model_forward.12} parent=1 // loop_header_branch
      %13 = sbr.rel (%p11) target = $region8
    $region5: #{x_model_forward.12} parent=1 // loop_body
      %s15 = ssub.s32 %s10, 1
      %s16 = ssub.s32 %s10, 2
      %s17 = sadd.s32 %s10, 1
      %s18 = ssub.s32 %s10, %s17
      %p19 = scmp.eq.s32.totalorder %s18, 0
      %s21 = sadd.s32 %s20, 1
      %s22 = scalar_select %p19, %s20, %s21
      %p25 = pneg %p19
      %p26 = scmp.eq.s32.totalorder %s10, 1
      %p27 = por %p25, %p26
      %p28 = scmp.ne.s32.totalorder %s20, %s23
      %p29 = scmp.eq.s32.totalorder %s10, 0
      %p30 = por %p28, %p29
      %p31 = scmp.ne.s32.totalorder %s20, %s23
      %p32 = scmp.eq.s32.totalorder %s15, 1
      %p33 = por %p31, %p32
      %p34 = scmp.ne.s32.totalorder %s23, %s24
      %p35 = scmp.eq.s32.totalorder %s15, 0
      %p36 = por %p34, %p35
      %p37 = scmp.ne.s32.totalorder %s23, %s24
      %p38 = scmp.eq.s32.totalorder %s16, 1
      %p39 = por %p37, %p38
      %p41 = scmp.ne.s32.totalorder %s24, %s40
      %p42 = scmp.eq.s32.totalorder %s16, 0
      %p43 = por %p41, %p42
      %s45 = sadd.s32 %s44, 1
      %p48 = scmp.eq.s32.totalorder %s10, 1
      %p49 = scmp.ne.s32.totalorder %s44, %s46
      %p50 = scmp.eq.s32.totalorder %s10, 0
      %p51 = por %p49, %p50
      %p52 = scmp.ne.s32.totalorder %s44, %s46
      %p53 = scmp.eq.s32.totalorder %s15, 1
      %p54 = por %p52, %p53
      %p55 = scmp.ne.s32.totalorder %s46, %s47
      %p56 = scmp.eq.s32.totalorder %s15, 0
      %p57 = por %p55, %p56
      %p58 = scmp.ne.s32.totalorder %s46, %s47
      %p59 = scmp.eq.s32.totalorder %s16, 1
      %p60 = por %p58, %p59
      %p62 = scmp.ne.s32.totalorder %s47, %s61
      %p63 = scmp.eq.s32.totalorder %s16, 0
      %p64 = por %p62, %p63
      %s66 = sadd.s32 %s65, 1
      %p69 = scmp.eq.s32.totalorder %s10, 1
      %p70 = scmp.ne.s32.totalorder %s65, %s67
      %p71 = scmp.eq.s32.totalorder %s10, 0
      %p72 = por %p70, %p71
      %p73 = scmp.ne.s32.totalorder %s65, %s67
      %p74 = scmp.eq.s32.totalorder %s15, 1
      %p75 = por %p73, %p74
      %p76 = scmp.ne.s32.totalorder %s67, %s68
      %p77 = scmp.eq.s32.totalorder %s15, 0
      %p78 = por %p76, %p77
      %p79 = scmp.ne.s32.totalorder %s67, %s68
      %p80 = scmp.eq.s32.totalorder %s16, 1
      %p81 = por %p79, %p80
      %p83 = scmp.ne.s32.totalorder %s68, %s82
      %p84 = scmp.eq.s32.totalorder %s16, 0
      %p85 = por %p83, %p84
      %s87 = sadd.s32 %s86, 1
      %p90 = scmp.eq.s32.totalorder %s10, 1
      %p91 = scmp.ne.s32.totalorder %s86, %s88
      %p92 = scmp.eq.s32.totalorder %s10, 0
      %p93 = por %p91, %p92
      %p94 = scmp.ne.s32.totalorder %s86, %s88
      %p95 = scmp.eq.s32.totalorder %s15, 1
      %p96 = por %p94, %p95
      %p97 = scmp.ne.s32.totalorder %s88, %s89
      %p98 = scmp.eq.s32.totalorder %s15, 0
      %p99 = por %p97, %p98
      %p100 = scmp.ne.s32.totalorder %s88, %s89
      %p101 = scmp.eq.s32.totalorder %s16, 1
      %p102 = por %p100, %p101
      %p104 = scmp.ne.s32.totalorder %s89, %s103
      %p105 = scmp.eq.s32.totalorder %s16, 0
      %p106 = por %p104, %p105
      %s107 = ssub.s32 %s10, %s17
      %p108 = scmp.eq.s32.totalorder %s107, 0
      %s110 = sadd.s32 %s109, 1
      %s111 = scalar_select %p108, %s109, %s110
      %p114 = pneg %p108
      %p115 = scmp.eq.s32.totalorder %s10, 1
      %p116 = por %p114, %p115
      %p117 = scmp.ne.s32.totalorder %s109, %s112
      %p118 = scmp.eq.s32.totalorder %s10, 0
      %p119 = por %p117, %p118
      %p120 = scmp.ne.s32.totalorder %s109, %s112
      %p121 = scmp.eq.s32.totalorder %s15, 1
      %p122 = por %p120, %p121
      %p123 = scmp.ne.s32.totalorder %s112, %s113
      %p124 = scmp.eq.s32.totalorder %s15, 0
      %p125 = por %p123, %p124
      %p126 = scmp.ne.s32.totalorder %s112, %s113
      %p127 = scmp.eq.s32.totalorder %s16, 1
      %p128 = por %p126, %p127
      %p130 = scmp.ne.s32.totalorder %s113, %s129
      %p131 = scmp.eq.s32.totalorder %s16, 0
      %p132 = por %p130, %p131
      %p133 = scmp.le.s32.totalorder 1, %s10
      %p134 = scmp.lt.s32.totalorder %s10, 3
      %p135 = pnand %p133, %p134
      %p136 = pneg %p135
      // Predicated region
      $region9: #{x_model_forward.12} parent=5 // pred_check
        _
      $region10: #{x_model_forward.12} parent=5 // pred_check_branch
        %138 = sbr.rel (%p135) target = $region12
      $region11: #{x_model_forward.12} parent=5 // pred_region
        %s139 = ssub.s32 %s10, 1
        // Predicated region
        $region13: #{x_model_forward.12} parent=11 // pred_check
          %p140 = pneg %p57
        $region14: #{x_model_forward.12} parent=11 // pred_check_branch
          %142 = sbr.rel (%p140) target = $region16
        $region15: #{x_model_forward.12} parent=11 // pred_region
          _
        $region16: #{x_model_forward.12} parent=11 // pred_fallthru
          _
        // Predicated region
        $region17: #{x_model_forward.12} parent=11 // pred_check
          %p143 = pneg %p78
        $region18: #{x_model_forward.12} parent=11 // pred_check_branch
          %145 = sbr.rel (%p143) target = $region20
        $region19: #{x_model_forward.12} parent=11 // pred_region
          _
        $region20: #{x_model_forward.12} parent=11 // pred_fallthru
          _
        // Predicated region
        $region21: #{x_model_forward.12} parent=11 // pred_check
          %p146 = pneg %p99
        $region22: #{x_model_forward.12} parent=11 // pred_check_branch
          %148 = sbr.rel (%p146) target = $region24
        $region23: #{x_model_forward.12} parent=11 // pred_region
          _
        $region24: #{x_model_forward.12} parent=11 // pred_fallthru
          _
      $region12: #{x_model_forward.12} parent=5 // pred_fallthru
        _
      %p149 = scmp.lt.s32.totalorder %s10, 2
      // Predicated region
      $region25: #{x_model_forward.12} parent=5 // pred_check
        %p150 = pneg %p149
      $region26: #{x_model_forward.12} parent=5 // pred_check_branch
        %152 = sbr.rel (%p150) target = $region28
      $region27: #{x_model_forward.12} parent=5 // pred_region
        // Predicated region
        $region29: #{x_model_forward.12} parent=27 // pred_check
          %p153 = pneg %p30
        $region30: #{x_model_forward.12} parent=27 // pred_check_branch
          %155 = sbr.rel (%p153) target = $region32
        $region31: #{x_model_forward.12} parent=27 // pred_region
          %s156 = sand.u32 %s20, 1
          %s157 = sand.u32 %s20, 1
          %s158 = smul.addr %s157, 2016
          %s159 = scalar_lea.vmem [#allocation2], %s158
          %s160 = smul.u32 28, %s10
          %s161 = ssub.s32 49, %s160
          %p162 = scmp.lt.s32.totalorder %s161, 28
          %s163 = scalar_select %p162, %s161, 28
          %s164 = smul.u32 1152, %s163
          %p165 = scmp.ne.s32.totalorder 0, %s164
          %s166 = smul.addr %s160, 8
          %s167 = scalar_lea.vmem %s0, %s166
          // Predicated region
          $region33: #{x_model_forward.12} parent=31 // pred_check
            %p168 = pneg %p165
          $region34: #{x_model_forward.12} parent=31 // pred_check_branch
            %170 = sbr.rel (%p168) target = $region36
          $region35: #{x_model_forward.12} parent=31 // pred_region
            // Predicated region
            $region37: #{x_model_forward.12} parent=35 // pred_check
              _
            $region38: #{x_model_forward.12} parent=35 // pred_check_branch
              %172 = sbr.rel (0) target = $region40
            $region39: #{x_model_forward.12} parent=35 // pred_region
              // Predicated region
              $region59: #{x_model_forward.12} parent=39 // pred_check
                _
              $region60: #{x_model_forward.12} parent=39 // pred_check_branch
                %380 = sbr.rel (0) target = $region62
              $region61: #{x_model_forward.12} parent=39 // pred_region
                %s381 = sshrl.u32 %s163, 3
                // While loop
                $region63: #{x_model_forward.12} parent=61 // loop_pre_header
                  _
                $region64: #{x_model_forward.12} parent=61 // loop_header
                  %s383 = sphi 0, %s385
                  %p384 = scmp.ge.s32.totalorder %s383, %s381
                  %s388 = sphi 0, %s537
                  %s389 = sphi %s167, %s540
                  %s390 = sphi %s159, %s541
                $region65: #{x_model_forward.12} parent=61 // loop_header_branch
                  %387 = sbr.rel (%p384) target = $region69
                $region66: #{x_model_forward.12} parent=61 // loop_body
                  %v391 = vld [vmem:[%s389] sm:$0xff]
                  %392 = vst [vmem:[%s390] sm:$0xff] %v391
                  %v393 = vld [vmem:[%s389 + $0x8] sm:$0xff]
                  %394 = vst [vmem:[%s390 + $0x8] sm:$0xff] %v393
                  %v395 = vld [vmem:[%s389 + $0x10] sm:$0xff]
                  %396 = vst [vmem:[%s390 + $0x10] sm:$0xff] %v395
                  %v397 = vld [vmem:[%s389 + $0x18] sm:$0xff]
                  %398 = vst [vmem:[%s390 + $0x18] sm:$0xff] %v397
                  %v399 = vld [vmem:[%s389 + $0x20] sm:$0xff]
                  %400 = vst [vmem:[%s390 + $0x20] sm:$0xff] %v399
                  %v401 = vld [vmem:[%s389 + $0x28] sm:$0xff]
                  %402 = vst [vmem:[%s390 + $0x28] sm:$0xff] %v401
                  %v403 = vld [vmem:[%s389 + $0x30] sm:$0xff]
                  %404 = vst [vmem:[%s390 + $0x30] sm:$0xff] %v403
                  %v405 = vld [vmem:[%s389 + $0x38] sm:$0xff]
                  %406 = vst [vmem:[%s390 + $0x38] sm:$0xff] %v405
                  %v407 = vld [vmem:[%s389 + $0x188] sm:$0xff]
                  %408 = vst [vmem:[%s390 + $0xe0] sm:$0xff] %v407
                  %v409 = vld [vmem:[%s389 + $0x190] sm:$0xff]
                  %410 = vst [vmem:[%s390 + $0xe8] sm:$0xff] %v409
                  %v411 = vld [vmem:[%s389 + $0x198] sm:$0xff]
                  %412 = vst [vmem:[%s390 + $0xf0] sm:$0xff] %v411
                  %v413 = vld [vmem:[%s389 + $0x1a0] sm:$0xff]
                  %414 = vst [vmem:[%s390 + $0xf8] sm:$0xff] %v413
                  %v415 = vld [vmem:[%s389 + $0x1a8] sm:$0xff]
                  %416 = vst [vmem:[%s390 + $0x100] sm:$0xff] %v415
                  %v417 = vld [vmem:[%s389 + $0x1b0] sm:$0xff]
                  %418 = vst [vmem:[%s390 + $0x108] sm:$0xff] %v417
                  %v419 = vld [vmem:[%s389 + $0x1b8] sm:$0xff]
                  %420 = vst [vmem:[%s390 + $0x110] sm:$0xff] %v419
                  %v421 = vld [vmem:[%s389 + $0x1c0] sm:$0xff]
                  %422 = vst [vmem:[%s390 + $0x118] sm:$0xff] %v421
                  %v423 = vld [vmem:[%s389 + $0x310] sm:$0xff]
                  %424 = vst [vmem:[%s390 + $0x1c0] sm:$0xff] %v423
                  %v425 = vld [vmem:[%s389 + $0x318] sm:$0xff]
                  %426 = vst [vmem:[%s390 + $0x1c8] sm:$0xff] %v425
                  %v427 = vld [vmem:[%s389 + $0x320] sm:$0xff]
                  %428 = vst [vmem:[%s390 + $0x1d0] sm:$0xff] %v427
                  %v429 = vld [vmem:[%s389 + $0x328] sm:$0xff]
                  %430 = vst [vmem:[%s390 + $0x1d8] sm:$0xff] %v429
                  %v431 = vld [vmem:[%s389 + $0x330] sm:$0xff]
                  %432 = vst [vmem:[%s390 + $0x1e0] sm:$0xff] %v431
                  %v433 = vld [vmem:[%s389 + $0x338] sm:$0xff]
                  %434 = vst [vmem:[%s390 + $0x1e8] sm:$0xff] %v433
                  %v435 = vld [vmem:[%s389 + $0x340] sm:$0xff]
                  %436 = vst [vmem:[%s390 + $0x1f0] sm:$0xff] %v435
                  %v437 = vld [vmem:[%s389 + $0x348] sm:$0xff]
                  %438 = vst [vmem:[%s390 + $0x1f8] sm:$0xff] %v437
                  %v439 = vld [vmem:[%s389 + $0x498] sm:$0xff]
                  %440 = vst [vmem:[%s390 + $0x2a0] sm:$0xff] %v439
                  %v441 = vld [vmem:[%s389 + $0x4a0] sm:$0xff]
                  %442 = vst [vmem:[%s390 + $0x2a8] sm:$0xff] %v441
                  %v443 = vld [vmem:[%s389 + $0x4a8] sm:$0xff]
                  %444 = vst [vmem:[%s390 + $0x2b0] sm:$0xff] %v443
                  %v445 = vld [vmem:[%s389 + $0x4b0] sm:$0xff]
                  %446 = vst [vmem:[%s390 + $0x2b8] sm:$0xff] %v445
                  %v447 = vld [vmem:[%s389 + $0x4b8] sm:$0xff]
                  %448 = vst [vmem:[%s390 + $0x2c0] sm:$0xff] %v447
                  %v449 = vld [vmem:[%s389 + $0x4c0] sm:$0xff]
                  %450 = vst [vmem:[%s390 + $0x2c8] sm:$0xff] %v449
                  %v451 = vld [vmem:[%s389 + $0x4c8] sm:$0xff]
                  %452 = vst [vmem:[%s390 + $0x2d0] sm:$0xff] %v451
                  %v453 = vld [vmem:[%s389 + $0x4d0] sm:$0xff]
                  %454 = vst [vmem:[%s390 + $0x2d8] sm:$0xff] %v453
                  %v455 = vld [vmem:[%s389 + $0x620] sm:$0xff]
                  %456 = vst [vmem:[%s390 + $0x380] sm:$0xff] %v455
                  %v457 = vld [vmem:[%s389 + $0x628] sm:$0xff]
                  %458 = vst [vmem:[%s390 + $0x388] sm:$0xff] %v457
                  %v459 = vld [vmem:[%s389 + $0x630] sm:$0xff]
                  %460 = vst [vmem:[%s390 + $0x390] sm:$0xff] %v459
                  %v461 = vld [vmem:[%s389 + $0x638] sm:$0xff]
                  %462 = vst [vmem:[%s390 + $0x398] sm:$0xff] %v461
                  %v463 = vld [vmem:[%s389 + $0x640] sm:$0xff]
                  %464 = vst [vmem:[%s390 + $0x3a0] sm:$0xff] %v463
                  %v465 = vld [vmem:[%s389 + $0x648] sm:$0xff]
                  %466 = vst [vmem:[%s390 + $0x3a8] sm:$0xff] %v465
                  %v467 = vld [vmem:[%s389 + $0x650] sm:$0xff]
                  %468 = vst [vmem:[%s390 + $0x3b0] sm:$0xff] %v467
                  %v469 = vld [vmem:[%s389 + $0x658] sm:$0xff]
                  %470 = vst [vmem:[%s390 + $0x3b8] sm:$0xff] %v469
                  %v471 = vld [vmem:[%s389 + $0x7a8] sm:$0xff]
                  %472 = vst [vmem:[%s390 + $0x460] sm:$0xff] %v471
                  %v473 = vld [vmem:[%s389 + $0x7b0] sm:$0xff]
                  %474 = vst [vmem:[%s390 + $0x468] sm:$0xff] %v473
                  %v475 = vld [vmem:[%s389 + $0x7b8] sm:$0xff]
                  %476 = vst [vmem:[%s390 + $0x470] sm:$0xff] %v475
                  %v477 = vld [vmem:[%s389 + $0x7c0] sm:$0xff]
                  %478 = vst [vmem:[%s390 + $0x478] sm:$0xff] %v477
                  %v479 = vld [vmem:[%s389 + $0x7c8] sm:$0xff]
                  %480 = vst [vmem:[%s390 + $0x480] sm:$0xff] %v479
                  %v481 = vld [vmem:[%s389 + $0x7d0] sm:$0xff]
                  %482 = vst [vmem:[%s390 + $0x488] sm:$0xff] %v481
                  %v483 = vld [vmem:[%s389 + $0x7d8] sm:$0xff]
                  %484 = vst [vmem:[%s390 + $0x490] sm:$0xff] %v483
                  %v485 = vld [vmem:[%s389 + $0x7e0] sm:$0xff]
                  %486 = vst [vmem:[%s390 + $0x498] sm:$0xff] %v485
                  %v487 = vld [vmem:[%s389 + $0x930] sm:$0xff]
                  %488 = vst [vmem:[%s390 + $0x540] sm:$0xff] %v487
                  %v489 = vld [vmem:[%s389 + $0x938] sm:$0xff]
                  %490 = vst [vmem:[%s390 + $0x548] sm:$0xff] %v489
                  %v491 = vld [vmem:[%s389 + $0x940] sm:$0xff]
                  %492 = vst [vmem:[%s390 + $0x550] sm:$0xff] %v491
                  %v493 = vld [vmem:[%s389 + $0x948] sm:$0xff]
                  %494 = vst [vmem:[%s390 + $0x558] sm:$0xff] %v493
                  %v495 = vld [vmem:[%s389 + $0x950] sm:$0xff]
                  %496 = vst [vmem:[%s390 + $0x560] sm:$0xff] %v495
                  %v497 = vld [vmem:[%s389 + $0x958] sm:$0xff]
                  %498 = vst [vmem:[%s390 + $0x568] sm:$0xff] %v497
                  %v499 = vld [vmem:[%s389 + $0x960] sm:$0xff]
                  %500 = vst [vmem:[%s390 + $0x570] sm:$0xff] %v499
                  %v501 = vld [vmem:[%s389 + $0x968] sm:$0xff]
                  %502 = vst [vmem:[%s390 + $0x578] sm:$0xff] %v501
                  %v503 = vld [vmem:[%s389 + $0xab8] sm:$0xff]
                  %504 = vst [vmem:[%s390 + $0x620] sm:$0xff] %v503
                  %v505 = vld [vmem:[%s389 + $0xac0] sm:$0xff]
                  %506 = vst [vmem:[%s390 + $0x628] sm:$0xff] %v505
                  %v507 = vld [vmem:[%s389 + $0xac8] sm:$0xff]
                  %508 = vst [vmem:[%s390 + $0x630] sm:$0xff] %v507
                  %v509 = vld [vmem:[%s389 + $0xad0] sm:$0xff]
                  %510 = vst [vmem:[%s390 + $0x638] sm:$0xff] %v509
                  %v511 = vld [vmem:[%s389 + $0xad8] sm:$0xff]
                  %512 = vst [vmem:[%s390 + $0x640] sm:$0xff] %v511
                  %v513 = vld [vmem:[%s389 + $0xae0] sm:$0xff]
                  %514 = vst [vmem:[%s390 + $0x648] sm:$0xff] %v513
                  %v515 = vld [vmem:[%s389 + $0xae8] sm:$0xff]
                  %516 = vst [vmem:[%s390 + $0x650] sm:$0xff] %v515
                  %v517 = vld [vmem:[%s389 + $0xaf0] sm:$0xff]
                  %518 = vst [vmem:[%s390 + $0x658] sm:$0xff] %v517
                  %v519 = vld [vmem:[%s389 + $0xc40] sm:$0xff]
                  %520 = vst [vmem:[%s390 + $0x700] sm:$0xff] %v519
                  %v521 = vld [vmem:[%s389 + $0xc48] sm:$0xff]
                  %522 = vst [vmem:[%s390 + $0x708] sm:$0xff] %v521
                  %v523 = vld [vmem:[%s389 + $0xc50] sm:$0xff]
                  %524 = vst [vmem:[%s390 + $0x710] sm:$0xff] %v523
                  %v525 = vld [vmem:[%s389 + $0xc58] sm:$0xff]
                  %526 = vst [vmem:[%s390 + $0x718] sm:$0xff] %v525
                  %v527 = vld [vmem:[%s389 + $0xc60] sm:$0xff]
                  %528 = vst [vmem:[%s390 + $0x720] sm:$0xff] %v527
                  %v529 = vld [vmem:[%s389 + $0xc68] sm:$0xff]
                  %530 = vst [vmem:[%s390 + $0x728] sm:$0xff] %v529
                  %v531 = vld [vmem:[%s389 + $0xc70] sm:$0xff]
                  %532 = vst [vmem:[%s390 + $0x730] sm:$0xff] %v531
                  %v533 = vld [vmem:[%s389 + $0xc78] sm:$0xff]
                  %534 = vst [vmem:[%s390 + $0x738] sm:$0xff] %v533
                  %s535 = sadd.s32 1, %s388
                  %p536 = scmp.ge.s32.totalorder %s535, %s381
                  %s537 = scalar_select %p536, 0, %s535
                  %s538 = smul.u32 %s537, 64
                  %s539 = smul.u32 %s537, 64
                  %s540 = scalar_lea.vmem %s167, %s538
                  %s541 = scalar_lea.vmem %s159, %s539 [#allocation2]
                $region67: #{x_model_forward.12} parent=61 // loop_footer
                  %s385 = sadd.s32 %s383, 1
                $region68: #{x_model_forward.12} parent=61 // loop_footer_branch
                  %382 = sbr.rel target = $region64
                $region69: #{x_model_forward.12} parent=61 // loop_exit
                  _
                %s542 = sshrl.u32 %s163, 3
                %s543 = sand.u32 %s163, 7
                %s544 = smul.u32 %s542, 8
                %s545 = smul.u32 8, %s544
                %s546 = scalar_lea.vmem %s167, %s545
                %s547 = smul.u32 8, %s544
                %s548 = scalar_lea.vmem %s159, %s547 [#allocation2]
                // While loop
                $region70: #{x_model_forward.12} parent=61 // loop_pre_header
                  _
                $region71: #{x_model_forward.12} parent=61 // loop_header
                  %s550 = sphi 0, %s552
                  %p551 = scmp.ge.s32.totalorder %s550, %s543
                  %s555 = sphi 0, %s578
                  %s556 = sphi %s546, %s581
                  %s557 = sphi %s548, %s582
                $region72: #{x_model_forward.12} parent=61 // loop_header_branch
                  %554 = sbr.rel (%p551) target = $region76
                $region73: #{x_model_forward.12} parent=61 // loop_body
                  %v558 = vld [vmem:[%s556] sm:$0xff]
                  %559 = vst [vmem:[%s557] sm:$0xff] %v558
                  %v560 = vld [vmem:[%s556 + $0x188] sm:$0xff]
                  %561 = vst [vmem:[%s557 + $0xe0] sm:$0xff] %v560
                  %v562 = vld [vmem:[%s556 + $0x310] sm:$0xff]
                  %563 = vst [vmem:[%s557 + $0x1c0] sm:$0xff] %v562
                  %v564 = vld [vmem:[%s556 + $0x498] sm:$0xff]
                  %565 = vst [vmem:[%s557 + $0x2a0] sm:$0xff] %v564
                  %v566 = vld [vmem:[%s556 + $0x620] sm:$0xff]
                  %567 = vst [vmem:[%s557 + $0x380] sm:$0xff] %v566
                  %v568 = vld [vmem:[%s556 + $0x7a8] sm:$0xff]
                  %569 = vst [vmem:[%s557 + $0x460] sm:$0xff] %v568
                  %v570 = vld [vmem:[%s556 + $0x930] sm:$0xff]
                  %571 = vst [vmem:[%s557 + $0x540] sm:$0xff] %v570
                  %v572 = vld [vmem:[%s556 + $0xab8] sm:$0xff]
                  %573 = vst [vmem:[%s557 + $0x620] sm:$0xff] %v572
                  %v574 = vld [vmem:[%s556 + $0xc40] sm:$0xff]
                  %575 = vst [vmem:[%s557 + $0x700] sm:$0xff] %v574
                  %s576 = sadd.s32 1, %s555
                  %p577 = scmp.ge.s32.totalorder %s576, %s543
                  %s578 = scalar_select %p577, 0, %s576
                  %s579 = smul.u32 %s578, 8
                  %s580 = smul.u32 %s578, 8
                  %s581 = scalar_lea.vmem %s546, %s579
                  %s582 = scalar_lea.vmem %s548, %s580 [#allocation2]
                $region74: #{x_model_forward.12} parent=61 // loop_footer
                  %s552 = sadd.s32 %s550, 1
                $region75: #{x_model_forward.12} parent=61 // loop_footer_branch
                  %549 = sbr.rel target = $region71
                $region76: #{x_model_forward.12} parent=61 // loop_exit
                  _
              $region62: #{x_model_forward.12} parent=39 // pred_fallthru
                _
              // Predicated region
              $region77: #{x_model_forward.12} parent=39 // pred_check
                _
              $region78: #{x_model_forward.12} parent=39 // pred_check_branch
                %584 = sbr.rel target = $region80
              $region79: #{x_model_forward.12} parent=39 // pred_region
                _
              $region80: #{x_model_forward.12} parent=39 // pred_fallthru
                _
            $region40: #{x_model_forward.12} parent=35 // pred_fallthru
              _
            // Predicated region
            $region41: #{x_model_forward.12} parent=35 // pred_check
              _
            $region42: #{x_model_forward.12} parent=35 // pred_check_branch
              %174 = sbr.rel target = $region44
            $region43: #{x_model_forward.12} parent=35 // pred_region
              %s176 = ssub.s32 256, 1
              %s177 = sshrl.u32 %s163, 3
              // While loop
              $region45: #{x_model_forward.12} parent=43 // loop_pre_header
                _
              $region46: #{x_model_forward.12} parent=43 // loop_header
                %s179 = sphi 0, %s181
                %p180 = scmp.ge.s32.totalorder %s179, %s177
                %s184 = sphi 0, %s333
                %s185 = sphi %s167, %s336
                %s186 = sphi %s159, %s337
              $region47: #{x_model_forward.12} parent=43 // loop_header_branch
                %183 = sbr.rel (%p180) target = $region51
              $region48: #{x_model_forward.12} parent=43 // loop_body
                %v187 = vld [vmem:[%s185] sm:%s176]
                %188 = vst [vmem:[%s186] sm:%s176] %v187
                %v189 = vld [vmem:[%s185 + $0x8] sm:%s176]
                %190 = vst [vmem:[%s186 + $0x8] sm:%s176] %v189
                %v191 = vld [vmem:[%s185 + $0x10] sm:%s176]
                %192 = vst [vmem:[%s186 + $0x10] sm:%s176] %v191
                %v193 = vld [vmem:[%s185 + $0x18] sm:%s176]
                %194 = vst [vmem:[%s186 + $0x18] sm:%s176] %v193
                %v195 = vld [vmem:[%s185 + $0x20] sm:%s176]
                %196 = vst [vmem:[%s186 + $0x20] sm:%s176] %v195
                %v197 = vld [vmem:[%s185 + $0x28] sm:%s176]
                %198 = vst [vmem:[%s186 + $0x28] sm:%s176] %v197
                %v199 = vld [vmem:[%s185 + $0x30] sm:%s176]
                %200 = vst [vmem:[%s186 + $0x30] sm:%s176] %v199
                %v201 = vld [vmem:[%s185 + $0x38] sm:%s176]
                %202 = vst [vmem:[%s186 + $0x38] sm:%s176] %v201
                %v203 = vld [vmem:[%s185 + $0x188] sm:%s176]
                %204 = vst [vmem:[%s186 + $0xe0] sm:%s176] %v203
                %v205 = vld [vmem:[%s185 + $0x190] sm:%s176]
                %206 = vst [vmem:[%s186 + $0xe8] sm:%s176] %v205
                %v207 = vld [vmem:[%s185 + $0x198] sm:%s176]
                %208 = vst [vmem:[%s186 + $0xf0] sm:%s176] %v207
                %v209 = vld [vmem:[%s185 + $0x1a0] sm:%s176]
                %210 = vst [vmem:[%s186 + $0xf8] sm:%s176] %v209
                %v211 = vld [vmem:[%s185 + $0x1a8] sm:%s176]
                %212 = vst [vmem:[%s186 + $0x100] sm:%s176] %v211
                %v213 = vld [vmem:[%s185 + $0x1b0] sm:%s176]
                %214 = vst [vmem:[%s186 + $0x108] sm:%s176] %v213
                %v215 = vld [vmem:[%s185 + $0x1b8] sm:%s176]
                %216 = vst [vmem:[%s186 + $0x110] sm:%s176] %v215
                %v217 = vld [vmem:[%s185 + $0x1c0] sm:%s176]
                %218 = vst [vmem:[%s186 + $0x118] sm:%s176] %v217
                %v219 = vld [vmem:[%s185 + $0x310] sm:%s176]
                %220 = vst [vmem:[%s186 + $0x1c0] sm:%s176] %v219
                %v221 = vld [vmem:[%s185 + $0x318] sm:%s176]
                %222 = vst [vmem:[%s186 + $0x1c8] sm:%s176] %v221
                %v223 = vld [vmem:[%s185 + $0x320] sm:%s176]
                %224 = vst [vmem:[%s186 + $0x1d0] sm:%s176] %v223
                %v225 = vld [vmem:[%s185 + $0x328] sm:%s176]
                %226 = vst [vmem:[%s186 + $0x1d8] sm:%s176] %v225
                %v227 = vld [vmem:[%s185 + $0x330] sm:%s176]
                %228 = vst [vmem:[%s186 + $0x1e0] sm:%s176] %v227
                %v229 = vld [vmem:[%s185 + $0x338] sm:%s176]
                %230 = vst [vmem:[%s186 + $0x1e8] sm:%s176] %v229
                %v231 = vld [vmem:[%s185 + $0x340] sm:%s176]
                %232 = vst [vmem:[%s186 + $0x1f0] sm:%s176] %v231
                %v233 = vld [vmem:[%s185 + $0x348] sm:%s176]
                %234 = vst [vmem:[%s186 + $0x1f8] sm:%s176] %v233
                %v235 = vld [vmem:[%s185 + $0x498] sm:%s176]
                %236 = vst [vmem:[%s186 + $0x2a0] sm:%s176] %v235
                %v237 = vld [vmem:[%s185 + $0x4a0] sm:%s176]
                %238 = vst [vmem:[%s186 + $0x2a8] sm:%s176] %v237
                %v239 = vld [vmem:[%s185 + $0x4a8] sm:%s176]
                %240 = vst [vmem:[%s186 + $0x2b0] sm:%s176] %v239
                %v241 = vld [vmem:[%s185 + $0x4b0] sm:%s176]
                %242 = vst [vmem:[%s186 + $0x2b8] sm:%s176] %v241
                %v243 = vld [vmem:[%s185 + $0x4b8] sm:%s176]
                %244 = vst [vmem:[%s186 + $0x2c0] sm:%s176] %v243
                %v245 = vld [vmem:[%s185 + $0x4c0] sm:%s176]
                %246 = vst [vmem:[%s186 + $0x2c8] sm:%s176] %v245
                %v247 = vld [vmem:[%s185 + $0x4c8] sm:%s176]
                %248 = vst [vmem:[%s186 + $0x2d0] sm:%s176] %v247
                %v249 = vld [vmem:[%s185 + $0x4d0] sm:%s176]
                %250 = vst [vmem:[%s186 + $0x2d8] sm:%s176] %v249
                %v251 = vld [vmem:[%s185 + $0x620] sm:%s176]
                %252 = vst [vmem:[%s186 + $0x380] sm:%s176] %v251
                %v253 = vld [vmem:[%s185 + $0x628] sm:%s176]
                %254 = vst [vmem:[%s186 + $0x388] sm:%s176] %v253
                %v255 = vld [vmem:[%s185 + $0x630] sm:%s176]
                %256 = vst [vmem:[%s186 + $0x390] sm:%s176] %v255
                %v257 = vld [vmem:[%s185 + $0x638] sm:%s176]
                %258 = vst [vmem:[%s186 + $0x398] sm:%s176] %v257
                %v259 = vld [vmem:[%s185 + $0x640] sm:%s176]
                %260 = vst [vmem:[%s186 + $0x3a0] sm:%s176] %v259
                %v261 = vld [vmem:[%s185 + $0x648] sm:%s176]
                %262 = vst [vmem:[%s186 + $0x3a8] sm:%s176] %v261
                %v263 = vld [vmem:[%s185 + $0x650] sm:%s176]
                %264 = vst [vmem:[%s186 + $0x3b0] sm:%s176] %v263
                %v265 = vld [vmem:[%s185 + $0x658] sm:%s176]
                %266 = vst [vmem:[%s186 + $0x3b8] sm:%s176] %v265
                %v267 = vld [vmem:[%s185 + $0x7a8] sm:%s176]
                %268 = vst [vmem:[%s186 + $0x460] sm:%s176] %v267
                %v269 = vld [vmem:[%s185 + $0x7b0] sm:%s176]
                %270 = vst [vmem:[%s186 + $0x468] sm:%s176] %v269
                %v271 = vld [vmem:[%s185 + $0x7b8] sm:%s176]
                %272 = vst [vmem:[%s186 + $0x470] sm:%s176] %v271
                %v273 = vld [vmem:[%s185 + $0x7c0] sm:%s176]
                %274 = vst [vmem:[%s186 + $0x478] sm:%s176] %v273
                %v275 = vld [vmem:[%s185 + $0x7c8] sm:%s176]
                %276 = vst [vmem:[%s186 + $0x480] sm:%s176] %v275
                %v277 = vld [vmem:[%s185 + $0x7d0] sm:%s176]
                %278 = vst [vmem:[%s186 + $0x488] sm:%s176] %v277
                %v279 = vld [vmem:[%s185 + $0x7d8] sm:%s176]
                %280 = vst [vmem:[%s186 + $0x490] sm:%s176] %v279
                %v281 = vld [vmem:[%s185 + $0x7e0] sm:%s176]
                %282 = vst [vmem:[%s186 + $0x498] sm:%s176] %v281
                %v283 = vld [vmem:[%s185 + $0x930] sm:%s176]
                %284 = vst [vmem:[%s186 + $0x540] sm:%s176] %v283
                %v285 = vld [vmem:[%s185 + $0x938] sm:%s176]
                %286 = vst [vmem:[%s186 + $0x548] sm:%s176] %v285
                %v287 = vld [vmem:[%s185 + $0x940] sm:%s176]
                %288 = vst [vmem:[%s186 + $0x550] sm:%s176] %v287
                %v289 = vld [vmem:[%s185 + $0x948] sm:%s176]
                %290 = vst [vmem:[%s186 + $0x558] sm:%s176] %v289
                %v291 = vld [vmem:[%s185 + $0x950] sm:%s176]
                %292 = vst [vmem:[%s186 + $0x560] sm:%s176] %v291
                %v293 = vld [vmem:[%s185 + $0x958] sm:%s176]
                %294 = vst [vmem:[%s186 + $0x568] sm:%s176] %v293
                %v295 = vld [vmem:[%s185 + $0x960] sm:%s176]
                %296 = vst [vmem:[%s186 + $0x570] sm:%s176] %v295
                %v297 = vld [vmem:[%s185 + $0x968] sm:%s176]
                %298 = vst [vmem:[%s186 + $0x578] sm:%s176] %v297
                %v299 = vld [vmem:[%s185 + $0xab8] sm:%s176]
                %300 = vst [vmem:[%s186 + $0x620] sm:%s176] %v299
                %v301 = vld [vmem:[%s185 + $0xac0] sm:%s176]
                %302 = vst [vmem:[%s186 + $0x628] sm:%s176] %v301
                %v303 = vld [vmem:[%s185 + $0xac8] sm:%s176]
                %304 = vst [vmem:[%s186 + $0x630] sm:%s176] %v303
                %v305 = vld [vmem:[%s185 + $0xad0] sm:%s176]
                %306 = vst [vmem:[%s186 + $0x638] sm:%s176] %v305
                %v307 = vld [vmem:[%s185 + $0xad8] sm:%s176]
                %308 = vst [vmem:[%s186 + $0x640] sm:%s176] %v307
                %v309 = vld [vmem:[%s185 + $0xae0] sm:%s176]
                %310 = vst [vmem:[%s186 + $0x648] sm:%s176] %v309
                %v311 = vld [vmem:[%s185 + $0xae8] sm:%s176]
                %312 = vst [vmem:[%s186 + $0x650] sm:%s176] %v311
                %v313 = vld [vmem:[%s185 + $0xaf0] sm:%s176]
                %314 = vst [vmem:[%s186 + $0x658] sm:%s176] %v313
                %v315 = vld [vmem:[%s185 + $0xc40] sm:%s176]
                %316 = vst [vmem:[%s186 + $0x700] sm:%s176] %v315
                %v317 = vld [vmem:[%s185 + $0xc48] sm:%s176]
                %318 = vst [vmem:[%s186 + $0x708] sm:%s176] %v317
                %v319 = vld [vmem:[%s185 + $0xc50] sm:%s176]
                %320 = vst [vmem:[%s186 + $0x710] sm:%s176] %v319
                %v321 = vld [vmem:[%s185 + $0xc58] sm:%s176]
                %322 = vst [vmem:[%s186 + $0x718] sm:%s176] %v321
                %v323 = vld [vmem:[%s185 + $0xc60] sm:%s176]
                %324 = vst [vmem:[%s186 + $0x720] sm:%s176] %v323
                %v325 = vld [vmem:[%s185 + $0xc68] sm:%s176]
                %326 = vst [vmem:[%s186 + $0x728] sm:%s176] %v325
                %v327 = vld [vmem:[%s185 + $0xc70] sm:%s176]
                %328 = vst [vmem:[%s186 + $0x730] sm:%s176] %v327
                %v329 = vld [vmem:[%s185 + $0xc78] sm:%s176]
                %330 = vst [vmem:[%s186 + $0x738] sm:%s176] %v329
                %s331 = sadd.s32 1, %s184
                %p332 = scmp.ge.s32.totalorder %s331, %s177
                %s333 = scalar_select %p332, 0, %s331
                %s334 = smul.u32 %s333, 64
                %s335 = smul.u32 %s333, 64
                %s336 = scalar_lea.vmem %s167, %s334
                %s337 = scalar_lea.vmem %s159, %s335 [#allocation2]
              $region49: #{x_model_forward.12} parent=43 // loop_footer
                %s181 = sadd.s32 %s179, 1
              $region50: #{x_model_forward.12} parent=43 // loop_footer_branch
                %178 = sbr.rel target = $region46
              $region51: #{x_model_forward.12} parent=43 // loop_exit
                _
              %s338 = sshrl.u32 %s163, 3
              %s339 = sand.u32 %s163, 7
              %s340 = smul.u32 %s338, 8
              %s341 = smul.u32 8, %s340
              %s342 = scalar_lea.vmem %s167, %s341
              %s343 = smul.u32 8, %s340
              %s344 = scalar_lea.vmem %s159, %s343 [#allocation2]
              // While loop
              $region52: #{x_model_forward.12} parent=43 // loop_pre_header
                _
              $region53: #{x_model_forward.12} parent=43 // loop_header
                %s346 = sphi 0, %s348
                %p347 = scmp.ge.s32.totalorder %s346, %s339
                %s351 = sphi 0, %s374
                %s352 = sphi %s342, %s377
                %s353 = sphi %s344, %s378
              $region54: #{x_model_forward.12} parent=43 // loop_header_branch
                %350 = sbr.rel (%p347) target = $region58
              $region55: #{x_model_forward.12} parent=43 // loop_body
                %v354 = vld [vmem:[%s352] sm:%s176]
                %355 = vst [vmem:[%s353] sm:%s176] %v354
                %v356 = vld [vmem:[%s352 + $0x188] sm:%s176]
                %357 = vst [vmem:[%s353 + $0xe0] sm:%s176] %v356
                %v358 = vld [vmem:[%s352 + $0x310] sm:%s176]
                %359 = vst [vmem:[%s353 + $0x1c0] sm:%s176] %v358
                %v360 = vld [vmem:[%s352 + $0x498] sm:%s176]
                %361 = vst [vmem:[%s353 + $0x2a0] sm:%s176] %v360
                %v362 = vld [vmem:[%s352 + $0x620] sm:%s176]
                %363 = vst [vmem:[%s353 + $0x380] sm:%s176] %v362
                %v364 = vld [vmem:[%s352 + $0x7a8] sm:%s176]
                %365 = vst [vmem:[%s353 + $0x460] sm:%s176] %v364
                %v366 = vld [vmem:[%s352 + $0x930] sm:%s176]
                %367 = vst [vmem:[%s353 + $0x540] sm:%s176] %v366
                %v368 = vld [vmem:[%s352 + $0xab8] sm:%s176]
                %369 = vst [vmem:[%s353 + $0x620] sm:%s176] %v368
                %v370 = vld [vmem:[%s352 + $0xc40] sm:%s176]
                %371 = vst [vmem:[%s353 + $0x700] sm:%s176] %v370
                %s372 = sadd.s32 1, %s351
                %p373 = scmp.ge.s32.totalorder %s372, %s339
                %s374 = scalar_select %p373, 0, %s372
                %s375 = smul.u32 %s374, 8
                %s376 = smul.u32 %s374, 8
                %s377 = scalar_lea.vmem %s342, %s375
                %s378 = scalar_lea.vmem %s344, %s376 [#allocation2]
              $region56: #{x_model_forward.12} parent=43 // loop_footer
                %s348 = sadd.s32 %s346, 1
              $region57: #{x_model_forward.12} parent=43 // loop_footer_branch
                %345 = sbr.rel target = $region53
              $region58: #{x_model_forward.12} parent=43 // loop_exit
                _
            $region44: #{x_model_forward.12} parent=35 // pred_fallthru
              _
          $region36: #{x_model_forward.12} parent=31 // pred_fallthru
            _
          %585 = vnop
        $region32: #{x_model_forward.12} parent=27 // pred_fallthru
          _
      $region28: #{x_model_forward.12} parent=5 // pred_fallthru
        _
      %p586 = scmp.le.s32.totalorder 1, %s10
      %p587 = scmp.lt.s32.totalorder %s10, 3
      %p588 = pnand %p586, %p587
      %p589 = pneg %p588
      // Predicated region
      $region81: #{x_model_forward.12} parent=5 // pred_check
        _
      $region82: #{x_model_forward.12} parent=5 // pred_check_branch
        %591 = sbr.rel (%p588) target = $region84
      $region83: #{x_model_forward.12} parent=5 // pred_region
        %s592 = ssub.s32 %s10, 1
        %s593 = sand.u32 %s23, 1
        %s594 = sand.u32 %s23, 1
        %s595 = smul.addr %s594, 2016
        %s596 = scalar_lea.vmem [#allocation2], %s595
        // Predicated region
        $region85: #{x_model_forward.12} parent=83 // pred_check
          %p597 = pneg %p36
        $region86: #{x_model_forward.12} parent=83 // pred_check_branch
          %599 = sbr.rel (%p597) target = $region88
        $region87: #{x_model_forward.12} parent=83 // pred_region
          _
        $region88: #{x_model_forward.12} parent=83 // pred_fallthru
          _
        %s600 = sand.u32 %s23, 1
        %s601 = sand.u32 %s23, 1
        %s602 = smul.addr %s601, 2016
        %s603 = scalar_lea.vmem [#allocation2], %s602
        %p604 = pneg %p36
        %p605 = pneg %p33
        %p606 = pneg %p57
        %p607 = pneg %p54
        %p608 = pneg %p78
        %p609 = pneg %p75
        %p610 = pneg %p99
        %p611 = pneg %p96
        %p612 = pneg %p125
        %p613 = pneg %p122
        %s614 = sand.u32 %s112, 1
        %s615 = sand.u32 %s112, 1
        %s616 = smul.addr %s615, 224
        %s617 = scalar_lea.vmem [#allocation3], %s616
        %s618 = smul.u32 28, %s15
        %s619 = ssub.s32 49, %s618
        %p620 = scmp.lt.s32.totalorder %s619, 28
        %s621 = scalar_select %p620, %s619, 28
        %s622 = smul.u32 1152, %s621
        %s623 = smul.u32 28, %s15
        %s624 = ssub.s32 49, %s623
        %p625 = scmp.lt.s32.totalorder %s624, 28
        %s626 = scalar_select %p625, %s624, 28
        %s627 = smul.u32 128, %s626
        %v628 = vld [vmem:[%s596] sm:$0xff]
        %v629 = vld [vmem:[%s596 + $0x8] sm:$0xff]
        %v630 = vld [vmem:[%s596 + $0x10] sm:$0xff]
        %v631 = vld [vmem:[%s596 + $0x18] sm:$0xff]
        %v632 = vld [vmem:[%s596 + $0x20] sm:$0xff]
        %v633 = vld [vmem:[%s596 + $0x28] sm:$0xff]
        %v634 = vld [vmem:[%s596 + $0x30] sm:$0xff]
        %v635 = vld [vmem:[%s596 + $0x38] sm:$0xff]
        %v636 = vld [vmem:[%s596 + $0x40] sm:$0xff]
        %v637 = vld [vmem:[%s596 + $0x48] sm:$0xff]
        %v638 = vld [vmem:[%s596 + $0x50] sm:$0xff]
        %v639 = vld [vmem:[%s596 + $0x58] sm:$0xff]
        %v640 = vld [vmem:[%s596 + $0x60] sm:$0xff]
        %v641 = vld [vmem:[%s596 + $0x68] sm:$0xff]
        %v642 = vld [vmem:[%s596 + $0x70] sm:$0xff]
        %v643 = vld [vmem:[%s596 + $0x78] sm:$0xff]
        %v644 = vld [vmem:[%s596 + $0x80] sm:$0xff]
        %v645 = vld [vmem:[%s596 + $0x88] sm:$0xff]
        %v646 = vld [vmem:[%s596 + $0x90] sm:$0xff]
        %v647 = vld [vmem:[%s596 + $0x98] sm:$0xff]
        %v648 = vld [vmem:[%s596 + $0xa0] sm:$0xff]
        %v649 = vld [vmem:[%s596 + $0xa8] sm:$0xff]
        %v650 = vld [vmem:[%s596 + $0xb0] sm:$0xff]
        %v651 = vld [vmem:[%s596 + $0xb8] sm:$0xff]
        %v652 = vld [vmem:[%s596 + $0xc0] sm:$0xff]
        %v653 = vld [vmem:[%s596 + $0xc8] sm:$0xff]
        %v654 = vld [vmem:[%s596 + $0xd0] sm:$0xff]
        %v655 = vld [vmem:[%s596 + $0xd8] sm:$0xff]
        %s656 = scalar_lea.vmem %s596, 224 [#allocation2]
        %v657 = vld [vmem:[%s656] sm:$0xff]
        %v658 = vld [vmem:[%s656 + $0x8] sm:$0xff]
        %v659 = vld [vmem:[%s656 + $0x10] sm:$0xff]
        %v660 = vld [vmem:[%s656 + $0x18] sm:$0xff]
        %v661 = vld [vmem:[%s656 + $0x20] sm:$0xff]
        %v662 = vld [vmem:[%s656 + $0x28] sm:$0xff]
        %v663 = vld [vmem:[%s656 + $0x30] sm:$0xff]
        %v664 = vld [vmem:[%s656 + $0x38] sm:$0xff]
        %v665 = vld [vmem:[%s656 + $0x40] sm:$0xff]
        %v666 = vld [vmem:[%s656 + $0x48] sm:$0xff]
        %v667 = vld [vmem:[%s656 + $0x50] sm:$0xff]
        %v668 = vld [vmem:[%s656 + $0x58] sm:$0xff]
        %v669 = vld [vmem:[%s656 + $0x60] sm:$0xff]
        %v670 = vld [vmem:[%s656 + $0x68] sm:$0xff]
        %v671 = vld [vmem:[%s656 + $0x70] sm:$0xff]
        %v672 = vld [vmem:[%s656 + $0x78] sm:$0xff]
        %v673 = vld [vmem:[%s656 + $0x80] sm:$0xff]
        %v674 = vld [vmem:[%s656 + $0x88] sm:$0xff]
        %v675 = vld [vmem:[%s656 + $0x90] sm:$0xff]
        %v676 = vld [vmem:[%s656 + $0x98] sm:$0xff]
        %v677 = vld [vmem:[%s656 + $0xa0] sm:$0xff]
        %v678 = vld [vmem:[%s656 + $0xa8] sm:$0xff]
        %v679 = vld [vmem:[%s656 + $0xb0] sm:$0xff]
        %v680 = vld [vmem:[%s656 + $0xb8] sm:$0xff]
        %v681 = vld [vmem:[%s656 + $0xc0] sm:$0xff]
        %v682 = vld [vmem:[%s656 + $0xc8] sm:$0xff]
        %v683 = vld [vmem:[%s656 + $0xd0] sm:$0xff]
        %v684 = vld [vmem:[%s656 + $0xd8] sm:$0xff]
        %v685 = vmax.f32 %v628, %v657
        %v686 = vmax.f32 %v629, %v658
        %v687 = vmax.f32 %v630, %v659
        %v688 = vmax.f32 %v631, %v660
        %v689 = vmax.f32 %v632, %v661
        %v690 = vmax.f32 %v633, %v662
        %v691 = vmax.f32 %v634, %v663
        %v692 = vmax.f32 %v635, %v664
        %v693 = vmax.f32 %v636, %v665
        %v694 = vmax.f32 %v637, %v666
        %v695 = vmax.f32 %v638, %v667
        %v696 = vmax.f32 %v639, %v668
        %v697 = vmax.f32 %v640, %v669
        %v698 = vmax.f32 %v641, %v670
        %v699 = vmax.f32 %v642, %v671
        %v700 = vmax.f32 %v643, %v672
        %v701 = vmax.f32 %v644, %v673
        %v702 = vmax.f32 %v645, %v674
        %v703 = vmax.f32 %v646, %v675
        %v704 = vmax.f32 %v647, %v676
        %v705 = vmax.f32 %v648, %v677
        %v706 = vmax.f32 %v649, %v678
        %v707 = vmax.f32 %v650, %v679
        %v708 = vmax.f32 %v651, %v680
        %v709 = vmax.f32 %v652, %v681
        %v710 = vmax.f32 %v653, %v682
        %v711 = vmax.f32 %v654, %v683
        %v712 = vmax.f32 %v655, %v684
        %s713 = scalar_lea.vmem %s596, 448 [#allocation2]
        %v714 = vld [vmem:[%s713] sm:$0xff]
        %v715 = vld [vmem:[%s713 + $0x8] sm:$0xff]
        %v716 = vld [vmem:[%s713 + $0x10] sm:$0xff]
        %v717 = vld [vmem:[%s713 + $0x18] sm:$0xff]
        %v718 = vld [vmem:[%s713 + $0x20] sm:$0xff]
        %v719 = vld [vmem:[%s713 + $0x28] sm:$0xff]
        %v720 = vld [vmem:[%s713 + $0x30] sm:$0xff]
        %v721 = vld [vmem:[%s713 + $0x38] sm:$0xff]
        %v722 = vld [vmem:[%s713 + $0x40] sm:$0xff]
        %v723 = vld [vmem:[%s713 + $0x48] sm:$0xff]
        %v724 = vld [vmem:[%s713 + $0x50] sm:$0xff]
        %v725 = vld [vmem:[%s713 + $0x58] sm:$0xff]
        %v726 = vld [vmem:[%s713 + $0x60] sm:$0xff]
        %v727 = vld [vmem:[%s713 + $0x68] sm:$0xff]
        %v728 = vld [vmem:[%s713 + $0x70] sm:$0xff]
        %v729 = vld [vmem:[%s713 + $0x78] sm:$0xff]
        %v730 = vld [vmem:[%s713 + $0x80] sm:$0xff]
        %v731 = vld [vmem:[%s713 + $0x88] sm:$0xff]
        %v732 = vld [vmem:[%s713 + $0x90] sm:$0xff]
        %v733 = vld [vmem:[%s713 + $0x98] sm:$0xff]
        %v734 = vld [vmem:[%s713 + $0xa0] sm:$0xff]
        %v735 = vld [vmem:[%s713 + $0xa8] sm:$0xff]
        %v736 = vld [vmem:[%s713 + $0xb0] sm:$0xff]
        %v737 = vld [vmem:[%s713 + $0xb8] sm:$0xff]
        %v738 = vld [vmem:[%s713 + $0xc0] sm:$0xff]
        %v739 = vld [vmem:[%s713 + $0xc8] sm:$0xff]
        %v740 = vld [vmem:[%s713 + $0xd0] sm:$0xff]
        %v741 = vld [vmem:[%s713 + $0xd8] sm:$0xff]
        %v742 = vmax.f32 %v685, %v714
        %v743 = vmax.f32 %v686, %v715
        %v744 = vmax.f32 %v687, %v716
        %v745 = vmax.f32 %v688, %v717
        %v746 = vmax.f32 %v689, %v718
        %v747 = vmax.f32 %v690, %v719
        %v748 = vmax.f32 %v691, %v720
        %v749 = vmax.f32 %v692, %v721
        %v750 = vmax.f32 %v693, %v722
        %v751 = vmax.f32 %v694, %v723
        %v752 = vmax.f32 %v695, %v724
        %v753 = vmax.f32 %v696, %v725
        %v754 = vmax.f32 %v697, %v726
        %v755 = vmax.f32 %v698, %v727
        %v756 = vmax.f32 %v699, %v728
        %v757 = vmax.f32 %v700, %v729
        %v758 = vmax.f32 %v701, %v730
        %v759 = vmax.f32 %v702, %v731
        %v760 = vmax.f32 %v703, %v732
        %v761 = vmax.f32 %v704, %v733
        %v762 = vmax.f32 %v705, %v734
        %v763 = vmax.f32 %v706, %v735
        %v764 = vmax.f32 %v707, %v736
        %v765 = vmax.f32 %v708, %v737
        %v766 = vmax.f32 %v709, %v738
        %v767 = vmax.f32 %v710, %v739
        %v768 = vmax.f32 %v711, %v740
        %v769 = vmax.f32 %v712, %v741
        %s770 = scalar_lea.vmem %s596, 672 [#allocation2]
        %v771 = vld [vmem:[%s770] sm:$0xff]
        %v772 = vld [vmem:[%s770 + $0x8] sm:$0xff]
        %v773 = vld [vmem:[%s770 + $0x10] sm:$0xff]
        %v774 = vld [vmem:[%s770 + $0x18] sm:$0xff]
        %v775 = vld [vmem:[%s770 + $0x20] sm:$0xff]
        %v776 = vld [vmem:[%s770 + $0x28] sm:$0xff]
        %v777 = vld [vmem:[%s770 + $0x30] sm:$0xff]
        %v778 = vld [vmem:[%s770 + $0x38] sm:$0xff]
        %v779 = vld [vmem:[%s770 + $0x40] sm:$0xff]
        %v780 = vld [vmem:[%s770 + $0x48] sm:$0xff]
        %v781 = vld [vmem:[%s770 + $0x50] sm:$0xff]
        %v782 = vld [vmem:[%s770 + $0x58] sm:$0xff]
        %v783 = vld [vmem:[%s770 + $0x60] sm:$0xff]
        %v784 = vld [vmem:[%s770 + $0x68] sm:$0xff]
        %v785 = vld [vmem:[%s770 + $0x70] sm:$0xff]
        %v786 = vld [vmem:[%s770 + $0x78] sm:$0xff]
        %v787 = vld [vmem:[%s770 + $0x80] sm:$0xff]
        %v788 = vld [vmem:[%s770 + $0x88] sm:$0xff]
        %v789 = vld [vmem:[%s770 + $0x90] sm:$0xff]
        %v790 = vld [vmem:[%s770 + $0x98] sm:$0xff]
        %v791 = vld [vmem:[%s770 + $0xa0] sm:$0xff]
        %v792 = vld [vmem:[%s770 + $0xa8] sm:$0xff]
        %v793 = vld [vmem:[%s770 + $0xb0] sm:$0xff]
        %v794 = vld [vmem:[%s770 + $0xb8] sm:$0xff]
        %v795 = vld [vmem:[%s770 + $0xc0] sm:$0xff]
        %v796 = vld [vmem:[%s770 + $0xc8] sm:$0xff]
        %v797 = vld [vmem:[%s770 + $0xd0] sm:$0xff]
        %v798 = vld [vmem:[%s770 + $0xd8] sm:$0xff]
        %v799 = vmax.f32 %v742, %v771
        %v800 = vmax.f32 %v743, %v772
        %v801 = vmax.f32 %v744, %v773
        %v802 = vmax.f32 %v745, %v774
        %v803 = vmax.f32 %v746, %v775
        %v804 = vmax.f32 %v747, %v776
        %v805 = vmax.f32 %v748, %v777
        %v806 = vmax.f32 %v749, %v778
        %v807 = vmax.f32 %v750, %v779
        %v808 = vmax.f32 %v751, %v780
        %v809 = vmax.f32 %v752, %v781
        %v810 = vmax.f32 %v753, %v782
        %v811 = vmax.f32 %v754, %v783
        %v812 = vmax.f32 %v755, %v784
        %v813 = vmax.f32 %v756, %v785
        %v814 = vmax.f32 %v757, %v786
        %v815 = vmax.f32 %v758, %v787
        %v816 = vmax.f32 %v759, %v788
        %v817 = vmax.f32 %v760, %v789
        %v818 = vmax.f32 %v761, %v790
        %v819 = vmax.f32 %v762, %v791
        %v820 = vmax.f32 %v763, %v792
        %v821 = vmax.f32 %v764, %v793
        %v822 = vmax.f32 %v765, %v794
        %v823 = vmax.f32 %v766, %v795
        %v824 = vmax.f32 %v767, %v796
        %v825 = vmax.f32 %v768, %v797
        %v826 = vmax.f32 %v769, %v798
        %s827 = scalar_lea.vmem %s596, 896 [#allocation2]
        %v828 = vld [vmem:[%s827] sm:$0xff]
        %v829 = vld [vmem:[%s827 + $0x8] sm:$0xff]
        %v830 = vld [vmem:[%s827 + $0x10] sm:$0xff]
        %v831 = vld [vmem:[%s827 + $0x18] sm:$0xff]
        %v832 = vld [vmem:[%s827 + $0x20] sm:$0xff]
        %v833 = vld [vmem:[%s827 + $0x28] sm:$0xff]
        %v834 = vld [vmem:[%s827 + $0x30] sm:$0xff]
        %v835 = vld [vmem:[%s827 + $0x38] sm:$0xff]
        %v836 = vld [vmem:[%s827 + $0x40] sm:$0xff]
        %v837 = vld [vmem:[%s827 + $0x48] sm:$0xff]
        %v838 = vld [vmem:[%s827 + $0x50] sm:$0xff]
        %v839 = vld [vmem:[%s827 + $0x58] sm:$0xff]
        %v840 = vld [vmem:[%s827 + $0x60] sm:$0xff]
        %v841 = vld [vmem:[%s827 + $0x68] sm:$0xff]
        %v842 = vld [vmem:[%s827 + $0x70] sm:$0xff]
        %v843 = vld [vmem:[%s827 + $0x78] sm:$0xff]
        %v844 = vld [vmem:[%s827 + $0x80] sm:$0xff]
        %v845 = vld [vmem:[%s827 + $0x88] sm:$0xff]
        %v846 = vld [vmem:[%s827 + $0x90] sm:$0xff]
        %v847 = vld [vmem:[%s827 + $0x98] sm:$0xff]
        %v848 = vld [vmem:[%s827 + $0xa0] sm:$0xff]
        %v849 = vld [vmem:[%s827 + $0xa8] sm:$0xff]
        %v850 = vld [vmem:[%s827 + $0xb0] sm:$0xff]
        %v851 = vld [vmem:[%s827 + $0xb8] sm:$0xff]
        %v852 = vld [vmem:[%s827 + $0xc0] sm:$0xff]
        %v853 = vld [vmem:[%s827 + $0xc8] sm:$0xff]
        %v854 = vld [vmem:[%s827 + $0xd0] sm:$0xff]
        %v855 = vld [vmem:[%s827 + $0xd8] sm:$0xff]
        %v856 = vmax.f32 %v799, %v828
        %v857 = vmax.f32 %v800, %v829
        %v858 = vmax.f32 %v801, %v830
        %v859 = vmax.f32 %v802, %v831
        %v860 = vmax.f32 %v803, %v832
        %v861 = vmax.f32 %v804, %v833
        %v862 = vmax.f32 %v805, %v834
        %v863 = vmax.f32 %v806, %v835
        %v864 = vmax.f32 %v807, %v836
        %v865 = vmax.f32 %v808, %v837
        %v866 = vmax.f32 %v809, %v838
        %v867 = vmax.f32 %v810, %v839
        %v868 = vmax.f32 %v811, %v840
        %v869 = vmax.f32 %v812, %v841
        %v870 = vmax.f32 %v813, %v842
        %v871 = vmax.f32 %v814, %v843
        %v872 = vmax.f32 %v815, %v844
        %v873 = vmax.f32 %v816, %v845
        %v874 = vmax.f32 %v817, %v846
        %v875 = vmax.f32 %v818, %v847
        %v876 = vmax.f32 %v819, %v848
        %v877 = vmax.f32 %v820, %v849
        %v878 = vmax.f32 %v821, %v850
        %v879 = vmax.f32 %v822, %v851
        %v880 = vmax.f32 %v823, %v852
        %v881 = vmax.f32 %v824, %v853
        %v882 = vmax.f32 %v825, %v854
        %v883 = vmax.f32 %v826, %v855
        %s884 = scalar_lea.vmem %s596, 1120 [#allocation2]
        %v885 = vld [vmem:[%s884] sm:$0xff]
        %v886 = vld [vmem:[%s884 + $0x8] sm:$0xff]
        %v887 = vld [vmem:[%s884 + $0x10] sm:$0xff]
        %v888 = vld [vmem:[%s884 + $0x18] sm:$0xff]
        %v889 = vld [vmem:[%s884 + $0x20] sm:$0xff]
        %v890 = vld [vmem:[%s884 + $0x28] sm:$0xff]
        %v891 = vld [vmem:[%s884 + $0x30] sm:$0xff]
        %v892 = vld [vmem:[%s884 + $0x38] sm:$0xff]
        %v893 = vld [vmem:[%s884 + $0x40] sm:$0xff]
        %v894 = vld [vmem:[%s884 + $0x48] sm:$0xff]
        %v895 = vld [vmem:[%s884 + $0x50] sm:$0xff]
        %v896 = vld [vmem:[%s884 + $0x58] sm:$0xff]
        %v897 = vld [vmem:[%s884 + $0x60] sm:$0xff]
        %v898 = vld [vmem:[%s884 + $0x68] sm:$0xff]
        %v899 = vld [vmem:[%s884 + $0x70] sm:$0xff]
        %v900 = vld [vmem:[%s884 + $0x78] sm:$0xff]
        %v901 = vld [vmem:[%s884 + $0x80] sm:$0xff]
        %v902 = vld [vmem:[%s884 + $0x88] sm:$0xff]
        %v903 = vld [vmem:[%s884 + $0x90] sm:$0xff]
        %v904 = vld [vmem:[%s884 + $0x98] sm:$0xff]
        %v905 = vld [vmem:[%s884 + $0xa0] sm:$0xff]
        %v906 = vld [vmem:[%s884 + $0xa8] sm:$0xff]
        %v907 = vld [vmem:[%s884 + $0xb0] sm:$0xff]
        %v908 = vld [vmem:[%s884 + $0xb8] sm:$0xff]
        %v909 = vld [vmem:[%s884 + $0xc0] sm:$0xff]
        %v910 = vld [vmem:[%s884 + $0xc8] sm:$0xff]
        %v911 = vld [vmem:[%s884 + $0xd0] sm:$0xff]
        %v912 = vld [vmem:[%s884 + $0xd8] sm:$0xff]
        %v913 = vmax.f32 %v856, %v885
        %v914 = vmax.f32 %v857, %v886
        %v915 = vmax.f32 %v858, %v887
        %v916 = vmax.f32 %v859, %v888
        %v917 = vmax.f32 %v860, %v889
        %v918 = vmax.f32 %v861, %v890
        %v919 = vmax.f32 %v862, %v891
        %v920 = vmax.f32 %v863, %v892
        %v921 = vmax.f32 %v864, %v893
        %v922 = vmax.f32 %v865, %v894
        %v923 = vmax.f32 %v866, %v895
        %v924 = vmax.f32 %v867, %v896
        %v925 = vmax.f32 %v868, %v897
        %v926 = vmax.f32 %v869, %v898
        %v927 = vmax.f32 %v870, %v899
        %v928 = vmax.f32 %v871, %v900
        %v929 = vmax.f32 %v872, %v901
        %v930 = vmax.f32 %v873, %v902
        %v931 = vmax.f32 %v874, %v903
        %v932 = vmax.f32 %v875, %v904
        %v933 = vmax.f32 %v876, %v905
        %v934 = vmax.f32 %v877, %v906
        %v935 = vmax.f32 %v878, %v907
        %v936 = vmax.f32 %v879, %v908
        %v937 = vmax.f32 %v880, %v909
        %v938 = vmax.f32 %v881, %v910
        %v939 = vmax.f32 %v882, %v911
        %v940 = vmax.f32 %v883, %v912
        %s941 = scalar_lea.vmem %s596, 1344 [#allocation2]
        %v942 = vld [vmem:[%s941] sm:$0xff]
        %v943 = vld [vmem:[%s941 + $0x8] sm:$0xff]
        %v944 = vld [vmem:[%s941 + $0x10] sm:$0xff]
        %v945 = vld [vmem:[%s941 + $0x18] sm:$0xff]
        %v946 = vld [vmem:[%s941 + $0x20] sm:$0xff]
        %v947 = vld [vmem:[%s941 + $0x28] sm:$0xff]
        %v948 = vld [vmem:[%s941 + $0x30] sm:$0xff]
        %v949 = vld [vmem:[%s941 + $0x38] sm:$0xff]
        %v950 = vld [vmem:[%s941 + $0x40] sm:$0xff]
        %v951 = vld [vmem:[%s941 + $0x48] sm:$0xff]
        %v952 = vld [vmem:[%s941 + $0x50] sm:$0xff]
        %v953 = vld [vmem:[%s941 + $0x58] sm:$0xff]
        %v954 = vld [vmem:[%s941 + $0x60] sm:$0xff]
        %v955 = vld [vmem:[%s941 + $0x68] sm:$0xff]
        %v956 = vld [vmem:[%s941 + $0x70] sm:$0xff]
        %v957 = vld [vmem:[%s941 + $0x78] sm:$0xff]
        %v958 = vld [vmem:[%s941 + $0x80] sm:$0xff]
        %v959 = vld [vmem:[%s941 + $0x88] sm:$0xff]
        %v960 = vld [vmem:[%s941 + $0x90] sm:$0xff]
        %v961 = vld [vmem:[%s941 + $0x98] sm:$0xff]
        %v962 = vld [vmem:[%s941 + $0xa0] sm:$0xff]
        %v963 = vld [vmem:[%s941 + $0xa8] sm:$0xff]
        %v964 = vld [vmem:[%s941 + $0xb0] sm:$0xff]
        %v965 = vld [vmem:[%s941 + $0xb8] sm:$0xff]
        %v966 = vld [vmem:[%s941 + $0xc0] sm:$0xff]
        %v967 = vld [vmem:[%s941 + $0xc8] sm:$0xff]
        %v968 = vld [vmem:[%s941 + $0xd0] sm:$0xff]
        %v969 = vld [vmem:[%s941 + $0xd8] sm:$0xff]
        %v970 = vmax.f32 %v913, %v942
        %v971 = vmax.f32 %v914, %v943
        %v972 = vmax.f32 %v915, %v944
        %v973 = vmax.f32 %v916, %v945
        %v974 = vmax.f32 %v917, %v946
        %v975 = vmax.f32 %v918, %v947
        %v976 = vmax.f32 %v919, %v948
        %v977 = vmax.f32 %v920, %v949
        %v978 = vmax.f32 %v921, %v950
        %v979 = vmax.f32 %v922, %v951
        %v980 = vmax.f32 %v923, %v952
        %v981 = vmax.f32 %v924, %v953
        %v982 = vmax.f32 %v925, %v954
        %v983 = vmax.f32 %v926, %v955
        %v984 = vmax.f32 %v927, %v956
        %v985 = vmax.f32 %v928, %v957
        %v986 = vmax.f32 %v929, %v958
        %v987 = vmax.f32 %v930, %v959
        %v988 = vmax.f32 %v931, %v960
        %v989 = vmax.f32 %v932, %v961
        %v990 = vmax.f32 %v933, %v962
        %v991 = vmax.f32 %v934, %v963
        %v992 = vmax.f32 %v935, %v964
        %v993 = vmax.f32 %v936, %v965
        %v994 = vmax.f32 %v937, %v966
        %v995 = vmax.f32 %v938, %v967
        %v996 = vmax.f32 %v939, %v968
        %v997 = vmax.f32 %v940, %v969
        %s998 = scalar_lea.vmem %s596, 1568 [#allocation2]
        %v999 = vld [vmem:[%s998] sm:$0xff]
        %v1000 = vld [vmem:[%s998 + $0x8] sm:$0xff]
        %v1001 = vld [vmem:[%s998 + $0x10] sm:$0xff]
        %v1002 = vld [vmem:[%s998 + $0x18] sm:$0xff]
        %v1003 = vld [vmem:[%s998 + $0x20] sm:$0xff]
        %v1004 = vld [vmem:[%s998 + $0x28] sm:$0xff]
        %v1005 = vld [vmem:[%s998 + $0x30] sm:$0xff]
        %v1006 = vld [vmem:[%s998 + $0x38] sm:$0xff]
        %v1007 = vld [vmem:[%s998 + $0x40] sm:$0xff]
        %v1008 = vld [vmem:[%s998 + $0x48] sm:$0xff]
        %v1009 = vld [vmem:[%s998 + $0x50] sm:$0xff]
        %v1010 = vld [vmem:[%s998 + $0x58] sm:$0xff]
        %v1011 = vld [vmem:[%s998 + $0x60] sm:$0xff]
        %v1012 = vld [vmem:[%s998 + $0x68] sm:$0xff]
        %v1013 = vld [vmem:[%s998 + $0x70] sm:$0xff]
        %v1014 = vld [vmem:[%s998 + $0x78] sm:$0xff]
        %v1015 = vld [vmem:[%s998 + $0x80] sm:$0xff]
        %v1016 = vld [vmem:[%s998 + $0x88] sm:$0xff]
        %v1017 = vld [vmem:[%s998 + $0x90] sm:$0xff]
        %v1018 = vld [vmem:[%s998 + $0x98] sm:$0xff]
        %v1019 = vld [vmem:[%s998 + $0xa0] sm:$0xff]
        %v1020 = vld [vmem:[%s998 + $0xa8] sm:$0xff]
        %v1021 = vld [vmem:[%s998 + $0xb0] sm:$0xff]
        %v1022 = vld [vmem:[%s998 + $0xb8] sm:$0xff]
        %v1023 = vld [vmem:[%s998 + $0xc0] sm:$0xff]
        %v1024 = vld [vmem:[%s998 + $0xc8] sm:$0xff]
        %v1025 = vld [vmem:[%s998 + $0xd0] sm:$0xff]
        %v1026 = vld [vmem:[%s998 + $0xd8] sm:$0xff]
        %v1027 = vmax.f32 %v970, %v999
        %v1028 = vmax.f32 %v971, %v1000
        %v1029 = vmax.f32 %v972, %v1001
        %v1030 = vmax.f32 %v973, %v1002
        %v1031 = vmax.f32 %v974, %v1003
        %v1032 = vmax.f32 %v975, %v1004
        %v1033 = vmax.f32 %v976, %v1005
        %v1034 = vmax.f32 %v977, %v1006
        %v1035 = vmax.f32 %v978, %v1007
        %v1036 = vmax.f32 %v979, %v1008
        %v1037 = vmax.f32 %v980, %v1009
        %v1038 = vmax.f32 %v981, %v1010
        %v1039 = vmax.f32 %v982, %v1011
        %v1040 = vmax.f32 %v983, %v1012
        %v1041 = vmax.f32 %v984, %v1013
        %v1042 = vmax.f32 %v985, %v1014
        %v1043 = vmax.f32 %v986, %v1015
        %v1044 = vmax.f32 %v987, %v1016
        %v1045 = vmax.f32 %v988, %v1017
        %v1046 = vmax.f32 %v989, %v1018
        %v1047 = vmax.f32 %v990, %v1019
        %v1048 = vmax.f32 %v991, %v1020
        %v1049 = vmax.f32 %v992, %v1021
        %v1050 = vmax.f32 %v993, %v1022
        %v1051 = vmax.f32 %v994, %v1023
        %v1052 = vmax.f32 %v995, %v1024
        %v1053 = vmax.f32 %v996, %v1025
        %v1054 = vmax.f32 %v997, %v1026
        %s1055 = scalar_lea.vmem %s596, 1792 [#allocation2]
        %v1056 = vld [vmem:[%s1055] sm:$0xff]
        %v1057 = vld [vmem:[%s1055 + $0x8] sm:$0xff]
        %v1058 = vld [vmem:[%s1055 + $0x10] sm:$0xff]
        %v1059 = vld [vmem:[%s1055 + $0x18] sm:$0xff]
        %v1060 = vld [vmem:[%s1055 + $0x20] sm:$0xff]
        %v1061 = vld [vmem:[%s1055 + $0x28] sm:$0xff]
        %v1062 = vld [vmem:[%s1055 + $0x30] sm:$0xff]
        %v1063 = vld [vmem:[%s1055 + $0x38] sm:$0xff]
        %v1064 = vld [vmem:[%s1055 + $0x40] sm:$0xff]
        %v1065 = vld [vmem:[%s1055 + $0x48] sm:$0xff]
        %v1066 = vld [vmem:[%s1055 + $0x50] sm:$0xff]
        %v1067 = vld [vmem:[%s1055 + $0x58] sm:$0xff]
        %v1068 = vld [vmem:[%s1055 + $0x60] sm:$0xff]
        %v1069 = vld [vmem:[%s1055 + $0x68] sm:$0xff]
        %v1070 = vld [vmem:[%s1055 + $0x70] sm:$0xff]
        %v1071 = vld [vmem:[%s1055 + $0x78] sm:$0xff]
        %v1072 = vld [vmem:[%s1055 + $0x80] sm:$0xff]
        %v1073 = vld [vmem:[%s1055 + $0x88] sm:$0xff]
        %v1074 = vld [vmem:[%s1055 + $0x90] sm:$0xff]
        %v1075 = vld [vmem:[%s1055 + $0x98] sm:$0xff]
        %v1076 = vld [vmem:[%s1055 + $0xa0] sm:$0xff]
        %v1077 = vld [vmem:[%s1055 + $0xa8] sm:$0xff]
        %v1078 = vld [vmem:[%s1055 + $0xb0] sm:$0xff]
        %v1079 = vld [vmem:[%s1055 + $0xb8] sm:$0xff]
        %v1080 = vld [vmem:[%s1055 + $0xc0] sm:$0xff]
        %v1081 = vld [vmem:[%s1055 + $0xc8] sm:$0xff]
        %v1082 = vld [vmem:[%s1055 + $0xd0] sm:$0xff]
        %v1083 = vld [vmem:[%s1055 + $0xd8] sm:$0xff]
        %v1084 = vmax.f32 %v1027, %v1056
        %v1085 = vmax.f32 %v1028, %v1057
        %v1086 = vmax.f32 %v1029, %v1058
        %v1087 = vmax.f32 %v1030, %v1059
        %v1088 = vmax.f32 %v1031, %v1060
        %v1089 = vmax.f32 %v1032, %v1061
        %v1090 = vmax.f32 %v1033, %v1062
        %v1091 = vmax.f32 %v1034, %v1063
        %v1092 = vmax.f32 %v1035, %v1064
        %v1093 = vmax.f32 %v1036, %v1065
        %v1094 = vmax.f32 %v1037, %v1066
        %v1095 = vmax.f32 %v1038, %v1067
        %v1096 = vmax.f32 %v1039, %v1068
        %v1097 = vmax.f32 %v1040, %v1069
        %v1098 = vmax.f32 %v1041, %v1070
        %v1099 = vmax.f32 %v1042, %v1071
        %v1100 = vmax.f32 %v1043, %v1072
        %v1101 = vmax.f32 %v1044, %v1073
        %v1102 = vmax.f32 %v1045, %v1074
        %v1103 = vmax.f32 %v1046, %v1075
        %v1104 = vmax.f32 %v1047, %v1076
        %v1105 = vmax.f32 %v1048, %v1077
        %v1106 = vmax.f32 %v1049, %v1078
        %v1107 = vmax.f32 %v1050, %v1079
        %v1108 = vmax.f32 %v1051, %v1080
        %v1109 = vmax.f32 %v1052, %v1081
        %v1110 = vmax.f32 %v1053, %v1082
        %v1111 = vmax.f32 %v1054, %v1083
        %v1112 = vld [vmem:[%s1] sm:$0xff]
        %v1113 = vld [vmem:[%s1 + $0x8] sm:$0xff]
        %v1114 = vmul.f32 %v1084, %v1084
        %v1115 = vmul.f32 %v1085, %v1085
        %v1116 = vmul.f32 %v1086, %v1086
        %v1117 = vmul.f32 %v1087, %v1087
        %v1118 = vmul.f32 %v1088, %v1088
        %v1119 = vmul.f32 %v1089, %v1089
        %v1120 = vmul.f32 %v1090, %v1090
        %v1121 = vmul.f32 %v1091, %v1091
        %v1122 = vmul.f32 %v1092, %v1092
        %v1123 = vmul.f32 %v1093, %v1093
        %v1124 = vmul.f32 %v1094, %v1094
        %v1125 = vmul.f32 %v1095, %v1095
        %v1126 = vmul.f32 %v1096, %v1096
        %v1127 = vmul.f32 %v1097, %v1097
        %v1128 = vmul.f32 %v1098, %v1098
        %v1129 = vmul.f32 %v1099, %v1099
        %v1130 = vmul.f32 %v1100, %v1100
        %v1131 = vmul.f32 %v1101, %v1101
        %v1132 = vmul.f32 %v1102, %v1102
        %v1133 = vmul.f32 %v1103, %v1103
        %v1134 = vmul.f32 %v1104, %v1104
        %v1135 = vmul.f32 %v1105, %v1105
        %v1136 = vmul.f32 %v1106, %v1106
        %v1137 = vmul.f32 %v1107, %v1107
        %v1138 = vmul.f32 %v1108, %v1108
        %v1139 = vmul.f32 %v1109, %v1109
        %v1140 = vmul.f32 %v1110, %v1110
        %v1141 = vmul.f32 %v1111, %v1111
        %vm1142 = vcmask 130048
        %v1144 = vsel %vm1142, %v1114, 0
        %v1147 = vsel %vm1142, %v1115, 0
        %v1150 = vsel %vm1142, %v1116, 0
        %v1153 = vsel %vm1142, %v1117, 0
        %v1156 = vsel %vm1142, %v1118, 0
        %v1159 = vsel %vm1142, %v1119, 0
        %v1162 = vsel %vm1142, %v1120, 0
        %v1165 = vsel %vm1142, %v1121, 0
        %v1168 = vsel %vm1142, %v1122, 0
        %v1171 = vsel %vm1142, %v1123, 0
        %v1174 = vsel %vm1142, %v1124, 0
        %v1177 = vsel %vm1142, %v1125, 0
        %v1180 = vsel %vm1142, %v1126, 0
        %v1183 = vsel %vm1142, %v1127, 0
        %v1186 = vsel %vm1142, %v1128, 0
        %v1189 = vsel %vm1142, %v1129, 0
        %v1192 = vsel %vm1142, %v1130, 0
        %v1195 = vsel %vm1142, %v1131, 0
        %v1198 = vsel %vm1142, %v1132, 0
        %v1201 = vsel %vm1142, %v1133, 0
        %v1204 = vsel %vm1142, %v1134, 0
        %v1207 = vsel %vm1142, %v1135, 0
        %v1210 = vsel %vm1142, %v1136, 0
        %v1213 = vsel %vm1142, %v1137, 0
        %v1216 = vsel %vm1142, %v1138, 0
        %v1219 = vsel %vm1142, %v1139, 0
        %v1222 = vsel %vm1142, %v1140, 0
        %v1225 = vsel %vm1142, %v1141, 0
        %1227 = vmatprep.subr.mxu0 0.0
        %1228 = vmatpush1.msra.mxu0 0.0
        %1229 = vmatprep.subr.mxu0 0.0
        %1230 = vmatpush1.msra.mxu0 0.0
        %1231 = vmatprep.subr.mxu0 0.0
        %1232 = vmatpush1.msra.mxu0 0.0
        %1233 = vmatprep.subr.mxu0 0.0
        %1234 = vmatpush1.msra.mxu0 0.0
        %1235 = vmatprep.subr.mxu0 0.0
        %1236 = vmatpush1.msra.mxu0 0.0
        %1237 = vmatprep.subr.mxu0 0.0
        %1238 = vmatpush1.msra.mxu0 0.0
        %1239 = vmatprep.subr.mxu0 0.0
        %1240 = vmatpush1.msra.mxu0 0.0
        %1241 = vmatprep.subr.mxu0 0.0
        %1242 = vmatpush1.msra.mxu0 0.0
        %1243 = vmatprep.subr.mxu0 0.0
        %1244 = vmatpush1.msra.mxu0 0.0
        %1245 = vmatprep.subr.mxu0 0.0
        %1246 = vmatpush1.msra.mxu0 0.0
        %1247 = vmatprep.subr.mxu0 0.0
        %1248 = vmatpush1.msra.mxu0 0.0
        %1249 = vmatprep.subr.mxu0 0.0
        %1250 = vmatpush1.msra.mxu0 0.0
        %1251 = vmatprep.subr.mxu0 0.0
        %1252 = vmatpush1.msra.mxu0 0.0
        %1253 = vmatprep.subr.mxu0 0.0
        %1254 = vmatpush1.msra.mxu0 0.0
        %1255 = vmatprep.subr.mxu0 0.0
        %1256 = vmatpush1.msra.mxu0 %v1113
        %1257 = vmatprep.subr.mxu0 0.0
        %1258 = vmatpush1.msra.mxu0 %v1112
        %1259 = vmatprep.subr.mxu0 0.0
        %1260 = vmatpush2.msra.mxu0 0.0
        %1261 = vmatprep.subr.mxu0 0.0
        %1262 = vmatpush2.msra.mxu0 0.0
        %1263 = vmatprep.subr.mxu0 0.0
        %1264 = vmatpush2.msra.mxu0 0.0
        %1265 = vmatprep.subr.mxu0 0.0
        %1266 = vmatpush2.msra.mxu0 0.0
        %1267 = vmatprep.subr.mxu0 0.0
        %1268 = vmatpush2.msra.mxu0 0.0
        %1269 = vmatprep.subr.mxu0 0.0
        %1270 = vmatpush2.msra.mxu0 0.0
        %1271 = vmatprep.subr.mxu0 0.0
        %1272 = vmatpush2.msra.mxu0 0.0
        %1273 = vmatprep.subr.mxu0 0.0
        %1274 = vmatpush2.msra.mxu0 0.0
        %1275 = vmatprep.subr.mxu0 0.0
        %1276 = vmatpush2.msra.mxu0 0.0
        %1277 = vmatprep.subr.mxu0 0.0
        %1278 = vmatpush2.msra.mxu0 0.0
        %1279 = vmatprep.subr.mxu0 0.0
        %1280 = vmatpush2.msra.mxu0 0.0
        %1281 = vmatprep.subr.mxu0 0.0
        %1282 = vmatpush2.msra.mxu0 0.0
        %1283 = vmatprep.subr.mxu0 0.0
        %1284 = vmatpush2.msra.mxu0 0.0
        %1285 = vmatprep.subr.mxu0 0.0
        %1286 = vmatpush2.msra.mxu0 0.0
        %1287 = vmatprep.subr.mxu0 0.0
        %1288 = vmatpush2.msra.mxu0 0.0
        %1289 = vmatprep.subr.mxu0 0.0
        %1290 = vmatpush2.msra.mxu0 0.0
        %1291 = vmatprep.mubr.f32.mxu0 0.0
        %1292 = vmatmul.mubr.f32.gmra.mxu0 %v1144
        %v1293 = vpop.f32.mrf.mxu0
        %v1294 = vadd.f32 0.0, %v1293
        %v1295 = vpop.f32.mrf.mxu0
        %1296 = vmatprep.mubr.f32.mxu0 0.0
        %1297 = vmatmul.mubr.f32.gmra.mxu0 %v1147
        %v1298 = vpop.f32.mrf.mxu0
        %v1299 = vadd.f32 0.0, %v1298
        %v1300 = vpop.f32.mrf.mxu0
        %1301 = vmatprep.mubr.f32.mxu0 0.0
        %1302 = vmatmul.mubr.f32.gmra.mxu0 %v1150
        %v1303 = vpop.f32.mrf.mxu0
        %v1304 = vadd.f32 0.0, %v1303
        %v1305 = vpop.f32.mrf.mxu0
        %1306 = vmatprep.mubr.f32.mxu0 0.0
        %1307 = vmatmul.mubr.f32.gmra.mxu0 %v1153
        %v1308 = vpop.f32.mrf.mxu0
        %v1309 = vadd.f32 0.0, %v1308
        %v1310 = vpop.f32.mrf.mxu0
        %1311 = vmatprep.mubr.f32.mxu0 0.0
        %1312 = vmatmul.mubr.f32.gmra.mxu0 %v1156
        %v1313 = vpop.f32.mrf.mxu0
        %v1314 = vadd.f32 0.0, %v1313
        %v1315 = vpop.f32.mrf.mxu0
        %1316 = vmatprep.mubr.f32.mxu0 0.0
        %1317 = vmatmul.mubr.f32.gmra.mxu0 %v1159
        %v1318 = vpop.f32.mrf.mxu0
        %v1319 = vadd.f32 0.0, %v1318
        %v1320 = vpop.f32.mrf.mxu0
        %1321 = vmatprep.mubr.f32.mxu0 0.0
        %1322 = vmatmul.mubr.f32.gmra.mxu0 %v1162
        %v1323 = vpop.f32.mrf.mxu0
        %v1324 = vadd.f32 0.0, %v1323
        %v1325 = vpop.f32.mrf.mxu0
        %1326 = vmatprep.mubr.f32.mxu0 0.0
        %1327 = vmatmul.mubr.f32.gmra.mxu0 %v1165
        %v1328 = vpop.f32.mrf.mxu0
        %v1329 = vadd.f32 0.0, %v1328
        %v1330 = vpop.f32.mrf.mxu0
        %1331 = vmatprep.mubr.f32.mxu0 0.0
        %1332 = vmatmul.mubr.f32.gmra.mxu0 %v1168
        %v1333 = vpop.f32.mrf.mxu0
        %v1334 = vadd.f32 0.0, %v1333
        %v1335 = vpop.f32.mrf.mxu0
        %1336 = vmatprep.mubr.f32.mxu0 0.0
        %1337 = vmatmul.mubr.f32.gmra.mxu0 %v1171
        %v1338 = vpop.f32.mrf.mxu0
        %v1339 = vadd.f32 0.0, %v1338
        %v1340 = vpop.f32.mrf.mxu0
        %1341 = vmatprep.mubr.f32.mxu0 0.0
        %1342 = vmatmul.mubr.f32.gmra.mxu0 %v1174
        %v1343 = vpop.f32.mrf.mxu0
        %v1344 = vadd.f32 0.0, %v1343
        %v1345 = vpop.f32.mrf.mxu0
        %1346 = vmatprep.mubr.f32.mxu0 0.0
        %1347 = vmatmul.mubr.f32.gmra.mxu0 %v1177
        %v1348 = vpop.f32.mrf.mxu0
        %v1349 = vadd.f32 0.0, %v1348
        %v1350 = vpop.f32.mrf.mxu0
        %1351 = vmatprep.mubr.f32.mxu0 0.0
        %1352 = vmatmul.mubr.f32.gmra.mxu0 %v1180
        %v1353 = vpop.f32.mrf.mxu0
        %v1354 = vadd.f32 0.0, %v1353
        %v1355 = vpop.f32.mrf.mxu0
        %1356 = vmatprep.mubr.f32.mxu0 0.0
        %1357 = vmatmul.mubr.f32.gmra.mxu0 %v1183
        %v1358 = vpop.f32.mrf.mxu0
        %v1359 = vadd.f32 0.0, %v1358
        %v1360 = vpop.f32.mrf.mxu0
        %1361 = vmatprep.mubr.f32.mxu0 0.0
        %1362 = vmatmul.mubr.f32.gmra.mxu0 %v1186
        %v1363 = vpop.f32.mrf.mxu0
        %v1364 = vadd.f32 0.0, %v1363
        %v1365 = vpop.f32.mrf.mxu0
        %1366 = vmatprep.mubr.f32.mxu0 0.0
        %1367 = vmatmul.mubr.f32.gmra.mxu0 %v1189
        %v1368 = vpop.f32.mrf.mxu0
        %v1369 = vadd.f32 0.0, %v1368
        %v1370 = vpop.f32.mrf.mxu0
        %1371 = vmatprep.mubr.f32.mxu0 0.0
        %1372 = vmatmul.mubr.f32.gmra.mxu0 %v1192
        %v1373 = vpop.f32.mrf.mxu0
        %v1374 = vadd.f32 0.0, %v1373
        %v1375 = vpop.f32.mrf.mxu0
        %1376 = vmatprep.mubr.f32.mxu0 0.0
        %1377 = vmatmul.mubr.f32.gmra.mxu0 %v1195
        %v1378 = vpop.f32.mrf.mxu0
        %v1379 = vadd.f32 0.0, %v1378
        %v1380 = vpop.f32.mrf.mxu0
        %1381 = vmatprep.mubr.f32.mxu0 0.0
        %1382 = vmatmul.mubr.f32.gmra.mxu0 %v1198
        %v1383 = vpop.f32.mrf.mxu0
        %v1384 = vadd.f32 0.0, %v1383
        %v1385 = vpop.f32.mrf.mxu0
        %1386 = vmatprep.mubr.f32.mxu0 0.0
        %1387 = vmatmul.mubr.f32.gmra.mxu0 %v1201
        %v1388 = vpop.f32.mrf.mxu0
        %v1389 = vadd.f32 0.0, %v1388
        %v1390 = vpop.f32.mrf.mxu0
        %1391 = vmatprep.mubr.f32.mxu0 0.0
        %1392 = vmatmul.mubr.f32.gmra.mxu0 %v1204
        %v1393 = vpop.f32.mrf.mxu0
        %v1394 = vadd.f32 0.0, %v1393
        %v1395 = vpop.f32.mrf.mxu0
        %1396 = vmatprep.mubr.f32.mxu0 0.0
        %1397 = vmatmul.mubr.f32.gmra.mxu0 %v1207
        %v1398 = vpop.f32.mrf.mxu0
        %v1399 = vadd.f32 0.0, %v1398
        %v1400 = vpop.f32.mrf.mxu0
        %1401 = vmatprep.mubr.f32.mxu0 0.0
        %1402 = vmatmul.mubr.f32.gmra.mxu0 %v1210
        %v1403 = vpop.f32.mrf.mxu0
        %v1404 = vadd.f32 0.0, %v1403
        %v1405 = vpop.f32.mrf.mxu0
        %1406 = vmatprep.mubr.f32.mxu0 0.0
        %1407 = vmatmul.mubr.f32.gmra.mxu0 %v1213
        %v1408 = vpop.f32.mrf.mxu0
        %v1409 = vadd.f32 0.0, %v1408
        %v1410 = vpop.f32.mrf.mxu0
        %1411 = vmatprep.mubr.f32.mxu0 0.0
        %1412 = vmatmul.mubr.f32.gmra.mxu0 %v1216
        %v1413 = vpop.f32.mrf.mxu0
        %v1414 = vadd.f32 0.0, %v1413
        %v1415 = vpop.f32.mrf.mxu0
        %1416 = vmatprep.mubr.f32.mxu0 0.0
        %1417 = vmatmul.mubr.f32.gmra.mxu0 %v1219
        %v1418 = vpop.f32.mrf.mxu0
        %v1419 = vadd.f32 0.0, %v1418
        %v1420 = vpop.f32.mrf.mxu0
        %1421 = vmatprep.mubr.f32.mxu0 0.0
        %1422 = vmatmul.mubr.f32.gmra.mxu0 %v1222
        %v1423 = vpop.f32.mrf.mxu0
        %v1424 = vadd.f32 0.0, %v1423
        %v1425 = vpop.f32.mrf.mxu0
        %1426 = vmatprep.mubr.f32.mxu0 0.0
        %1427 = vmatmul.mubr.f32.gmra.mxu0 %v1225
        %v1428 = vpop.f32.mrf.mxu0
        %v1429 = vadd.f32 0.0, %v1428
        %v1430 = vpop.f32.mrf.mxu0
        %1431 = vdwg.mxu0
        %v1432 = vmul.f32 %v1294, 2e-05
        %v1433 = vmul.f32 %v1299, 2e-05
        %v1434 = vmul.f32 %v1304, 2e-05
        %v1435 = vmul.f32 %v1309, 2e-05
        %v1436 = vmul.f32 %v1314, 2e-05
        %v1437 = vmul.f32 %v1319, 2e-05
        %v1438 = vmul.f32 %v1324, 2e-05
        %v1439 = vmul.f32 %v1329, 2e-05
        %v1440 = vmul.f32 %v1334, 2e-05
        %v1441 = vmul.f32 %v1339, 2e-05
        %v1442 = vmul.f32 %v1344, 2e-05
        %v1443 = vmul.f32 %v1349, 2e-05
        %v1444 = vmul.f32 %v1354, 2e-05
        %v1445 = vmul.f32 %v1359, 2e-05
        %v1446 = vmul.f32 %v1364, 2e-05
        %v1447 = vmul.f32 %v1369, 2e-05
        %v1448 = vmul.f32 %v1374, 2e-05
        %v1449 = vmul.f32 %v1379, 2e-05
        %v1450 = vmul.f32 %v1384, 2e-05
        %v1451 = vmul.f32 %v1389, 2e-05
        %v1452 = vmul.f32 %v1394, 2e-05
        %v1453 = vmul.f32 %v1399, 2e-05
        %v1454 = vmul.f32 %v1404, 2e-05
        %v1455 = vmul.f32 %v1409, 2e-05
        %v1456 = vmul.f32 %v1414, 2e-05
        %v1457 = vmul.f32 %v1419, 2e-05
        %v1458 = vmul.f32 %v1424, 2e-05
        %v1459 = vmul.f32 %v1429, 2e-05
        %v1460 = vadd.f32 %v1432, 1.0
        %v1461 = vadd.f32 %v1433, 1.0
        %v1462 = vadd.f32 %v1434, 1.0
        %v1463 = vadd.f32 %v1435, 1.0
        %v1464 = vadd.f32 %v1436, 1.0
        %v1465 = vadd.f32 %v1437, 1.0
        %v1466 = vadd.f32 %v1438, 1.0
        %v1467 = vadd.f32 %v1439, 1.0
        %v1468 = vadd.f32 %v1440, 1.0
        %v1469 = vadd.f32 %v1441, 1.0
        %v1470 = vadd.f32 %v1442, 1.0
        %v1471 = vadd.f32 %v1443, 1.0
        %v1472 = vadd.f32 %v1444, 1.0
        %v1473 = vadd.f32 %v1445, 1.0
        %v1474 = vadd.f32 %v1446, 1.0
        %v1475 = vadd.f32 %v1447, 1.0
        %v1476 = vadd.f32 %v1448, 1.0
        %v1477 = vadd.f32 %v1449, 1.0
        %v1478 = vadd.f32 %v1450, 1.0
        %v1479 = vadd.f32 %v1451, 1.0
        %v1480 = vadd.f32 %v1452, 1.0
        %v1481 = vadd.f32 %v1453, 1.0
        %v1482 = vadd.f32 %v1454, 1.0
        %v1483 = vadd.f32 %v1455, 1.0
        %v1484 = vadd.f32 %v1456, 1.0
        %v1485 = vadd.f32 %v1457, 1.0
        %v1486 = vadd.f32 %v1458, 1.0
        %v1487 = vadd.f32 %v1459, 1.0
        %v1488 = vlog2.pop %v1460
        %v1489 = vmul.f32 %v1488, 0.6931472
        %v1490 = vlog2.pop %v1461
        %v1491 = vmul.f32 %v1490, 0.6931472
        %v1492 = vlog2.pop %v1462
        %v1493 = vmul.f32 %v1492, 0.6931472
        %v1494 = vlog2.pop %v1463
        %v1495 = vmul.f32 %v1494, 0.6931472
        %v1496 = vlog2.pop %v1464
        %v1497 = vmul.f32 %v1496, 0.6931472
        %v1498 = vlog2.pop %v1465
        %v1499 = vmul.f32 %v1498, 0.6931472
        %v1500 = vlog2.pop %v1466
        %v1501 = vmul.f32 %v1500, 0.6931472
        %v1502 = vlog2.pop %v1467
        %v1503 = vmul.f32 %v1502, 0.6931472
        %v1504 = vlog2.pop %v1468
        %v1505 = vmul.f32 %v1504, 0.6931472
        %v1506 = vlog2.pop %v1469
        %v1507 = vmul.f32 %v1506, 0.6931472
        %v1508 = vlog2.pop %v1470
        %v1509 = vmul.f32 %v1508, 0.6931472
        %v1510 = vlog2.pop %v1471
        %v1511 = vmul.f32 %v1510, 0.6931472
        %v1512 = vlog2.pop %v1472
        %v1513 = vmul.f32 %v1512, 0.6931472
        %v1514 = vlog2.pop %v1473
        %v1515 = vmul.f32 %v1514, 0.6931472
        %v1516 = vlog2.pop %v1474
        %v1517 = vmul.f32 %v1516, 0.6931472
        %v1518 = vlog2.pop %v1475
        %v1519 = vmul.f32 %v1518, 0.6931472
        %v1520 = vlog2.pop %v1476
        %v1521 = vmul.f32 %v1520, 0.6931472
        %v1522 = vlog2.pop %v1477
        %v1523 = vmul.f32 %v1522, 0.6931472
        %v1524 = vlog2.pop %v1478
        %v1525 = vmul.f32 %v1524, 0.6931472
        %v1526 = vlog2.pop %v1479
        %v1527 = vmul.f32 %v1526, 0.6931472
        %v1528 = vlog2.pop %v1480
        %v1529 = vmul.f32 %v1528, 0.6931472
        %v1530 = vlog2.pop %v1481
        %v1531 = vmul.f32 %v1530, 0.6931472
        %v1532 = vlog2.pop %v1482
        %v1533 = vmul.f32 %v1532, 0.6931472
        %v1534 = vlog2.pop %v1483
        %v1535 = vmul.f32 %v1534, 0.6931472
        %v1536 = vlog2.pop %v1484
        %v1537 = vmul.f32 %v1536, 0.6931472
        %v1538 = vlog2.pop %v1485
        %v1539 = vmul.f32 %v1538, 0.6931472
        %v1540 = vlog2.pop %v1486
        %v1541 = vmul.f32 %v1540, 0.6931472
        %v1542 = vlog2.pop %v1487
        %v1543 = vmul.f32 %v1542, 0.6931472
        %v1544 = vmul.f32 %v1489, -0.75
        %v1545 = vmul.f32 %v1491, -0.75
        %v1546 = vmul.f32 %v1493, -0.75
        %v1547 = vmul.f32 %v1495, -0.75
        %v1548 = vmul.f32 %v1497, -0.75
        %v1549 = vmul.f32 %v1499, -0.75
        %v1550 = vmul.f32 %v1501, -0.75
        %v1551 = vmul.f32 %v1503, -0.75
        %v1552 = vmul.f32 %v1505, -0.75
        %v1553 = vmul.f32 %v1507, -0.75
        %v1554 = vmul.f32 %v1509, -0.75
        %v1555 = vmul.f32 %v1511, -0.75
        %v1556 = vmul.f32 %v1513, -0.75
        %v1557 = vmul.f32 %v1515, -0.75
        %v1558 = vmul.f32 %v1517, -0.75
        %v1559 = vmul.f32 %v1519, -0.75
        %v1560 = vmul.f32 %v1521, -0.75
        %v1561 = vmul.f32 %v1523, -0.75
        %v1562 = vmul.f32 %v1525, -0.75
        %v1563 = vmul.f32 %v1527, -0.75
        %v1564 = vmul.f32 %v1529, -0.75
        %v1565 = vmul.f32 %v1531, -0.75
        %v1566 = vmul.f32 %v1533, -0.75
        %v1567 = vmul.f32 %v1535, -0.75
        %v1568 = vmul.f32 %v1537, -0.75
        %v1569 = vmul.f32 %v1539, -0.75
        %v1570 = vmul.f32 %v1541, -0.75
        %v1571 = vmul.f32 %v1543, -0.75
        %v1572 = vmul.f32 %v1544, 1.442695
        %v1573 = vpow.pop %v1572
        %v1574 = vmul.f32 %v1545, 1.442695
        %v1575 = vpow.pop %v1574
        %v1576 = vmul.f32 %v1546, 1.442695
        %v1577 = vpow.pop %v1576
        %v1578 = vmul.f32 %v1547, 1.442695
        %v1579 = vpow.pop %v1578
        %v1580 = vmul.f32 %v1548, 1.442695
        %v1581 = vpow.pop %v1580
        %v1582 = vmul.f32 %v1549, 1.442695
        %v1583 = vpow.pop %v1582
        %v1584 = vmul.f32 %v1550, 1.442695
        %v1585 = vpow.pop %v1584
        %v1586 = vmul.f32 %v1551, 1.442695
        %v1587 = vpow.pop %v1586
        %v1588 = vmul.f32 %v1552, 1.442695
        %v1589 = vpow.pop %v1588
        %v1590 = vmul.f32 %v1553, 1.442695
        %v1591 = vpow.pop %v1590
        %v1592 = vmul.f32 %v1554, 1.442695
        %v1593 = vpow.pop %v1592
        %v1594 = vmul.f32 %v1555, 1.442695
        %v1595 = vpow.pop %v1594
        %v1596 = vmul.f32 %v1556, 1.442695
        %v1597 = vpow.pop %v1596
        %v1598 = vmul.f32 %v1557, 1.442695
        %v1599 = vpow.pop %v1598
        %v1600 = vmul.f32 %v1558, 1.442695
        %v1601 = vpow.pop %v1600
        %v1602 = vmul.f32 %v1559, 1.442695
        %v1603 = vpow.pop %v1602
        %v1604 = vmul.f32 %v1560, 1.442695
        %v1605 = vpow.pop %v1604
        %v1606 = vmul.f32 %v1561, 1.442695
        %v1607 = vpow.pop %v1606
        %v1608 = vmul.f32 %v1562, 1.442695
        %v1609 = vpow.pop %v1608
        %v1610 = vmul.f32 %v1563, 1.442695
        %v1611 = vpow.pop %v1610
        %v1612 = vmul.f32 %v1564, 1.442695
        %v1613 = vpow.pop %v1612
        %v1614 = vmul.f32 %v1565, 1.442695
        %v1615 = vpow.pop %v1614
        %v1616 = vmul.f32 %v1566, 1.442695
        %v1617 = vpow.pop %v1616
        %v1618 = vmul.f32 %v1567, 1.442695
        %v1619 = vpow.pop %v1618
        %v1620 = vmul.f32 %v1568, 1.442695
        %v1621 = vpow.pop %v1620
        %v1622 = vmul.f32 %v1569, 1.442695
        %v1623 = vpow.pop %v1622
        %v1624 = vmul.f32 %v1570, 1.442695
        %v1625 = vpow.pop %v1624
        %v1626 = vmul.f32 %v1571, 1.442695
        %v1627 = vpow.pop %v1626
        %v1628 = vmul.f32 %v1084, %v1573
        %v1629 = vmul.f32 %v1085, %v1575
        %v1630 = vmul.f32 %v1086, %v1577
        %v1631 = vmul.f32 %v1087, %v1579
        %v1632 = vmul.f32 %v1088, %v1581
        %v1633 = vmul.f32 %v1089, %v1583
        %v1634 = vmul.f32 %v1090, %v1585
        %v1635 = vmul.f32 %v1091, %v1587
        %v1636 = vmul.f32 %v1092, %v1589
        %v1637 = vmul.f32 %v1093, %v1591
        %v1638 = vmul.f32 %v1094, %v1593
        %v1639 = vmul.f32 %v1095, %v1595
        %v1640 = vmul.f32 %v1096, %v1597
        %v1641 = vmul.f32 %v1097, %v1599
        %v1642 = vmul.f32 %v1098, %v1601
        %v1643 = vmul.f32 %v1099, %v1603
        %v1644 = vmul.f32 %v1100, %v1605
        %v1645 = vmul.f32 %v1101, %v1607
        %v1646 = vmul.f32 %v1102, %v1609
        %v1647 = vmul.f32 %v1103, %v1611
        %v1648 = vmul.f32 %v1104, %v1613
        %v1649 = vmul.f32 %v1105, %v1615
        %v1650 = vmul.f32 %v1106, %v1617
        %v1651 = vmul.f32 %v1107, %v1619
        %v1652 = vmul.f32 %v1108, %v1621
        %v1653 = vmul.f32 %v1109, %v1623
        %v1654 = vmul.f32 %v1110, %v1625
        %v1655 = vmul.f32 %v1111, %v1627
        %v1656 = vld [vmem:[%s2] sm:$0xff]
        %v1657 = vld [vmem:[%s2 + $0x8] sm:$0xff]
        %v1658 = vld [vmem:[%s3] sm:$0x1]
        %v1660 = vlaneseq
        %v1661 = vshrl.u32 %v1660, 7
        %v1662 = vsub.s32 0, %v1661
        %v1663 = vrot.slane %v1658, %v1662
        %v1666 = vsel %vm1142, %v1628, 0
        %v1669 = vsel %vm1142, %v1629, 0
        %v1672 = vsel %vm1142, %v1630, 0
        %v1675 = vsel %vm1142, %v1631, 0
        %v1678 = vsel %vm1142, %v1632, 0
        %v1681 = vsel %vm1142, %v1633, 0
        %v1684 = vsel %vm1142, %v1634, 0
        %v1687 = vsel %vm1142, %v1635, 0
        %v1690 = vsel %vm1142, %v1636, 0
        %v1693 = vsel %vm1142, %v1637, 0
        %v1696 = vsel %vm1142, %v1638, 0
        %v1699 = vsel %vm1142, %v1639, 0
        %v1702 = vsel %vm1142, %v1640, 0
        %v1705 = vsel %vm1142, %v1641, 0
        %v1708 = vsel %vm1142, %v1642, 0
        %v1711 = vsel %vm1142, %v1643, 0
        %v1714 = vsel %vm1142, %v1644, 0
        %v1717 = vsel %vm1142, %v1645, 0
        %v1720 = vsel %vm1142, %v1646, 0
        %v1723 = vsel %vm1142, %v1647, 0
        %v1726 = vsel %vm1142, %v1648, 0
        %v1729 = vsel %vm1142, %v1649, 0
        %v1732 = vsel %vm1142, %v1650, 0
        %v1735 = vsel %vm1142, %v1651, 0
        %v1738 = vsel %vm1142, %v1652, 0
        %v1741 = vsel %vm1142, %v1653, 0
        %v1744 = vsel %vm1142, %v1654, 0
        %v1747 = vsel %vm1142, %v1655, 0
        %1749 = vmatprep.subr.mxu0 0.0
        %1750 = vmatpush1.msra.mxu0 0.0
        %1751 = vmatprep.subr.mxu0 0.0
        %1752 = vmatpush1.msra.mxu0 0.0
        %1753 = vmatprep.subr.mxu0 0.0
        %1754 = vmatpush1.msra.mxu0 0.0
        %1755 = vmatprep.subr.mxu0 0.0
        %1756 = vmatpush1.msra.mxu0 0.0
        %1757 = vmatprep.subr.mxu0 0.0
        %1758 = vmatpush1.msra.mxu0 0.0
        %1759 = vmatprep.subr.mxu0 0.0
        %1760 = vmatpush1.msra.mxu0 0.0
        %1761 = vmatprep.subr.mxu0 0.0
        %1762 = vmatpush1.msra.mxu0 0.0
        %1763 = vmatprep.subr.mxu0 0.0
        %1764 = vmatpush1.msra.mxu0 0.0
        %1765 = vmatprep.subr.mxu0 0.0
        %1766 = vmatpush1.msra.mxu0 0.0
        %1767 = vmatprep.subr.mxu0 0.0
        %1768 = vmatpush1.msra.mxu0 0.0
        %1769 = vmatprep.subr.mxu0 0.0
        %1770 = vmatpush1.msra.mxu0 0.0
        %1771 = vmatprep.subr.mxu0 0.0
        %1772 = vmatpush1.msra.mxu0 0.0
        %1773 = vmatprep.subr.mxu0 0.0
        %1774 = vmatpush1.msra.mxu0 0.0
        %1775 = vmatprep.subr.mxu0 0.0
        %1776 = vmatpush1.msra.mxu0 0.0
        %1777 = vmatprep.subr.mxu0 0.0
        %1778 = vmatpush1.msra.mxu0 %v1657
        %1779 = vmatprep.subr.mxu0 0.0
        %1780 = vmatpush1.msra.mxu0 %v1656
        %1781 = vmatprep.subr.mxu0 0.0
        %1782 = vmatpush2.msra.mxu0 0.0
        %1783 = vmatprep.subr.mxu0 0.0
        %1784 = vmatpush2.msra.mxu0 0.0
        %1785 = vmatprep.subr.mxu0 0.0
        %1786 = vmatpush2.msra.mxu0 0.0
        %1787 = vmatprep.subr.mxu0 0.0
        %1788 = vmatpush2.msra.mxu0 0.0
        %1789 = vmatprep.subr.mxu0 0.0
        %1790 = vmatpush2.msra.mxu0 0.0
        %1791 = vmatprep.subr.mxu0 0.0
        %1792 = vmatpush2.msra.mxu0 0.0
        %1793 = vmatprep.subr.mxu0 0.0
        %1794 = vmatpush2.msra.mxu0 0.0
        %1795 = vmatprep.subr.mxu0 0.0
        %1796 = vmatpush2.msra.mxu0 0.0
        %1797 = vmatprep.subr.mxu0 0.0
        %1798 = vmatpush2.msra.mxu0 0.0
        %1799 = vmatprep.subr.mxu0 0.0
        %1800 = vmatpush2.msra.mxu0 0.0
        %1801 = vmatprep.subr.mxu0 0.0
        %1802 = vmatpush2.msra.mxu0 0.0
        %1803 = vmatprep.subr.mxu0 0.0
        %1804 = vmatpush2.msra.mxu0 0.0
        %1805 = vmatprep.subr.mxu0 0.0
        %1806 = vmatpush2.msra.mxu0 0.0
        %1807 = vmatprep.subr.mxu0 0.0
        %1808 = vmatpush2.msra.mxu0 0.0
        %1809 = vmatprep.subr.mxu0 0.0
        %1810 = vmatpush2.msra.mxu0 0.0
        %1811 = vmatprep.subr.mxu0 0.0
        %1812 = vmatpush2.msra.mxu0 0.0
        %1813 = vmatprep.mubr.f32.mxu0 0.0
        %1814 = vmatmul.mubr.f32.gmra.mxu0 %v1666
        %v1815 = vpop.f32.mrf.mxu0
        %v1816 = vadd.f32 %v1663, %v1815
        %v1817 = vpop.f32.mrf.mxu0
        %1818 = vmatprep.mubr.f32.mxu0 0.0
        %1819 = vmatmul.mubr.f32.gmra.mxu0 %v1669
        %v1820 = vpop.f32.mrf.mxu0
        %v1821 = vadd.f32 %v1663, %v1820
        %v1822 = vpop.f32.mrf.mxu0
        %1823 = vmatprep.mubr.f32.mxu0 0.0
        %1824 = vmatmul.mubr.f32.gmra.mxu0 %v1672
        %v1825 = vpop.f32.mrf.mxu0
        %v1826 = vadd.f32 %v1663, %v1825
        %v1827 = vpop.f32.mrf.mxu0
        %1828 = vmatprep.mubr.f32.mxu0 0.0
        %1829 = vmatmul.mubr.f32.gmra.mxu0 %v1675
        %v1830 = vpop.f32.mrf.mxu0
        %v1831 = vadd.f32 %v1663, %v1830
        %v1832 = vpop.f32.mrf.mxu0
        %1833 = vmatprep.mubr.f32.mxu0 0.0
        %1834 = vmatmul.mubr.f32.gmra.mxu0 %v1678
        %v1835 = vpop.f32.mrf.mxu0
        %v1836 = vadd.f32 %v1663, %v1835
        %v1837 = vpop.f32.mrf.mxu0
        %1838 = vmatprep.mubr.f32.mxu0 0.0
        %1839 = vmatmul.mubr.f32.gmra.mxu0 %v1681
        %v1840 = vpop.f32.mrf.mxu0
        %v1841 = vadd.f32 %v1663, %v1840
        %v1842 = vpop.f32.mrf.mxu0
        %1843 = vmatprep.mubr.f32.mxu0 0.0
        %1844 = vmatmul.mubr.f32.gmra.mxu0 %v1684
        %v1845 = vpop.f32.mrf.mxu0
        %v1846 = vadd.f32 %v1663, %v1845
        %v1847 = vpop.f32.mrf.mxu0
        %1848 = vmatprep.mubr.f32.mxu0 0.0
        %1849 = vmatmul.mubr.f32.gmra.mxu0 %v1687
        %v1850 = vpop.f32.mrf.mxu0
        %v1851 = vadd.f32 %v1663, %v1850
        %v1852 = vpop.f32.mrf.mxu0
        %1853 = vmatprep.mubr.f32.mxu0 0.0
        %1854 = vmatmul.mubr.f32.gmra.mxu0 %v1690
        %v1855 = vpop.f32.mrf.mxu0
        %v1856 = vadd.f32 %v1663, %v1855
        %v1857 = vpop.f32.mrf.mxu0
        %1858 = vmatprep.mubr.f32.mxu0 0.0
        %1859 = vmatmul.mubr.f32.gmra.mxu0 %v1693
        %v1860 = vpop.f32.mrf.mxu0
        %v1861 = vadd.f32 %v1663, %v1860
        %v1862 = vpop.f32.mrf.mxu0
        %1863 = vmatprep.mubr.f32.mxu0 0.0
        %1864 = vmatmul.mubr.f32.gmra.mxu0 %v1696
        %v1865 = vpop.f32.mrf.mxu0
        %v1866 = vadd.f32 %v1663, %v1865
        %v1867 = vpop.f32.mrf.mxu0
        %1868 = vmatprep.mubr.f32.mxu0 0.0
        %1869 = vmatmul.mubr.f32.gmra.mxu0 %v1699
        %v1870 = vpop.f32.mrf.mxu0
        %v1871 = vadd.f32 %v1663, %v1870
        %v1872 = vpop.f32.mrf.mxu0
        %1873 = vmatprep.mubr.f32.mxu0 0.0
        %1874 = vmatmul.mubr.f32.gmra.mxu0 %v1702
        %v1875 = vpop.f32.mrf.mxu0
        %v1876 = vadd.f32 %v1663, %v1875
        %v1877 = vpop.f32.mrf.mxu0
        %1878 = vmatprep.mubr.f32.mxu0 0.0
        %1879 = vmatmul.mubr.f32.gmra.mxu0 %v1705
        %v1880 = vpop.f32.mrf.mxu0
        %v1881 = vadd.f32 %v1663, %v1880
        %v1882 = vpop.f32.mrf.mxu0
        %1883 = vmatprep.mubr.f32.mxu0 0.0
        %1884 = vmatmul.mubr.f32.gmra.mxu0 %v1708
        %v1885 = vpop.f32.mrf.mxu0
        %v1886 = vadd.f32 %v1663, %v1885
        %v1887 = vpop.f32.mrf.mxu0
        %1888 = vmatprep.mubr.f32.mxu0 0.0
        %1889 = vmatmul.mubr.f32.gmra.mxu0 %v1711
        %v1890 = vpop.f32.mrf.mxu0
        %v1891 = vadd.f32 %v1663, %v1890
        %v1892 = vpop.f32.mrf.mxu0
        %1893 = vmatprep.mubr.f32.mxu0 0.0
        %1894 = vmatmul.mubr.f32.gmra.mxu0 %v1714
        %v1895 = vpop.f32.mrf.mxu0
        %v1896 = vadd.f32 %v1663, %v1895
        %v1897 = vpop.f32.mrf.mxu0
        %1898 = vmatprep.mubr.f32.mxu0 0.0
        %1899 = vmatmul.mubr.f32.gmra.mxu0 %v1717
        %v1900 = vpop.f32.mrf.mxu0
        %v1901 = vadd.f32 %v1663, %v1900
        %v1902 = vpop.f32.mrf.mxu0
        %1903 = vmatprep.mubr.f32.mxu0 0.0
        %1904 = vmatmul.mubr.f32.gmra.mxu0 %v1720
        %v1905 = vpop.f32.mrf.mxu0
        %v1906 = vadd.f32 %v1663, %v1905
        %v1907 = vpop.f32.mrf.mxu0
        %1908 = vmatprep.mubr.f32.mxu0 0.0
        %1909 = vmatmul.mubr.f32.gmra.mxu0 %v1723
        %v1910 = vpop.f32.mrf.mxu0
        %v1911 = vadd.f32 %v1663, %v1910
        %v1912 = vpop.f32.mrf.mxu0
        %1913 = vmatprep.mubr.f32.mxu0 0.0
        %1914 = vmatmul.mubr.f32.gmra.mxu0 %v1726
        %v1915 = vpop.f32.mrf.mxu0
        %v1916 = vadd.f32 %v1663, %v1915
        %v1917 = vpop.f32.mrf.mxu0
        %1918 = vmatprep.mubr.f32.mxu0 0.0
        %1919 = vmatmul.mubr.f32.gmra.mxu0 %v1729
        %v1920 = vpop.f32.mrf.mxu0
        %v1921 = vadd.f32 %v1663, %v1920
        %v1922 = vpop.f32.mrf.mxu0
        %1923 = vmatprep.mubr.f32.mxu0 0.0
        %1924 = vmatmul.mubr.f32.gmra.mxu0 %v1732
        %v1925 = vpop.f32.mrf.mxu0
        %v1926 = vadd.f32 %v1663, %v1925
        %v1927 = vpop.f32.mrf.mxu0
        %1928 = vmatprep.mubr.f32.mxu0 0.0
        %1929 = vmatmul.mubr.f32.gmra.mxu0 %v1735
        %v1930 = vpop.f32.mrf.mxu0
        %v1931 = vadd.f32 %v1663, %v1930
        %v1932 = vpop.f32.mrf.mxu0
        %1933 = vmatprep.mubr.f32.mxu0 0.0
        %1934 = vmatmul.mubr.f32.gmra.mxu0 %v1738
        %v1935 = vpop.f32.mrf.mxu0
        %v1936 = vadd.f32 %v1663, %v1935
        %v1937 = vpop.f32.mrf.mxu0
        %1938 = vmatprep.mubr.f32.mxu0 0.0
        %1939 = vmatmul.mubr.f32.gmra.mxu0 %v1741
        %v1940 = vpop.f32.mrf.mxu0
        %v1941 = vadd.f32 %v1663, %v1940
        %v1942 = vpop.f32.mrf.mxu0
        %1943 = vmatprep.mubr.f32.mxu0 0.0
        %1944 = vmatmul.mubr.f32.gmra.mxu0 %v1744
        %v1945 = vpop.f32.mrf.mxu0
        %v1946 = vadd.f32 %v1663, %v1945
        %v1947 = vpop.f32.mrf.mxu0
        %1948 = vmatprep.mubr.f32.mxu0 0.0
        %1949 = vmatmul.mubr.f32.gmra.mxu0 %v1747
        %v1950 = vpop.f32.mrf.mxu0
        %v1951 = vadd.f32 %v1663, %v1950
        %v1952 = vpop.f32.mrf.mxu0
        %1953 = vdwg.mxu0
        %v1954 = vmax.f32 %v1816, 0.0
        %v1955 = vmax.f32 %v1821, 0.0
        %v1956 = vmax.f32 %v1826, 0.0
        %v1957 = vmax.f32 %v1831, 0.0
        %v1958 = vmax.f32 %v1836, 0.0
        %v1959 = vmax.f32 %v1841, 0.0
        %v1960 = vmax.f32 %v1846, 0.0
        %v1961 = vmax.f32 %v1851, 0.0
        %v1962 = vmax.f32 %v1856, 0.0
        %v1963 = vmax.f32 %v1861, 0.0
        %v1964 = vmax.f32 %v1866, 0.0
        %v1965 = vmax.f32 %v1871, 0.0
        %v1966 = vmax.f32 %v1876, 0.0
        %v1967 = vmax.f32 %v1881, 0.0
        %v1968 = vmax.f32 %v1886, 0.0
        %v1969 = vmax.f32 %v1891, 0.0
        %v1970 = vmax.f32 %v1896, 0.0
        %v1971 = vmax.f32 %v1901, 0.0
        %v1972 = vmax.f32 %v1906, 0.0
        %v1973 = vmax.f32 %v1911, 0.0
        %v1974 = vmax.f32 %v1916, 0.0
        %v1975 = vmax.f32 %v1921, 0.0
        %v1976 = vmax.f32 %v1926, 0.0
        %v1977 = vmax.f32 %v1931, 0.0
        %v1978 = vmax.f32 %v1936, 0.0
        %v1979 = vmax.f32 %v1941, 0.0
        %v1980 = vmax.f32 %v1946, 0.0
        %v1981 = vmax.f32 %v1951, 0.0
        %1982 = vst.msk [vmem:[%s617] sm:$0xff] %vm1142, %v1954
        %1983 = vst.msk [vmem:[%s617 + $0x8] sm:$0xff] %vm1142, %v1955
        %1984 = vst.msk [vmem:[%s617 + $0x10] sm:$0xff] %vm1142, %v1956
        %1985 = vst.msk [vmem:[%s617 + $0x18] sm:$0xff] %vm1142, %v1957
        %1986 = vst.msk [vmem:[%s617 + $0x20] sm:$0xff] %vm1142, %v1958
        %1987 = vst.msk [vmem:[%s617 + $0x28] sm:$0xff] %vm1142, %v1959
        %1988 = vst.msk [vmem:[%s617 + $0x30] sm:$0xff] %vm1142, %v1960
        %1989 = vst.msk [vmem:[%s617 + $0x38] sm:$0xff] %vm1142, %v1961
        %1990 = vst.msk [vmem:[%s617 + $0x40] sm:$0xff] %vm1142, %v1962
        %1991 = vst.msk [vmem:[%s617 + $0x48] sm:$0xff] %vm1142, %v1963
        %1992 = vst.msk [vmem:[%s617 + $0x50] sm:$0xff] %vm1142, %v1964
        %1993 = vst.msk [vmem:[%s617 + $0x58] sm:$0xff] %vm1142, %v1965
        %1994 = vst.msk [vmem:[%s617 + $0x60] sm:$0xff] %vm1142, %v1966
        %1995 = vst.msk [vmem:[%s617 + $0x68] sm:$0xff] %vm1142, %v1967
        %1996 = vst.msk [vmem:[%s617 + $0x70] sm:$0xff] %vm1142, %v1968
        %1997 = vst.msk [vmem:[%s617 + $0x78] sm:$0xff] %vm1142, %v1969
        %1998 = vst.msk [vmem:[%s617 + $0x80] sm:$0xff] %vm1142, %v1970
        %1999 = vst.msk [vmem:[%s617 + $0x88] sm:$0xff] %vm1142, %v1971
        %2000 = vst.msk [vmem:[%s617 + $0x90] sm:$0xff] %vm1142, %v1972
        %2001 = vst.msk [vmem:[%s617 + $0x98] sm:$0xff] %vm1142, %v1973
        %2002 = vst.msk [vmem:[%s617 + $0xa0] sm:$0xff] %vm1142, %v1974
        %2003 = vst.msk [vmem:[%s617 + $0xa8] sm:$0xff] %vm1142, %v1975
        %2004 = vst.msk [vmem:[%s617 + $0xb0] sm:$0xff] %vm1142, %v1976
        %2005 = vst.msk [vmem:[%s617 + $0xb8] sm:$0xff] %vm1142, %v1977
        %2006 = vst.msk [vmem:[%s617 + $0xc0] sm:$0xff] %vm1142, %v1978
        %2007 = vst.msk [vmem:[%s617 + $0xc8] sm:$0xff] %vm1142, %v1979
        %2008 = vst.msk [vmem:[%s617 + $0xd0] sm:$0xff] %vm1142, %v1980
        %2009 = vst.msk [vmem:[%s617 + $0xd8] sm:$0xff] %vm1142, %v1981
        %s2010 = sand.u32 %s112, 1
        %s2011 = sand.u32 %s112, 1
        %s2012 = smul.addr %s2011, 224
        %s2013 = scalar_lea.vmem [#allocation3], %s2012
        // Predicated region
        $region89: #{x_model_forward.12} parent=83 // pred_check
          %p2014 = pneg %p122
        $region90: #{x_model_forward.12} parent=83 // pred_check_branch
          %2016 = sbr.rel (%p2014) target = $region92
        $region91: #{x_model_forward.12} parent=83 // pred_region
          %s2017 = smul.u32 28, %s15
          %s2018 = ssub.s32 49, %s2017
          %p2019 = scmp.lt.s32.totalorder %s2018, 28
          %s2020 = scalar_select %p2019, %s2018, 28
          %s2021 = smul.u32 128, %s2020
          %p2022 = scmp.ne.s32.totalorder 0, %s2021
          %s2023 = smul.addr %s2017, 8
          %s2024 = scalar_lea.vmem %s4, %s2023
          // Predicated region
          $region93: #{x_model_forward.12} parent=91 // pred_check
            %p2025 = pneg %p2022
          $region94: #{x_model_forward.12} parent=91 // pred_check_branch
            %2027 = sbr.rel (%p2025) target = $region96
          $region95: #{x_model_forward.12} parent=91 // pred_region
            // Predicated region
            $region97: #{x_model_forward.12} parent=95 // pred_check
              _
            $region98: #{x_model_forward.12} parent=95 // pred_check_branch
              %2029 = sbr.rel (0) target = $region100
            $region99: #{x_model_forward.12} parent=95 // pred_region
              // Predicated region
              $region119: #{x_model_forward.12} parent=99 // pred_check
                _
              $region120: #{x_model_forward.12} parent=99 // pred_check_branch
                %2134 = sbr.rel (0) target = $region122
              $region121: #{x_model_forward.12} parent=99 // pred_region
                %s2135 = sdiv.u32.pop %s2020, 28
                %s2136 = srem.u32.pop %s2020, 28
                // While loop
                $region123: #{x_model_forward.12} parent=121 // loop_pre_header
                  _
                $region124: #{x_model_forward.12} parent=121 // loop_header
                  %s2138 = sphi 0, %s2140
                  %p2139 = scmp.ge.s32.totalorder %s2138, %s2135
                  %s2143 = sphi 0, %s2204
                  %s2144 = sphi %s2013, %s2207
                  %s2145 = sphi %s2024, %s2208
                $region125: #{x_model_forward.12} parent=121 // loop_header_branch
                  %2142 = sbr.rel (%p2139) target = $region129
                $region126: #{x_model_forward.12} parent=121 // loop_body
                  %v2146 = vld [vmem:[%s2144] sm:$0xff]
                  %2147 = vst [vmem:[%s2145] sm:$0xff] %v2146
                  %v2148 = vld [vmem:[%s2144 + $0x8] sm:$0xff]
                  %2149 = vst [vmem:[%s2145 + $0x8] sm:$0xff] %v2148
                  %v2150 = vld [vmem:[%s2144 + $0x10] sm:$0xff]
                  %2151 = vst [vmem:[%s2145 + $0x10] sm:$0xff] %v2150
                  %v2152 = vld [vmem:[%s2144 + $0x18] sm:$0xff]
                  %2153 = vst [vmem:[%s2145 + $0x18] sm:$0xff] %v2152
                  %v2154 = vld [vmem:[%s2144 + $0x20] sm:$0xff]
                  %2155 = vst [vmem:[%s2145 + $0x20] sm:$0xff] %v2154
                  %v2156 = vld [vmem:[%s2144 + $0x28] sm:$0xff]
                  %2157 = vst [vmem:[%s2145 + $0x28] sm:$0xff] %v2156
                  %v2158 = vld [vmem:[%s2144 + $0x30] sm:$0xff]
                  %2159 = vst [vmem:[%s2145 + $0x30] sm:$0xff] %v2158
                  %v2160 = vld [vmem:[%s2144 + $0x38] sm:$0xff]
                  %2161 = vst [vmem:[%s2145 + $0x38] sm:$0xff] %v2160
                  %v2162 = vld [vmem:[%s2144 + $0x40] sm:$0xff]
                  %2163 = vst [vmem:[%s2145 + $0x40] sm:$0xff] %v2162
                  %v2164 = vld [vmem:[%s2144 + $0x48] sm:$0xff]
                  %2165 = vst [vmem:[%s2145 + $0x48] sm:$0xff] %v2164
                  %v2166 = vld [vmem:[%s2144 + $0x50] sm:$0xff]
                  %2167 = vst [vmem:[%s2145 + $0x50] sm:$0xff] %v2166
                  %v2168 = vld [vmem:[%s2144 + $0x58] sm:$0xff]
                  %2169 = vst [vmem:[%s2145 + $0x58] sm:$0xff] %v2168
                  %v2170 = vld [vmem:[%s2144 + $0x60] sm:$0xff]
                  %2171 = vst [vmem:[%s2145 + $0x60] sm:$0xff] %v2170
                  %v2172 = vld [vmem:[%s2144 + $0x68] sm:$0xff]
                  %2173 = vst [vmem:[%s2145 + $0x68] sm:$0xff] %v2172
                  %v2174 = vld [vmem:[%s2144 + $0x70] sm:$0xff]
                  %2175 = vst [vmem:[%s2145 + $0x70] sm:$0xff] %v2174
                  %v2176 = vld [vmem:[%s2144 + $0x78] sm:$0xff]
                  %2177 = vst [vmem:[%s2145 + $0x78] sm:$0xff] %v2176
                  %v2178 = vld [vmem:[%s2144 + $0x80] sm:$0xff]
                  %2179 = vst [vmem:[%s2145 + $0x80] sm:$0xff] %v2178
                  %v2180 = vld [vmem:[%s2144 + $0x88] sm:$0xff]
                  %2181 = vst [vmem:[%s2145 + $0x88] sm:$0xff] %v2180
                  %v2182 = vld [vmem:[%s2144 + $0x90] sm:$0xff]
                  %2183 = vst [vmem:[%s2145 + $0x90] sm:$0xff] %v2182
                  %v2184 = vld [vmem:[%s2144 + $0x98] sm:$0xff]
                  %2185 = vst [vmem:[%s2145 + $0x98] sm:$0xff] %v2184
                  %v2186 = vld [vmem:[%s2144 + $0xa0] sm:$0xff]
                  %2187 = vst [vmem:[%s2145 + $0xa0] sm:$0xff] %v2186
                  %v2188 = vld [vmem:[%s2144 + $0xa8] sm:$0xff]
                  %2189 = vst [vmem:[%s2145 + $0xa8] sm:$0xff] %v2188
                  %v2190 = vld [vmem:[%s2144 + $0xb0] sm:$0xff]
                  %2191 = vst [vmem:[%s2145 + $0xb0] sm:$0xff] %v2190
                  %v2192 = vld [vmem:[%s2144 + $0xb8] sm:$0xff]
                  %2193 = vst [vmem:[%s2145 + $0xb8] sm:$0xff] %v2192
                  %v2194 = vld [vmem:[%s2144 + $0xc0] sm:$0xff]
                  %2195 = vst [vmem:[%s2145 + $0xc0] sm:$0xff] %v2194
                  %v2196 = vld [vmem:[%s2144 + $0xc8] sm:$0xff]
                  %2197 = vst [vmem:[%s2145 + $0xc8] sm:$0xff] %v2196
                  %v2198 = vld [vmem:[%s2144 + $0xd0] sm:$0xff]
                  %2199 = vst [vmem:[%s2145 + $0xd0] sm:$0xff] %v2198
                  %v2200 = vld [vmem:[%s2144 + $0xd8] sm:$0xff]
                  %2201 = vst [vmem:[%s2145 + $0xd8] sm:$0xff] %v2200
                  %s2202 = sadd.s32 1, %s2143
                  %p2203 = scmp.ge.s32.totalorder %s2202, %s2135
                  %s2204 = scalar_select %p2203, 0, %s2202
                  %s2205 = smul.u32 %s2204, 224
                  %s2206 = smul.u32 %s2204, 224
                  %s2207 = scalar_lea.vmem %s2013, %s2205 [#allocation3]
                  %s2208 = scalar_lea.vmem %s2024, %s2206
                $region127: #{x_model_forward.12} parent=121 // loop_footer
                  %s2140 = sadd.s32 %s2138, 1
                $region128: #{x_model_forward.12} parent=121 // loop_footer_branch
                  %2137 = sbr.rel target = $region124
                $region129: #{x_model_forward.12} parent=121 // loop_exit
                  _
                %s2209 = sdiv.u32.pop %s2020, 28
                %s2210 = srem.u32.pop %s2020, 28
                %s2211 = smul.u32 %s2209, 28
                %s2212 = smul.u32 8, %s2211
                %s2213 = scalar_lea.vmem %s2013, %s2212 [#allocation3]
                %s2214 = smul.u32 8, %s2211
                %s2215 = scalar_lea.vmem %s2024, %s2214
                // While loop
                $region130: #{x_model_forward.12} parent=121 // loop_pre_header
                  _
                $region131: #{x_model_forward.12} parent=121 // loop_header
                  %s2217 = sphi 0, %s2219
                  %p2218 = scmp.ge.s32.totalorder %s2217, %s2210
                  %s2222 = sphi 0, %s2229
                  %s2223 = sphi %s2213, %s2232
                  %s2224 = sphi %s2215, %s2233
                $region132: #{x_model_forward.12} parent=121 // loop_header_branch
                  %2221 = sbr.rel (%p2218) target = $region136
                $region133: #{x_model_forward.12} parent=121 // loop_body
                  %v2225 = vld [vmem:[%s2223] sm:$0xff]
                  %2226 = vst [vmem:[%s2224] sm:$0xff] %v2225
                  %s2227 = sadd.s32 1, %s2222
                  %p2228 = scmp.ge.s32.totalorder %s2227, %s2210
                  %s2229 = scalar_select %p2228, 0, %s2227
                  %s2230 = smul.u32 %s2229, 8
                  %s2231 = smul.u32 %s2229, 8
                  %s2232 = scalar_lea.vmem %s2213, %s2230 [#allocation3]
                  %s2233 = scalar_lea.vmem %s2215, %s2231
                $region134: #{x_model_forward.12} parent=121 // loop_footer
                  %s2219 = sadd.s32 %s2217, 1
                $region135: #{x_model_forward.12} parent=121 // loop_footer_branch
                  %2216 = sbr.rel target = $region131
                $region136: #{x_model_forward.12} parent=121 // loop_exit
                  _
              $region122: #{x_model_forward.12} parent=99 // pred_fallthru
                _
              // Predicated region
              $region137: #{x_model_forward.12} parent=99 // pred_check
                _
              $region138: #{x_model_forward.12} parent=99 // pred_check_branch
                %2235 = sbr.rel target = $region140
              $region139: #{x_model_forward.12} parent=99 // pred_region
                _
              $region140: #{x_model_forward.12} parent=99 // pred_fallthru
                _
            $region100: #{x_model_forward.12} parent=95 // pred_fallthru
              _
            // Predicated region
            $region101: #{x_model_forward.12} parent=95 // pred_check
              _
            $region102: #{x_model_forward.12} parent=95 // pred_check_branch
              %2031 = sbr.rel target = $region104
            $region103: #{x_model_forward.12} parent=95 // pred_region
              %s2033 = ssub.s32 256, 1
              %s2034 = sdiv.u32.pop %s2020, 28
              %s2035 = srem.u32.pop %s2020, 28
              // While loop
              $region105: #{x_model_forward.12} parent=103 // loop_pre_header
                _
              $region106: #{x_model_forward.12} parent=103 // loop_header
                %s2037 = sphi 0, %s2039
                %p2038 = scmp.ge.s32.totalorder %s2037, %s2034
                %s2042 = sphi 0, %s2103
                %s2043 = sphi %s2013, %s2106
                %s2044 = sphi %s2024, %s2107
              $region107: #{x_model_forward.12} parent=103 // loop_header_branch
                %2041 = sbr.rel (%p2038) target = $region111
              $region108: #{x_model_forward.12} parent=103 // loop_body
                %v2045 = vld [vmem:[%s2043] sm:%s2033]
                %2046 = vst [vmem:[%s2044] sm:%s2033] %v2045
                %v2047 = vld [vmem:[%s2043 + $0x8] sm:%s2033]
                %2048 = vst [vmem:[%s2044 + $0x8] sm:%s2033] %v2047
                %v2049 = vld [vmem:[%s2043 + $0x10] sm:%s2033]
                %2050 = vst [vmem:[%s2044 + $0x10] sm:%s2033] %v2049
                %v2051 = vld [vmem:[%s2043 + $0x18] sm:%s2033]
                %2052 = vst [vmem:[%s2044 + $0x18] sm:%s2033] %v2051
                %v2053 = vld [vmem:[%s2043 + $0x20] sm:%s2033]
                %2054 = vst [vmem:[%s2044 + $0x20] sm:%s2033] %v2053
                %v2055 = vld [vmem:[%s2043 + $0x28] sm:%s2033]
                %2056 = vst [vmem:[%s2044 + $0x28] sm:%s2033] %v2055
                %v2057 = vld [vmem:[%s2043 + $0x30] sm:%s2033]
                %2058 = vst [vmem:[%s2044 + $0x30] sm:%s2033] %v2057
                %v2059 = vld [vmem:[%s2043 + $0x38] sm:%s2033]
                %2060 = vst [vmem:[%s2044 + $0x38] sm:%s2033] %v2059
                %v2061 = vld [vmem:[%s2043 + $0x40] sm:%s2033]
                %2062 = vst [vmem:[%s2044 + $0x40] sm:%s2033] %v2061
                %v2063 = vld [vmem:[%s2043 + $0x48] sm:%s2033]
                %2064 = vst [vmem:[%s2044 + $0x48] sm:%s2033] %v2063
                %v2065 = vld [vmem:[%s2043 + $0x50] sm:%s2033]
                %2066 = vst [vmem:[%s2044 + $0x50] sm:%s2033] %v2065
                %v2067 = vld [vmem:[%s2043 + $0x58] sm:%s2033]
                %2068 = vst [vmem:[%s2044 + $0x58] sm:%s2033] %v2067
                %v2069 = vld [vmem:[%s2043 + $0x60] sm:%s2033]
                %2070 = vst [vmem:[%s2044 + $0x60] sm:%s2033] %v2069
                %v2071 = vld [vmem:[%s2043 + $0x68] sm:%s2033]
                %2072 = vst [vmem:[%s2044 + $0x68] sm:%s2033] %v2071
                %v2073 = vld [vmem:[%s2043 + $0x70] sm:%s2033]
                %2074 = vst [vmem:[%s2044 + $0x70] sm:%s2033] %v2073
                %v2075 = vld [vmem:[%s2043 + $0x78] sm:%s2033]
                %2076 = vst [vmem:[%s2044 + $0x78] sm:%s2033] %v2075
                %v2077 = vld [vmem:[%s2043 + $0x80] sm:%s2033]
                %2078 = vst [vmem:[%s2044 + $0x80] sm:%s2033] %v2077
                %v2079 = vld [vmem:[%s2043 + $0x88] sm:%s2033]
                %2080 = vst [vmem:[%s2044 + $0x88] sm:%s2033] %v2079
                %v2081 = vld [vmem:[%s2043 + $0x90] sm:%s2033]
                %2082 = vst [vmem:[%s2044 + $0x90] sm:%s2033] %v2081
                %v2083 = vld [vmem:[%s2043 + $0x98] sm:%s2033]
                %2084 = vst [vmem:[%s2044 + $0x98] sm:%s2033] %v2083
                %v2085 = vld [vmem:[%s2043 + $0xa0] sm:%s2033]
                %2086 = vst [vmem:[%s2044 + $0xa0] sm:%s2033] %v2085
                %v2087 = vld [vmem:[%s2043 + $0xa8] sm:%s2033]
                %2088 = vst [vmem:[%s2044 + $0xa8] sm:%s2033] %v2087
                %v2089 = vld [vmem:[%s2043 + $0xb0] sm:%s2033]
                %2090 = vst [vmem:[%s2044 + $0xb0] sm:%s2033] %v2089
                %v2091 = vld [vmem:[%s2043 + $0xb8] sm:%s2033]
                %2092 = vst [vmem:[%s2044 + $0xb8] sm:%s2033] %v2091
                %v2093 = vld [vmem:[%s2043 + $0xc0] sm:%s2033]
                %2094 = vst [vmem:[%s2044 + $0xc0] sm:%s2033] %v2093
                %v2095 = vld [vmem:[%s2043 + $0xc8] sm:%s2033]
                %2096 = vst [vmem:[%s2044 + $0xc8] sm:%s2033] %v2095
                %v2097 = vld [vmem:[%s2043 + $0xd0] sm:%s2033]
                %2098 = vst [vmem:[%s2044 + $0xd0] sm:%s2033] %v2097
                %v2099 = vld [vmem:[%s2043 + $0xd8] sm:%s2033]
                %2100 = vst [vmem:[%s2044 + $0xd8] sm:%s2033] %v2099
                %s2101 = sadd.s32 1, %s2042
                %p2102 = scmp.ge.s32.totalorder %s2101, %s2034
                %s2103 = scalar_select %p2102, 0, %s2101
                %s2104 = smul.u32 %s2103, 224
                %s2105 = smul.u32 %s2103, 224
                %s2106 = scalar_lea.vmem %s2013, %s2104 [#allocation3]
                %s2107 = scalar_lea.vmem %s2024, %s2105
              $region109: #{x_model_forward.12} parent=103 // loop_footer
                %s2039 = sadd.s32 %s2037, 1
              $region110: #{x_model_forward.12} parent=103 // loop_footer_branch
                %2036 = sbr.rel target = $region106
              $region111: #{x_model_forward.12} parent=103 // loop_exit
                _
              %s2108 = sdiv.u32.pop %s2020, 28
              %s2109 = srem.u32.pop %s2020, 28
              %s2110 = smul.u32 %s2108, 28
              %s2111 = smul.u32 8, %s2110
              %s2112 = scalar_lea.vmem %s2013, %s2111 [#allocation3]
              %s2113 = smul.u32 8, %s2110
              %s2114 = scalar_lea.vmem %s2024, %s2113
              // While loop
              $region112: #{x_model_forward.12} parent=103 // loop_pre_header
                _
              $region113: #{x_model_forward.12} parent=103 // loop_header
                %s2116 = sphi 0, %s2118
                %p2117 = scmp.ge.s32.totalorder %s2116, %s2109
                %s2121 = sphi 0, %s2128
                %s2122 = sphi %s2112, %s2131
                %s2123 = sphi %s2114, %s2132
              $region114: #{x_model_forward.12} parent=103 // loop_header_branch
                %2120 = sbr.rel (%p2117) target = $region118
              $region115: #{x_model_forward.12} parent=103 // loop_body
                %v2124 = vld [vmem:[%s2122] sm:%s2033]
                %2125 = vst [vmem:[%s2123] sm:%s2033] %v2124
                %s2126 = sadd.s32 1, %s2121
                %p2127 = scmp.ge.s32.totalorder %s2126, %s2109
                %s2128 = scalar_select %p2127, 0, %s2126
                %s2129 = smul.u32 %s2128, 8
                %s2130 = smul.u32 %s2128, 8
                %s2131 = scalar_lea.vmem %s2112, %s2129 [#allocation3]
                %s2132 = scalar_lea.vmem %s2114, %s2130
              $region116: #{x_model_forward.12} parent=103 // loop_footer
                %s2118 = sadd.s32 %s2116, 1
              $region117: #{x_model_forward.12} parent=103 // loop_footer_branch
                %2115 = sbr.rel target = $region113
              $region118: #{x_model_forward.12} parent=103 // loop_exit
                _
            $region104: #{x_model_forward.12} parent=95 // pred_fallthru
              _
          $region96: #{x_model_forward.12} parent=91 // pred_fallthru
            _
          %2236 = vnop
        $region92: #{x_model_forward.12} parent=83 // pred_fallthru
          _
      $region84: #{x_model_forward.12} parent=5 // pred_fallthru
        _
      %p2237 = scmp.le.s32.totalorder 2, %s10
      // Predicated region
      $region141: #{x_model_forward.12} parent=5 // pred_check
        %p2238 = pneg %p2237
      $region142: #{x_model_forward.12} parent=5 // pred_check_branch
        %2240 = sbr.rel (%p2238) target = $region144
      $region143: #{x_model_forward.12} parent=5 // pred_region
        %s2241 = ssub.s32 %s10, 2
        // Predicated region
        $region145: #{x_model_forward.12} parent=143 // pred_check
          %p2242 = pneg %p128
        $region146: #{x_model_forward.12} parent=143 // pred_check_branch
          %2244 = sbr.rel (%p2242) target = $region148
        $region147: #{x_model_forward.12} parent=143 // pred_region
          %s2245 = sand.u32 %s113, 1
          %s2246 = sand.u32 %s113, 1
          %s2247 = smul.addr %s2246, 224
          %s2248 = scalar_lea.vmem [#allocation3], %s2247
        $region148: #{x_model_forward.12} parent=143 // pred_fallthru
          _
      $region144: #{x_model_forward.12} parent=5 // pred_fallthru
        _
    $region6: #{x_model_forward.12} parent=1 // loop_footer
      %s14 = sadd.s32 1, %s10
    $region7: #{x_model_forward.12} parent=1 // loop_footer_branch
      %9 = sbr.rel target = $region3
    $region8: #{x_model_forward.12} parent=1 // loop_exit
      _

// kernel: x_model_forward.13
$region0: #{x_model_forward.13}
  #allocation0 [shape = 'u32[]', space=smem, size = 0x4, offset = 0x4, fixed_abs, tag = 'smem constant byte address 0x4 - core index']
  #allocation1 [shape = 'u32[144,128]{1,0:T(1,128)}', space=vmem, size = 0x12000, scoped, tag = 'internal scratch']
  %s0 = inlined_call_operand.vmem [shape: bf16[288,144], index: 0, kind: input, shape index: {}]
  %s1 = inlined_call_operand.vmem [shape: bf16[144,64], index: 1, kind: input, shape index: {}]
  %s2 = inlined_call_operand.vmem [shape: f32[1,64], index: 2, kind: input, shape index: {}]
  %s3 = inlined_call_operand.vmem [shape: f32[64,64], index: 3, kind: input, shape index: {}]
  %s4 = inlined_call_operand.vmem [shape: f32[288,64], index: 4, kind: output, shape index: {}]
  %s5 = sld [smem:[#allocation0]]
  $region97: #{x_model_forward.13} parent=0
    _
  %s7 = ssub.s32 1, %s5
  %s8 = scalar_select 0, %s7, %s5
  $region1: #{x_model_forward.13} parent=0
    #allocation2 [shape = 'u8[163840]{0}', space=vmem, size = 0x28000, scoped, tag = 'output window, operand 0']
    loop: start=0, step=1, limit=4
    $region2: #{x_model_forward.13} parent=1 // loop_pre_header
      _
    $region3: #{x_model_forward.13} parent=1 // loop_header
      %s10 = sphi 0, %s14
      %p11 = scmp.ge.s32.totalorder %s10, 4
      %s20 = sphi 0, %s22
      %s23 = sphi 0, %s20
      %s24 = sphi 0, %s23
      %s40 = sphi 0, %s24
      %s44 = sphi 0, %s44
      %s46 = sphi 0, %s44
      %s47 = sphi 0, %s46
      %s61 = sphi 0, %s47
      %s65 = sphi 0, %s65
      %s67 = sphi 0, %s65
      %s68 = sphi 0, %s67
      %s82 = sphi 0, %s68
      %s86 = sphi 0, %s86
      %s88 = sphi 0, %s86
      %s89 = sphi 0, %s88
      %s103 = sphi 0, %s89
      %s109 = sphi 0, %s111
      %s112 = sphi 0, %s109
      %s113 = sphi 0, %s112
      %s129 = sphi 0, %s113
    $region4: #{x_model_forward.13} parent=1 // loop_header_branch
      %13 = sbr.rel (%p11) target = $region8
    $region5: #{x_model_forward.13} parent=1 // loop_body
      %s15 = ssub.s32 %s10, 1
      %s16 = ssub.s32 %s10, 2
      %s17 = sadd.s32 %s10, 1
      %s18 = ssub.s32 %s10, %s17
      %p19 = scmp.eq.s32.totalorder %s18, 0
      %s21 = sadd.s32 %s20, 1
      %s22 = scalar_select %p19, %s20, %s21
      %p25 = pneg %p19
      %p26 = scmp.eq.s32.totalorder %s10, 1
      %p27 = por %p25, %p26
      %p28 = scmp.ne.s32.totalorder %s20, %s23
      %p29 = scmp.eq.s32.totalorder %s10, 0
      %p30 = por %p28, %p29
      %p31 = scmp.ne.s32.totalorder %s20, %s23
      %p32 = scmp.eq.s32.totalorder %s15, 1
      %p33 = por %p31, %p32
      %p34 = scmp.ne.s32.totalorder %s23, %s24
      %p35 = scmp.eq.s32.totalorder %s15, 0
      %p36 = por %p34, %p35
      %p37 = scmp.ne.s32.totalorder %s23, %s24
      %p38 = scmp.eq.s32.totalorder %s16, 1
      %p39 = por %p37, %p38
      %p41 = scmp.ne.s32.totalorder %s24, %s40
      %p42 = scmp.eq.s32.totalorder %s16, 0
      %p43 = por %p41, %p42
      %s45 = sadd.s32 %s44, 1
      %p48 = scmp.eq.s32.totalorder %s10, 1
      %p49 = scmp.ne.s32.totalorder %s44, %s46
      %p50 = scmp.eq.s32.totalorder %s10, 0
      %p51 = por %p49, %p50
      %p52 = scmp.ne.s32.totalorder %s44, %s46
      %p53 = scmp.eq.s32.totalorder %s15, 1
      %p54 = por %p52, %p53
      %p55 = scmp.ne.s32.totalorder %s46, %s47
      %p56 = scmp.eq.s32.totalorder %s15, 0
      %p57 = por %p55, %p56
      %p58 = scmp.ne.s32.totalorder %s46, %s47
      %p59 = scmp.eq.s32.totalorder %s16, 1
      %p60 = por %p58, %p59
      %p62 = scmp.ne.s32.totalorder %s47, %s61
      %p63 = scmp.eq.s32.totalorder %s16, 0
      %p64 = por %p62, %p63
      %s66 = sadd.s32 %s65, 1
      %p69 = scmp.eq.s32.totalorder %s10, 1
      %p70 = scmp.ne.s32.totalorder %s65, %s67
      %p71 = scmp.eq.s32.totalorder %s10, 0
      %p72 = por %p70, %p71
      %p73 = scmp.ne.s32.totalorder %s65, %s67
      %p74 = scmp.eq.s32.totalorder %s15, 1
      %p75 = por %p73, %p74
      %p76 = scmp.ne.s32.totalorder %s67, %s68
      %p77 = scmp.eq.s32.totalorder %s15, 0
      %p78 = por %p76, %p77
      %p79 = scmp.ne.s32.totalorder %s67, %s68
      %p80 = scmp.eq.s32.totalorder %s16, 1
      %p81 = por %p79, %p80
      %p83 = scmp.ne.s32.totalorder %s68, %s82
      %p84 = scmp.eq.s32.totalorder %s16, 0
      %p85 = por %p83, %p84
      %s87 = sadd.s32 %s86, 1
      %p90 = scmp.eq.s32.totalorder %s10, 1
      %p91 = scmp.ne.s32.totalorder %s86, %s88
      %p92 = scmp.eq.s32.totalorder %s10, 0
      %p93 = por %p91, %p92
      %p94 = scmp.ne.s32.totalorder %s86, %s88
      %p95 = scmp.eq.s32.totalorder %s15, 1
      %p96 = por %p94, %p95
      %p97 = scmp.ne.s32.totalorder %s88, %s89
      %p98 = scmp.eq.s32.totalorder %s15, 0
      %p99 = por %p97, %p98
      %p100 = scmp.ne.s32.totalorder %s88, %s89
      %p101 = scmp.eq.s32.totalorder %s16, 1
      %p102 = por %p100, %p101
      %p104 = scmp.ne.s32.totalorder %s89, %s103
      %p105 = scmp.eq.s32.totalorder %s16, 0
      %p106 = por %p104, %p105
      %s107 = ssub.s32 %s10, %s17
      %p108 = scmp.eq.s32.totalorder %s107, 0
      %s110 = sadd.s32 %s109, 1
      %s111 = scalar_select %p108, %s109, %s110
      %p114 = pneg %p108
      %p115 = scmp.eq.s32.totalorder %s10, 1
      %p116 = por %p114, %p115
      %p117 = scmp.ne.s32.totalorder %s109, %s112
      %p118 = scmp.eq.s32.totalorder %s10, 0
      %p119 = por %p117, %p118
      %p120 = scmp.ne.s32.totalorder %s109, %s112
      %p121 = scmp.eq.s32.totalorder %s15, 1
      %p122 = por %p120, %p121
      %p123 = scmp.ne.s32.totalorder %s112, %s113
      %p124 = scmp.eq.s32.totalorder %s15, 0
      %p125 = por %p123, %p124
      %p126 = scmp.ne.s32.totalorder %s112, %s113
      %p127 = scmp.eq.s32.totalorder %s16, 1
      %p128 = por %p126, %p127
      %p130 = scmp.ne.s32.totalorder %s113, %s129
      %p131 = scmp.eq.s32.totalorder %s16, 0
      %p132 = por %p130, %p131
      %p133 = scmp.le.s32.totalorder 1, %s10
      %p134 = scmp.lt.s32.totalorder %s10, 3
      %p135 = pnand %p133, %p134
      %p136 = pneg %p135
      // Predicated region
      $region9: #{x_model_forward.13} parent=5 // pred_check
        _
      $region10: #{x_model_forward.13} parent=5 // pred_check_branch
        %138 = sbr.rel (%p135) target = $region12
      $region11: #{x_model_forward.13} parent=5 // pred_region
        %s139 = ssub.s32 %s10, 1
        // Predicated region
        $region13: #{x_model_forward.13} parent=11 // pred_check
          %p140 = pneg %p57
        $region14: #{x_model_forward.13} parent=11 // pred_check_branch
          %142 = sbr.rel (%p140) target = $region16
        $region15: #{x_model_forward.13} parent=11 // pred_region
          _
        $region16: #{x_model_forward.13} parent=11 // pred_fallthru
          _
        // Predicated region
        $region17: #{x_model_forward.13} parent=11 // pred_check
          %p143 = pneg %p78
        $region18: #{x_model_forward.13} parent=11 // pred_check_branch
          %145 = sbr.rel (%p143) target = $region20
        $region19: #{x_model_forward.13} parent=11 // pred_region
          _
        $region20: #{x_model_forward.13} parent=11 // pred_fallthru
          _
        // Predicated region
        $region21: #{x_model_forward.13} parent=11 // pred_check
          %p146 = pneg %p99
        $region22: #{x_model_forward.13} parent=11 // pred_check_branch
          %148 = sbr.rel (%p146) target = $region24
        $region23: #{x_model_forward.13} parent=11 // pred_region
          _
        $region24: #{x_model_forward.13} parent=11 // pred_fallthru
          _
      $region12: #{x_model_forward.13} parent=5 // pred_fallthru
        _
      %p149 = scmp.lt.s32.totalorder %s10, 2
      // Predicated region
      $region25: #{x_model_forward.13} parent=5 // pred_check
        %p150 = pneg %p149
      $region26: #{x_model_forward.13} parent=5 // pred_check_branch
        %152 = sbr.rel (%p150) target = $region28
      $region27: #{x_model_forward.13} parent=5 // pred_region
        // Predicated region
        $region29: #{x_model_forward.13} parent=27 // pred_check
          %p153 = pneg %p30
        $region30: #{x_model_forward.13} parent=27 // pred_check_branch
          %155 = sbr.rel (%p153) target = $region32
        $region31: #{x_model_forward.13} parent=27 // pred_region
          %s156 = smul.u32 20, %s10
          %s157 = ssub.s32 36, %s156
          %p158 = scmp.lt.s32.totalorder %s157, 20
          %s159 = scalar_select %p158, %s157, 20
          %s160 = smul.u32 64, %s159
          %s161 = smul.u32 %s160, 2
          %p162 = scmp.lt.s32.totalorder %s156, 35
          %s163 = scalar_select %p162, %s156, 35
          %s164 = smul.addr %s163, 2
          %s165 = smul.addr %s164, 4
          %s166 = scalar_lea.vmem %s0, %s165
          %s167 = smul.u32 20, %s10
          %s168 = ssub.s32 36, %s167
          %p169 = scmp.lt.s32.totalorder %s168, 20
          %s170 = scalar_select %p169, %s168, 20
          %s171 = smul.u32 64, %s170
          %s172 = smul.u32 %s171, 2
        $region32: #{x_model_forward.13} parent=27 // pred_fallthru
          _
      $region28: #{x_model_forward.13} parent=5 // pred_fallthru
        _
      %p173 = scmp.le.s32.totalorder 1, %s10
      %p174 = scmp.lt.s32.totalorder %s10, 3
      %p175 = pnand %p173, %p174
      %p176 = pneg %p175
      // Predicated region
      $region33: #{x_model_forward.13} parent=5 // pred_check
        _
      $region34: #{x_model_forward.13} parent=5 // pred_check_branch
        %178 = sbr.rel (%p175) target = $region36
      $region35: #{x_model_forward.13} parent=5 // pred_region
        %s179 = ssub.s32 %s10, 1
        %s180 = smul.u32 20, %s15
        %s181 = ssub.s32 36, %s180
        %p182 = scmp.lt.s32.totalorder %s181, 20
        %s183 = scalar_select %p182, %s181, 20
        %s184 = smul.u32 64, %s183
        %s185 = smul.u32 %s184, 2
        %p186 = scmp.lt.s32.totalorder %s180, 35
        %s187 = scalar_select %p186, %s180, 35
        %s188 = smul.addr %s187, 2
        %s189 = smul.addr %s188, 4
        %s190 = scalar_lea.vmem %s0, %s189
        %p191 = pneg %p36
        %p192 = pneg %p33
        %p193 = pneg %p57
        %p194 = pneg %p54
        %p195 = pneg %p78
        %p196 = pneg %p75
        %p197 = pneg %p99
        %p198 = pneg %p96
        %p199 = pneg %p125
        %p200 = pneg %p122
        %s201 = sand.u32 %s112, 1
        %s202 = sand.u32 %s112, 1
        %s203 = smul.addr %s202, 160
        %s204 = scalar_lea.vmem [#allocation2], %s203
        %s205 = smul.u32 20, %s15
        %s206 = ssub.s32 36, %s205
        %p207 = scmp.lt.s32.totalorder %s206, 20
        %s208 = scalar_select %p207, %s206, 20
        %s209 = smul.u32 64, %s208
        %s210 = smul.u32 %s209, 2
        %p211 = scmp.lt.s32.totalorder %s205, 35
        %s212 = scalar_select %p211, %s205, 35
        %s213 = smul.addr %s212, 2
        %s214 = smul.addr %s213, 4
        %s215 = scalar_lea.vmem %s0, %s214
        %s216 = smul.u32 20, %s15
        %s217 = ssub.s32 36, %s216
        %p218 = scmp.lt.s32.totalorder %s217, 20
        %s219 = scalar_select %p218, %s217, 20
        %s220 = smul.u32 64, %s219
        %s221 = smul.u32 %s220, 2
        %s222 = smul.u32 20, %s15
        %s223 = ssub.s32 36, %s222
        %p224 = scmp.lt.s32.totalorder %s223, 20
        %s225 = scalar_select %p224, %s223, 20
        %s226 = smul.u32 128, %s225
        %v228 = vld [vmem:[%s215] sm:$0xff]
        %v229 = vld [vmem:[%s215 + $0x8] sm:$0xff]
        %v230 = vld [vmem:[%s215 + $0x10] sm:$0xff]
        %v231 = vld [vmem:[%s215 + $0x18] sm:$0xff]
        %v232 = vld [vmem:[%s215 + $0x20] sm:$0xff]
        %v233 = vld [vmem:[%s215 + $0x28] sm:$0xff]
        %v234 = vld [vmem:[%s215 + $0x30] sm:$0xff]
        %v235 = vld [vmem:[%s215 + $0x38] sm:$0xff]
        %v236 = vld [vmem:[%s215 + $0x40] sm:$0xff]
        %v237 = vld [vmem:[%s215 + $0x48] sm:$0xff]
        %v238 = vld [vmem:[%s215 + $0x50] sm:$0xff]
        %v239 = vld [vmem:[%s215 + $0x58] sm:$0xff]
        %v240 = vld [vmem:[%s215 + $0x60] sm:$0xff]
        %v241 = vld [vmem:[%s215 + $0x68] sm:$0xff]
        %v242 = vld [vmem:[%s215 + $0x70] sm:$0xff]
        %v243 = vld [vmem:[%s215 + $0x78] sm:$0xff]
        %v244 = vld [vmem:[%s215 + $0x80] sm:$0xff]
        %v245 = vld [vmem:[%s215 + $0x88] sm:$0xff]
        %v246 = vld [vmem:[%s215 + $0x90] sm:$0xff]
        %v247 = vld [vmem:[%s215 + $0x98] sm:$0xff]
        %v248 = vld [vmem:[%s1] sm:$0xf]
        %v249 = vld [vmem:[%s1 + $0x4] sm:$0xf]
        %v250 = vld [vmem:[%s1 + $0x8] sm:$0xf]
        %v251 = vld [vmem:[%s1 + $0xc] sm:$0xf]
        %v252 = vld [vmem:[%s1 + $0x10] sm:$0xf]
        %v253 = vld [vmem:[%s1 + $0x14] sm:$0xf]
        %v254 = vld [vmem:[%s1 + $0x18] sm:$0xf]
        %v255 = vld [vmem:[%s1 + $0x1c] sm:$0xf]
        %v256 = vld [vmem:[%s1 + $0x20] sm:$0xf]
        %v257 = vld [vmem:[%s1 + $0x24] sm:$0xf]
        %v258 = vld [vmem:[%s1 + $0x28] sm:$0xf]
        %v259 = vld [vmem:[%s1 + $0x2c] sm:$0xf]
        %v260 = vld [vmem:[%s1 + $0x30] sm:$0xf]
        %v261 = vld [vmem:[%s1 + $0x34] sm:$0xf]
        %v262 = vld [vmem:[%s1 + $0x38] sm:$0xf]
        %v263 = vld [vmem:[%s1 + $0x3c] sm:$0xf]
        %v264 = vld [vmem:[%s1 + $0x40] sm:$0xf]
        %v265 = vld [vmem:[%s1 + $0x44] sm:$0xf]
        %v266 = vld [vmem:[%s2] sm:$0x1]
        %v268 = vlaneseq
        %v269 = vshrl.u32 %v268, 7
        %v270 = vsub.s32 0, %v269
        %v271 = vrot.slane %v266, %v270
        %v293 = vunpack.c.l.b16 %v228
        %v294 = vunpack.c.h.b16 %v228
        %v295 = vunpack.c.l.b16 %v229
        %v296 = vunpack.c.h.b16 %v229
        %v297 = vunpack.c.l.b16 %v230
        %v298 = vunpack.c.h.b16 %v230
        %v299 = vunpack.c.l.b16 %v231
        %v300 = vunpack.c.h.b16 %v231
        %v301 = vunpack.c.l.b16 %v232
        %v302 = vunpack.c.h.b16 %v232
        %v303 = vunpack.c.l.b16 %v233
        %v304 = vunpack.c.h.b16 %v233
        %v305 = vunpack.c.l.b16 %v234
        %v306 = vunpack.c.h.b16 %v234
        %v307 = vunpack.c.l.b16 %v235
        %v308 = vunpack.c.h.b16 %v235
        %v309 = vunpack.c.l.b16 %v236
        %v310 = vunpack.c.h.b16 %v236
        %v311 = vunpack.c.l.b16 %v237
        %v312 = vunpack.c.h.b16 %v237
        %v313 = vunpack.c.l.b16 %v238
        %v314 = vunpack.c.h.b16 %v238
        %v315 = vunpack.c.l.b16 %v239
        %v316 = vunpack.c.h.b16 %v239
        %v317 = vunpack.c.l.b16 %v240
        %v318 = vunpack.c.h.b16 %v240
        %v319 = vunpack.c.l.b16 %v241
        %v320 = vunpack.c.h.b16 %v241
        %v321 = vunpack.c.l.b16 %v242
        %v322 = vunpack.c.h.b16 %v242
        %v323 = vunpack.c.l.b16 %v243
        %v324 = vunpack.c.h.b16 %v243
        %v325 = vunpack.c.l.b16 %v244
        %v326 = vunpack.c.h.b16 %v244
        %v327 = vunpack.c.l.b16 %v245
        %v328 = vunpack.c.h.b16 %v245
        %v329 = vunpack.c.l.b16 %v246
        %v330 = vunpack.c.h.b16 %v246
        %v331 = vunpack.c.l.b16 %v247
        %v332 = vunpack.c.h.b16 %v247
        %v333 = vpack.c.b16 %v295, %v293
        %v334 = vpack.c.b16 %v296, %v294
        %v335 = vpack.c.b16 %v299, %v297
        %v336 = vpack.c.b16 %v300, %v298
        %v337 = vpack.c.b16 %v303, %v301
        %v338 = vpack.c.b16 %v304, %v302
        %v339 = vpack.c.b16 %v307, %v305
        %v340 = vpack.c.b16 %v308, %v306
        %v341 = vpack.c.b16 %v311, %v309
        %v342 = vpack.c.b16 %v312, %v310
        %v343 = vpack.c.b16 %v315, %v313
        %v344 = vpack.c.b16 %v316, %v314
        %v345 = vpack.c.b16 %v319, %v317
        %v346 = vpack.c.b16 %v320, %v318
        %v347 = vpack.c.b16 %v323, %v321
        %v348 = vpack.c.b16 %v324, %v322
        %v349 = vpack.c.b16 %v327, %v325
        %v350 = vpack.c.b16 %v328, %v326
        %v351 = vpack.c.b16 %v331, %v329
        %v352 = vpack.c.b16 %v332, %v330
        %v381 = vunpack.c.l.b16 %v248
        %v382 = vunpack.c.l.b16 %v249
        %v383 = vunpack.c.l.b16 %v250
        %v384 = vunpack.c.l.b16 %v251
        %v385 = vunpack.c.l.b16 %v252
        %v386 = vunpack.c.l.b16 %v253
        %v387 = vunpack.c.l.b16 %v254
        %v388 = vunpack.c.l.b16 %v255
        %v389 = vunpack.c.l.b16 %v256
        %v390 = vunpack.c.l.b16 %v257
        %v391 = vunpack.c.l.b16 %v258
        %v392 = vunpack.c.l.b16 %v259
        %v393 = vunpack.c.l.b16 %v260
        %v394 = vunpack.c.l.b16 %v261
        %v395 = vunpack.c.l.b16 %v262
        %v396 = vunpack.c.l.b16 %v263
        %v397 = vunpack.c.l.b16 %v264
        %v398 = vunpack.c.l.b16 %v265
        %v399 = vpack.c.b16 %v382, %v381
        %v400 = vpack.c.b16 %v384, %v383
        %v401 = vpack.c.b16 %v386, %v385
        %v402 = vpack.c.b16 %v388, %v387
        %v403 = vpack.c.b16 %v390, %v389
        %v404 = vpack.c.b16 %v392, %v391
        %v405 = vpack.c.b16 %v394, %v393
        %v406 = vpack.c.b16 %v396, %v395
        %v407 = vpack.c.b16 %v398, %v397
        %vm417 = vcmask 130048
        %v419 = vsel %vm417, %v334, 0
        %v422 = vsel %vm417, %v336, 0
        %v425 = vsel %vm417, %v338, 0
        %v428 = vsel %vm417, %v340, 0
        %v431 = vsel %vm417, %v342, 0
        %v434 = vsel %vm417, %v344, 0
        %v437 = vsel %vm417, %v346, 0
        %v440 = vsel %vm417, %v348, 0
        %v443 = vsel %vm417, %v350, 0
        %v446 = vsel %vm417, %v352, 0
        %448 = vmatprep.subr.bf16.mxu0 0
        %449 = vmatpush1.bf16.msra.mxu0 %v406
        %450 = vmatprep.subr.bf16.mxu0 0
        %451 = vmatpush1.bf16.msra.mxu0 %v405
        %452 = vmatprep.subr.bf16.mxu0 0
        %453 = vmatpush1.bf16.msra.mxu0 %v404
        %454 = vmatprep.subr.bf16.mxu0 0
        %455 = vmatpush1.bf16.msra.mxu0 %v403
        %456 = vmatprep.subr.bf16.mxu0 0
        %457 = vmatpush1.bf16.msra.mxu0 %v402
        %458 = vmatprep.subr.bf16.mxu0 0
        %459 = vmatpush1.bf16.msra.mxu0 %v401
        %460 = vmatprep.subr.bf16.mxu0 0
        %461 = vmatpush1.bf16.msra.mxu0 %v400
        %462 = vmatprep.subr.bf16.mxu0 0
        %463 = vmatpush1.bf16.msra.mxu0 %v399
        %464 = vmatprep.subr.bf16.mxu0 0
        %465 = vmatpush2.bf16.msra.mxu0 0
        %466 = vmatprep.subr.bf16.mxu0 0
        %467 = vmatpush2.bf16.msra.mxu0 0
        %468 = vmatprep.subr.bf16.mxu0 0
        %469 = vmatpush2.bf16.msra.mxu0 0
        %470 = vmatprep.subr.bf16.mxu0 0
        %471 = vmatpush2.bf16.msra.mxu0 0
        %472 = vmatprep.subr.bf16.mxu0 0
        %473 = vmatpush2.bf16.msra.mxu0 0
        %474 = vmatprep.subr.bf16.mxu0 0
        %475 = vmatpush2.bf16.msra.mxu0 0
        %476 = vmatprep.subr.bf16.mxu0 0
        %477 = vmatpush2.bf16.msra.mxu0 0
        %478 = vmatprep.subr.bf16.mxu0 0
        %479 = vmatpush2.bf16.msra.mxu0 %v407
        %480 = vmatprep.mubr.bf16.mxu0 %v419
        %481 = vmatmul.mubr.bf16.gmra.mxu0 %v333
        %v482 = vpop.f32.mrf.mxu0
        %v483 = vadd.f32 %v271, %v482
        %v484 = vpop.f32.mrf.mxu0
        %v485 = vpop.f32.mrf.mxu0
        %v486 = vadd.f32 %v271, %v485
        %v487 = vpop.f32.mrf.mxu0
        %488 = vmatprep.mubr.bf16.mxu0 %v422
        %489 = vmatmul.mubr.bf16.gmra.mxu0 %v335
        %v490 = vpop.f32.mrf.mxu0
        %v491 = vadd.f32 %v271, %v490
        %v492 = vpop.f32.mrf.mxu0
        %v493 = vpop.f32.mrf.mxu0
        %v494 = vadd.f32 %v271, %v493
        %v495 = vpop.f32.mrf.mxu0
        %496 = vmatprep.mubr.bf16.mxu0 %v425
        %497 = vmatmul.mubr.bf16.gmra.mxu0 %v337
        %v498 = vpop.f32.mrf.mxu0
        %v499 = vadd.f32 %v271, %v498
        %v500 = vpop.f32.mrf.mxu0
        %v501 = vpop.f32.mrf.mxu0
        %v502 = vadd.f32 %v271, %v501
        %v503 = vpop.f32.mrf.mxu0
        %504 = vmatprep.mubr.bf16.mxu0 %v428
        %505 = vmatmul.mubr.bf16.gmra.mxu0 %v339
        %v506 = vpop.f32.mrf.mxu0
        %v507 = vadd.f32 %v271, %v506
        %v508 = vpop.f32.mrf.mxu0
        %v509 = vpop.f32.mrf.mxu0
        %v510 = vadd.f32 %v271, %v509
        %v511 = vpop.f32.mrf.mxu0
        %512 = vmatprep.mubr.bf16.mxu0 %v431
        %513 = vmatmul.mubr.bf16.gmra.mxu0 %v341
        %v514 = vpop.f32.mrf.mxu0
        %v515 = vadd.f32 %v271, %v514
        %v516 = vpop.f32.mrf.mxu0
        %v517 = vpop.f32.mrf.mxu0
        %v518 = vadd.f32 %v271, %v517
        %v519 = vpop.f32.mrf.mxu0
        %520 = vmatprep.mubr.bf16.mxu0 %v434
        %521 = vmatmul.mubr.bf16.gmra.mxu0 %v343
        %v522 = vpop.f32.mrf.mxu0
        %v523 = vadd.f32 %v271, %v522
        %v524 = vpop.f32.mrf.mxu0
        %v525 = vpop.f32.mrf.mxu0
        %v526 = vadd.f32 %v271, %v525
        %v527 = vpop.f32.mrf.mxu0
        %528 = vmatprep.mubr.bf16.mxu0 %v437
        %529 = vmatmul.mubr.bf16.gmra.mxu0 %v345
        %v530 = vpop.f32.mrf.mxu0
        %v531 = vadd.f32 %v271, %v530
        %v532 = vpop.f32.mrf.mxu0
        %v533 = vpop.f32.mrf.mxu0
        %v534 = vadd.f32 %v271, %v533
        %v535 = vpop.f32.mrf.mxu0
        %536 = vmatprep.mubr.bf16.mxu0 %v440
        %537 = vmatmul.mubr.bf16.gmra.mxu0 %v347
        %v538 = vpop.f32.mrf.mxu0
        %v539 = vadd.f32 %v271, %v538
        %v540 = vpop.f32.mrf.mxu0
        %v541 = vpop.f32.mrf.mxu0
        %v542 = vadd.f32 %v271, %v541
        %v543 = vpop.f32.mrf.mxu0
        %544 = vmatprep.mubr.bf16.mxu0 %v443
        %545 = vmatmul.mubr.bf16.gmra.mxu0 %v349
        %v546 = vpop.f32.mrf.mxu0
        %v547 = vadd.f32 %v271, %v546
        %v548 = vpop.f32.mrf.mxu0
        %v549 = vpop.f32.mrf.mxu0
        %v550 = vadd.f32 %v271, %v549
        %v551 = vpop.f32.mrf.mxu0
        %552 = vmatprep.mubr.bf16.mxu0 %v446
        %553 = vmatmul.mubr.bf16.gmra.mxu0 %v351
        %v554 = vpop.f32.mrf.mxu0
        %v555 = vadd.f32 %v271, %v554
        %v556 = vpop.f32.mrf.mxu0
        %v557 = vpop.f32.mrf.mxu0
        %v558 = vadd.f32 %v271, %v557
        %v559 = vpop.f32.mrf.mxu0
        %560 = vdwg.mxu0
        %v561 = vmax.f32 %v483, 0.0
        %v562 = vmax.f32 %v486, 0.0
        %v563 = vmax.f32 %v491, 0.0
        %v564 = vmax.f32 %v494, 0.0
        %v565 = vmax.f32 %v499, 0.0
        %v566 = vmax.f32 %v502, 0.0
        %v567 = vmax.f32 %v507, 0.0
        %v568 = vmax.f32 %v510, 0.0
        %v569 = vmax.f32 %v515, 0.0
        %v570 = vmax.f32 %v518, 0.0
        %v571 = vmax.f32 %v523, 0.0
        %v572 = vmax.f32 %v526, 0.0
        %v573 = vmax.f32 %v531, 0.0
        %v574 = vmax.f32 %v534, 0.0
        %v575 = vmax.f32 %v539, 0.0
        %v576 = vmax.f32 %v542, 0.0
        %v577 = vmax.f32 %v547, 0.0
        %v578 = vmax.f32 %v550, 0.0
        %v579 = vmax.f32 %v555, 0.0
        %v580 = vmax.f32 %v558, 0.0
        %v581 = vld [vmem:[%s3] sm:$0xff]
        %v582 = vld [vmem:[%s3 + $0x8] sm:$0xff]
        %v583 = vld [vmem:[%s3 + $0x10] sm:$0xff]
        %v584 = vld [vmem:[%s3 + $0x18] sm:$0xff]
        %v585 = vld [vmem:[%s3 + $0x20] sm:$0xff]
        %v586 = vld [vmem:[%s3 + $0x28] sm:$0xff]
        %v587 = vld [vmem:[%s3 + $0x30] sm:$0xff]
        %v588 = vld [vmem:[%s3 + $0x38] sm:$0xff]
        %v589 = vmul.f32 %v561, %v561
        %v590 = vmul.f32 %v562, %v562
        %v591 = vmul.f32 %v563, %v563
        %v592 = vmul.f32 %v564, %v564
        %v593 = vmul.f32 %v565, %v565
        %v594 = vmul.f32 %v566, %v566
        %v595 = vmul.f32 %v567, %v567
        %v596 = vmul.f32 %v568, %v568
        %v597 = vmul.f32 %v569, %v569
        %v598 = vmul.f32 %v570, %v570
        %v599 = vmul.f32 %v571, %v571
        %v600 = vmul.f32 %v572, %v572
        %v601 = vmul.f32 %v573, %v573
        %v602 = vmul.f32 %v574, %v574
        %v603 = vmul.f32 %v575, %v575
        %v604 = vmul.f32 %v576, %v576
        %v605 = vmul.f32 %v577, %v577
        %v606 = vmul.f32 %v578, %v578
        %v607 = vmul.f32 %v579, %v579
        %v608 = vmul.f32 %v580, %v580
        %vm609 = vcmask 523264
        %v611 = vsel %vm609, %v589, 0
        %v614 = vsel %vm609, %v590, 0
        %v617 = vsel %vm609, %v591, 0
        %v620 = vsel %vm609, %v592, 0
        %v623 = vsel %vm609, %v593, 0
        %v626 = vsel %vm609, %v594, 0
        %v629 = vsel %vm609, %v595, 0
        %v632 = vsel %vm609, %v596, 0
        %v635 = vsel %vm609, %v597, 0
        %v638 = vsel %vm609, %v598, 0
        %v641 = vsel %vm609, %v599, 0
        %v644 = vsel %vm609, %v600, 0
        %v647 = vsel %vm609, %v601, 0
        %v650 = vsel %vm609, %v602, 0
        %v653 = vsel %vm609, %v603, 0
        %v656 = vsel %vm609, %v604, 0
        %v659 = vsel %vm609, %v605, 0
        %v662 = vsel %vm609, %v606, 0
        %v665 = vsel %vm609, %v607, 0
        %v668 = vsel %vm609, %v608, 0
        %670 = vmatprep.subr.mxu0 0.0
        %671 = vmatpush1.msra.mxu0 0.0
        %672 = vmatprep.subr.mxu0 0.0
        %673 = vmatpush1.msra.mxu0 0.0
        %674 = vmatprep.subr.mxu0 0.0
        %675 = vmatpush1.msra.mxu0 0.0
        %676 = vmatprep.subr.mxu0 0.0
        %677 = vmatpush1.msra.mxu0 0.0
        %678 = vmatprep.subr.mxu0 0.0
        %679 = vmatpush1.msra.mxu0 0.0
        %680 = vmatprep.subr.mxu0 0.0
        %681 = vmatpush1.msra.mxu0 0.0
        %682 = vmatprep.subr.mxu0 0.0
        %683 = vmatpush1.msra.mxu0 0.0
        %684 = vmatprep.subr.mxu0 0.0
        %685 = vmatpush1.msra.mxu0 0.0
        %686 = vmatprep.subr.mxu0 0.0
        %687 = vmatpush1.msra.mxu0 %v588
        %688 = vmatprep.subr.mxu0 0.0
        %689 = vmatpush1.msra.mxu0 %v587
        %690 = vmatprep.subr.mxu0 0.0
        %691 = vmatpush1.msra.mxu0 %v586
        %692 = vmatprep.subr.mxu0 0.0
        %693 = vmatpush1.msra.mxu0 %v585
        %694 = vmatprep.subr.mxu0 0.0
        %695 = vmatpush1.msra.mxu0 %v584
        %696 = vmatprep.subr.mxu0 0.0
        %697 = vmatpush1.msra.mxu0 %v583
        %698 = vmatprep.subr.mxu0 0.0
        %699 = vmatpush1.msra.mxu0 %v582
        %700 = vmatprep.subr.mxu0 0.0
        %701 = vmatpush1.msra.mxu0 %v581
        %702 = vmatprep.subr.mxu0 0.0
        %703 = vmatpush2.msra.mxu0 0.0
        %704 = vmatprep.subr.mxu0 0.0
        %705 = vmatpush2.msra.mxu0 0.0
        %706 = vmatprep.subr.mxu0 0.0
        %707 = vmatpush2.msra.mxu0 0.0
        %708 = vmatprep.subr.mxu0 0.0
        %709 = vmatpush2.msra.mxu0 0.0
        %710 = vmatprep.subr.mxu0 0.0
        %711 = vmatpush2.msra.mxu0 0.0
        %712 = vmatprep.subr.mxu0 0.0
        %713 = vmatpush2.msra.mxu0 0.0
        %714 = vmatprep.subr.mxu0 0.0
        %715 = vmatpush2.msra.mxu0 0.0
        %716 = vmatprep.subr.mxu0 0.0
        %717 = vmatpush2.msra.mxu0 0.0
        %718 = vmatprep.subr.mxu0 0.0
        %719 = vmatpush2.msra.mxu0 0.0
        %720 = vmatprep.subr.mxu0 0.0
        %721 = vmatpush2.msra.mxu0 0.0
        %722 = vmatprep.subr.mxu0 0.0
        %723 = vmatpush2.msra.mxu0 0.0
        %724 = vmatprep.subr.mxu0 0.0
        %725 = vmatpush2.msra.mxu0 0.0
        %726 = vmatprep.subr.mxu0 0.0
        %727 = vmatpush2.msra.mxu0 0.0
        %728 = vmatprep.subr.mxu0 0.0
        %729 = vmatpush2.msra.mxu0 0.0
        %730 = vmatprep.subr.mxu0 0.0
        %731 = vmatpush2.msra.mxu0 0.0
        %732 = vmatprep.subr.mxu0 0.0
        %733 = vmatpush2.msra.mxu0 0.0
        %734 = vmatprep.mubr.f32.mxu0 0.0
        %735 = vmatmul.mubr.f32.gmra.mxu0 %v611
        %v736 = vpop.f32.mrf.mxu0
        %v737 = vadd.f32 0.0, %v736
        %v738 = vpop.f32.mrf.mxu0
        %739 = vmatprep.mubr.f32.mxu0 0.0
        %740 = vmatmul.mubr.f32.gmra.mxu0 %v614
        %v741 = vpop.f32.mrf.mxu0
        %v742 = vadd.f32 0.0, %v741
        %v743 = vpop.f32.mrf.mxu0
        %744 = vmatprep.mubr.f32.mxu0 0.0
        %745 = vmatmul.mubr.f32.gmra.mxu0 %v617
        %v746 = vpop.f32.mrf.mxu0
        %v747 = vadd.f32 0.0, %v746
        %v748 = vpop.f32.mrf.mxu0
        %749 = vmatprep.mubr.f32.mxu0 0.0
        %750 = vmatmul.mubr.f32.gmra.mxu0 %v620
        %v751 = vpop.f32.mrf.mxu0
        %v752 = vadd.f32 0.0, %v751
        %v753 = vpop.f32.mrf.mxu0
        %754 = vmatprep.mubr.f32.mxu0 0.0
        %755 = vmatmul.mubr.f32.gmra.mxu0 %v623
        %v756 = vpop.f32.mrf.mxu0
        %v757 = vadd.f32 0.0, %v756
        %v758 = vpop.f32.mrf.mxu0
        %759 = vmatprep.mubr.f32.mxu0 0.0
        %760 = vmatmul.mubr.f32.gmra.mxu0 %v626
        %v761 = vpop.f32.mrf.mxu0
        %v762 = vadd.f32 0.0, %v761
        %v763 = vpop.f32.mrf.mxu0
        %764 = vmatprep.mubr.f32.mxu0 0.0
        %765 = vmatmul.mubr.f32.gmra.mxu0 %v629
        %v766 = vpop.f32.mrf.mxu0
        %v767 = vadd.f32 0.0, %v766
        %v768 = vpop.f32.mrf.mxu0
        %769 = vmatprep.mubr.f32.mxu0 0.0
        %770 = vmatmul.mubr.f32.gmra.mxu0 %v632
        %v771 = vpop.f32.mrf.mxu0
        %v772 = vadd.f32 0.0, %v771
        %v773 = vpop.f32.mrf.mxu0
        %774 = vmatprep.mubr.f32.mxu0 0.0
        %775 = vmatmul.mubr.f32.gmra.mxu0 %v635
        %v776 = vpop.f32.mrf.mxu0
        %v777 = vadd.f32 0.0, %v776
        %v778 = vpop.f32.mrf.mxu0
        %779 = vmatprep.mubr.f32.mxu0 0.0
        %780 = vmatmul.mubr.f32.gmra.mxu0 %v638
        %v781 = vpop.f32.mrf.mxu0
        %v782 = vadd.f32 0.0, %v781
        %v783 = vpop.f32.mrf.mxu0
        %784 = vmatprep.mubr.f32.mxu0 0.0
        %785 = vmatmul.mubr.f32.gmra.mxu0 %v641
        %v786 = vpop.f32.mrf.mxu0
        %v787 = vadd.f32 0.0, %v786
        %v788 = vpop.f32.mrf.mxu0
        %789 = vmatprep.mubr.f32.mxu0 0.0
        %790 = vmatmul.mubr.f32.gmra.mxu0 %v644
        %v791 = vpop.f32.mrf.mxu0
        %v792 = vadd.f32 0.0, %v791
        %v793 = vpop.f32.mrf.mxu0
        %794 = vmatprep.mubr.f32.mxu0 0.0
        %795 = vmatmul.mubr.f32.gmra.mxu0 %v647
        %v796 = vpop.f32.mrf.mxu0
        %v797 = vadd.f32 0.0, %v796
        %v798 = vpop.f32.mrf.mxu0
        %799 = vmatprep.mubr.f32.mxu0 0.0
        %800 = vmatmul.mubr.f32.gmra.mxu0 %v650
        %v801 = vpop.f32.mrf.mxu0
        %v802 = vadd.f32 0.0, %v801
        %v803 = vpop.f32.mrf.mxu0
        %804 = vmatprep.mubr.f32.mxu0 0.0
        %805 = vmatmul.mubr.f32.gmra.mxu0 %v653
        %v806 = vpop.f32.mrf.mxu0
        %v807 = vadd.f32 0.0, %v806
        %v808 = vpop.f32.mrf.mxu0
        %809 = vmatprep.mubr.f32.mxu0 0.0
        %810 = vmatmul.mubr.f32.gmra.mxu0 %v656
        %v811 = vpop.f32.mrf.mxu0
        %v812 = vadd.f32 0.0, %v811
        %v813 = vpop.f32.mrf.mxu0
        %814 = vmatprep.mubr.f32.mxu0 0.0
        %815 = vmatmul.mubr.f32.gmra.mxu0 %v659
        %v816 = vpop.f32.mrf.mxu0
        %v817 = vadd.f32 0.0, %v816
        %v818 = vpop.f32.mrf.mxu0
        %819 = vmatprep.mubr.f32.mxu0 0.0
        %820 = vmatmul.mubr.f32.gmra.mxu0 %v662
        %v821 = vpop.f32.mrf.mxu0
        %v822 = vadd.f32 0.0, %v821
        %v823 = vpop.f32.mrf.mxu0
        %824 = vmatprep.mubr.f32.mxu0 0.0
        %825 = vmatmul.mubr.f32.gmra.mxu0 %v665
        %v826 = vpop.f32.mrf.mxu0
        %v827 = vadd.f32 0.0, %v826
        %v828 = vpop.f32.mrf.mxu0
        %829 = vmatprep.mubr.f32.mxu0 0.0
        %830 = vmatmul.mubr.f32.gmra.mxu0 %v668
        %v831 = vpop.f32.mrf.mxu0
        %v832 = vadd.f32 0.0, %v831
        %v833 = vpop.f32.mrf.mxu0
        %834 = vdwg.mxu0
        %v835 = vmul.f32 %v737, 2e-05
        %v836 = vmul.f32 %v742, 2e-05
        %v837 = vmul.f32 %v747, 2e-05
        %v838 = vmul.f32 %v752, 2e-05
        %v839 = vmul.f32 %v757, 2e-05
        %v840 = vmul.f32 %v762, 2e-05
        %v841 = vmul.f32 %v767, 2e-05
        %v842 = vmul.f32 %v772, 2e-05
        %v843 = vmul.f32 %v777, 2e-05
        %v844 = vmul.f32 %v782, 2e-05
        %v845 = vmul.f32 %v787, 2e-05
        %v846 = vmul.f32 %v792, 2e-05
        %v847 = vmul.f32 %v797, 2e-05
        %v848 = vmul.f32 %v802, 2e-05
        %v849 = vmul.f32 %v807, 2e-05
        %v850 = vmul.f32 %v812, 2e-05
        %v851 = vmul.f32 %v817, 2e-05
        %v852 = vmul.f32 %v822, 2e-05
        %v853 = vmul.f32 %v827, 2e-05
        %v854 = vmul.f32 %v832, 2e-05
        %v855 = vadd.f32 %v835, 1.0
        %v856 = vadd.f32 %v836, 1.0
        %v857 = vadd.f32 %v837, 1.0
        %v858 = vadd.f32 %v838, 1.0
        %v859 = vadd.f32 %v839, 1.0
        %v860 = vadd.f32 %v840, 1.0
        %v861 = vadd.f32 %v841, 1.0
        %v862 = vadd.f32 %v842, 1.0
        %v863 = vadd.f32 %v843, 1.0
        %v864 = vadd.f32 %v844, 1.0
        %v865 = vadd.f32 %v845, 1.0
        %v866 = vadd.f32 %v846, 1.0
        %v867 = vadd.f32 %v847, 1.0
        %v868 = vadd.f32 %v848, 1.0
        %v869 = vadd.f32 %v849, 1.0
        %v870 = vadd.f32 %v850, 1.0
        %v871 = vadd.f32 %v851, 1.0
        %v872 = vadd.f32 %v852, 1.0
        %v873 = vadd.f32 %v853, 1.0
        %v874 = vadd.f32 %v854, 1.0
        %v875 = vlog2.pop %v855
        %v876 = vmul.f32 %v875, 0.6931472
        %v877 = vlog2.pop %v856
        %v878 = vmul.f32 %v877, 0.6931472
        %v879 = vlog2.pop %v857
        %v880 = vmul.f32 %v879, 0.6931472
        %v881 = vlog2.pop %v858
        %v882 = vmul.f32 %v881, 0.6931472
        %v883 = vlog2.pop %v859
        %v884 = vmul.f32 %v883, 0.6931472
        %v885 = vlog2.pop %v860
        %v886 = vmul.f32 %v885, 0.6931472
        %v887 = vlog2.pop %v861
        %v888 = vmul.f32 %v887, 0.6931472
        %v889 = vlog2.pop %v862
        %v890 = vmul.f32 %v889, 0.6931472
        %v891 = vlog2.pop %v863
        %v892 = vmul.f32 %v891, 0.6931472
        %v893 = vlog2.pop %v864
        %v894 = vmul.f32 %v893, 0.6931472
        %v895 = vlog2.pop %v865
        %v896 = vmul.f32 %v895, 0.6931472
        %v897 = vlog2.pop %v866
        %v898 = vmul.f32 %v897, 0.6931472
        %v899 = vlog2.pop %v867
        %v900 = vmul.f32 %v899, 0.6931472
        %v901 = vlog2.pop %v868
        %v902 = vmul.f32 %v901, 0.6931472
        %v903 = vlog2.pop %v869
        %v904 = vmul.f32 %v903, 0.6931472
        %v905 = vlog2.pop %v870
        %v906 = vmul.f32 %v905, 0.6931472
        %v907 = vlog2.pop %v871
        %v908 = vmul.f32 %v907, 0.6931472
        %v909 = vlog2.pop %v872
        %v910 = vmul.f32 %v909, 0.6931472
        %v911 = vlog2.pop %v873
        %v912 = vmul.f32 %v911, 0.6931472
        %v913 = vlog2.pop %v874
        %v914 = vmul.f32 %v913, 0.6931472
        %v915 = vmul.f32 %v876, -0.75
        %v916 = vmul.f32 %v878, -0.75
        %v917 = vmul.f32 %v880, -0.75
        %v918 = vmul.f32 %v882, -0.75
        %v919 = vmul.f32 %v884, -0.75
        %v920 = vmul.f32 %v886, -0.75
        %v921 = vmul.f32 %v888, -0.75
        %v922 = vmul.f32 %v890, -0.75
        %v923 = vmul.f32 %v892, -0.75
        %v924 = vmul.f32 %v894, -0.75
        %v925 = vmul.f32 %v896, -0.75
        %v926 = vmul.f32 %v898, -0.75
        %v927 = vmul.f32 %v900, -0.75
        %v928 = vmul.f32 %v902, -0.75
        %v929 = vmul.f32 %v904, -0.75
        %v930 = vmul.f32 %v906, -0.75
        %v931 = vmul.f32 %v908, -0.75
        %v932 = vmul.f32 %v910, -0.75
        %v933 = vmul.f32 %v912, -0.75
        %v934 = vmul.f32 %v914, -0.75
        %v935 = vmul.f32 %v915, 1.442695
        %v936 = vpow.pop %v935
        %v937 = vmul.f32 %v916, 1.442695
        %v938 = vpow.pop %v937
        %v939 = vmul.f32 %v917, 1.442695
        %v940 = vpow.pop %v939
        %v941 = vmul.f32 %v918, 1.442695
        %v942 = vpow.pop %v941
        %v943 = vmul.f32 %v919, 1.442695
        %v944 = vpow.pop %v943
        %v945 = vmul.f32 %v920, 1.442695
        %v946 = vpow.pop %v945
        %v947 = vmul.f32 %v921, 1.442695
        %v948 = vpow.pop %v947
        %v949 = vmul.f32 %v922, 1.442695
        %v950 = vpow.pop %v949
        %v951 = vmul.f32 %v923, 1.442695
        %v952 = vpow.pop %v951
        %v953 = vmul.f32 %v924, 1.442695
        %v954 = vpow.pop %v953
        %v955 = vmul.f32 %v925, 1.442695
        %v956 = vpow.pop %v955
        %v957 = vmul.f32 %v926, 1.442695
        %v958 = vpow.pop %v957
        %v959 = vmul.f32 %v927, 1.442695
        %v960 = vpow.pop %v959
        %v961 = vmul.f32 %v928, 1.442695
        %v962 = vpow.pop %v961
        %v963 = vmul.f32 %v929, 1.442695
        %v964 = vpow.pop %v963
        %v965 = vmul.f32 %v930, 1.442695
        %v966 = vpow.pop %v965
        %v967 = vmul.f32 %v931, 1.442695
        %v968 = vpow.pop %v967
        %v969 = vmul.f32 %v932, 1.442695
        %v970 = vpow.pop %v969
        %v971 = vmul.f32 %v933, 1.442695
        %v972 = vpow.pop %v971
        %v973 = vmul.f32 %v934, 1.442695
        %v974 = vpow.pop %v973
        %v975 = vmul.f32 %v561, %v936
        %v976 = vmul.f32 %v562, %v938
        %v977 = vmul.f32 %v563, %v940
        %v978 = vmul.f32 %v564, %v942
        %v979 = vmul.f32 %v565, %v944
        %v980 = vmul.f32 %v566, %v946
        %v981 = vmul.f32 %v567, %v948
        %v982 = vmul.f32 %v568, %v950
        %v983 = vmul.f32 %v569, %v952
        %v984 = vmul.f32 %v570, %v954
        %v985 = vmul.f32 %v571, %v956
        %v986 = vmul.f32 %v572, %v958
        %v987 = vmul.f32 %v573, %v960
        %v988 = vmul.f32 %v574, %v962
        %v989 = vmul.f32 %v575, %v964
        %v990 = vmul.f32 %v576, %v966
        %v991 = vmul.f32 %v577, %v968
        %v992 = vmul.f32 %v578, %v970
        %v993 = vmul.f32 %v579, %v972
        %v994 = vmul.f32 %v580, %v974
        %995 = vst.msk [vmem:[%s204] sm:$0xff] %vm609, %v975
        %996 = vst.msk [vmem:[%s204 + $0x8] sm:$0xff] %vm609, %v976
        %997 = vst.msk [vmem:[%s204 + $0x10] sm:$0xff] %vm609, %v977
        %998 = vst.msk [vmem:[%s204 + $0x18] sm:$0xff] %vm609, %v978
        %999 = vst.msk [vmem:[%s204 + $0x20] sm:$0xff] %vm609, %v979
        %1000 = vst.msk [vmem:[%s204 + $0x28] sm:$0xff] %vm609, %v980
        %1001 = vst.msk [vmem:[%s204 + $0x30] sm:$0xff] %vm609, %v981
        %1002 = vst.msk [vmem:[%s204 + $0x38] sm:$0xff] %vm609, %v982
        %1003 = vst.msk [vmem:[%s204 + $0x40] sm:$0xff] %vm609, %v983
        %1004 = vst.msk [vmem:[%s204 + $0x48] sm:$0xff] %vm609, %v984
        %1005 = vst.msk [vmem:[%s204 + $0x50] sm:$0xff] %vm609, %v985
        %1006 = vst.msk [vmem:[%s204 + $0x58] sm:$0xff] %vm609, %v986
        %1007 = vst.msk [vmem:[%s204 + $0x60] sm:$0xff] %vm609, %v987
        %1008 = vst.msk [vmem:[%s204 + $0x68] sm:$0xff] %vm609, %v988
        %1009 = vst.msk [vmem:[%s204 + $0x70] sm:$0xff] %vm609, %v989
        %1010 = vst.msk [vmem:[%s204 + $0x78] sm:$0xff] %vm609, %v990
        %1011 = vst.msk [vmem:[%s204 + $0x80] sm:$0xff] %vm609, %v991
        %1012 = vst.msk [vmem:[%s204 + $0x88] sm:$0xff] %vm609, %v992
        %1013 = vst.msk [vmem:[%s204 + $0x90] sm:$0xff] %vm609, %v993
        %1014 = vst.msk [vmem:[%s204 + $0x98] sm:$0xff] %vm609, %v994
        %s1015 = sand.u32 %s112, 1
        %s1016 = sand.u32 %s112, 1
        %s1017 = smul.addr %s1016, 160
        %s1018 = scalar_lea.vmem [#allocation2], %s1017
        // Predicated region
        $region37: #{x_model_forward.13} parent=35 // pred_check
          %p1019 = pneg %p122
        $region38: #{x_model_forward.13} parent=35 // pred_check_branch
          %1021 = sbr.rel (%p1019) target = $region40
        $region39: #{x_model_forward.13} parent=35 // pred_region
          %s1022 = smul.u32 20, %s15
          %s1023 = ssub.s32 36, %s1022
          %p1024 = scmp.lt.s32.totalorder %s1023, 20
          %s1025 = scalar_select %p1024, %s1023, 20
          %s1026 = smul.u32 128, %s1025
          %p1027 = scmp.ne.s32.totalorder 0, %s1026
          %s1028 = smul.addr %s1022, 8
          %s1029 = scalar_lea.vmem %s4, %s1028
          // Predicated region
          $region41: #{x_model_forward.13} parent=39 // pred_check
            %p1030 = pneg %p1027
          $region42: #{x_model_forward.13} parent=39 // pred_check_branch
            %1032 = sbr.rel (%p1030) target = $region44
          $region43: #{x_model_forward.13} parent=39 // pred_region
            // Predicated region
            $region45: #{x_model_forward.13} parent=43 // pred_check
              _
            $region46: #{x_model_forward.13} parent=43 // pred_check_branch
              %1034 = sbr.rel (0) target = $region48
            $region47: #{x_model_forward.13} parent=43 // pred_region
              // Predicated region
              $region67: #{x_model_forward.13} parent=47 // pred_check
                _
              $region68: #{x_model_forward.13} parent=47 // pred_check_branch
                %1123 = sbr.rel (0) target = $region70
              $region69: #{x_model_forward.13} parent=47 // pred_region
                %s1124 = sdiv.u32.pop %s1025, 20
                %s1125 = srem.u32.pop %s1025, 20
                // While loop
                $region71: #{x_model_forward.13} parent=69 // loop_pre_header
                  _
                $region72: #{x_model_forward.13} parent=69 // loop_header
                  %s1127 = sphi 0, %s1129
                  %p1128 = scmp.ge.s32.totalorder %s1127, %s1124
                  %s1132 = sphi 0, %s1177
                  %s1133 = sphi %s1018, %s1180
                  %s1134 = sphi %s1029, %s1181
                $region73: #{x_model_forward.13} parent=69 // loop_header_branch
                  %1131 = sbr.rel (%p1128) target = $region77
                $region74: #{x_model_forward.13} parent=69 // loop_body
                  %v1135 = vld [vmem:[%s1133] sm:$0xff]
                  %1136 = vst [vmem:[%s1134] sm:$0xff] %v1135
                  %v1137 = vld [vmem:[%s1133 + $0x8] sm:$0xff]
                  %1138 = vst [vmem:[%s1134 + $0x8] sm:$0xff] %v1137
                  %v1139 = vld [vmem:[%s1133 + $0x10] sm:$0xff]
                  %1140 = vst [vmem:[%s1134 + $0x10] sm:$0xff] %v1139
                  %v1141 = vld [vmem:[%s1133 + $0x18] sm:$0xff]
                  %1142 = vst [vmem:[%s1134 + $0x18] sm:$0xff] %v1141
                  %v1143 = vld [vmem:[%s1133 + $0x20] sm:$0xff]
                  %1144 = vst [vmem:[%s1134 + $0x20] sm:$0xff] %v1143
                  %v1145 = vld [vmem:[%s1133 + $0x28] sm:$0xff]
                  %1146 = vst [vmem:[%s1134 + $0x28] sm:$0xff] %v1145
                  %v1147 = vld [vmem:[%s1133 + $0x30] sm:$0xff]
                  %1148 = vst [vmem:[%s1134 + $0x30] sm:$0xff] %v1147
                  %v1149 = vld [vmem:[%s1133 + $0x38] sm:$0xff]
                  %1150 = vst [vmem:[%s1134 + $0x38] sm:$0xff] %v1149
                  %v1151 = vld [vmem:[%s1133 + $0x40] sm:$0xff]
                  %1152 = vst [vmem:[%s1134 + $0x40] sm:$0xff] %v1151
                  %v1153 = vld [vmem:[%s1133 + $0x48] sm:$0xff]
                  %1154 = vst [vmem:[%s1134 + $0x48] sm:$0xff] %v1153
                  %v1155 = vld [vmem:[%s1133 + $0x50] sm:$0xff]
                  %1156 = vst [vmem:[%s1134 + $0x50] sm:$0xff] %v1155
                  %v1157 = vld [vmem:[%s1133 + $0x58] sm:$0xff]
                  %1158 = vst [vmem:[%s1134 + $0x58] sm:$0xff] %v1157
                  %v1159 = vld [vmem:[%s1133 + $0x60] sm:$0xff]
                  %1160 = vst [vmem:[%s1134 + $0x60] sm:$0xff] %v1159
                  %v1161 = vld [vmem:[%s1133 + $0x68] sm:$0xff]
                  %1162 = vst [vmem:[%s1134 + $0x68] sm:$0xff] %v1161
                  %v1163 = vld [vmem:[%s1133 + $0x70] sm:$0xff]
                  %1164 = vst [vmem:[%s1134 + $0x70] sm:$0xff] %v1163
                  %v1165 = vld [vmem:[%s1133 + $0x78] sm:$0xff]
                  %1166 = vst [vmem:[%s1134 + $0x78] sm:$0xff] %v1165
                  %v1167 = vld [vmem:[%s1133 + $0x80] sm:$0xff]
                  %1168 = vst [vmem:[%s1134 + $0x80] sm:$0xff] %v1167
                  %v1169 = vld [vmem:[%s1133 + $0x88] sm:$0xff]
                  %1170 = vst [vmem:[%s1134 + $0x88] sm:$0xff] %v1169
                  %v1171 = vld [vmem:[%s1133 + $0x90] sm:$0xff]
                  %1172 = vst [vmem:[%s1134 + $0x90] sm:$0xff] %v1171
                  %v1173 = vld [vmem:[%s1133 + $0x98] sm:$0xff]
                  %1174 = vst [vmem:[%s1134 + $0x98] sm:$0xff] %v1173
                  %s1175 = sadd.s32 1, %s1132
                  %p1176 = scmp.ge.s32.totalorder %s1175, %s1124
                  %s1177 = scalar_select %p1176, 0, %s1175
                  %s1178 = smul.u32 %s1177, 160
                  %s1179 = smul.u32 %s1177, 160
                  %s1180 = scalar_lea.vmem %s1018, %s1178 [#allocation2]
                  %s1181 = scalar_lea.vmem %s1029, %s1179
                $region75: #{x_model_forward.13} parent=69 // loop_footer
                  %s1129 = sadd.s32 %s1127, 1
                $region76: #{x_model_forward.13} parent=69 // loop_footer_branch
                  %1126 = sbr.rel target = $region72
                $region77: #{x_model_forward.13} parent=69 // loop_exit
                  _
                %s1182 = sdiv.u32.pop %s1025, 20
                %s1183 = srem.u32.pop %s1025, 20
                %s1184 = smul.u32 %s1182, 20
                %s1185 = smul.u32 8, %s1184
                %s1186 = scalar_lea.vmem %s1018, %s1185 [#allocation2]
                %s1187 = smul.u32 8, %s1184
                %s1188 = scalar_lea.vmem %s1029, %s1187
                // While loop
                $region78: #{x_model_forward.13} parent=69 // loop_pre_header
                  _
                $region79: #{x_model_forward.13} parent=69 // loop_header
                  %s1190 = sphi 0, %s1192
                  %p1191 = scmp.ge.s32.totalorder %s1190, %s1183
                  %s1195 = sphi 0, %s1202
                  %s1196 = sphi %s1186, %s1205
                  %s1197 = sphi %s1188, %s1206
                $region80: #{x_model_forward.13} parent=69 // loop_header_branch
                  %1194 = sbr.rel (%p1191) target = $region84
                $region81: #{x_model_forward.13} parent=69 // loop_body
                  %v1198 = vld [vmem:[%s1196] sm:$0xff]
                  %1199 = vst [vmem:[%s1197] sm:$0xff] %v1198
                  %s1200 = sadd.s32 1, %s1195
                  %p1201 = scmp.ge.s32.totalorder %s1200, %s1183
                  %s1202 = scalar_select %p1201, 0, %s1200
                  %s1203 = smul.u32 %s1202, 8
                  %s1204 = smul.u32 %s1202, 8
                  %s1205 = scalar_lea.vmem %s1186, %s1203 [#allocation2]
                  %s1206 = scalar_lea.vmem %s1188, %s1204
                $region82: #{x_model_forward.13} parent=69 // loop_footer
                  %s1192 = sadd.s32 %s1190, 1
                $region83: #{x_model_forward.13} parent=69 // loop_footer_branch
                  %1189 = sbr.rel target = $region79
                $region84: #{x_model_forward.13} parent=69 // loop_exit
                  _
              $region70: #{x_model_forward.13} parent=47 // pred_fallthru
                _
              // Predicated region
              $region85: #{x_model_forward.13} parent=47 // pred_check
                _
              $region86: #{x_model_forward.13} parent=47 // pred_check_branch
                %1208 = sbr.rel target = $region88
              $region87: #{x_model_forward.13} parent=47 // pred_region
                _
              $region88: #{x_model_forward.13} parent=47 // pred_fallthru
                _
            $region48: #{x_model_forward.13} parent=43 // pred_fallthru
              _
            // Predicated region
            $region49: #{x_model_forward.13} parent=43 // pred_check
              _
            $region50: #{x_model_forward.13} parent=43 // pred_check_branch
              %1036 = sbr.rel target = $region52
            $region51: #{x_model_forward.13} parent=43 // pred_region
              %s1038 = ssub.s32 256, 1
              %s1039 = sdiv.u32.pop %s1025, 20
              %s1040 = srem.u32.pop %s1025, 20
              // While loop
              $region53: #{x_model_forward.13} parent=51 // loop_pre_header
                _
              $region54: #{x_model_forward.13} parent=51 // loop_header
                %s1042 = sphi 0, %s1044
                %p1043 = scmp.ge.s32.totalorder %s1042, %s1039
                %s1047 = sphi 0, %s1092
                %s1048 = sphi %s1018, %s1095
                %s1049 = sphi %s1029, %s1096
              $region55: #{x_model_forward.13} parent=51 // loop_header_branch
                %1046 = sbr.rel (%p1043) target = $region59
              $region56: #{x_model_forward.13} parent=51 // loop_body
                %v1050 = vld [vmem:[%s1048] sm:%s1038]
                %1051 = vst [vmem:[%s1049] sm:%s1038] %v1050
                %v1052 = vld [vmem:[%s1048 + $0x8] sm:%s1038]
                %1053 = vst [vmem:[%s1049 + $0x8] sm:%s1038] %v1052
                %v1054 = vld [vmem:[%s1048 + $0x10] sm:%s1038]
                %1055 = vst [vmem:[%s1049 + $0x10] sm:%s1038] %v1054
                %v1056 = vld [vmem:[%s1048 + $0x18] sm:%s1038]
                %1057 = vst [vmem:[%s1049 + $0x18] sm:%s1038] %v1056
                %v1058 = vld [vmem:[%s1048 + $0x20] sm:%s1038]
                %1059 = vst [vmem:[%s1049 + $0x20] sm:%s1038] %v1058
                %v1060 = vld [vmem:[%s1048 + $0x28] sm:%s1038]
                %1061 = vst [vmem:[%s1049 + $0x28] sm:%s1038] %v1060
                %v1062 = vld [vmem:[%s1048 + $0x30] sm:%s1038]
                %1063 = vst [vmem:[%s1049 + $0x30] sm:%s1038] %v1062
                %v1064 = vld [vmem:[%s1048 + $0x38] sm:%s1038]
                %1065 = vst [vmem:[%s1049 + $0x38] sm:%s1038] %v1064
                %v1066 = vld [vmem:[%s1048 + $0x40] sm:%s1038]
                %1067 = vst [vmem:[%s1049 + $0x40] sm:%s1038] %v1066
                %v1068 = vld [vmem:[%s1048 + $0x48] sm:%s1038]
                %1069 = vst [vmem:[%s1049 + $0x48] sm:%s1038] %v1068
                %v1070 = vld [vmem:[%s1048 + $0x50] sm:%s1038]
                %1071 = vst [vmem:[%s1049 + $0x50] sm:%s1038] %v1070
                %v1072 = vld [vmem:[%s1048 + $0x58] sm:%s1038]
                %1073 = vst [vmem:[%s1049 + $0x58] sm:%s1038] %v1072
                %v1074 = vld [vmem:[%s1048 + $0x60] sm:%s1038]
                %1075 = vst [vmem:[%s1049 + $0x60] sm:%s1038] %v1074
                %v1076 = vld [vmem:[%s1048 + $0x68] sm:%s1038]
                %1077 = vst [vmem:[%s1049 + $0x68] sm:%s1038] %v1076
                %v1078 = vld [vmem:[%s1048 + $0x70] sm:%s1038]
                %1079 = vst [vmem:[%s1049 + $0x70] sm:%s1038] %v1078
                %v1080 = vld [vmem:[%s1048 + $0x78] sm:%s1038]
                %1081 = vst [vmem:[%s1049 + $0x78] sm:%s1038] %v1080
                %v1082 = vld [vmem:[%s1048 + $0x80] sm:%s1038]
                %1083 = vst [vmem:[%s1049 + $0x80] sm:%s1038] %v1082
                %v1084 = vld [vmem:[%s1048 + $0x88] sm:%s1038]
                %1085 = vst [vmem:[%s1049 + $0x88] sm:%s1038] %v1084
                %v1086 = vld [vmem:[%s1048 + $0x90] sm:%s1038]
                %1087 = vst [vmem:[%s1049 + $0x90] sm:%s1038] %v1086
                %v1088 = vld [vmem:[%s1048 + $0x98] sm:%s1038]
                %1089 = vst [vmem:[%s1049 + $0x98] sm:%s1038] %v1088
                %s1090 = sadd.s32 1, %s1047
                %p1091 = scmp.ge.s32.totalorder %s1090, %s1039
                %s1092 = scalar_select %p1091, 0, %s1090
                %s1093 = smul.u32 %s1092, 160
                %s1094 = smul.u32 %s1092, 160
                %s1095 = scalar_lea.vmem %s1018, %s1093 [#allocation2]
                %s1096 = scalar_lea.vmem %s1029, %s1094
              $region57: #{x_model_forward.13} parent=51 // loop_footer
                %s1044 = sadd.s32 %s1042, 1
              $region58: #{x_model_forward.13} parent=51 // loop_footer_branch
                %1041 = sbr.rel target = $region54
              $region59: #{x_model_forward.13} parent=51 // loop_exit
                _
              %s1097 = sdiv.u32.pop %s1025, 20
              %s1098 = srem.u32.pop %s1025, 20
              %s1099 = smul.u32 %s1097, 20
              %s1100 = smul.u32 8, %s1099
              %s1101 = scalar_lea.vmem %s1018, %s1100 [#allocation2]
              %s1102 = smul.u32 8, %s1099
              %s1103 = scalar_lea.vmem %s1029, %s1102
              // While loop
              $region60: #{x_model_forward.13} parent=51 // loop_pre_header
                _
              $region61: #{x_model_forward.13} parent=51 // loop_header
                %s1105 = sphi 0, %s1107
                %p1106 = scmp.ge.s32.totalorder %s1105, %s1098
                %s1110 = sphi 0, %s1117
                %s1111 = sphi %s1101, %s1120
                %s1112 = sphi %s1103, %s1121
              $region62: #{x_model_forward.13} parent=51 // loop_header_branch
                %1109 = sbr.rel (%p1106) target = $region66
              $region63: #{x_model_forward.13} parent=51 // loop_body
                %v1113 = vld [vmem:[%s1111] sm:%s1038]
                %1114 = vst [vmem:[%s1112] sm:%s1038] %v1113
                %s1115 = sadd.s32 1, %s1110
                %p1116 = scmp.ge.s32.totalorder %s1115, %s1098
                %s1117 = scalar_select %p1116, 0, %s1115
                %s1118 = smul.u32 %s1117, 8
                %s1119 = smul.u32 %s1117, 8
                %s1120 = scalar_lea.vmem %s1101, %s1118 [#allocation2]
                %s1121 = scalar_lea.vmem %s1103, %s1119
              $region64: #{x_model_forward.13} parent=51 // loop_footer
                %s1107 = sadd.s32 %s1105, 1
              $region65: #{x_model_forward.13} parent=51 // loop_footer_branch
                %1104 = sbr.rel target = $region61
              $region66: #{x_model_forward.13} parent=51 // loop_exit
                _
            $region52: #{x_model_forward.13} parent=43 // pred_fallthru
              _
          $region44: #{x_model_forward.13} parent=39 // pred_fallthru
            _
          %1209 = vnop
        $region40: #{x_model_forward.13} parent=35 // pred_fallthru
          _
      $region36: #{x_model_forward.13} parent=5 // pred_fallthru
        _
      %p1210 = scmp.le.s32.totalorder 2, %s10
      // Predicated region
      $region89: #{x_model_forward.13} parent=5 // pred_check
        %p1211 = pneg %p1210
      $region90: #{x_model_forward.13} parent=5 // pred_check_branch
        %1213 = sbr.rel (%p1211) target = $region92
      $region91: #{x_model_forward.13} parent=5 // pred_region
        %s1214 = ssub.s32 %s10, 2
        // Predicated region
        $region93: #{x_model_forward.13} parent=91 // pred_check
          %p1215 = pneg %p128
        $region94: #{x_model_forward.13} parent=91 // pred_check_branch
          %1217 = sbr.rel (%p1215) target = $region96
        $region95: #{x_model_forward.13} parent=91 // pred_region
          %s1218 = sand.u32 %s113, 1
          %s1219 = sand.u32 %s113, 1
          %s1220 = smul.addr %s1219, 160
          %s1221 = scalar_lea.vmem [#allocation2], %s1220
        $region96: #{x_model_forward.13} parent=91 // pred_fallthru
          _
      $region92: #{x_model_forward.13} parent=5 // pred_fallthru
        _
    $region6: #{x_model_forward.13} parent=1 // loop_footer
      %s14 = sadd.s32 1, %s10
    $region7: #{x_model_forward.13} parent=1 // loop_footer_branch
      %9 = sbr.rel target = $region3
    $region8: #{x_model_forward.13} parent=1 // loop_exit
      _

// kernel: x_model_forward.14
$region0: #{x_model_forward.14}
  #allocation0 [shape = 'u32[]', space=smem, size = 0x4, offset = 0x4, fixed_abs, tag = 'smem constant byte address 0x4 - core index']
  #allocation1 [shape = 'u32[144,128]{1,0:T(1,128)}', space=vmem, size = 0x12000, scoped, tag = 'internal scratch']
  %s0 = inlined_call_operand.vmem [shape: f32[9,10,320], index: 0, kind: input, shape index: {}]
  %s1 = inlined_call_operand.vmem [shape: f32[10,320], index: 1, kind: output, shape index: {}]
  %s2 = sld [smem:[#allocation0]]
  $region56: #{x_model_forward.14} parent=0
    _
  %s4 = ssub.s32 1, %s2
  %s5 = scalar_select 0, %s4, %s2
  $region1: #{x_model_forward.14} parent=0
    #allocation2 [shape = 'u8[442368]{0}', space=vmem, size = 0x6c000, scoped, tag = 'input window, operand 0, single buffered']
    #allocation3 [shape = 'u8[49152]{0}', space=vmem, size = 0xc000, scoped, tag = 'output window, operand 0, single buffered']
    // Predicated region
    $region2: #{x_model_forward.14} parent=1 // pred_check
      _
    $region3: #{x_model_forward.14} parent=1 // pred_check_branch
      %7 = sbr.rel (0) target = $region5
    $region4: #{x_model_forward.14} parent=1 // pred_region
      // Predicated region
      $region6: #{x_model_forward.14} parent=4 // pred_check
        _
      $region7: #{x_model_forward.14} parent=4 // pred_check_branch
        %9 = sbr.rel (0) target = $region9
      $region8: #{x_model_forward.14} parent=4 // pred_region
        // Predicated region
        $region10: #{x_model_forward.14} parent=8 // pred_check
          _
        $region11: #{x_model_forward.14} parent=8 // pred_check_branch
          %11 = sbr.rel (0) target = $region13
        $region12: #{x_model_forward.14} parent=8 // pred_region
          loop: start=0, step=1, limit=1
          $region14: #{x_model_forward.14} parent=12 // loop_pre_header
            _
          $region15: #{x_model_forward.14} parent=12 // loop_header
            %s13 = sphi 0, %s17
            %p14 = scmp.ge.s32.totalorder %s13, 1
            %s18 = sphi %s0, %s0
            %s19 = sphi [#allocation2], [#allocation2]
          $region16: #{x_model_forward.14} parent=12 // loop_header_branch
            %16 = sbr.rel (%p14) target = $region20
          $region17: #{x_model_forward.14} parent=12 // loop_body
            %v20 = vld [vmem:[%s18] sm:$0xff]
            %21 = vst [vmem:[%s19] sm:$0xff] %v20
            %v22 = vld [vmem:[%s18 + $0x8] sm:$0xff]
            %23 = vst [vmem:[%s19 + $0x8] sm:$0xff] %v22
            %v24 = vld [vmem:[%s18 + $0x10] sm:$0xff]
            %25 = vst [vmem:[%s19 + $0x10] sm:$0xff] %v24
            %v26 = vld [vmem:[%s18 + $0x18] sm:$0xff]
            %27 = vst [vmem:[%s19 + $0x18] sm:$0xff] %v26
            %v28 = vld [vmem:[%s18 + $0x20] sm:$0xff]
            %29 = vst [vmem:[%s19 + $0x20] sm:$0xff] %v28
            %v30 = vld [vmem:[%s18 + $0x28] sm:$0xff]
            %31 = vst [vmem:[%s19 + $0x28] sm:$0xff] %v30
            %v32 = vld [vmem:[%s18 + $0x30] sm:$0xff]
            %33 = vst [vmem:[%s19 + $0x60] sm:$0xff] %v32
            %v34 = vld [vmem:[%s18 + $0x38] sm:$0xff]
            %35 = vst [vmem:[%s19 + $0x68] sm:$0xff] %v34
            %v36 = vld [vmem:[%s18 + $0x40] sm:$0xff]
            %37 = vst [vmem:[%s19 + $0x70] sm:$0xff] %v36
            %v38 = vld [vmem:[%s18 + $0x48] sm:$0xff]
            %39 = vst [vmem:[%s19 + $0x78] sm:$0xff] %v38
            %v40 = vld [vmem:[%s18 + $0x50] sm:$0xff]
            %41 = vst [vmem:[%s19 + $0x80] sm:$0xff] %v40
            %v42 = vld [vmem:[%s18 + $0x58] sm:$0xff]
            %43 = vst [vmem:[%s19 + $0x88] sm:$0xff] %v42
            %v44 = vld [vmem:[%s18 + $0x60] sm:$0xff]
            %45 = vst [vmem:[%s19 + $0xc0] sm:$0xff] %v44
            %v46 = vld [vmem:[%s18 + $0x68] sm:$0xff]
            %47 = vst [vmem:[%s19 + $0xc8] sm:$0xff] %v46
            %v48 = vld [vmem:[%s18 + $0x70] sm:$0xff]
            %49 = vst [vmem:[%s19 + $0xd0] sm:$0xff] %v48
            %v50 = vld [vmem:[%s18 + $0x78] sm:$0xff]
            %51 = vst [vmem:[%s19 + $0xd8] sm:$0xff] %v50
            %v52 = vld [vmem:[%s18 + $0x80] sm:$0xff]
            %53 = vst [vmem:[%s19 + $0xe0] sm:$0xff] %v52
            %v54 = vld [vmem:[%s18 + $0x88] sm:$0xff]
            %55 = vst [vmem:[%s19 + $0xe8] sm:$0xff] %v54
            %v56 = vld [vmem:[%s18 + $0x90] sm:$0xff]
            %57 = vst [vmem:[%s19 + $0x120] sm:$0xff] %v56
            %v58 = vld [vmem:[%s18 + $0x98] sm:$0xff]
            %59 = vst [vmem:[%s19 + $0x128] sm:$0xff] %v58
            %v60 = vld [vmem:[%s18 + $0xa0] sm:$0xff]
            %61 = vst [vmem:[%s19 + $0x130] sm:$0xff] %v60
            %v62 = vld [vmem:[%s18 + $0xa8] sm:$0xff]
            %63 = vst [vmem:[%s19 + $0x138] sm:$0xff] %v62
            %v64 = vld [vmem:[%s18 + $0xb0] sm:$0xff]
            %65 = vst [vmem:[%s19 + $0x140] sm:$0xff] %v64
            %v66 = vld [vmem:[%s18 + $0xb8] sm:$0xff]
            %67 = vst [vmem:[%s19 + $0x148] sm:$0xff] %v66
            %v68 = vld [vmem:[%s18 + $0xc0] sm:$0xff]
            %69 = vst [vmem:[%s19 + $0x180] sm:$0xff] %v68
            %v70 = vld [vmem:[%s18 + $0xc8] sm:$0xff]
            %71 = vst [vmem:[%s19 + $0x188] sm:$0xff] %v70
            %v72 = vld [vmem:[%s18 + $0xd0] sm:$0xff]
            %73 = vst [vmem:[%s19 + $0x190] sm:$0xff] %v72
            %v74 = vld [vmem:[%s18 + $0xd8] sm:$0xff]
            %75 = vst [vmem:[%s19 + $0x198] sm:$0xff] %v74
            %v76 = vld [vmem:[%s18 + $0xe0] sm:$0xff]
            %77 = vst [vmem:[%s19 + $0x1a0] sm:$0xff] %v76
            %v78 = vld [vmem:[%s18 + $0xe8] sm:$0xff]
            %79 = vst [vmem:[%s19 + $0x1a8] sm:$0xff] %v78
            %v80 = vld [vmem:[%s18 + $0xf0] sm:$0xff]
            %81 = vst [vmem:[%s19 + $0x1e0] sm:$0xff] %v80
            %v82 = vld [vmem:[%s18 + $0xf8] sm:$0xff]
            %83 = vst [vmem:[%s19 + $0x1e8] sm:$0xff] %v82
            %v84 = vld [vmem:[%s18 + $0x100] sm:$0xff]
            %85 = vst [vmem:[%s19 + $0x1f0] sm:$0xff] %v84
            %v86 = vld [vmem:[%s18 + $0x108] sm:$0xff]
            %87 = vst [vmem:[%s19 + $0x1f8] sm:$0xff] %v86
            %v88 = vld [vmem:[%s18 + $0x110] sm:$0xff]
            %89 = vst [vmem:[%s19 + $0x200] sm:$0xff] %v88
            %v90 = vld [vmem:[%s18 + $0x118] sm:$0xff]
            %91 = vst [vmem:[%s19 + $0x208] sm:$0xff] %v90
            %v92 = vld [vmem:[%s18 + $0x120] sm:$0xff]
            %93 = vst [vmem:[%s19 + $0x240] sm:$0xff] %v92
            %v94 = vld [vmem:[%s18 + $0x128] sm:$0xff]
            %95 = vst [vmem:[%s19 + $0x248] sm:$0xff] %v94
            %v96 = vld [vmem:[%s18 + $0x130] sm:$0xff]
            %97 = vst [vmem:[%s19 + $0x250] sm:$0xff] %v96
            %v98 = vld [vmem:[%s18 + $0x138] sm:$0xff]
            %99 = vst [vmem:[%s19 + $0x258] sm:$0xff] %v98
            %v100 = vld [vmem:[%s18 + $0x140] sm:$0xff]
            %101 = vst [vmem:[%s19 + $0x260] sm:$0xff] %v100
            %v102 = vld [vmem:[%s18 + $0x148] sm:$0xff]
            %103 = vst [vmem:[%s19 + $0x268] sm:$0xff] %v102
            %v104 = vld [vmem:[%s18 + $0x150] sm:$0xff]
            %105 = vst [vmem:[%s19 + $0x2a0] sm:$0xff] %v104
            %v106 = vld [vmem:[%s18 + $0x158] sm:$0xff]
            %107 = vst [vmem:[%s19 + $0x2a8] sm:$0xff] %v106
            %v108 = vld [vmem:[%s18 + $0x160] sm:$0xff]
            %109 = vst [vmem:[%s19 + $0x2b0] sm:$0xff] %v108
            %v110 = vld [vmem:[%s18 + $0x168] sm:$0xff]
            %111 = vst [vmem:[%s19 + $0x2b8] sm:$0xff] %v110
            %v112 = vld [vmem:[%s18 + $0x170] sm:$0xff]
            %113 = vst [vmem:[%s19 + $0x2c0] sm:$0xff] %v112
            %v114 = vld [vmem:[%s18 + $0x178] sm:$0xff]
            %115 = vst [vmem:[%s19 + $0x2c8] sm:$0xff] %v114
            %v116 = vld [vmem:[%s18 + $0x180] sm:$0xff]
            %117 = vst [vmem:[%s19 + $0x300] sm:$0xff] %v116
            %v118 = vld [vmem:[%s18 + $0x188] sm:$0xff]
            %119 = vst [vmem:[%s19 + $0x308] sm:$0xff] %v118
            %v120 = vld [vmem:[%s18 + $0x190] sm:$0xff]
            %121 = vst [vmem:[%s19 + $0x310] sm:$0xff] %v120
            %v122 = vld [vmem:[%s18 + $0x198] sm:$0xff]
            %123 = vst [vmem:[%s19 + $0x318] sm:$0xff] %v122
            %v124 = vld [vmem:[%s18 + $0x1a0] sm:$0xff]
            %125 = vst [vmem:[%s19 + $0x320] sm:$0xff] %v124
            %v126 = vld [vmem:[%s18 + $0x1a8] sm:$0xff]
            %127 = vst [vmem:[%s19 + $0x328] sm:$0xff] %v126
          $region18: #{x_model_forward.14} parent=12 // loop_footer
            %s17 = sadd.s32 1, %s13
          $region19: #{x_model_forward.14} parent=12 // loop_footer_branch
            %12 = sbr.rel target = $region15
          $region20: #{x_model_forward.14} parent=12 // loop_exit
            _
        $region13: #{x_model_forward.14} parent=8 // pred_fallthru
          _
        // Predicated region
        $region21: #{x_model_forward.14} parent=8 // pred_check
          _
        $region22: #{x_model_forward.14} parent=8 // pred_check_branch
          %129 = sbr.rel target = $region24
        $region23: #{x_model_forward.14} parent=8 // pred_region
          _
        $region24: #{x_model_forward.14} parent=8 // pred_fallthru
          _
      $region9: #{x_model_forward.14} parent=4 // pred_fallthru
        _
      %130 = vnop
    $region5: #{x_model_forward.14} parent=1 // pred_fallthru
      _
    // Predicated region
    $region25: #{x_model_forward.14} parent=1 // pred_check
      _
    $region26: #{x_model_forward.14} parent=1 // pred_check_branch
      %132 = sbr.rel (0) target = $region28
    $region27: #{x_model_forward.14} parent=1 // pred_region
      _
    $region28: #{x_model_forward.14} parent=1 // pred_fallthru
      _
    %v133 = vld [vmem:[#allocation2] sm:$0xff]
    %v134 = vld [vmem:[#allocation2 + $0x8] sm:$0xff]
    %v135 = vld [vmem:[#allocation2 + $0x10] sm:$0xff]
    %v136 = vld [vmem:[#allocation2 + $0x18] sm:$0xff]
    %v137 = vld [vmem:[#allocation2 + $0x20] sm:$0xff]
    %v138 = vld [vmem:[#allocation2 + $0x28] sm:$0xff]
    %v139 = vld [vmem:[#allocation2 + $0x30] sm:$0xff]
    %v140 = vld [vmem:[#allocation2 + $0x38] sm:$0xff]
    %v141 = vld [vmem:[#allocation2 + $0x40] sm:$0xff]
    %v142 = vld [vmem:[#allocation2 + $0x48] sm:$0xff]
    %v143 = vld [vmem:[#allocation2 + $0x50] sm:$0xff]
    %v144 = vld [vmem:[#allocation2 + $0x58] sm:$0xff]
    %s145 = scalar_lea.vmem [#allocation2], 96
    %v146 = vld [vmem:[%s145] sm:$0xff]
    %v147 = vld [vmem:[%s145 + $0x8] sm:$0xff]
    %v148 = vld [vmem:[%s145 + $0x10] sm:$0xff]
    %v149 = vld [vmem:[%s145 + $0x18] sm:$0xff]
    %v150 = vld [vmem:[%s145 + $0x20] sm:$0xff]
    %v151 = vld [vmem:[%s145 + $0x28] sm:$0xff]
    %v152 = vld [vmem:[%s145 + $0x30] sm:$0xff]
    %v153 = vld [vmem:[%s145 + $0x38] sm:$0xff]
    %v154 = vld [vmem:[%s145 + $0x40] sm:$0xff]
    %v155 = vld [vmem:[%s145 + $0x48] sm:$0xff]
    %v156 = vld [vmem:[%s145 + $0x50] sm:$0xff]
    %v157 = vld [vmem:[%s145 + $0x58] sm:$0xff]
    %v158 = vmax.f32 %v133, %v146
    %v159 = vmax.f32 %v134, %v147
    %v160 = vmax.f32 %v135, %v148
    %v161 = vmax.f32 %v136, %v149
    %v162 = vmax.f32 %v137, %v150
    %v163 = vmax.f32 %v138, %v151
    %v164 = vmax.f32 %v139, %v152
    %v165 = vmax.f32 %v140, %v153
    %v166 = vmax.f32 %v141, %v154
    %v167 = vmax.f32 %v142, %v155
    %v168 = vmax.f32 %v143, %v156
    %v169 = vmax.f32 %v144, %v157
    %s170 = scalar_lea.vmem [#allocation2], 192
    %v171 = vld [vmem:[%s170] sm:$0xff]
    %v172 = vld [vmem:[%s170 + $0x8] sm:$0xff]
    %v173 = vld [vmem:[%s170 + $0x10] sm:$0xff]
    %v174 = vld [vmem:[%s170 + $0x18] sm:$0xff]
    %v175 = vld [vmem:[%s170 + $0x20] sm:$0xff]
    %v176 = vld [vmem:[%s170 + $0x28] sm:$0xff]
    %v177 = vld [vmem:[%s170 + $0x30] sm:$0xff]
    %v178 = vld [vmem:[%s170 + $0x38] sm:$0xff]
    %v179 = vld [vmem:[%s170 + $0x40] sm:$0xff]
    %v180 = vld [vmem:[%s170 + $0x48] sm:$0xff]
    %v181 = vld [vmem:[%s170 + $0x50] sm:$0xff]
    %v182 = vld [vmem:[%s170 + $0x58] sm:$0xff]
    %v183 = vmax.f32 %v158, %v171
    %v184 = vmax.f32 %v159, %v172
    %v185 = vmax.f32 %v160, %v173
    %v186 = vmax.f32 %v161, %v174
    %v187 = vmax.f32 %v162, %v175
    %v188 = vmax.f32 %v163, %v176
    %v189 = vmax.f32 %v164, %v177
    %v190 = vmax.f32 %v165, %v178
    %v191 = vmax.f32 %v166, %v179
    %v192 = vmax.f32 %v167, %v180
    %v193 = vmax.f32 %v168, %v181
    %v194 = vmax.f32 %v169, %v182
    %s195 = scalar_lea.vmem [#allocation2], 288
    %v196 = vld [vmem:[%s195] sm:$0xff]
    %v197 = vld [vmem:[%s195 + $0x8] sm:$0xff]
    %v198 = vld [vmem:[%s195 + $0x10] sm:$0xff]
    %v199 = vld [vmem:[%s195 + $0x18] sm:$0xff]
    %v200 = vld [vmem:[%s195 + $0x20] sm:$0xff]
    %v201 = vld [vmem:[%s195 + $0x28] sm:$0xff]
    %v202 = vld [vmem:[%s195 + $0x30] sm:$0xff]
    %v203 = vld [vmem:[%s195 + $0x38] sm:$0xff]
    %v204 = vld [vmem:[%s195 + $0x40] sm:$0xff]
    %v205 = vld [vmem:[%s195 + $0x48] sm:$0xff]
    %v206 = vld [vmem:[%s195 + $0x50] sm:$0xff]
    %v207 = vld [vmem:[%s195 + $0x58] sm:$0xff]
    %v208 = vmax.f32 %v183, %v196
    %v209 = vmax.f32 %v184, %v197
    %v210 = vmax.f32 %v185, %v198
    %v211 = vmax.f32 %v186, %v199
    %v212 = vmax.f32 %v187, %v200
    %v213 = vmax.f32 %v188, %v201
    %v214 = vmax.f32 %v189, %v202
    %v215 = vmax.f32 %v190, %v203
    %v216 = vmax.f32 %v191, %v204
    %v217 = vmax.f32 %v192, %v205
    %v218 = vmax.f32 %v193, %v206
    %v219 = vmax.f32 %v194, %v207
    %s220 = scalar_lea.vmem [#allocation2], 384
    %v221 = vld [vmem:[%s220] sm:$0xff]
    %v222 = vld [vmem:[%s220 + $0x8] sm:$0xff]
    %v223 = vld [vmem:[%s220 + $0x10] sm:$0xff]
    %v224 = vld [vmem:[%s220 + $0x18] sm:$0xff]
    %v225 = vld [vmem:[%s220 + $0x20] sm:$0xff]
    %v226 = vld [vmem:[%s220 + $0x28] sm:$0xff]
    %v227 = vld [vmem:[%s220 + $0x30] sm:$0xff]
    %v228 = vld [vmem:[%s220 + $0x38] sm:$0xff]
    %v229 = vld [vmem:[%s220 + $0x40] sm:$0xff]
    %v230 = vld [vmem:[%s220 + $0x48] sm:$0xff]
    %v231 = vld [vmem:[%s220 + $0x50] sm:$0xff]
    %v232 = vld [vmem:[%s220 + $0x58] sm:$0xff]
    %v233 = vmax.f32 %v208, %v221
    %v234 = vmax.f32 %v209, %v222
    %v235 = vmax.f32 %v210, %v223
    %v236 = vmax.f32 %v211, %v224
    %v237 = vmax.f32 %v212, %v225
    %v238 = vmax.f32 %v213, %v226
    %v239 = vmax.f32 %v214, %v227
    %v240 = vmax.f32 %v215, %v228
    %v241 = vmax.f32 %v216, %v229
    %v242 = vmax.f32 %v217, %v230
    %v243 = vmax.f32 %v218, %v231
    %v244 = vmax.f32 %v219, %v232
    %s245 = scalar_lea.vmem [#allocation2], 480
    %v246 = vld [vmem:[%s245] sm:$0xff]
    %v247 = vld [vmem:[%s245 + $0x8] sm:$0xff]
    %v248 = vld [vmem:[%s245 + $0x10] sm:$0xff]
    %v249 = vld [vmem:[%s245 + $0x18] sm:$0xff]
    %v250 = vld [vmem:[%s245 + $0x20] sm:$0xff]
    %v251 = vld [vmem:[%s245 + $0x28] sm:$0xff]
    %v252 = vld [vmem:[%s245 + $0x30] sm:$0xff]
    %v253 = vld [vmem:[%s245 + $0x38] sm:$0xff]
    %v254 = vld [vmem:[%s245 + $0x40] sm:$0xff]
    %v255 = vld [vmem:[%s245 + $0x48] sm:$0xff]
    %v256 = vld [vmem:[%s245 + $0x50] sm:$0xff]
    %v257 = vld [vmem:[%s245 + $0x58] sm:$0xff]
    %v258 = vmax.f32 %v233, %v246
    %v259 = vmax.f32 %v234, %v247
    %v260 = vmax.f32 %v235, %v248
    %v261 = vmax.f32 %v236, %v249
    %v262 = vmax.f32 %v237, %v250
    %v263 = vmax.f32 %v238, %v251
    %v264 = vmax.f32 %v239, %v252
    %v265 = vmax.f32 %v240, %v253
    %v266 = vmax.f32 %v241, %v254
    %v267 = vmax.f32 %v242, %v255
    %v268 = vmax.f32 %v243, %v256
    %v269 = vmax.f32 %v244, %v257
    %s270 = scalar_lea.vmem [#allocation2], 576
    %v271 = vld [vmem:[%s270] sm:$0xff]
    %v272 = vld [vmem:[%s270 + $0x8] sm:$0xff]
    %v273 = vld [vmem:[%s270 + $0x10] sm:$0xff]
    %v274 = vld [vmem:[%s270 + $0x18] sm:$0xff]
    %v275 = vld [vmem:[%s270 + $0x20] sm:$0xff]
    %v276 = vld [vmem:[%s270 + $0x28] sm:$0xff]
    %v277 = vld [vmem:[%s270 + $0x30] sm:$0xff]
    %v278 = vld [vmem:[%s270 + $0x38] sm:$0xff]
    %v279 = vld [vmem:[%s270 + $0x40] sm:$0xff]
    %v280 = vld [vmem:[%s270 + $0x48] sm:$0xff]
    %v281 = vld [vmem:[%s270 + $0x50] sm:$0xff]
    %v282 = vld [vmem:[%s270 + $0x58] sm:$0xff]
    %v283 = vmax.f32 %v258, %v271
    %v284 = vmax.f32 %v259, %v272
    %v285 = vmax.f32 %v260, %v273
    %v286 = vmax.f32 %v261, %v274
    %v287 = vmax.f32 %v262, %v275
    %v288 = vmax.f32 %v263, %v276
    %v289 = vmax.f32 %v264, %v277
    %v290 = vmax.f32 %v265, %v278
    %v291 = vmax.f32 %v266, %v279
    %v292 = vmax.f32 %v267, %v280
    %v293 = vmax.f32 %v268, %v281
    %v294 = vmax.f32 %v269, %v282
    %s295 = scalar_lea.vmem [#allocation2], 672
    %v296 = vld [vmem:[%s295] sm:$0xff]
    %v297 = vld [vmem:[%s295 + $0x8] sm:$0xff]
    %v298 = vld [vmem:[%s295 + $0x10] sm:$0xff]
    %v299 = vld [vmem:[%s295 + $0x18] sm:$0xff]
    %v300 = vld [vmem:[%s295 + $0x20] sm:$0xff]
    %v301 = vld [vmem:[%s295 + $0x28] sm:$0xff]
    %v302 = vld [vmem:[%s295 + $0x30] sm:$0xff]
    %v303 = vld [vmem:[%s295 + $0x38] sm:$0xff]
    %v304 = vld [vmem:[%s295 + $0x40] sm:$0xff]
    %v305 = vld [vmem:[%s295 + $0x48] sm:$0xff]
    %v306 = vld [vmem:[%s295 + $0x50] sm:$0xff]
    %v307 = vld [vmem:[%s295 + $0x58] sm:$0xff]
    %v308 = vmax.f32 %v283, %v296
    %v309 = vmax.f32 %v284, %v297
    %v310 = vmax.f32 %v285, %v298
    %v311 = vmax.f32 %v286, %v299
    %v312 = vmax.f32 %v287, %v300
    %v313 = vmax.f32 %v288, %v301
    %v314 = vmax.f32 %v289, %v302
    %v315 = vmax.f32 %v290, %v303
    %v316 = vmax.f32 %v291, %v304
    %v317 = vmax.f32 %v292, %v305
    %v318 = vmax.f32 %v293, %v306
    %v319 = vmax.f32 %v294, %v307
    %s320 = scalar_lea.vmem [#allocation2], 768
    %v321 = vld [vmem:[%s320] sm:$0xff]
    %v322 = vld [vmem:[%s320 + $0x8] sm:$0xff]
    %v323 = vld [vmem:[%s320 + $0x10] sm:$0xff]
    %v324 = vld [vmem:[%s320 + $0x18] sm:$0xff]
    %v325 = vld [vmem:[%s320 + $0x20] sm:$0xff]
    %v326 = vld [vmem:[%s320 + $0x28] sm:$0xff]
    %v327 = vld [vmem:[%s320 + $0x30] sm:$0xff]
    %v328 = vld [vmem:[%s320 + $0x38] sm:$0xff]
    %v329 = vld [vmem:[%s320 + $0x40] sm:$0xff]
    %v330 = vld [vmem:[%s320 + $0x48] sm:$0xff]
    %v331 = vld [vmem:[%s320 + $0x50] sm:$0xff]
    %v332 = vld [vmem:[%s320 + $0x58] sm:$0xff]
    %v333 = vmax.f32 %v308, %v321
    %v334 = vmax.f32 %v309, %v322
    %v335 = vmax.f32 %v310, %v323
    %v336 = vmax.f32 %v311, %v324
    %v337 = vmax.f32 %v312, %v325
    %v338 = vmax.f32 %v313, %v326
    %v339 = vmax.f32 %v314, %v327
    %v340 = vmax.f32 %v315, %v328
    %v341 = vmax.f32 %v316, %v329
    %v342 = vmax.f32 %v317, %v330
    %v343 = vmax.f32 %v318, %v331
    %v344 = vmax.f32 %v319, %v332
    %345 = vst [vmem:[#allocation3] sm:$0xff] %v333
    %346 = vst [vmem:[#allocation3 + $0x8] sm:$0xff] %v334
    %vm347 = vcmask 523264
    %348 = vst.msk [vmem:[#allocation3 + $0x10] sm:$0xff] %vm347, %v335
    %349 = vst [vmem:[#allocation3 + $0x18] sm:$0xff] %v336
    %350 = vst [vmem:[#allocation3 + $0x20] sm:$0xff] %v337
    %351 = vst.msk [vmem:[#allocation3 + $0x28] sm:$0xff] %vm347, %v338
    %352 = vst [vmem:[#allocation3 + $0x30] sm:$0xff] %v339
    %353 = vst [vmem:[#allocation3 + $0x38] sm:$0xff] %v340
    %354 = vst.msk [vmem:[#allocation3 + $0x40] sm:$0xff] %vm347, %v341
    %355 = vst [vmem:[#allocation3 + $0x48] sm:$0xff] %v342
    %356 = vst [vmem:[#allocation3 + $0x50] sm:$0xff] %v343
    %357 = vst.msk [vmem:[#allocation3 + $0x58] sm:$0xff] %vm347, %v344
    // Predicated region
    $region29: #{x_model_forward.14} parent=1 // pred_check
      _
    $region30: #{x_model_forward.14} parent=1 // pred_check_branch
      %359 = sbr.rel (0) target = $region32
    $region31: #{x_model_forward.14} parent=1 // pred_region
      // Predicated region
      $region33: #{x_model_forward.14} parent=31 // pred_check
        _
      $region34: #{x_model_forward.14} parent=31 // pred_check_branch
        %361 = sbr.rel (0) target = $region36
      $region35: #{x_model_forward.14} parent=31 // pred_region
        // Predicated region
        $region37: #{x_model_forward.14} parent=35 // pred_check
          _
        $region38: #{x_model_forward.14} parent=35 // pred_check_branch
          %363 = sbr.rel (0) target = $region40
        $region39: #{x_model_forward.14} parent=35 // pred_region
          loop: start=0, step=1, limit=1
          $region41: #{x_model_forward.14} parent=39 // loop_pre_header
            _
          $region42: #{x_model_forward.14} parent=39 // loop_header
            %s365 = sphi 0, %s369
            %p366 = scmp.ge.s32.totalorder %s365, 1
            %s370 = sphi [#allocation3], [#allocation3]
            %s371 = sphi %s1, %s1
          $region43: #{x_model_forward.14} parent=39 // loop_header_branch
            %368 = sbr.rel (%p366) target = $region47
          $region44: #{x_model_forward.14} parent=39 // loop_body
            %v372 = vld [vmem:[%s370] sm:$0xff]
            %373 = vst [vmem:[%s371] sm:$0xff] %v372
            %v374 = vld [vmem:[%s370 + $0x8] sm:$0xff]
            %375 = vst [vmem:[%s371 + $0x8] sm:$0xff] %v374
            %v376 = vld [vmem:[%s370 + $0x10] sm:$0xff]
            %377 = vst [vmem:[%s371 + $0x10] sm:$0xff] %v376
            %v378 = vld [vmem:[%s370 + $0x18] sm:$0xff]
            %379 = vst [vmem:[%s371 + $0x18] sm:$0xff] %v378
            %v380 = vld [vmem:[%s370 + $0x20] sm:$0xff]
            %381 = vst [vmem:[%s371 + $0x20] sm:$0xff] %v380
            %v382 = vld [vmem:[%s370 + $0x28] sm:$0xff]
            %383 = vst [vmem:[%s371 + $0x28] sm:$0xff] %v382
          $region45: #{x_model_forward.14} parent=39 // loop_footer
            %s369 = sadd.s32 1, %s365
          $region46: #{x_model_forward.14} parent=39 // loop_footer_branch
            %364 = sbr.rel target = $region42
          $region47: #{x_model_forward.14} parent=39 // loop_exit
            _
        $region40: #{x_model_forward.14} parent=35 // pred_fallthru
          _
        // Predicated region
        $region48: #{x_model_forward.14} parent=35 // pred_check
          _
        $region49: #{x_model_forward.14} parent=35 // pred_check_branch
          %385 = sbr.rel target = $region51
        $region50: #{x_model_forward.14} parent=35 // pred_region
          _
        $region51: #{x_model_forward.14} parent=35 // pred_fallthru
          _
      $region36: #{x_model_forward.14} parent=31 // pred_fallthru
        _
      %386 = vnop
    $region32: #{x_model_forward.14} parent=1 // pred_fallthru
      _
    // Predicated region
    $region52: #{x_model_forward.14} parent=1 // pred_check
      _
    $region53: #{x_model_forward.14} parent=1 // pred_check_branch
      %388 = sbr.rel (0) target = $region55
    $region54: #{x_model_forward.14} parent=1 // pred_region
      _
    $region55: #{x_model_forward.14} parent=1 // pred_fallthru
      _

// kernel: x_model_forward.15
$region0: #{x_model_forward.15}
  #allocation0 [shape = 'u32[]', space=smem, size = 0x4, offset = 0x4, fixed_abs, tag = 'smem constant byte address 0x4 - core index']
  #allocation1 [shape = 'u32[144,128]{1,0:T(1,128)}', space=vmem, size = 0x12000, scoped, tag = 'internal scratch']
  %s0 = inlined_call_operand.vmem [shape: f32[50,64], index: 0, kind: input, shape index: {}]
  %s1 = inlined_call_operand.vmem [shape: f32[9,50,64], index: 1, kind: input, shape index: {}]
  %s2 = inlined_call_operand.vmem [shape: f32[64,52], index: 2, kind: input, shape index: {}]
  %s3 = inlined_call_operand.vmem [shape: f32[64,52], index: 3, kind: input, shape index: {}]
  %s4 = inlined_call_operand.vmem [shape: f32[1,52], index: 4, kind: input, shape index: {}]
  %s5 = inlined_call_operand.vmem [shape: f32[50,52], index: 5, kind: output, shape index: {}]
  %s6 = sld [smem:[#allocation0]]
  $region102: #{x_model_forward.15} parent=0
    _
  %s8 = ssub.s32 1, %s6
  %s9 = scalar_select 0, %s8, %s6
  $region1: #{x_model_forward.15} parent=0
    #allocation2 [shape = 'u8[294912]{0}', space=vmem, size = 0x48000, scoped, tag = 'input window, operand 1, single buffered']
    #allocation3 [shape = 'u8[32768]{0}', space=vmem, size = 0x8000, scoped, tag = 'output window, operand 0, single buffered']
    // Predicated region
    $region2: #{x_model_forward.15} parent=1 // pred_check
      _
    $region3: #{x_model_forward.15} parent=1 // pred_check_branch
      %11 = sbr.rel (0) target = $region5
    $region4: #{x_model_forward.15} parent=1 // pred_region
      _
    $region5: #{x_model_forward.15} parent=1 // pred_fallthru
      _
    // Predicated region
    $region6: #{x_model_forward.15} parent=1 // pred_check
      _
    $region7: #{x_model_forward.15} parent=1 // pred_check_branch
      %13 = sbr.rel (0) target = $region9
    $region8: #{x_model_forward.15} parent=1 // pred_region
      // Predicated region
      $region10: #{x_model_forward.15} parent=8 // pred_check
        _
      $region11: #{x_model_forward.15} parent=8 // pred_check_branch
        %15 = sbr.rel (0) target = $region13
      $region12: #{x_model_forward.15} parent=8 // pred_region
        // Predicated region
        $region14: #{x_model_forward.15} parent=12 // pred_check
          _
        $region15: #{x_model_forward.15} parent=12 // pred_check_branch
          %17 = sbr.rel (0) target = $region17
        $region16: #{x_model_forward.15} parent=12 // pred_region
          // Predicated region
          $region29: #{x_model_forward.15} parent=16 // pred_check
            _
          $region30: #{x_model_forward.15} parent=16 // pred_check_branch
            %157 = sbr.rel (0) target = $region32
          $region31: #{x_model_forward.15} parent=16 // pred_region
            loop: start=0, step=1, limit=1
            $region33: #{x_model_forward.15} parent=31 // loop_pre_header
              _
            $region34: #{x_model_forward.15} parent=31 // loop_header
              %s159 = sphi 0, %s163
              %p160 = scmp.ge.s32.totalorder %s159, 1
              %s164 = sphi %s1, %s1
              %s165 = sphi [#allocation2], [#allocation2]
            $region35: #{x_model_forward.15} parent=31 // loop_header_branch
              %162 = sbr.rel (%p160) target = $region39
            $region36: #{x_model_forward.15} parent=31 // loop_body
              %v166 = vld [vmem:[%s164] sm:$0xff]
              %167 = vst [vmem:[%s165] sm:$0xff] %v166
              %v168 = vld [vmem:[%s164 + $0x8] sm:$0xff]
              %169 = vst [vmem:[%s165 + $0x8] sm:$0xff] %v168
              %v170 = vld [vmem:[%s164 + $0x10] sm:$0xff]
              %171 = vst [vmem:[%s165 + $0x10] sm:$0xff] %v170
              %v172 = vld [vmem:[%s164 + $0x18] sm:$0xff]
              %173 = vst [vmem:[%s165 + $0x18] sm:$0xff] %v172
              %v174 = vld [vmem:[%s164 + $0x20] sm:$0xff]
              %175 = vst [vmem:[%s165 + $0x20] sm:$0xff] %v174
              %v176 = vld [vmem:[%s164 + $0x28] sm:$0xff]
              %177 = vst [vmem:[%s165 + $0x28] sm:$0xff] %v176
              %v178 = vld [vmem:[%s164 + $0x30] sm:$0xff]
              %179 = vst [vmem:[%s165 + $0x30] sm:$0xff] %v178
              %v180 = vld [vmem:[%s164 + $0x38] sm:$0xff]
              %181 = vst [vmem:[%s165 + $0x40] sm:$0xff] %v180
              %v182 = vld [vmem:[%s164 + $0x40] sm:$0xff]
              %183 = vst [vmem:[%s165 + $0x48] sm:$0xff] %v182
              %v184 = vld [vmem:[%s164 + $0x48] sm:$0xff]
              %185 = vst [vmem:[%s165 + $0x50] sm:$0xff] %v184
              %v186 = vld [vmem:[%s164 + $0x50] sm:$0xff]
              %187 = vst [vmem:[%s165 + $0x58] sm:$0xff] %v186
              %v188 = vld [vmem:[%s164 + $0x58] sm:$0xff]
              %189 = vst [vmem:[%s165 + $0x60] sm:$0xff] %v188
              %v190 = vld [vmem:[%s164 + $0x60] sm:$0xff]
              %191 = vst [vmem:[%s165 + $0x68] sm:$0xff] %v190
              %v192 = vld [vmem:[%s164 + $0x68] sm:$0xff]
              %193 = vst [vmem:[%s165 + $0x70] sm:$0xff] %v192
              %v194 = vld [vmem:[%s164 + $0x70] sm:$0xff]
              %195 = vst [vmem:[%s165 + $0x80] sm:$0xff] %v194
              %v196 = vld [vmem:[%s164 + $0x78] sm:$0xff]
              %197 = vst [vmem:[%s165 + $0x88] sm:$0xff] %v196
              %v198 = vld [vmem:[%s164 + $0x80] sm:$0xff]
              %199 = vst [vmem:[%s165 + $0x90] sm:$0xff] %v198
              %v200 = vld [vmem:[%s164 + $0x88] sm:$0xff]
              %201 = vst [vmem:[%s165 + $0x98] sm:$0xff] %v200
              %v202 = vld [vmem:[%s164 + $0x90] sm:$0xff]
              %203 = vst [vmem:[%s165 + $0xa0] sm:$0xff] %v202
              %v204 = vld [vmem:[%s164 + $0x98] sm:$0xff]
              %205 = vst [vmem:[%s165 + $0xa8] sm:$0xff] %v204
              %v206 = vld [vmem:[%s164 + $0xa0] sm:$0xff]
              %207 = vst [vmem:[%s165 + $0xb0] sm:$0xff] %v206
              %v208 = vld [vmem:[%s164 + $0xa8] sm:$0xff]
              %209 = vst [vmem:[%s165 + $0xc0] sm:$0xff] %v208
              %v210 = vld [vmem:[%s164 + $0xb0] sm:$0xff]
              %211 = vst [vmem:[%s165 + $0xc8] sm:$0xff] %v210
              %v212 = vld [vmem:[%s164 + $0xb8] sm:$0xff]
              %213 = vst [vmem:[%s165 + $0xd0] sm:$0xff] %v212
              %v214 = vld [vmem:[%s164 + $0xc0] sm:$0xff]
              %215 = vst [vmem:[%s165 + $0xd8] sm:$0xff] %v214
              %v216 = vld [vmem:[%s164 + $0xc8] sm:$0xff]
              %217 = vst [vmem:[%s165 + $0xe0] sm:$0xff] %v216
              %v218 = vld [vmem:[%s164 + $0xd0] sm:$0xff]
              %219 = vst [vmem:[%s165 + $0xe8] sm:$0xff] %v218
              %v220 = vld [vmem:[%s164 + $0xd8] sm:$0xff]
              %221 = vst [vmem:[%s165 + $0xf0] sm:$0xff] %v220
              %v222 = vld [vmem:[%s164 + $0xe0] sm:$0xff]
              %223 = vst [vmem:[%s165 + $0x100] sm:$0xff] %v222
              %v224 = vld [vmem:[%s164 + $0xe8] sm:$0xff]
              %225 = vst [vmem:[%s165 + $0x108] sm:$0xff] %v224
              %v226 = vld [vmem:[%s164 + $0xf0] sm:$0xff]
              %227 = vst [vmem:[%s165 + $0x110] sm:$0xff] %v226
              %v228 = vld [vmem:[%s164 + $0xf8] sm:$0xff]
              %229 = vst [vmem:[%s165 + $0x118] sm:$0xff] %v228
              %v230 = vld [vmem:[%s164 + $0x100] sm:$0xff]
              %231 = vst [vmem:[%s165 + $0x120] sm:$0xff] %v230
              %v232 = vld [vmem:[%s164 + $0x108] sm:$0xff]
              %233 = vst [vmem:[%s165 + $0x128] sm:$0xff] %v232
              %v234 = vld [vmem:[%s164 + $0x110] sm:$0xff]
              %235 = vst [vmem:[%s165 + $0x130] sm:$0xff] %v234
              %v236 = vld [vmem:[%s164 + $0x118] sm:$0xff]
              %237 = vst [vmem:[%s165 + $0x140] sm:$0xff] %v236
              %v238 = vld [vmem:[%s164 + $0x120] sm:$0xff]
              %239 = vst [vmem:[%s165 + $0x148] sm:$0xff] %v238
              %v240 = vld [vmem:[%s164 + $0x128] sm:$0xff]
              %241 = vst [vmem:[%s165 + $0x150] sm:$0xff] %v240
              %v242 = vld [vmem:[%s164 + $0x130] sm:$0xff]
              %243 = vst [vmem:[%s165 + $0x158] sm:$0xff] %v242
              %v244 = vld [vmem:[%s164 + $0x138] sm:$0xff]
              %245 = vst [vmem:[%s165 + $0x160] sm:$0xff] %v244
              %v246 = vld [vmem:[%s164 + $0x140] sm:$0xff]
              %247 = vst [vmem:[%s165 + $0x168] sm:$0xff] %v246
              %v248 = vld [vmem:[%s164 + $0x148] sm:$0xff]
              %249 = vst [vmem:[%s165 + $0x170] sm:$0xff] %v248
              %v250 = vld [vmem:[%s164 + $0x150] sm:$0xff]
              %251 = vst [vmem:[%s165 + $0x180] sm:$0xff] %v250
              %v252 = vld [vmem:[%s164 + $0x158] sm:$0xff]
              %253 = vst [vmem:[%s165 + $0x188] sm:$0xff] %v252
              %v254 = vld [vmem:[%s164 + $0x160] sm:$0xff]
              %255 = vst [vmem:[%s165 + $0x190] sm:$0xff] %v254
              %v256 = vld [vmem:[%s164 + $0x168] sm:$0xff]
              %257 = vst [vmem:[%s165 + $0x198] sm:$0xff] %v256
              %v258 = vld [vmem:[%s164 + $0x170] sm:$0xff]
              %259 = vst [vmem:[%s165 + $0x1a0] sm:$0xff] %v258
              %v260 = vld [vmem:[%s164 + $0x178] sm:$0xff]
              %261 = vst [vmem:[%s165 + $0x1a8] sm:$0xff] %v260
              %v262 = vld [vmem:[%s164 + $0x180] sm:$0xff]
              %263 = vst [vmem:[%s165 + $0x1b0] sm:$0xff] %v262
              %v264 = vld [vmem:[%s164 + $0x188] sm:$0xff]
              %265 = vst [vmem:[%s165 + $0x1c0] sm:$0xff] %v264
              %v266 = vld [vmem:[%s164 + $0x190] sm:$0xff]
              %267 = vst [vmem:[%s165 + $0x1c8] sm:$0xff] %v266
              %v268 = vld [vmem:[%s164 + $0x198] sm:$0xff]
              %269 = vst [vmem:[%s165 + $0x1d0] sm:$0xff] %v268
              %v270 = vld [vmem:[%s164 + $0x1a0] sm:$0xff]
              %271 = vst [vmem:[%s165 + $0x1d8] sm:$0xff] %v270
              %v272 = vld [vmem:[%s164 + $0x1a8] sm:$0xff]
              %273 = vst [vmem:[%s165 + $0x1e0] sm:$0xff] %v272
              %v274 = vld [vmem:[%s164 + $0x1b0] sm:$0xff]
              %275 = vst [vmem:[%s165 + $0x1e8] sm:$0xff] %v274
              %v276 = vld [vmem:[%s164 + $0x1b8] sm:$0xff]
              %277 = vst [vmem:[%s165 + $0x1f0] sm:$0xff] %v276
              %v278 = vld [vmem:[%s164 + $0x1c0] sm:$0xff]
              %279 = vst [vmem:[%s165 + $0x200] sm:$0xff] %v278
              %v280 = vld [vmem:[%s164 + $0x1c8] sm:$0xff]
              %281 = vst [vmem:[%s165 + $0x208] sm:$0xff] %v280
              %v282 = vld [vmem:[%s164 + $0x1d0] sm:$0xff]
              %283 = vst [vmem:[%s165 + $0x210] sm:$0xff] %v282
              %v284 = vld [vmem:[%s164 + $0x1d8] sm:$0xff]
              %285 = vst [vmem:[%s165 + $0x218] sm:$0xff] %v284
              %v286 = vld [vmem:[%s164 + $0x1e0] sm:$0xff]
              %287 = vst [vmem:[%s165 + $0x220] sm:$0xff] %v286
              %v288 = vld [vmem:[%s164 + $0x1e8] sm:$0xff]
              %289 = vst [vmem:[%s165 + $0x228] sm:$0xff] %v288
              %v290 = vld [vmem:[%s164 + $0x1f0] sm:$0xff]
              %291 = vst [vmem:[%s165 + $0x230] sm:$0xff] %v290
            $region37: #{x_model_forward.15} parent=31 // loop_footer
              %s163 = sadd.s32 1, %s159
            $region38: #{x_model_forward.15} parent=31 // loop_footer_branch
              %158 = sbr.rel target = $region34
            $region39: #{x_model_forward.15} parent=31 // loop_exit
              _
          $region32: #{x_model_forward.15} parent=16 // pred_fallthru
            _
          // Predicated region
          $region40: #{x_model_forward.15} parent=16 // pred_check
            _
          $region41: #{x_model_forward.15} parent=16 // pred_check_branch
            %293 = sbr.rel target = $region43
          $region42: #{x_model_forward.15} parent=16 // pred_region
            _
          $region43: #{x_model_forward.15} parent=16 // pred_fallthru
            _
        $region17: #{x_model_forward.15} parent=12 // pred_fallthru
          _
        // Predicated region
        $region18: #{x_model_forward.15} parent=12 // pred_check
          _
        $region19: #{x_model_forward.15} parent=12 // pred_check_branch
          %19 = sbr.rel target = $region21
        $region20: #{x_model_forward.15} parent=12 // pred_region
          %s21 = ssub.s32 256, 1
          loop: start=0, step=1, limit=1
          $region22: #{x_model_forward.15} parent=20 // loop_pre_header
            _
          $region23: #{x_model_forward.15} parent=20 // loop_header
            %s23 = sphi 0, %s27
            %p24 = scmp.ge.s32.totalorder %s23, 1
            %s28 = sphi %s1, %s1
            %s29 = sphi [#allocation2], [#allocation2]
          $region24: #{x_model_forward.15} parent=20 // loop_header_branch
            %26 = sbr.rel (%p24) target = $region28
          $region25: #{x_model_forward.15} parent=20 // loop_body
            %v30 = vld [vmem:[%s28] sm:%s21]
            %31 = vst [vmem:[%s29] sm:%s21] %v30
            %v32 = vld [vmem:[%s28 + $0x8] sm:%s21]
            %33 = vst [vmem:[%s29 + $0x8] sm:%s21] %v32
            %v34 = vld [vmem:[%s28 + $0x10] sm:%s21]
            %35 = vst [vmem:[%s29 + $0x10] sm:%s21] %v34
            %v36 = vld [vmem:[%s28 + $0x18] sm:%s21]
            %37 = vst [vmem:[%s29 + $0x18] sm:%s21] %v36
            %v38 = vld [vmem:[%s28 + $0x20] sm:%s21]
            %39 = vst [vmem:[%s29 + $0x20] sm:%s21] %v38
            %v40 = vld [vmem:[%s28 + $0x28] sm:%s21]
            %41 = vst [vmem:[%s29 + $0x28] sm:%s21] %v40
            %v42 = vld [vmem:[%s28 + $0x30] sm:%s21]
            %43 = vst [vmem:[%s29 + $0x30] sm:%s21] %v42
            %v44 = vld [vmem:[%s28 + $0x38] sm:%s21]
            %45 = vst [vmem:[%s29 + $0x40] sm:%s21] %v44
            %v46 = vld [vmem:[%s28 + $0x40] sm:%s21]
            %47 = vst [vmem:[%s29 + $0x48] sm:%s21] %v46
            %v48 = vld [vmem:[%s28 + $0x48] sm:%s21]
            %49 = vst [vmem:[%s29 + $0x50] sm:%s21] %v48
            %v50 = vld [vmem:[%s28 + $0x50] sm:%s21]
            %51 = vst [vmem:[%s29 + $0x58] sm:%s21] %v50
            %v52 = vld [vmem:[%s28 + $0x58] sm:%s21]
            %53 = vst [vmem:[%s29 + $0x60] sm:%s21] %v52
            %v54 = vld [vmem:[%s28 + $0x60] sm:%s21]
            %55 = vst [vmem:[%s29 + $0x68] sm:%s21] %v54
            %v56 = vld [vmem:[%s28 + $0x68] sm:%s21]
            %57 = vst [vmem:[%s29 + $0x70] sm:%s21] %v56
            %v58 = vld [vmem:[%s28 + $0x70] sm:%s21]
            %59 = vst [vmem:[%s29 + $0x80] sm:%s21] %v58
            %v60 = vld [vmem:[%s28 + $0x78] sm:%s21]
            %61 = vst [vmem:[%s29 + $0x88] sm:%s21] %v60
            %v62 = vld [vmem:[%s28 + $0x80] sm:%s21]
            %63 = vst [vmem:[%s29 + $0x90] sm:%s21] %v62
            %v64 = vld [vmem:[%s28 + $0x88] sm:%s21]
            %65 = vst [vmem:[%s29 + $0x98] sm:%s21] %v64
            %v66 = vld [vmem:[%s28 + $0x90] sm:%s21]
            %67 = vst [vmem:[%s29 + $0xa0] sm:%s21] %v66
            %v68 = vld [vmem:[%s28 + $0x98] sm:%s21]
            %69 = vst [vmem:[%s29 + $0xa8] sm:%s21] %v68
            %v70 = vld [vmem:[%s28 + $0xa0] sm:%s21]
            %71 = vst [vmem:[%s29 + $0xb0] sm:%s21] %v70
            %v72 = vld [vmem:[%s28 + $0xa8] sm:%s21]
            %73 = vst [vmem:[%s29 + $0xc0] sm:%s21] %v72
            %v74 = vld [vmem:[%s28 + $0xb0] sm:%s21]
            %75 = vst [vmem:[%s29 + $0xc8] sm:%s21] %v74
            %v76 = vld [vmem:[%s28 + $0xb8] sm:%s21]
            %77 = vst [vmem:[%s29 + $0xd0] sm:%s21] %v76
            %v78 = vld [vmem:[%s28 + $0xc0] sm:%s21]
            %79 = vst [vmem:[%s29 + $0xd8] sm:%s21] %v78
            %v80 = vld [vmem:[%s28 + $0xc8] sm:%s21]
            %81 = vst [vmem:[%s29 + $0xe0] sm:%s21] %v80
            %v82 = vld [vmem:[%s28 + $0xd0] sm:%s21]
            %83 = vst [vmem:[%s29 + $0xe8] sm:%s21] %v82
            %v84 = vld [vmem:[%s28 + $0xd8] sm:%s21]
            %85 = vst [vmem:[%s29 + $0xf0] sm:%s21] %v84
            %v86 = vld [vmem:[%s28 + $0xe0] sm:%s21]
            %87 = vst [vmem:[%s29 + $0x100] sm:%s21] %v86
            %v88 = vld [vmem:[%s28 + $0xe8] sm:%s21]
            %89 = vst [vmem:[%s29 + $0x108] sm:%s21] %v88
            %v90 = vld [vmem:[%s28 + $0xf0] sm:%s21]
            %91 = vst [vmem:[%s29 + $0x110] sm:%s21] %v90
            %v92 = vld [vmem:[%s28 + $0xf8] sm:%s21]
            %93 = vst [vmem:[%s29 + $0x118] sm:%s21] %v92
            %v94 = vld [vmem:[%s28 + $0x100] sm:%s21]
            %95 = vst [vmem:[%s29 + $0x120] sm:%s21] %v94
            %v96 = vld [vmem:[%s28 + $0x108] sm:%s21]
            %97 = vst [vmem:[%s29 + $0x128] sm:%s21] %v96
            %v98 = vld [vmem:[%s28 + $0x110] sm:%s21]
            %99 = vst [vmem:[%s29 + $0x130] sm:%s21] %v98
            %v100 = vld [vmem:[%s28 + $0x118] sm:%s21]
            %101 = vst [vmem:[%s29 + $0x140] sm:%s21] %v100
            %v102 = vld [vmem:[%s28 + $0x120] sm:%s21]
            %103 = vst [vmem:[%s29 + $0x148] sm:%s21] %v102
            %v104 = vld [vmem:[%s28 + $0x128] sm:%s21]
            %105 = vst [vmem:[%s29 + $0x150] sm:%s21] %v104
            %v106 = vld [vmem:[%s28 + $0x130] sm:%s21]
            %107 = vst [vmem:[%s29 + $0x158] sm:%s21] %v106
            %v108 = vld [vmem:[%s28 + $0x138] sm:%s21]
            %109 = vst [vmem:[%s29 + $0x160] sm:%s21] %v108
            %v110 = vld [vmem:[%s28 + $0x140] sm:%s21]
            %111 = vst [vmem:[%s29 + $0x168] sm:%s21] %v110
            %v112 = vld [vmem:[%s28 + $0x148] sm:%s21]
            %113 = vst [vmem:[%s29 + $0x170] sm:%s21] %v112
            %v114 = vld [vmem:[%s28 + $0x150] sm:%s21]
            %115 = vst [vmem:[%s29 + $0x180] sm:%s21] %v114
            %v116 = vld [vmem:[%s28 + $0x158] sm:%s21]
            %117 = vst [vmem:[%s29 + $0x188] sm:%s21] %v116
            %v118 = vld [vmem:[%s28 + $0x160] sm:%s21]
            %119 = vst [vmem:[%s29 + $0x190] sm:%s21] %v118
            %v120 = vld [vmem:[%s28 + $0x168] sm:%s21]
            %121 = vst [vmem:[%s29 + $0x198] sm:%s21] %v120
            %v122 = vld [vmem:[%s28 + $0x170] sm:%s21]
            %123 = vst [vmem:[%s29 + $0x1a0] sm:%s21] %v122
            %v124 = vld [vmem:[%s28 + $0x178] sm:%s21]
            %125 = vst [vmem:[%s29 + $0x1a8] sm:%s21] %v124
            %v126 = vld [vmem:[%s28 + $0x180] sm:%s21]
            %127 = vst [vmem:[%s29 + $0x1b0] sm:%s21] %v126
            %v128 = vld [vmem:[%s28 + $0x188] sm:%s21]
            %129 = vst [vmem:[%s29 + $0x1c0] sm:%s21] %v128
            %v130 = vld [vmem:[%s28 + $0x190] sm:%s21]
            %131 = vst [vmem:[%s29 + $0x1c8] sm:%s21] %v130
            %v132 = vld [vmem:[%s28 + $0x198] sm:%s21]
            %133 = vst [vmem:[%s29 + $0x1d0] sm:%s21] %v132
            %v134 = vld [vmem:[%s28 + $0x1a0] sm:%s21]
            %135 = vst [vmem:[%s29 + $0x1d8] sm:%s21] %v134
            %v136 = vld [vmem:[%s28 + $0x1a8] sm:%s21]
            %137 = vst [vmem:[%s29 + $0x1e0] sm:%s21] %v136
            %v138 = vld [vmem:[%s28 + $0x1b0] sm:%s21]
            %139 = vst [vmem:[%s29 + $0x1e8] sm:%s21] %v138
            %v140 = vld [vmem:[%s28 + $0x1b8] sm:%s21]
            %141 = vst [vmem:[%s29 + $0x1f0] sm:%s21] %v140
            %v142 = vld [vmem:[%s28 + $0x1c0] sm:%s21]
            %143 = vst [vmem:[%s29 + $0x200] sm:%s21] %v142
            %v144 = vld [vmem:[%s28 + $0x1c8] sm:%s21]
            %145 = vst [vmem:[%s29 + $0x208] sm:%s21] %v144
            %v146 = vld [vmem:[%s28 + $0x1d0] sm:%s21]
            %147 = vst [vmem:[%s29 + $0x210] sm:%s21] %v146
            %v148 = vld [vmem:[%s28 + $0x1d8] sm:%s21]
            %149 = vst [vmem:[%s29 + $0x218] sm:%s21] %v148
            %v150 = vld [vmem:[%s28 + $0x1e0] sm:%s21]
            %151 = vst [vmem:[%s29 + $0x220] sm:%s21] %v150
            %v152 = vld [vmem:[%s28 + $0x1e8] sm:%s21]
            %153 = vst [vmem:[%s29 + $0x228] sm:%s21] %v152
            %v154 = vld [vmem:[%s28 + $0x1f0] sm:%s21]
            %155 = vst [vmem:[%s29 + $0x230] sm:%s21] %v154
          $region26: #{x_model_forward.15} parent=20 // loop_footer
            %s27 = sadd.s32 1, %s23
          $region27: #{x_model_forward.15} parent=20 // loop_footer_branch
            %22 = sbr.rel target = $region23
          $region28: #{x_model_forward.15} parent=20 // loop_exit
            _
        $region21: #{x_model_forward.15} parent=12 // pred_fallthru
          _
      $region13: #{x_model_forward.15} parent=8 // pred_fallthru
        _
      %294 = vnop
    $region9: #{x_model_forward.15} parent=1 // pred_fallthru
      _
    // Predicated region
    $region44: #{x_model_forward.15} parent=1 // pred_check
      _
    $region45: #{x_model_forward.15} parent=1 // pred_check_branch
      %296 = sbr.rel (0) target = $region47
    $region46: #{x_model_forward.15} parent=1 // pred_region
      _
    $region47: #{x_model_forward.15} parent=1 // pred_fallthru
      _
    // Predicated region
    $region48: #{x_model_forward.15} parent=1 // pred_check
      _
    $region49: #{x_model_forward.15} parent=1 // pred_check_branch
      %298 = sbr.rel (0) target = $region51
    $region50: #{x_model_forward.15} parent=1 // pred_region
      _
    $region51: #{x_model_forward.15} parent=1 // pred_fallthru
      _
    // Predicated region
    $region52: #{x_model_forward.15} parent=1 // pred_check
      _
    $region53: #{x_model_forward.15} parent=1 // pred_check_branch
      %300 = sbr.rel (0) target = $region55
    $region54: #{x_model_forward.15} parent=1 // pred_region
      _
    $region55: #{x_model_forward.15} parent=1 // pred_fallthru
      _
    // Predicated region
    $region56: #{x_model_forward.15} parent=1 // pred_check
      _
    $region57: #{x_model_forward.15} parent=1 // pred_check_branch
      %302 = sbr.rel (0) target = $region59
    $region58: #{x_model_forward.15} parent=1 // pred_region
      _
    $region59: #{x_model_forward.15} parent=1 // pred_fallthru
      _
    %v303 = vld [vmem:[#allocation2] sm:$0xff]
    %v304 = vld [vmem:[#allocation2 + $0x8] sm:$0xff]
    %v305 = vld [vmem:[#allocation2 + $0x10] sm:$0xff]
    %v306 = vld [vmem:[#allocation2 + $0x18] sm:$0xff]
    %v307 = vld [vmem:[#allocation2 + $0x20] sm:$0xff]
    %v308 = vld [vmem:[#allocation2 + $0x28] sm:$0xff]
    %v309 = vld [vmem:[#allocation2 + $0x30] sm:$0xff]
    %v310 = vld [vmem:[#allocation2 + $0x38] sm:$0xff]
    %s311 = scalar_lea.vmem [#allocation2], 64
    %v312 = vld [vmem:[%s311] sm:$0xff]
    %v313 = vld [vmem:[%s311 + $0x8] sm:$0xff]
    %v314 = vld [vmem:[%s311 + $0x10] sm:$0xff]
    %v315 = vld [vmem:[%s311 + $0x18] sm:$0xff]
    %v316 = vld [vmem:[%s311 + $0x20] sm:$0xff]
    %v317 = vld [vmem:[%s311 + $0x28] sm:$0xff]
    %v318 = vld [vmem:[%s311 + $0x30] sm:$0xff]
    %v319 = vld [vmem:[%s311 + $0x38] sm:$0xff]
    %v320 = vmax.f32 %v303, %v312
    %v321 = vmax.f32 %v304, %v313
    %v322 = vmax.f32 %v305, %v314
    %v323 = vmax.f32 %v306, %v315
    %v324 = vmax.f32 %v307, %v316
    %v325 = vmax.f32 %v308, %v317
    %v326 = vmax.f32 %v309, %v318
    %v327 = vmax.f32 %v310, %v319
    %s328 = scalar_lea.vmem [#allocation2], 128
    %v329 = vld [vmem:[%s328] sm:$0xff]
    %v330 = vld [vmem:[%s328 + $0x8] sm:$0xff]
    %v331 = vld [vmem:[%s328 + $0x10] sm:$0xff]
    %v332 = vld [vmem:[%s328 + $0x18] sm:$0xff]
    %v333 = vld [vmem:[%s328 + $0x20] sm:$0xff]
    %v334 = vld [vmem:[%s328 + $0x28] sm:$0xff]
    %v335 = vld [vmem:[%s328 + $0x30] sm:$0xff]
    %v336 = vld [vmem:[%s328 + $0x38] sm:$0xff]
    %v337 = vmax.f32 %v320, %v329
    %v338 = vmax.f32 %v321, %v330
    %v339 = vmax.f32 %v322, %v331
    %v340 = vmax.f32 %v323, %v332
    %v341 = vmax.f32 %v324, %v333
    %v342 = vmax.f32 %v325, %v334
    %v343 = vmax.f32 %v326, %v335
    %v344 = vmax.f32 %v327, %v336
    %s345 = scalar_lea.vmem [#allocation2], 192
    %v346 = vld [vmem:[%s345] sm:$0xff]
    %v347 = vld [vmem:[%s345 + $0x8] sm:$0xff]
    %v348 = vld [vmem:[%s345 + $0x10] sm:$0xff]
    %v349 = vld [vmem:[%s345 + $0x18] sm:$0xff]
    %v350 = vld [vmem:[%s345 + $0x20] sm:$0xff]
    %v351 = vld [vmem:[%s345 + $0x28] sm:$0xff]
    %v352 = vld [vmem:[%s345 + $0x30] sm:$0xff]
    %v353 = vld [vmem:[%s345 + $0x38] sm:$0xff]
    %v354 = vmax.f32 %v337, %v346
    %v355 = vmax.f32 %v338, %v347
    %v356 = vmax.f32 %v339, %v348
    %v357 = vmax.f32 %v340, %v349
    %v358 = vmax.f32 %v341, %v350
    %v359 = vmax.f32 %v342, %v351
    %v360 = vmax.f32 %v343, %v352
    %v361 = vmax.f32 %v344, %v353
    %s362 = scalar_lea.vmem [#allocation2], 256
    %v363 = vld [vmem:[%s362] sm:$0xff]
    %v364 = vld [vmem:[%s362 + $0x8] sm:$0xff]
    %v365 = vld [vmem:[%s362 + $0x10] sm:$0xff]
    %v366 = vld [vmem:[%s362 + $0x18] sm:$0xff]
    %v367 = vld [vmem:[%s362 + $0x20] sm:$0xff]
    %v368 = vld [vmem:[%s362 + $0x28] sm:$0xff]
    %v369 = vld [vmem:[%s362 + $0x30] sm:$0xff]
    %v370 = vld [vmem:[%s362 + $0x38] sm:$0xff]
    %v371 = vmax.f32 %v354, %v363
    %v372 = vmax.f32 %v355, %v364
    %v373 = vmax.f32 %v356, %v365
    %v374 = vmax.f32 %v357, %v366
    %v375 = vmax.f32 %v358, %v367
    %v376 = vmax.f32 %v359, %v368
    %v377 = vmax.f32 %v360, %v369
    %v378 = vmax.f32 %v361, %v370
    %s379 = scalar_lea.vmem [#allocation2], 320
    %v380 = vld [vmem:[%s379] sm:$0xff]
    %v381 = vld [vmem:[%s379 + $0x8] sm:$0xff]
    %v382 = vld [vmem:[%s379 + $0x10] sm:$0xff]
    %v383 = vld [vmem:[%s379 + $0x18] sm:$0xff]
    %v384 = vld [vmem:[%s379 + $0x20] sm:$0xff]
    %v385 = vld [vmem:[%s379 + $0x28] sm:$0xff]
    %v386 = vld [vmem:[%s379 + $0x30] sm:$0xff]
    %v387 = vld [vmem:[%s379 + $0x38] sm:$0xff]
    %v388 = vmax.f32 %v371, %v380
    %v389 = vmax.f32 %v372, %v381
    %v390 = vmax.f32 %v373, %v382
    %v391 = vmax.f32 %v374, %v383
    %v392 = vmax.f32 %v375, %v384
    %v393 = vmax.f32 %v376, %v385
    %v394 = vmax.f32 %v377, %v386
    %v395 = vmax.f32 %v378, %v387
    %s396 = scalar_lea.vmem [#allocation2], 384
    %v397 = vld [vmem:[%s396] sm:$0xff]
    %v398 = vld [vmem:[%s396 + $0x8] sm:$0xff]
    %v399 = vld [vmem:[%s396 + $0x10] sm:$0xff]
    %v400 = vld [vmem:[%s396 + $0x18] sm:$0xff]
    %v401 = vld [vmem:[%s396 + $0x20] sm:$0xff]
    %v402 = vld [vmem:[%s396 + $0x28] sm:$0xff]
    %v403 = vld [vmem:[%s396 + $0x30] sm:$0xff]
    %v404 = vld [vmem:[%s396 + $0x38] sm:$0xff]
    %v405 = vmax.f32 %v388, %v397
    %v406 = vmax.f32 %v389, %v398
    %v407 = vmax.f32 %v390, %v399
    %v408 = vmax.f32 %v391, %v400
    %v409 = vmax.f32 %v392, %v401
    %v410 = vmax.f32 %v393, %v402
    %v411 = vmax.f32 %v394, %v403
    %v412 = vmax.f32 %v395, %v404
    %s413 = scalar_lea.vmem [#allocation2], 448
    %v414 = vld [vmem:[%s413] sm:$0xff]
    %v415 = vld [vmem:[%s413 + $0x8] sm:$0xff]
    %v416 = vld [vmem:[%s413 + $0x10] sm:$0xff]
    %v417 = vld [vmem:[%s413 + $0x18] sm:$0xff]
    %v418 = vld [vmem:[%s413 + $0x20] sm:$0xff]
    %v419 = vld [vmem:[%s413 + $0x28] sm:$0xff]
    %v420 = vld [vmem:[%s413 + $0x30] sm:$0xff]
    %v421 = vld [vmem:[%s413 + $0x38] sm:$0xff]
    %v422 = vmax.f32 %v405, %v414
    %v423 = vmax.f32 %v406, %v415
    %v424 = vmax.f32 %v407, %v416
    %v425 = vmax.f32 %v408, %v417
    %v426 = vmax.f32 %v409, %v418
    %v427 = vmax.f32 %v410, %v419
    %v428 = vmax.f32 %v411, %v420
    %v429 = vmax.f32 %v412, %v421
    %s430 = scalar_lea.vmem [#allocation2], 512
    %v431 = vld [vmem:[%s430] sm:$0xff]
    %v432 = vld [vmem:[%s430 + $0x8] sm:$0xff]
    %v433 = vld [vmem:[%s430 + $0x10] sm:$0xff]
    %v434 = vld [vmem:[%s430 + $0x18] sm:$0xff]
    %v435 = vld [vmem:[%s430 + $0x20] sm:$0xff]
    %v436 = vld [vmem:[%s430 + $0x28] sm:$0xff]
    %v437 = vld [vmem:[%s430 + $0x30] sm:$0xff]
    %v438 = vld [vmem:[%s430 + $0x38] sm:$0xff]
    %v439 = vmax.f32 %v422, %v431
    %v440 = vmax.f32 %v423, %v432
    %v441 = vmax.f32 %v424, %v433
    %v442 = vmax.f32 %v425, %v434
    %v443 = vmax.f32 %v426, %v435
    %v444 = vmax.f32 %v427, %v436
    %v445 = vmax.f32 %v428, %v437
    %v446 = vmax.f32 %v429, %v438
    %v447 = vld [vmem:[%s0] sm:$0xff]
    %v448 = vld [vmem:[%s0 + $0x8] sm:$0xff]
    %v449 = vld [vmem:[%s0 + $0x10] sm:$0xff]
    %v450 = vld [vmem:[%s0 + $0x18] sm:$0xff]
    %v451 = vld [vmem:[%s0 + $0x20] sm:$0xff]
    %v452 = vld [vmem:[%s0 + $0x28] sm:$0xff]
    %v453 = vld [vmem:[%s0 + $0x30] sm:$0xff]
    %v454 = vld [vmem:[%s0 + $0x38] sm:$0xff]
    %v455 = vld [vmem:[%s2] sm:$0xff]
    %v456 = vld [vmem:[%s2 + $0x8] sm:$0xff]
    %v457 = vld [vmem:[%s2 + $0x10] sm:$0xff]
    %v458 = vld [vmem:[%s2 + $0x18] sm:$0xff]
    %v459 = vld [vmem:[%s2 + $0x20] sm:$0xff]
    %v460 = vld [vmem:[%s2 + $0x28] sm:$0xff]
    %v461 = vld [vmem:[%s2 + $0x30] sm:$0xff]
    %v462 = vld [vmem:[%s2 + $0x38] sm:$0xff]
    %v463 = vld [vmem:[%s3] sm:$0xff]
    %v464 = vld [vmem:[%s3 + $0x8] sm:$0xff]
    %v465 = vld [vmem:[%s3 + $0x10] sm:$0xff]
    %v466 = vld [vmem:[%s3 + $0x18] sm:$0xff]
    %v467 = vld [vmem:[%s3 + $0x20] sm:$0xff]
    %v468 = vld [vmem:[%s3 + $0x28] sm:$0xff]
    %v469 = vld [vmem:[%s3 + $0x30] sm:$0xff]
    %v470 = vld [vmem:[%s3 + $0x38] sm:$0xff]
    %vm471 = vcmask 523264
    %v473 = vsel %vm471, %v439, 0
    %v476 = vsel %vm471, %v440, 0
    %v479 = vsel %vm471, %v441, 0
    %v482 = vsel %vm471, %v442, 0
    %v485 = vsel %vm471, %v443, 0
    %v488 = vsel %vm471, %v444, 0
    %v491 = vsel %vm471, %v445, 0
    %v494 = vsel %vm471, %v446, 0
    %496 = vmatprep.subr.mxu0 0.0
    %497 = vmatpush1.msra.mxu0 0.0
    %498 = vmatprep.subr.mxu0 0.0
    %499 = vmatpush1.msra.mxu0 0.0
    %500 = vmatprep.subr.mxu0 0.0
    %501 = vmatpush1.msra.mxu0 0.0
    %502 = vmatprep.subr.mxu0 0.0
    %503 = vmatpush1.msra.mxu0 0.0
    %504 = vmatprep.subr.mxu0 0.0
    %505 = vmatpush1.msra.mxu0 0.0
    %506 = vmatprep.subr.mxu0 0.0
    %507 = vmatpush1.msra.mxu0 0.0
    %508 = vmatprep.subr.mxu0 0.0
    %509 = vmatpush1.msra.mxu0 0.0
    %510 = vmatprep.subr.mxu0 0.0
    %511 = vmatpush1.msra.mxu0 0.0
    %512 = vmatprep.subr.mxu0 0.0
    %513 = vmatpush1.msra.mxu0 %v470
    %514 = vmatprep.subr.mxu0 0.0
    %515 = vmatpush1.msra.mxu0 %v469
    %516 = vmatprep.subr.mxu0 0.0
    %517 = vmatpush1.msra.mxu0 %v468
    %518 = vmatprep.subr.mxu0 0.0
    %519 = vmatpush1.msra.mxu0 %v467
    %520 = vmatprep.subr.mxu0 0.0
    %521 = vmatpush1.msra.mxu0 %v466
    %522 = vmatprep.subr.mxu0 0.0
    %523 = vmatpush1.msra.mxu0 %v465
    %524 = vmatprep.subr.mxu0 0.0
    %525 = vmatpush1.msra.mxu0 %v464
    %526 = vmatprep.subr.mxu0 0.0
    %527 = vmatpush1.msra.mxu0 %v463
    %528 = vmatprep.subr.mxu0 0.0
    %529 = vmatpush2.msra.mxu0 0.0
    %530 = vmatprep.subr.mxu0 0.0
    %531 = vmatpush2.msra.mxu0 0.0
    %532 = vmatprep.subr.mxu0 0.0
    %533 = vmatpush2.msra.mxu0 0.0
    %534 = vmatprep.subr.mxu0 0.0
    %535 = vmatpush2.msra.mxu0 0.0
    %536 = vmatprep.subr.mxu0 0.0
    %537 = vmatpush2.msra.mxu0 0.0
    %538 = vmatprep.subr.mxu0 0.0
    %539 = vmatpush2.msra.mxu0 0.0
    %540 = vmatprep.subr.mxu0 0.0
    %541 = vmatpush2.msra.mxu0 0.0
    %542 = vmatprep.subr.mxu0 0.0
    %543 = vmatpush2.msra.mxu0 0.0
    %544 = vmatprep.subr.mxu0 0.0
    %545 = vmatpush2.msra.mxu0 0.0
    %546 = vmatprep.subr.mxu0 0.0
    %547 = vmatpush2.msra.mxu0 0.0
    %548 = vmatprep.subr.mxu0 0.0
    %549 = vmatpush2.msra.mxu0 0.0
    %550 = vmatprep.subr.mxu0 0.0
    %551 = vmatpush2.msra.mxu0 0.0
    %552 = vmatprep.subr.mxu0 0.0
    %553 = vmatpush2.msra.mxu0 0.0
    %554 = vmatprep.subr.mxu0 0.0
    %555 = vmatpush2.msra.mxu0 0.0
    %556 = vmatprep.subr.mxu0 0.0
    %557 = vmatpush2.msra.mxu0 0.0
    %558 = vmatprep.subr.mxu0 0.0
    %559 = vmatpush2.msra.mxu0 0.0
    %560 = vmatprep.mubr.f32.mxu0 0.0
    %561 = vmatmul.mubr.f32.gmra.mxu0 %v473
    %v562 = vpop.f32.mrf.mxu0
    %v563 = vadd.f32 0.0, %v562
    %v564 = vpop.f32.mrf.mxu0
    %565 = vmatprep.mubr.f32.mxu0 0.0
    %566 = vmatmul.mubr.f32.gmra.mxu0 %v476
    %v567 = vpop.f32.mrf.mxu0
    %v568 = vadd.f32 0.0, %v567
    %v569 = vpop.f32.mrf.mxu0
    %570 = vmatprep.mubr.f32.mxu0 0.0
    %571 = vmatmul.mubr.f32.gmra.mxu0 %v479
    %v572 = vpop.f32.mrf.mxu0
    %v573 = vadd.f32 0.0, %v572
    %v574 = vpop.f32.mrf.mxu0
    %575 = vmatprep.mubr.f32.mxu0 0.0
    %576 = vmatmul.mubr.f32.gmra.mxu0 %v482
    %v577 = vpop.f32.mrf.mxu0
    %v578 = vadd.f32 0.0, %v577
    %v579 = vpop.f32.mrf.mxu0
    %580 = vmatprep.mubr.f32.mxu0 0.0
    %581 = vmatmul.mubr.f32.gmra.mxu0 %v485
    %v582 = vpop.f32.mrf.mxu0
    %v583 = vadd.f32 0.0, %v582
    %v584 = vpop.f32.mrf.mxu0
    %585 = vmatprep.mubr.f32.mxu0 0.0
    %586 = vmatmul.mubr.f32.gmra.mxu0 %v488
    %v587 = vpop.f32.mrf.mxu0
    %v588 = vadd.f32 0.0, %v587
    %v589 = vpop.f32.mrf.mxu0
    %590 = vmatprep.mubr.f32.mxu0 0.0
    %591 = vmatmul.mubr.f32.gmra.mxu0 %v491
    %v592 = vpop.f32.mrf.mxu0
    %v593 = vadd.f32 0.0, %v592
    %v594 = vpop.f32.mrf.mxu0
    %595 = vmatprep.mubr.f32.mxu0 0.0
    %596 = vmatmul.mubr.f32.gmra.mxu0 %v494
    %v597 = vpop.f32.mrf.mxu0
    %v598 = vadd.f32 0.0, %v597
    %v599 = vpop.f32.mrf.mxu0
    %600 = vdwg.mxu0
    %v602 = vsel %vm471, %v447, 0
    %v605 = vsel %vm471, %v448, 0
    %v608 = vsel %vm471, %v449, 0
    %v611 = vsel %vm471, %v450, 0
    %v614 = vsel %vm471, %v451, 0
    %v617 = vsel %vm471, %v452, 0
    %v620 = vsel %vm471, %v453, 0
    %v623 = vsel %vm471, %v454, 0
    %625 = vmatprep.subr.mxu0 0.0
    %626 = vmatpush1.msra.mxu0 0.0
    %627 = vmatprep.subr.mxu0 0.0
    %628 = vmatpush1.msra.mxu0 0.0
    %629 = vmatprep.subr.mxu0 0.0
    %630 = vmatpush1.msra.mxu0 0.0
    %631 = vmatprep.subr.mxu0 0.0
    %632 = vmatpush1.msra.mxu0 0.0
    %633 = vmatprep.subr.mxu0 0.0
    %634 = vmatpush1.msra.mxu0 0.0
    %635 = vmatprep.subr.mxu0 0.0
    %636 = vmatpush1.msra.mxu0 0.0
    %637 = vmatprep.subr.mxu0 0.0
    %638 = vmatpush1.msra.mxu0 0.0
    %639 = vmatprep.subr.mxu0 0.0
    %640 = vmatpush1.msra.mxu0 0.0
    %641 = vmatprep.subr.mxu0 0.0
    %642 = vmatpush1.msra.mxu0 %v462
    %643 = vmatprep.subr.mxu0 0.0
    %644 = vmatpush1.msra.mxu0 %v461
    %645 = vmatprep.subr.mxu0 0.0
    %646 = vmatpush1.msra.mxu0 %v460
    %647 = vmatprep.subr.mxu0 0.0
    %648 = vmatpush1.msra.mxu0 %v459
    %649 = vmatprep.subr.mxu0 0.0
    %650 = vmatpush1.msra.mxu0 %v458
    %651 = vmatprep.subr.mxu0 0.0
    %652 = vmatpush1.msra.mxu0 %v457
    %653 = vmatprep.subr.mxu0 0.0
    %654 = vmatpush1.msra.mxu0 %v456
    %655 = vmatprep.subr.mxu0 0.0
    %656 = vmatpush1.msra.mxu0 %v455
    %657 = vmatprep.subr.mxu0 0.0
    %658 = vmatpush2.msra.mxu0 0.0
    %659 = vmatprep.subr.mxu0 0.0
    %660 = vmatpush2.msra.mxu0 0.0
    %661 = vmatprep.subr.mxu0 0.0
    %662 = vmatpush2.msra.mxu0 0.0
    %663 = vmatprep.subr.mxu0 0.0
    %664 = vmatpush2.msra.mxu0 0.0
    %665 = vmatprep.subr.mxu0 0.0
    %666 = vmatpush2.msra.mxu0 0.0
    %667 = vmatprep.subr.mxu0 0.0
    %668 = vmatpush2.msra.mxu0 0.0
    %669 = vmatprep.subr.mxu0 0.0
    %670 = vmatpush2.msra.mxu0 0.0
    %671 = vmatprep.subr.mxu0 0.0
    %672 = vmatpush2.msra.mxu0 0.0
    %673 = vmatprep.subr.mxu0 0.0
    %674 = vmatpush2.msra.mxu0 0.0
    %675 = vmatprep.subr.mxu0 0.0
    %676 = vmatpush2.msra.mxu0 0.0
    %677 = vmatprep.subr.mxu0 0.0
    %678 = vmatpush2.msra.mxu0 0.0
    %679 = vmatprep.subr.mxu0 0.0
    %680 = vmatpush2.msra.mxu0 0.0
    %681 = vmatprep.subr.mxu0 0.0
    %682 = vmatpush2.msra.mxu0 0.0
    %683 = vmatprep.subr.mxu0 0.0
    %684 = vmatpush2.msra.mxu0 0.0
    %685 = vmatprep.subr.mxu0 0.0
    %686 = vmatpush2.msra.mxu0 0.0
    %687 = vmatprep.subr.mxu0 0.0
    %688 = vmatpush2.msra.mxu0 0.0
    %689 = vmatprep.mubr.f32.mxu0 0.0
    %690 = vmatmul.mubr.f32.gmra.mxu0 %v602
    %v691 = vpop.f32.mrf.mxu0
    %v692 = vadd.f32 %v563, %v691
    %v693 = vpop.f32.mrf.mxu0
    %694 = vmatprep.mubr.f32.mxu0 0.0
    %695 = vmatmul.mubr.f32.gmra.mxu0 %v605
    %v696 = vpop.f32.mrf.mxu0
    %v697 = vadd.f32 %v568, %v696
    %v698 = vpop.f32.mrf.mxu0
    %699 = vmatprep.mubr.f32.mxu0 0.0
    %700 = vmatmul.mubr.f32.gmra.mxu0 %v608
    %v701 = vpop.f32.mrf.mxu0
    %v702 = vadd.f32 %v573, %v701
    %v703 = vpop.f32.mrf.mxu0
    %704 = vmatprep.mubr.f32.mxu0 0.0
    %705 = vmatmul.mubr.f32.gmra.mxu0 %v611
    %v706 = vpop.f32.mrf.mxu0
    %v707 = vadd.f32 %v578, %v706
    %v708 = vpop.f32.mrf.mxu0
    %709 = vmatprep.mubr.f32.mxu0 0.0
    %710 = vmatmul.mubr.f32.gmra.mxu0 %v614
    %v711 = vpop.f32.mrf.mxu0
    %v712 = vadd.f32 %v583, %v711
    %v713 = vpop.f32.mrf.mxu0
    %714 = vmatprep.mubr.f32.mxu0 0.0
    %715 = vmatmul.mubr.f32.gmra.mxu0 %v617
    %v716 = vpop.f32.mrf.mxu0
    %v717 = vadd.f32 %v588, %v716
    %v718 = vpop.f32.mrf.mxu0
    %719 = vmatprep.mubr.f32.mxu0 0.0
    %720 = vmatmul.mubr.f32.gmra.mxu0 %v620
    %v721 = vpop.f32.mrf.mxu0
    %v722 = vadd.f32 %v593, %v721
    %v723 = vpop.f32.mrf.mxu0
    %724 = vmatprep.mubr.f32.mxu0 0.0
    %725 = vmatmul.mubr.f32.gmra.mxu0 %v623
    %v726 = vpop.f32.mrf.mxu0
    %v727 = vadd.f32 %v598, %v726
    %v728 = vpop.f32.mrf.mxu0
    %729 = vdwg.mxu0
    %v730 = vld [vmem:[%s4] sm:$0x1]
    %v732 = vlaneseq
    %v733 = vshrl.u32 %v732, 7
    %v734 = vsub.s32 0, %v733
    %v735 = vrot.slane %v730, %v734
    %v737 = vadd.f32 %v692, %v735
    %v738 = vadd.f32 %v697, %v735
    %v739 = vadd.f32 %v702, %v735
    %v740 = vadd.f32 %v707, %v735
    %v741 = vadd.f32 %v712, %v735
    %v742 = vadd.f32 %v717, %v735
    %v743 = vadd.f32 %v722, %v735
    %v744 = vadd.f32 %v727, %v735
    %v745 = vmax.f32 %v737, 0.0
    %v746 = vmax.f32 %v738, 0.0
    %v747 = vmax.f32 %v739, 0.0
    %v748 = vmax.f32 %v740, 0.0
    %v749 = vmax.f32 %v741, 0.0
    %v750 = vmax.f32 %v742, 0.0
    %v751 = vmax.f32 %v743, 0.0
    %v752 = vmax.f32 %v744, 0.0
    %vm753 = vcmask 424960
    %754 = vst.msk [vmem:[#allocation3] sm:$0xff] %vm753, %v745
    %755 = vst.msk [vmem:[#allocation3 + $0x8] sm:$0xff] %vm753, %v746
    %756 = vst.msk [vmem:[#allocation3 + $0x10] sm:$0xff] %vm753, %v747
    %757 = vst.msk [vmem:[#allocation3 + $0x18] sm:$0xff] %vm753, %v748
    %758 = vst.msk [vmem:[#allocation3 + $0x20] sm:$0xff] %vm753, %v749
    %759 = vst.msk [vmem:[#allocation3 + $0x28] sm:$0xff] %vm753, %v750
    %760 = vst.msk [vmem:[#allocation3 + $0x30] sm:$0xff] %vm753, %v751
    %761 = vst.msk [vmem:[#allocation3 + $0x38] sm:$0xff] %vm753, %v752
    // Predicated region
    $region60: #{x_model_forward.15} parent=1 // pred_check
      _
    $region61: #{x_model_forward.15} parent=1 // pred_check_branch
      %763 = sbr.rel (0) target = $region63
    $region62: #{x_model_forward.15} parent=1 // pred_region
      // Predicated region
      $region64: #{x_model_forward.15} parent=62 // pred_check
        _
      $region65: #{x_model_forward.15} parent=62 // pred_check_branch
        %765 = sbr.rel (0) target = $region67
      $region66: #{x_model_forward.15} parent=62 // pred_region
        // Predicated region
        $region68: #{x_model_forward.15} parent=66 // pred_check
          _
        $region69: #{x_model_forward.15} parent=66 // pred_check_branch
          %767 = sbr.rel (0) target = $region71
        $region70: #{x_model_forward.15} parent=66 // pred_region
          // Predicated region
          $region83: #{x_model_forward.15} parent=70 // pred_check
            _
          $region84: #{x_model_forward.15} parent=70 // pred_check_branch
            %795 = sbr.rel (0) target = $region86
          $region85: #{x_model_forward.15} parent=70 // pred_region
            loop: start=0, step=1, limit=1
            $region87: #{x_model_forward.15} parent=85 // loop_pre_header
              _
            $region88: #{x_model_forward.15} parent=85 // loop_header
              %s797 = sphi 0, %s801
              %p798 = scmp.ge.s32.totalorder %s797, 1
              %s802 = sphi [#allocation3], [#allocation3]
              %s803 = sphi %s5, %s5
            $region89: #{x_model_forward.15} parent=85 // loop_header_branch
              %800 = sbr.rel (%p798) target = $region93
            $region90: #{x_model_forward.15} parent=85 // loop_body
              %v804 = vld [vmem:[%s802] sm:$0xff]
              %805 = vst [vmem:[%s803] sm:$0xff] %v804
              %v806 = vld [vmem:[%s802 + $0x8] sm:$0xff]
              %807 = vst [vmem:[%s803 + $0x8] sm:$0xff] %v806
              %v808 = vld [vmem:[%s802 + $0x10] sm:$0xff]
              %809 = vst [vmem:[%s803 + $0x10] sm:$0xff] %v808
              %v810 = vld [vmem:[%s802 + $0x18] sm:$0xff]
              %811 = vst [vmem:[%s803 + $0x18] sm:$0xff] %v810
              %v812 = vld [vmem:[%s802 + $0x20] sm:$0xff]
              %813 = vst [vmem:[%s803 + $0x20] sm:$0xff] %v812
              %v814 = vld [vmem:[%s802 + $0x28] sm:$0xff]
              %815 = vst [vmem:[%s803 + $0x28] sm:$0xff] %v814
              %v816 = vld [vmem:[%s802 + $0x30] sm:$0xff]
              %817 = vst [vmem:[%s803 + $0x30] sm:$0xff] %v816
            $region91: #{x_model_forward.15} parent=85 // loop_footer
              %s801 = sadd.s32 1, %s797
            $region92: #{x_model_forward.15} parent=85 // loop_footer_branch
              %796 = sbr.rel target = $region88
            $region93: #{x_model_forward.15} parent=85 // loop_exit
              _
          $region86: #{x_model_forward.15} parent=70 // pred_fallthru
            _
          // Predicated region
          $region94: #{x_model_forward.15} parent=70 // pred_check
            _
          $region95: #{x_model_forward.15} parent=70 // pred_check_branch
            %819 = sbr.rel target = $region97
          $region96: #{x_model_forward.15} parent=70 // pred_region
            _
          $region97: #{x_model_forward.15} parent=70 // pred_fallthru
            _
        $region71: #{x_model_forward.15} parent=66 // pred_fallthru
          _
        // Predicated region
        $region72: #{x_model_forward.15} parent=66 // pred_check
          _
        $region73: #{x_model_forward.15} parent=66 // pred_check_branch
          %769 = sbr.rel target = $region75
        $region74: #{x_model_forward.15} parent=66 // pred_region
          %s771 = ssub.s32 256, 1
          loop: start=0, step=1, limit=1
          $region76: #{x_model_forward.15} parent=74 // loop_pre_header
            _
          $region77: #{x_model_forward.15} parent=74 // loop_header
            %s773 = sphi 0, %s777
            %p774 = scmp.ge.s32.totalorder %s773, 1
            %s778 = sphi [#allocation3], [#allocation3]
            %s779 = sphi %s5, %s5
          $region78: #{x_model_forward.15} parent=74 // loop_header_branch
            %776 = sbr.rel (%p774) target = $region82
          $region79: #{x_model_forward.15} parent=74 // loop_body
            %v780 = vld [vmem:[%s778] sm:%s771]
            %781 = vst [vmem:[%s779] sm:%s771] %v780
            %v782 = vld [vmem:[%s778 + $0x8] sm:%s771]
            %783 = vst [vmem:[%s779 + $0x8] sm:%s771] %v782
            %v784 = vld [vmem:[%s778 + $0x10] sm:%s771]
            %785 = vst [vmem:[%s779 + $0x10] sm:%s771] %v784
            %v786 = vld [vmem:[%s778 + $0x18] sm:%s771]
            %787 = vst [vmem:[%s779 + $0x18] sm:%s771] %v786
            %v788 = vld [vmem:[%s778 + $0x20] sm:%s771]
            %789 = vst [vmem:[%s779 + $0x20] sm:%s771] %v788
            %v790 = vld [vmem:[%s778 + $0x28] sm:%s771]
            %791 = vst [vmem:[%s779 + $0x28] sm:%s771] %v790
            %v792 = vld [vmem:[%s778 + $0x30] sm:%s771]
            %793 = vst [vmem:[%s779 + $0x30] sm:%s771] %v792
          $region80: #{x_model_forward.15} parent=74 // loop_footer
            %s777 = sadd.s32 1, %s773
          $region81: #{x_model_forward.15} parent=74 // loop_footer_branch
            %772 = sbr.rel target = $region77
          $region82: #{x_model_forward.15} parent=74 // loop_exit
            _
        $region75: #{x_model_forward.15} parent=66 // pred_fallthru
          _
      $region67: #{x_model_forward.15} parent=62 // pred_fallthru
        _
      %820 = vnop
    $region63: #{x_model_forward.15} parent=1 // pred_fallthru
      _
    // Predicated region
    $region98: #{x_model_forward.15} parent=1 // pred_check
      _
    $region99: #{x_model_forward.15} parent=1 // pred_check_branch
      %822 = sbr.rel (0) target = $region101
    $region100: #{x_model_forward.15} parent=1 // pred_region
      _
    $region101: #{x_model_forward.15} parent=1 // pred_fallthru
      _

// kernel: x_model_forward.16
$region0: #{x_model_forward.16}
  #allocation0 [shape = 'u32[]', space=smem, size = 0x4, offset = 0x4, fixed_abs, tag = 'smem constant byte address 0x4 - core index']
  #allocation1 [shape = 'u32[144,128]{1,0:T(1,128)}', space=vmem, size = 0x12000, scoped, tag = 'internal scratch']
  %s0 = inlined_call_operand.vmem [shape: bf16[50,216], index: 0, kind: input, shape index: {}]
  %s1 = inlined_call_operand.vmem [shape: bf16[50,100], index: 1, kind: input, shape index: {}]
  %s2 = inlined_call_operand.vmem [shape: bf16[216,40], index: 2, kind: input, shape index: {}]
  %s3 = inlined_call_operand.vmem [shape: bf16[100,40], index: 3, kind: input, shape index: {}]
  %s4 = inlined_call_operand.vmem [shape: f32[1,40], index: 4, kind: input, shape index: {}]
  %s5 = inlined_call_operand.vmem [shape: f32[50,40], index: 5, kind: output, shape index: {}]
  %s6 = sld [smem:[#allocation0]]
  $region64: #{x_model_forward.16} parent=0
    _
  %s8 = ssub.s32 1, %s6
  %s9 = scalar_select 0, %s8, %s6
  $region1: #{x_model_forward.16} parent=0
    #allocation2 [shape = 'u8[32768]{0}', space=vmem, size = 0x8000, scoped, tag = 'output window, operand 0, single buffered']
    // Predicated region
    $region2: #{x_model_forward.16} parent=1 // pred_check
      _
    $region3: #{x_model_forward.16} parent=1 // pred_check_branch
      %11 = sbr.rel (0) target = $region5
    $region4: #{x_model_forward.16} parent=1 // pred_region
      _
    $region5: #{x_model_forward.16} parent=1 // pred_fallthru
      _
    // Predicated region
    $region6: #{x_model_forward.16} parent=1 // pred_check
      _
    $region7: #{x_model_forward.16} parent=1 // pred_check_branch
      %13 = sbr.rel (0) target = $region9
    $region8: #{x_model_forward.16} parent=1 // pred_region
      _
    $region9: #{x_model_forward.16} parent=1 // pred_fallthru
      _
    // Predicated region
    $region10: #{x_model_forward.16} parent=1 // pred_check
      _
    $region11: #{x_model_forward.16} parent=1 // pred_check_branch
      %15 = sbr.rel (0) target = $region13
    $region12: #{x_model_forward.16} parent=1 // pred_region
      _
    $region13: #{x_model_forward.16} parent=1 // pred_fallthru
      _
    // Predicated region
    $region14: #{x_model_forward.16} parent=1 // pred_check
      _
    $region15: #{x_model_forward.16} parent=1 // pred_check_branch
      %17 = sbr.rel (0) target = $region17
    $region16: #{x_model_forward.16} parent=1 // pred_region
      _
    $region17: #{x_model_forward.16} parent=1 // pred_fallthru
      _
    // Predicated region
    $region18: #{x_model_forward.16} parent=1 // pred_check
      _
    $region19: #{x_model_forward.16} parent=1 // pred_check_branch
      %19 = sbr.rel (0) target = $region21
    $region20: #{x_model_forward.16} parent=1 // pred_region
      _
    $region21: #{x_model_forward.16} parent=1 // pred_fallthru
      _
    %v21 = vld [vmem:[%s0] sm:$0xff]
    %v22 = vld [vmem:[%s0 + $0x8] sm:$0xff]
    %v23 = vld [vmem:[%s0 + $0x10] sm:$0xff]
    %v24 = vld [vmem:[%s0 + $0x18] sm:$0xff]
    %v25 = vld [vmem:[%s0 + $0x20] sm:$0xff]
    %v26 = vld [vmem:[%s0 + $0x28] sm:$0xff]
    %v27 = vld [vmem:[%s0 + $0x30] sm:$0xff]
    %v28 = vld [vmem:[%s0 + $0x38] sm:$0xff]
    %v29 = vld [vmem:[%s2] sm:$0xf]
    %v30 = vld [vmem:[%s2 + $0x4] sm:$0xf]
    %v31 = vld [vmem:[%s2 + $0x8] sm:$0xf]
    %v32 = vld [vmem:[%s2 + $0xc] sm:$0xf]
    %v33 = vld [vmem:[%s2 + $0x10] sm:$0xf]
    %v34 = vld [vmem:[%s2 + $0x14] sm:$0xf]
    %v35 = vld [vmem:[%s2 + $0x18] sm:$0xf]
    %v36 = vld [vmem:[%s2 + $0x1c] sm:$0xf]
    %v37 = vld [vmem:[%s2 + $0x20] sm:$0xf]
    %v38 = vld [vmem:[%s2 + $0x24] sm:$0xf]
    %v39 = vld [vmem:[%s2 + $0x28] sm:$0xf]
    %v40 = vld [vmem:[%s2 + $0x2c] sm:$0xf]
    %v41 = vld [vmem:[%s2 + $0x30] sm:$0xf]
    %v42 = vld [vmem:[%s2 + $0x34] sm:$0xf]
    %v43 = vld [vmem:[%s2 + $0x38] sm:$0xf]
    %v44 = vld [vmem:[%s2 + $0x3c] sm:$0xf]
    %v45 = vld [vmem:[%s2 + $0x40] sm:$0xf]
    %v46 = vld [vmem:[%s2 + $0x44] sm:$0xf]
    %v47 = vld [vmem:[%s2 + $0x48] sm:$0xf]
    %v48 = vld [vmem:[%s2 + $0x4c] sm:$0xf]
    %v49 = vld [vmem:[%s2 + $0x50] sm:$0xf]
    %v50 = vld [vmem:[%s2 + $0x54] sm:$0xf]
    %v51 = vld [vmem:[%s2 + $0x58] sm:$0xf]
    %v52 = vld [vmem:[%s2 + $0x5c] sm:$0xf]
    %v53 = vld [vmem:[%s2 + $0x60] sm:$0xf]
    %v54 = vld [vmem:[%s2 + $0x64] sm:$0xf]
    %v55 = vld [vmem:[%s2 + $0x68] sm:$0xf]
    %v56 = vld [vmem:[%s1] sm:$0xf]
    %v57 = vld [vmem:[%s1 + $0x4] sm:$0xf]
    %v58 = vld [vmem:[%s1 + $0x8] sm:$0xf]
    %v59 = vld [vmem:[%s1 + $0xc] sm:$0xf]
    %v60 = vld [vmem:[%s1 + $0x10] sm:$0xf]
    %v61 = vld [vmem:[%s1 + $0x14] sm:$0xf]
    %v62 = vld [vmem:[%s1 + $0x18] sm:$0xf]
    %v63 = vld [vmem:[%s1 + $0x1c] sm:$0xf]
    %v64 = vld [vmem:[%s3] sm:$0xf]
    %v65 = vld [vmem:[%s3 + $0x4] sm:$0xf]
    %v66 = vld [vmem:[%s3 + $0x8] sm:$0xf]
    %v67 = vld [vmem:[%s3 + $0xc] sm:$0xf]
    %v68 = vld [vmem:[%s3 + $0x10] sm:$0xf]
    %v69 = vld [vmem:[%s3 + $0x14] sm:$0xf]
    %v70 = vld [vmem:[%s3 + $0x18] sm:$0xf]
    %v71 = vld [vmem:[%s3 + $0x1c] sm:$0xf]
    %v72 = vld [vmem:[%s3 + $0x20] sm:$0xf]
    %v73 = vld [vmem:[%s3 + $0x24] sm:$0xf]
    %v74 = vld [vmem:[%s3 + $0x28] sm:$0xf]
    %v75 = vld [vmem:[%s3 + $0x2c] sm:$0xf]
    %v76 = vld [vmem:[%s3 + $0x30] sm:$0x3]
    %v85 = vunpack.c.l.b16 %v56
    %v86 = vunpack.c.l.b16 %v57
    %v87 = vunpack.c.l.b16 %v58
    %v88 = vunpack.c.l.b16 %v59
    %v89 = vunpack.c.l.b16 %v60
    %v90 = vunpack.c.l.b16 %v61
    %v91 = vunpack.c.l.b16 %v62
    %v92 = vunpack.c.l.b16 %v63
    %v93 = vpack.c.b16 %v86, %v85
    %v94 = vpack.c.b16 %v88, %v87
    %v95 = vpack.c.b16 %v90, %v89
    %v96 = vpack.c.b16 %v92, %v91
    %v110 = vunpack.c.l.b16 %v64
    %v111 = vunpack.c.l.b16 %v65
    %v112 = vunpack.c.l.b16 %v66
    %v113 = vunpack.c.l.b16 %v67
    %v114 = vunpack.c.l.b16 %v68
    %v115 = vunpack.c.l.b16 %v69
    %v116 = vunpack.c.l.b16 %v70
    %v117 = vunpack.c.l.b16 %v71
    %v118 = vunpack.c.l.b16 %v72
    %v119 = vunpack.c.l.b16 %v73
    %v120 = vunpack.c.l.b16 %v74
    %v121 = vunpack.c.l.b16 %v75
    %v122 = vunpack.c.l.b16 %v76
    %v123 = vpack.c.b16 %v111, %v110
    %v124 = vpack.c.b16 %v113, %v112
    %v125 = vpack.c.b16 %v115, %v114
    %v126 = vpack.c.b16 %v117, %v116
    %v127 = vpack.c.b16 %v119, %v118
    %v128 = vpack.c.b16 %v121, %v120
    %v129 = vpack.c.b16 %v122, %v122
    %vm136 = vcmask 818176
    %v138 = vsel %vm136, %v93, 0
    %v141 = vsel %vm136, %v94, 0
    %v144 = vsel %vm136, %v95, 0
    %v147 = vsel %vm136, %v96, 0
    %vm149 = vcmask 1041408
    %v151 = vsel %vm149, %v129, 0
    %153 = vmatprep.subr.bf16.mxu0 0
    %154 = vmatpush1.bf16.msra.mxu0 0
    %155 = vmatprep.subr.bf16.mxu0 0
    %156 = vmatpush1.bf16.msra.mxu0 %v151
    %157 = vmatprep.subr.bf16.mxu0 0
    %158 = vmatpush1.bf16.msra.mxu0 %v128
    %159 = vmatprep.subr.bf16.mxu0 0
    %160 = vmatpush1.bf16.msra.mxu0 %v127
    %161 = vmatprep.subr.bf16.mxu0 0
    %162 = vmatpush1.bf16.msra.mxu0 %v126
    %163 = vmatprep.subr.bf16.mxu0 0
    %164 = vmatpush1.bf16.msra.mxu0 %v125
    %165 = vmatprep.subr.bf16.mxu0 0
    %166 = vmatpush1.bf16.msra.mxu0 %v124
    %167 = vmatprep.subr.bf16.mxu0 0
    %168 = vmatpush1.bf16.msra.mxu0 %v123
    %169 = vmatprep.subr.bf16.mxu0 0
    %170 = vmatpush2.bf16.msra.mxu0 0
    %171 = vmatprep.subr.bf16.mxu0 0
    %172 = vmatpush2.bf16.msra.mxu0 0
    %173 = vmatprep.subr.bf16.mxu0 0
    %174 = vmatpush2.bf16.msra.mxu0 0
    %175 = vmatprep.subr.bf16.mxu0 0
    %176 = vmatpush2.bf16.msra.mxu0 0
    %177 = vmatprep.subr.bf16.mxu0 0
    %178 = vmatpush2.bf16.msra.mxu0 0
    %179 = vmatprep.subr.bf16.mxu0 0
    %180 = vmatpush2.bf16.msra.mxu0 0
    %181 = vmatprep.subr.bf16.mxu0 0
    %182 = vmatpush2.bf16.msra.mxu0 0
    %183 = vmatprep.subr.bf16.mxu0 0
    %184 = vmatpush2.bf16.msra.mxu0 0
    %185 = vmatprep.mubr.bf16.mxu0 0
    %186 = vmatmul.mubr.bf16.gmra.mxu0 %v138
    %v187 = vpop.f32.mrf.mxu0
    %v188 = vadd.f32 0.0, %v187
    %v189 = vpop.f32.mrf.mxu0
    %v190 = vpop.f32.mrf.mxu0
    %v191 = vadd.f32 0.0, %v190
    %v192 = vpop.f32.mrf.mxu0
    %193 = vmatprep.mubr.bf16.mxu0 0
    %194 = vmatmul.mubr.bf16.gmra.mxu0 %v141
    %v195 = vpop.f32.mrf.mxu0
    %v196 = vadd.f32 0.0, %v195
    %v197 = vpop.f32.mrf.mxu0
    %v198 = vpop.f32.mrf.mxu0
    %v199 = vadd.f32 0.0, %v198
    %v200 = vpop.f32.mrf.mxu0
    %201 = vmatprep.mubr.bf16.mxu0 0
    %202 = vmatmul.mubr.bf16.gmra.mxu0 %v144
    %v203 = vpop.f32.mrf.mxu0
    %v204 = vadd.f32 0.0, %v203
    %v205 = vpop.f32.mrf.mxu0
    %v206 = vpop.f32.mrf.mxu0
    %v207 = vadd.f32 0.0, %v206
    %v208 = vpop.f32.mrf.mxu0
    %209 = vmatprep.mubr.bf16.mxu0 0
    %210 = vmatmul.mubr.bf16.gmra.mxu0 %v147
    %v211 = vpop.f32.mrf.mxu0
    %v212 = vadd.f32 0.0, %v211
    %v213 = vpop.f32.mrf.mxu0
    %v214 = vpop.f32.mrf.mxu0
    %v215 = vadd.f32 0.0, %v214
    %v216 = vpop.f32.mrf.mxu0
    %217 = vdwg.mxu0
    %v226 = vunpack.c.l.b16 %v21
    %v227 = vunpack.c.h.b16 %v21
    %v228 = vunpack.c.l.b16 %v22
    %v229 = vunpack.c.h.b16 %v22
    %v230 = vunpack.c.l.b16 %v23
    %v231 = vunpack.c.h.b16 %v23
    %v232 = vunpack.c.l.b16 %v24
    %v233 = vunpack.c.h.b16 %v24
    %v234 = vunpack.c.l.b16 %v25
    %v235 = vunpack.c.h.b16 %v25
    %v236 = vunpack.c.l.b16 %v26
    %v237 = vunpack.c.h.b16 %v26
    %v238 = vunpack.c.l.b16 %v27
    %v239 = vunpack.c.h.b16 %v27
    %v240 = vunpack.c.l.b16 %v28
    %v241 = vunpack.c.h.b16 %v28
    %v242 = vpack.c.b16 %v228, %v226
    %v243 = vpack.c.b16 %v229, %v227
    %v244 = vpack.c.b16 %v232, %v230
    %v245 = vpack.c.b16 %v233, %v231
    %v246 = vpack.c.b16 %v236, %v234
    %v247 = vpack.c.b16 %v237, %v235
    %v248 = vpack.c.b16 %v240, %v238
    %v249 = vpack.c.b16 %v241, %v239
    %v281 = vunpack.c.l.b16 %v29
    %v282 = vunpack.c.l.b16 %v30
    %v283 = vunpack.c.l.b16 %v31
    %v284 = vunpack.c.l.b16 %v32
    %v285 = vunpack.c.l.b16 %v33
    %v286 = vunpack.c.l.b16 %v34
    %v287 = vunpack.c.l.b16 %v35
    %v288 = vunpack.c.l.b16 %v36
    %v289 = vunpack.c.l.b16 %v37
    %v290 = vunpack.c.l.b16 %v38
    %v291 = vunpack.c.l.b16 %v39
    %v292 = vunpack.c.l.b16 %v40
    %v293 = vunpack.c.l.b16 %v41
    %v294 = vunpack.c.l.b16 %v42
    %v295 = vunpack.c.l.b16 %v43
    %v296 = vunpack.c.l.b16 %v44
    %v297 = vunpack.c.l.b16 %v45
    %v298 = vunpack.c.l.b16 %v46
    %v299 = vunpack.c.l.b16 %v47
    %v300 = vunpack.c.l.b16 %v48
    %v301 = vunpack.c.l.b16 %v49
    %v302 = vunpack.c.l.b16 %v50
    %v303 = vunpack.c.l.b16 %v51
    %v304 = vunpack.c.l.b16 %v52
    %v305 = vunpack.c.l.b16 %v53
    %v306 = vunpack.c.l.b16 %v54
    %v307 = vunpack.c.l.b16 %v55
    %v308 = vpack.c.b16 %v282, %v281
    %v309 = vpack.c.b16 %v284, %v283
    %v310 = vpack.c.b16 %v286, %v285
    %v311 = vpack.c.b16 %v288, %v287
    %v312 = vpack.c.b16 %v290, %v289
    %v313 = vpack.c.b16 %v292, %v291
    %v314 = vpack.c.b16 %v294, %v293
    %v315 = vpack.c.b16 %v296, %v295
    %v316 = vpack.c.b16 %v298, %v297
    %v317 = vpack.c.b16 %v300, %v299
    %v318 = vpack.c.b16 %v302, %v301
    %v319 = vpack.c.b16 %v304, %v303
    %v320 = vpack.c.b16 %v306, %v305
    %v321 = vpack.c.b16 %v307, %v307
    %vm335 = vcmask 719872
    %v337 = vsel %vm335, %v243, 0
    %v340 = vsel %vm335, %v245, 0
    %v343 = vsel %vm335, %v247, 0
    %v346 = vsel %vm335, %v249, 0
    %vm348 = vcmask 1043456
    %v350 = vsel %vm348, %v321, 0
    %352 = vmatprep.subr.bf16.mxu0 0
    %353 = vmatpush1.bf16.msra.mxu0 %v315
    %354 = vmatprep.subr.bf16.mxu0 0
    %355 = vmatpush1.bf16.msra.mxu0 %v314
    %356 = vmatprep.subr.bf16.mxu0 0
    %357 = vmatpush1.bf16.msra.mxu0 %v313
    %358 = vmatprep.subr.bf16.mxu0 0
    %359 = vmatpush1.bf16.msra.mxu0 %v312
    %360 = vmatprep.subr.bf16.mxu0 0
    %361 = vmatpush1.bf16.msra.mxu0 %v311
    %362 = vmatprep.subr.bf16.mxu0 0
    %363 = vmatpush1.bf16.msra.mxu0 %v310
    %364 = vmatprep.subr.bf16.mxu0 0
    %365 = vmatpush1.bf16.msra.mxu0 %v309
    %366 = vmatprep.subr.bf16.mxu0 0
    %367 = vmatpush1.bf16.msra.mxu0 %v308
    %368 = vmatprep.subr.bf16.mxu0 0
    %369 = vmatpush2.bf16.msra.mxu0 0
    %370 = vmatprep.subr.bf16.mxu0 0
    %371 = vmatpush2.bf16.msra.mxu0 0
    %372 = vmatprep.subr.bf16.mxu0 0
    %373 = vmatpush2.bf16.msra.mxu0 %v350
    %374 = vmatprep.subr.bf16.mxu0 0
    %375 = vmatpush2.bf16.msra.mxu0 %v320
    %376 = vmatprep.subr.bf16.mxu0 0
    %377 = vmatpush2.bf16.msra.mxu0 %v319
    %378 = vmatprep.subr.bf16.mxu0 0
    %379 = vmatpush2.bf16.msra.mxu0 %v318
    %380 = vmatprep.subr.bf16.mxu0 0
    %381 = vmatpush2.bf16.msra.mxu0 %v317
    %382 = vmatprep.subr.bf16.mxu0 0
    %383 = vmatpush2.bf16.msra.mxu0 %v316
    %384 = vmatprep.mubr.bf16.mxu0 %v337
    %385 = vmatmul.mubr.bf16.gmra.mxu0 %v242
    %v386 = vpop.f32.mrf.mxu0
    %v387 = vadd.f32 %v188, %v386
    %v388 = vpop.f32.mrf.mxu0
    %v389 = vpop.f32.mrf.mxu0
    %v390 = vadd.f32 %v191, %v389
    %v391 = vpop.f32.mrf.mxu0
    %392 = vmatprep.mubr.bf16.mxu0 %v340
    %393 = vmatmul.mubr.bf16.gmra.mxu0 %v244
    %v394 = vpop.f32.mrf.mxu0
    %v395 = vadd.f32 %v196, %v394
    %v396 = vpop.f32.mrf.mxu0
    %v397 = vpop.f32.mrf.mxu0
    %v398 = vadd.f32 %v199, %v397
    %v399 = vpop.f32.mrf.mxu0
    %400 = vmatprep.mubr.bf16.mxu0 %v343
    %401 = vmatmul.mubr.bf16.gmra.mxu0 %v246
    %v402 = vpop.f32.mrf.mxu0
    %v403 = vadd.f32 %v204, %v402
    %v404 = vpop.f32.mrf.mxu0
    %v405 = vpop.f32.mrf.mxu0
    %v406 = vadd.f32 %v207, %v405
    %v407 = vpop.f32.mrf.mxu0
    %408 = vmatprep.mubr.bf16.mxu0 %v346
    %409 = vmatmul.mubr.bf16.gmra.mxu0 %v248
    %v410 = vpop.f32.mrf.mxu0
    %v411 = vadd.f32 %v212, %v410
    %v412 = vpop.f32.mrf.mxu0
    %v413 = vpop.f32.mrf.mxu0
    %v414 = vadd.f32 %v215, %v413
    %v415 = vpop.f32.mrf.mxu0
    %416 = vdwg.mxu0
    %v417 = vld [vmem:[%s4] sm:$0x1]
    %v419 = vlaneseq
    %v420 = vshrl.u32 %v419, 7
    %v421 = vsub.s32 0, %v420
    %v422 = vrot.slane %v417, %v421
    %v424 = vadd.f32 %v387, %v422
    %v425 = vadd.f32 %v390, %v422
    %v426 = vadd.f32 %v395, %v422
    %v427 = vadd.f32 %v398, %v422
    %v428 = vadd.f32 %v403, %v422
    %v429 = vadd.f32 %v406, %v422
    %v430 = vadd.f32 %v411, %v422
    %v431 = vadd.f32 %v414, %v422
    %v432 = vmax.f32 %v424, 0.0
    %v433 = vmax.f32 %v425, 0.0
    %v434 = vmax.f32 %v426, 0.0
    %v435 = vmax.f32 %v427, 0.0
    %v436 = vmax.f32 %v428, 0.0
    %v437 = vmax.f32 %v429, 0.0
    %v438 = vmax.f32 %v430, 0.0
    %v439 = vmax.f32 %v431, 0.0
    %vm440 = vcmask 326656
    %441 = vst.msk [vmem:[#allocation2] sm:$0xff] %vm440, %v432
    %442 = vst.msk [vmem:[#allocation2 + $0x8] sm:$0xff] %vm440, %v433
    %443 = vst.msk [vmem:[#allocation2 + $0x10] sm:$0xff] %vm440, %v434
    %444 = vst.msk [vmem:[#allocation2 + $0x18] sm:$0xff] %vm440, %v435
    %445 = vst.msk [vmem:[#allocation2 + $0x20] sm:$0xff] %vm440, %v436
    %446 = vst.msk [vmem:[#allocation2 + $0x28] sm:$0xff] %vm440, %v437
    %447 = vst.msk [vmem:[#allocation2 + $0x30] sm:$0xff] %vm440, %v438
    %448 = vst.msk [vmem:[#allocation2 + $0x38] sm:$0xff] %vm440, %v439
    // Predicated region
    $region22: #{x_model_forward.16} parent=1 // pred_check
      _
    $region23: #{x_model_forward.16} parent=1 // pred_check_branch
      %450 = sbr.rel (0) target = $region25
    $region24: #{x_model_forward.16} parent=1 // pred_region
      // Predicated region
      $region26: #{x_model_forward.16} parent=24 // pred_check
        _
      $region27: #{x_model_forward.16} parent=24 // pred_check_branch
        %452 = sbr.rel (0) target = $region29
      $region28: #{x_model_forward.16} parent=24 // pred_region
        // Predicated region
        $region30: #{x_model_forward.16} parent=28 // pred_check
          _
        $region31: #{x_model_forward.16} parent=28 // pred_check_branch
          %454 = sbr.rel (0) target = $region33
        $region32: #{x_model_forward.16} parent=28 // pred_region
          // Predicated region
          $region45: #{x_model_forward.16} parent=32 // pred_check
            _
          $region46: #{x_model_forward.16} parent=32 // pred_check_branch
            %482 = sbr.rel (0) target = $region48
          $region47: #{x_model_forward.16} parent=32 // pred_region
            loop: start=0, step=1, limit=1
            $region49: #{x_model_forward.16} parent=47 // loop_pre_header
              _
            $region50: #{x_model_forward.16} parent=47 // loop_header
              %s484 = sphi 0, %s488
              %p485 = scmp.ge.s32.totalorder %s484, 1
              %s489 = sphi [#allocation2], [#allocation2]
              %s490 = sphi %s5, %s5
            $region51: #{x_model_forward.16} parent=47 // loop_header_branch
              %487 = sbr.rel (%p485) target = $region55
            $region52: #{x_model_forward.16} parent=47 // loop_body
              %v491 = vld [vmem:[%s489] sm:$0xff]
              %492 = vst [vmem:[%s490] sm:$0xff] %v491
              %v493 = vld [vmem:[%s489 + $0x8] sm:$0xff]
              %494 = vst [vmem:[%s490 + $0x8] sm:$0xff] %v493
              %v495 = vld [vmem:[%s489 + $0x10] sm:$0xff]
              %496 = vst [vmem:[%s490 + $0x10] sm:$0xff] %v495
              %v497 = vld [vmem:[%s489 + $0x18] sm:$0xff]
              %498 = vst [vmem:[%s490 + $0x18] sm:$0xff] %v497
              %v499 = vld [vmem:[%s489 + $0x20] sm:$0xff]
              %500 = vst [vmem:[%s490 + $0x20] sm:$0xff] %v499
              %v501 = vld [vmem:[%s489 + $0x28] sm:$0xff]
              %502 = vst [vmem:[%s490 + $0x28] sm:$0xff] %v501
              %v503 = vld [vmem:[%s489 + $0x30] sm:$0xff]
              %504 = vst [vmem:[%s490 + $0x30] sm:$0xff] %v503
            $region53: #{x_model_forward.16} parent=47 // loop_footer
              %s488 = sadd.s32 1, %s484
            $region54: #{x_model_forward.16} parent=47 // loop_footer_branch
              %483 = sbr.rel target = $region50
            $region55: #{x_model_forward.16} parent=47 // loop_exit
              _
          $region48: #{x_model_forward.16} parent=32 // pred_fallthru
            _
          // Predicated region
          $region56: #{x_model_forward.16} parent=32 // pred_check
            _
          $region57: #{x_model_forward.16} parent=32 // pred_check_branch
            %506 = sbr.rel target = $region59
          $region58: #{x_model_forward.16} parent=32 // pred_region
            _
          $region59: #{x_model_forward.16} parent=32 // pred_fallthru
            _
        $region33: #{x_model_forward.16} parent=28 // pred_fallthru
          _
        // Predicated region
        $region34: #{x_model_forward.16} parent=28 // pred_check
          _
        $region35: #{x_model_forward.16} parent=28 // pred_check_branch
          %456 = sbr.rel target = $region37
        $region36: #{x_model_forward.16} parent=28 // pred_region
          %s458 = ssub.s32 256, 1
          loop: start=0, step=1, limit=1
          $region38: #{x_model_forward.16} parent=36 // loop_pre_header
            _
          $region39: #{x_model_forward.16} parent=36 // loop_header
            %s460 = sphi 0, %s464
            %p461 = scmp.ge.s32.totalorder %s460, 1
            %s465 = sphi [#allocation2], [#allocation2]
            %s466 = sphi %s5, %s5
          $region40: #{x_model_forward.16} parent=36 // loop_header_branch
            %463 = sbr.rel (%p461) target = $region44
          $region41: #{x_model_forward.16} parent=36 // loop_body
            %v467 = vld [vmem:[%s465] sm:%s458]
            %468 = vst [vmem:[%s466] sm:%s458] %v467
            %v469 = vld [vmem:[%s465 + $0x8] sm:%s458]
            %470 = vst [vmem:[%s466 + $0x8] sm:%s458] %v469
            %v471 = vld [vmem:[%s465 + $0x10] sm:%s458]
            %472 = vst [vmem:[%s466 + $0x10] sm:%s458] %v471
            %v473 = vld [vmem:[%s465 + $0x18] sm:%s458]
            %474 = vst [vmem:[%s466 + $0x18] sm:%s458] %v473
            %v475 = vld [vmem:[%s465 + $0x20] sm:%s458]
            %476 = vst [vmem:[%s466 + $0x20] sm:%s458] %v475
            %v477 = vld [vmem:[%s465 + $0x28] sm:%s458]
            %478 = vst [vmem:[%s466 + $0x28] sm:%s458] %v477
            %v479 = vld [vmem:[%s465 + $0x30] sm:%s458]
            %480 = vst [vmem:[%s466 + $0x30] sm:%s458] %v479
          $region42: #{x_model_forward.16} parent=36 // loop_footer
            %s464 = sadd.s32 1, %s460
          $region43: #{x_model_forward.16} parent=36 // loop_footer_branch
            %459 = sbr.rel target = $region39
          $region44: #{x_model_forward.16} parent=36 // loop_exit
            _
        $region37: #{x_model_forward.16} parent=28 // pred_fallthru
          _
      $region29: #{x_model_forward.16} parent=24 // pred_fallthru
        _
      %507 = vnop
    $region25: #{x_model_forward.16} parent=1 // pred_fallthru
      _
    // Predicated region
    $region60: #{x_model_forward.16} parent=1 // pred_check
      _
    $region61: #{x_model_forward.16} parent=1 // pred_check_branch
      %509 = sbr.rel (0) target = $region63
    $region62: #{x_model_forward.16} parent=1 // pred_region
      _
    $region63: #{x_model_forward.16} parent=1 // pred_fallthru
      _

// kernel: x_model_forward.19
$region0: #{x_model_forward.19}
  #allocation0 [shape = 'u32[]', space=smem, size = 0x4, offset = 0x4, fixed_abs, tag = 'smem constant byte address 0x4 - core index']
  #allocation1 [shape = 'u32[144,128]{1,0:T(1,128)}', space=vmem, size = 0x12000, scoped, tag = 'internal scratch']
  %s0 = inlined_call_operand.vmem [shape: f32[9,4,128], index: 0, kind: input, shape index: {}]
  %s1 = inlined_call_operand.vmem [shape: f32[4,128], index: 1, kind: output, shape index: {}]
  %s2 = sld [smem:[#allocation0]]
  $region85: #{x_model_forward.19} parent=0
    _
  %s4 = ssub.s32 1, %s2
  %s5 = scalar_select 0, %s4, %s2
  $region1: #{x_model_forward.19} parent=0
    #allocation2 [shape = 'u8[147456]{0}', space=vmem, size = 0x24000, scoped, tag = 'input window, operand 0, single buffered']
    #allocation3 [shape = 'u8[16384]{0}', space=vmem, size = 0x4000, scoped, tag = 'output window, operand 0, single buffered']
    // Predicated region
    $region2: #{x_model_forward.19} parent=1 // pred_check
      _
    $region3: #{x_model_forward.19} parent=1 // pred_check_branch
      %7 = sbr.rel (0) target = $region5
    $region4: #{x_model_forward.19} parent=1 // pred_region
      // Predicated region
      $region6: #{x_model_forward.19} parent=4 // pred_check
        _
      $region7: #{x_model_forward.19} parent=4 // pred_check_branch
        %9 = sbr.rel (0) target = $region9
      $region8: #{x_model_forward.19} parent=4 // pred_region
        // Predicated region
        $region10: #{x_model_forward.19} parent=8 // pred_check
          _
        $region11: #{x_model_forward.19} parent=8 // pred_check_branch
          %11 = sbr.rel target = $region13
        $region12: #{x_model_forward.19} parent=8 // pred_region
          // Predicated region
          $region25: #{x_model_forward.19} parent=12 // pred_check
            _
          $region26: #{x_model_forward.19} parent=12 // pred_check_branch
            %43 = sbr.rel (0) target = $region28
          $region27: #{x_model_forward.19} parent=12 // pred_region
            loop: start=0, step=1, limit=1
            $region29: #{x_model_forward.19} parent=27 // loop_pre_header
              _
            $region30: #{x_model_forward.19} parent=27 // loop_header
              %s45 = sphi 0, %s49
              %p46 = scmp.ge.s32.totalorder %s45, 1
              %s50 = sphi %s0, %s0
              %s51 = sphi [#allocation2], [#allocation2]
            $region31: #{x_model_forward.19} parent=27 // loop_header_branch
              %48 = sbr.rel (%p46) target = $region35
            $region32: #{x_model_forward.19} parent=27 // loop_body
              _
            $region33: #{x_model_forward.19} parent=27 // loop_footer
              %s49 = sadd.s32 1, %s45
            $region34: #{x_model_forward.19} parent=27 // loop_footer_branch
              %44 = sbr.rel target = $region30
            $region35: #{x_model_forward.19} parent=27 // loop_exit
              _
            %s53 = ssub.s32 16, 1
            loop: start=0, step=1, limit=1
            $region36: #{x_model_forward.19} parent=27 // loop_pre_header
              _
            $region37: #{x_model_forward.19} parent=27 // loop_header
              %s55 = sphi 0, %s59
              %p56 = scmp.ge.s32.totalorder %s55, 1
              %s60 = sphi %s0, %s0
              %s61 = sphi [#allocation2], [#allocation2]
            $region38: #{x_model_forward.19} parent=27 // loop_header_branch
              %58 = sbr.rel (%p56) target = $region42
            $region39: #{x_model_forward.19} parent=27 // loop_body
              %v62 = vld [vmem:[%s60] sm:%s53]
              %63 = vst [vmem:[%s61] sm:%s53] %v62
              %v64 = vld [vmem:[%s60 + $0x4] sm:%s53]
              %65 = vst [vmem:[%s61 + $0x20] sm:%s53] %v64
              %v66 = vld [vmem:[%s60 + $0x8] sm:%s53]
              %67 = vst [vmem:[%s61 + $0x40] sm:%s53] %v66
              %v68 = vld [vmem:[%s60 + $0xc] sm:%s53]
              %69 = vst [vmem:[%s61 + $0x60] sm:%s53] %v68
              %v70 = vld [vmem:[%s60 + $0x10] sm:%s53]
              %71 = vst [vmem:[%s61 + $0x80] sm:%s53] %v70
              %v72 = vld [vmem:[%s60 + $0x14] sm:%s53]
              %73 = vst [vmem:[%s61 + $0xa0] sm:%s53] %v72
              %v74 = vld [vmem:[%s60 + $0x18] sm:%s53]
              %75 = vst [vmem:[%s61 + $0xc0] sm:%s53] %v74
              %v76 = vld [vmem:[%s60 + $0x1c] sm:%s53]
              %77 = vst [vmem:[%s61 + $0xe0] sm:%s53] %v76
              %v78 = vld [vmem:[%s60 + $0x20] sm:%s53]
              %79 = vst [vmem:[%s61 + $0x100] sm:%s53] %v78
            $region40: #{x_model_forward.19} parent=27 // loop_footer
              %s59 = sadd.s32 1, %s55
            $region41: #{x_model_forward.19} parent=27 // loop_footer_branch
              %54 = sbr.rel target = $region37
            $region42: #{x_model_forward.19} parent=27 // loop_exit
              _
          $region28: #{x_model_forward.19} parent=12 // pred_fallthru
            _
        $region13: #{x_model_forward.19} parent=8 // pred_fallthru
          _
        // Predicated region
        $region14: #{x_model_forward.19} parent=8 // pred_check
          _
        $region15: #{x_model_forward.19} parent=8 // pred_check_branch
          %13 = sbr.rel (0) target = $region17
        $region16: #{x_model_forward.19} parent=8 // pred_region
          %s15 = ssub.s32 16, 1
          loop: start=0, step=1, limit=1
          $region18: #{x_model_forward.19} parent=16 // loop_pre_header
            _
          $region19: #{x_model_forward.19} parent=16 // loop_header
            %s17 = sphi 0, %s21
            %p18 = scmp.ge.s32.totalorder %s17, 1
            %s22 = sphi %s0, %s0
            %s23 = sphi [#allocation2], [#allocation2]
          $region20: #{x_model_forward.19} parent=16 // loop_header_branch
            %20 = sbr.rel (%p18) target = $region24
          $region21: #{x_model_forward.19} parent=16 // loop_body
            %v24 = vld [vmem:[%s22] sm:%s15]
            %25 = vst [vmem:[%s23] sm:%s15] %v24
            %v26 = vld [vmem:[%s22 + $0x4] sm:%s15]
            %27 = vst [vmem:[%s23 + $0x20] sm:%s15] %v26
            %v28 = vld [vmem:[%s22 + $0x8] sm:%s15]
            %29 = vst [vmem:[%s23 + $0x40] sm:%s15] %v28
            %v30 = vld [vmem:[%s22 + $0xc] sm:%s15]
            %31 = vst [vmem:[%s23 + $0x60] sm:%s15] %v30
            %v32 = vld [vmem:[%s22 + $0x10] sm:%s15]
            %33 = vst [vmem:[%s23 + $0x80] sm:%s15] %v32
            %v34 = vld [vmem:[%s22 + $0x14] sm:%s15]
            %35 = vst [vmem:[%s23 + $0xa0] sm:%s15] %v34
            %v36 = vld [vmem:[%s22 + $0x18] sm:%s15]
            %37 = vst [vmem:[%s23 + $0xc0] sm:%s15] %v36
            %v38 = vld [vmem:[%s22 + $0x1c] sm:%s15]
            %39 = vst [vmem:[%s23 + $0xe0] sm:%s15] %v38
            %v40 = vld [vmem:[%s22 + $0x20] sm:%s15]
            %41 = vst [vmem:[%s23 + $0x100] sm:%s15] %v40
          $region22: #{x_model_forward.19} parent=16 // loop_footer
            %s21 = sadd.s32 1, %s17
          $region23: #{x_model_forward.19} parent=16 // loop_footer_branch
            %16 = sbr.rel target = $region19
          $region24: #{x_model_forward.19} parent=16 // loop_exit
            _
        $region17: #{x_model_forward.19} parent=8 // pred_fallthru
          _
      $region9: #{x_model_forward.19} parent=4 // pred_fallthru
        _
      %80 = vnop
    $region5: #{x_model_forward.19} parent=1 // pred_fallthru
      _
    // Predicated region
    $region43: #{x_model_forward.19} parent=1 // pred_check
      _
    $region44: #{x_model_forward.19} parent=1 // pred_check_branch
      %82 = sbr.rel (0) target = $region46
    $region45: #{x_model_forward.19} parent=1 // pred_region
      _
    $region46: #{x_model_forward.19} parent=1 // pred_fallthru
      _
    %v83 = vld [vmem:[#allocation2] sm:$0xff]
    %v84 = vld [vmem:[#allocation2 + $0x8] sm:$0xff]
    %v85 = vld [vmem:[#allocation2 + $0x10] sm:$0xff]
    %v86 = vld [vmem:[#allocation2 + $0x18] sm:$0xff]
    %s87 = scalar_lea.vmem [#allocation2], 32
    %v88 = vld [vmem:[%s87] sm:$0xff]
    %v89 = vld [vmem:[%s87 + $0x8] sm:$0xff]
    %v90 = vld [vmem:[%s87 + $0x10] sm:$0xff]
    %v91 = vld [vmem:[%s87 + $0x18] sm:$0xff]
    %v92 = vmax.f32 %v83, %v88
    %v93 = vmax.f32 %v84, %v89
    %v94 = vmax.f32 %v85, %v90
    %v95 = vmax.f32 %v86, %v91
    %s96 = scalar_lea.vmem [#allocation2], 64
    %v97 = vld [vmem:[%s96] sm:$0xff]
    %v98 = vld [vmem:[%s96 + $0x8] sm:$0xff]
    %v99 = vld [vmem:[%s96 + $0x10] sm:$0xff]
    %v100 = vld [vmem:[%s96 + $0x18] sm:$0xff]
    %v101 = vmax.f32 %v92, %v97
    %v102 = vmax.f32 %v93, %v98
    %v103 = vmax.f32 %v94, %v99
    %v104 = vmax.f32 %v95, %v100
    %s105 = scalar_lea.vmem [#allocation2], 96
    %v106 = vld [vmem:[%s105] sm:$0xff]
    %v107 = vld [vmem:[%s105 + $0x8] sm:$0xff]
    %v108 = vld [vmem:[%s105 + $0x10] sm:$0xff]
    %v109 = vld [vmem:[%s105 + $0x18] sm:$0xff]
    %v110 = vmax.f32 %v101, %v106
    %v111 = vmax.f32 %v102, %v107
    %v112 = vmax.f32 %v103, %v108
    %v113 = vmax.f32 %v104, %v109
    %s114 = scalar_lea.vmem [#allocation2], 128
    %v115 = vld [vmem:[%s114] sm:$0xff]
    %v116 = vld [vmem:[%s114 + $0x8] sm:$0xff]
    %v117 = vld [vmem:[%s114 + $0x10] sm:$0xff]
    %v118 = vld [vmem:[%s114 + $0x18] sm:$0xff]
    %v119 = vmax.f32 %v110, %v115
    %v120 = vmax.f32 %v111, %v116
    %v121 = vmax.f32 %v112, %v117
    %v122 = vmax.f32 %v113, %v118
    %s123 = scalar_lea.vmem [#allocation2], 160
    %v124 = vld [vmem:[%s123] sm:$0xff]
    %v125 = vld [vmem:[%s123 + $0x8] sm:$0xff]
    %v126 = vld [vmem:[%s123 + $0x10] sm:$0xff]
    %v127 = vld [vmem:[%s123 + $0x18] sm:$0xff]
    %v128 = vmax.f32 %v119, %v124
    %v129 = vmax.f32 %v120, %v125
    %v130 = vmax.f32 %v121, %v126
    %v131 = vmax.f32 %v122, %v127
    %s132 = scalar_lea.vmem [#allocation2], 192
    %v133 = vld [vmem:[%s132] sm:$0xff]
    %v134 = vld [vmem:[%s132 + $0x8] sm:$0xff]
    %v135 = vld [vmem:[%s132 + $0x10] sm:$0xff]
    %v136 = vld [vmem:[%s132 + $0x18] sm:$0xff]
    %v137 = vmax.f32 %v128, %v133
    %v138 = vmax.f32 %v129, %v134
    %v139 = vmax.f32 %v130, %v135
    %v140 = vmax.f32 %v131, %v136
    %s141 = scalar_lea.vmem [#allocation2], 224
    %v142 = vld [vmem:[%s141] sm:$0xff]
    %v143 = vld [vmem:[%s141 + $0x8] sm:$0xff]
    %v144 = vld [vmem:[%s141 + $0x10] sm:$0xff]
    %v145 = vld [vmem:[%s141 + $0x18] sm:$0xff]
    %v146 = vmax.f32 %v137, %v142
    %v147 = vmax.f32 %v138, %v143
    %v148 = vmax.f32 %v139, %v144
    %v149 = vmax.f32 %v140, %v145
    %s150 = scalar_lea.vmem [#allocation2], 256
    %v151 = vld [vmem:[%s150] sm:$0xff]
    %v152 = vld [vmem:[%s150 + $0x8] sm:$0xff]
    %v153 = vld [vmem:[%s150 + $0x10] sm:$0xff]
    %v154 = vld [vmem:[%s150 + $0x18] sm:$0xff]
    %v155 = vmax.f32 %v146, %v151
    %v156 = vmax.f32 %v147, %v152
    %v157 = vmax.f32 %v148, %v153
    %v158 = vmax.f32 %v149, %v154
    %159 = vst [vmem:[#allocation3] sm:$0xff] %v155
    %160 = vst [vmem:[#allocation3 + $0x8] sm:$0xff] %v156
    %161 = vst [vmem:[#allocation3 + $0x10] sm:$0xff] %v157
    %162 = vst [vmem:[#allocation3 + $0x18] sm:$0xff] %v158
    // Predicated region
    $region47: #{x_model_forward.19} parent=1 // pred_check
      _
    $region48: #{x_model_forward.19} parent=1 // pred_check_branch
      %164 = sbr.rel (0) target = $region50
    $region49: #{x_model_forward.19} parent=1 // pred_region
      // Predicated region
      $region51: #{x_model_forward.19} parent=49 // pred_check
        _
      $region52: #{x_model_forward.19} parent=49 // pred_check_branch
        %166 = sbr.rel (0) target = $region54
      $region53: #{x_model_forward.19} parent=49 // pred_region
        // Predicated region
        $region55: #{x_model_forward.19} parent=53 // pred_check
          _
        $region56: #{x_model_forward.19} parent=53 // pred_check_branch
          %168 = sbr.rel target = $region58
        $region57: #{x_model_forward.19} parent=53 // pred_region
          // Predicated region
          $region70: #{x_model_forward.19} parent=57 // pred_check
            _
          $region71: #{x_model_forward.19} parent=57 // pred_check_branch
            %184 = sbr.rel (0) target = $region73
          $region72: #{x_model_forward.19} parent=57 // pred_region
            %s186 = ssub.s32 16, 1
            loop: start=0, step=1, limit=1
            $region74: #{x_model_forward.19} parent=72 // loop_pre_header
              _
            $region75: #{x_model_forward.19} parent=72 // loop_header
              %s188 = sphi 0, %s192
              %p189 = scmp.ge.s32.totalorder %s188, 1
              %s193 = sphi [#allocation3], [#allocation3]
              %s194 = sphi %s1, %s1
            $region76: #{x_model_forward.19} parent=72 // loop_header_branch
              %191 = sbr.rel (%p189) target = $region80
            $region77: #{x_model_forward.19} parent=72 // loop_body
              %v195 = vld [vmem:[%s193] sm:%s186]
              %196 = vst [vmem:[%s194] sm:%s186] %v195
            $region78: #{x_model_forward.19} parent=72 // loop_footer
              %s192 = sadd.s32 1, %s188
            $region79: #{x_model_forward.19} parent=72 // loop_footer_branch
              %187 = sbr.rel target = $region75
            $region80: #{x_model_forward.19} parent=72 // loop_exit
              _
          $region73: #{x_model_forward.19} parent=57 // pred_fallthru
            _
        $region58: #{x_model_forward.19} parent=53 // pred_fallthru
          _
        // Predicated region
        $region59: #{x_model_forward.19} parent=53 // pred_check
          _
        $region60: #{x_model_forward.19} parent=53 // pred_check_branch
          %170 = sbr.rel (0) target = $region62
        $region61: #{x_model_forward.19} parent=53 // pred_region
          %s172 = ssub.s32 16, 1
          loop: start=0, step=1, limit=1
          $region63: #{x_model_forward.19} parent=61 // loop_pre_header
            _
          $region64: #{x_model_forward.19} parent=61 // loop_header
            %s174 = sphi 0, %s178
            %p175 = scmp.ge.s32.totalorder %s174, 1
            %s179 = sphi [#allocation3], [#allocation3]
            %s180 = sphi %s1, %s1
          $region65: #{x_model_forward.19} parent=61 // loop_header_branch
            %177 = sbr.rel (%p175) target = $region69
          $region66: #{x_model_forward.19} parent=61 // loop_body
            %v181 = vld [vmem:[%s179] sm:%s172]
            %182 = vst [vmem:[%s180] sm:%s172] %v181
          $region67: #{x_model_forward.19} parent=61 // loop_footer
            %s178 = sadd.s32 1, %s174
          $region68: #{x_model_forward.19} parent=61 // loop_footer_branch
            %173 = sbr.rel target = $region64
          $region69: #{x_model_forward.19} parent=61 // loop_exit
            _
        $region62: #{x_model_forward.19} parent=53 // pred_fallthru
          _
      $region54: #{x_model_forward.19} parent=49 // pred_fallthru
        _
      %197 = vnop
    $region50: #{x_model_forward.19} parent=1 // pred_fallthru
      _
    // Predicated region
    $region81: #{x_model_forward.19} parent=1 // pred_check
      _
    $region82: #{x_model_forward.19} parent=1 // pred_check_branch
      %199 = sbr.rel (0) target = $region84
    $region83: #{x_model_forward.19} parent=1 // pred_region
      _
    $region84: #{x_model_forward.19} parent=1 // pred_fallthru
      _

// kernel: x_model_forward.20
$region0: #{x_model_forward.20}
  #allocation0 [shape = 'u32[]', space=smem, size = 0x4, offset = 0x4, fixed_abs, tag = 'smem constant byte address 0x4 - core index']
  #allocation1 [shape = 'u32[144,128]{1,0:T(1,128)}', space=vmem, size = 0x12000, scoped, tag = 'internal scratch']
  %s0 = inlined_call_operand.vmem [shape: f32[8,64], index: 0, kind: input, shape index: {}]
  %s1 = inlined_call_operand.vmem [shape: f32[9,8,64], index: 1, kind: input, shape index: {}]
  %s2 = inlined_call_operand.vmem [shape: f32[64,52], index: 2, kind: input, shape index: {}]
  %s3 = inlined_call_operand.vmem [shape: f32[64,52], index: 3, kind: input, shape index: {}]
  %s4 = inlined_call_operand.vmem [shape: f32[1,52], index: 4, kind: input, shape index: {}]
  %s5 = inlined_call_operand.vmem [shape: f32[8,52], index: 5, kind: output, shape index: {}]
  %s6 = sld [smem:[#allocation0]]
  $region102: #{x_model_forward.20} parent=0
    _
  %s8 = ssub.s32 1, %s6
  %s9 = scalar_select 0, %s8, %s6
  $region1: #{x_model_forward.20} parent=0
    #allocation2 [shape = 'u8[147456]{0}', space=vmem, size = 0x24000, scoped, tag = 'input window, operand 1, single buffered']
    #allocation3 [shape = 'u8[16384]{0}', space=vmem, size = 0x4000, scoped, tag = 'output window, operand 0, single buffered']
    // Predicated region
    $region2: #{x_model_forward.20} parent=1 // pred_check
      _
    $region3: #{x_model_forward.20} parent=1 // pred_check_branch
      %11 = sbr.rel (0) target = $region5
    $region4: #{x_model_forward.20} parent=1 // pred_region
      _
    $region5: #{x_model_forward.20} parent=1 // pred_fallthru
      _
    // Predicated region
    $region6: #{x_model_forward.20} parent=1 // pred_check
      _
    $region7: #{x_model_forward.20} parent=1 // pred_check_branch
      %13 = sbr.rel (0) target = $region9
    $region8: #{x_model_forward.20} parent=1 // pred_region
      // Predicated region
      $region10: #{x_model_forward.20} parent=8 // pred_check
        _
      $region11: #{x_model_forward.20} parent=8 // pred_check_branch
        %15 = sbr.rel (0) target = $region13
      $region12: #{x_model_forward.20} parent=8 // pred_region
        // Predicated region
        $region14: #{x_model_forward.20} parent=12 // pred_check
          _
        $region15: #{x_model_forward.20} parent=12 // pred_check_branch
          %17 = sbr.rel (0) target = $region17
        $region16: #{x_model_forward.20} parent=12 // pred_region
          // Predicated region
          $region29: #{x_model_forward.20} parent=16 // pred_check
            _
          $region30: #{x_model_forward.20} parent=16 // pred_check_branch
            %49 = sbr.rel (0) target = $region32
          $region31: #{x_model_forward.20} parent=16 // pred_region
            loop: start=0, step=1, limit=1
            $region33: #{x_model_forward.20} parent=31 // loop_pre_header
              _
            $region34: #{x_model_forward.20} parent=31 // loop_header
              %s51 = sphi 0, %s55
              %p52 = scmp.ge.s32.totalorder %s51, 1
              %s56 = sphi %s1, %s1
              %s57 = sphi [#allocation2], [#allocation2]
            $region35: #{x_model_forward.20} parent=31 // loop_header_branch
              %54 = sbr.rel (%p52) target = $region39
            $region36: #{x_model_forward.20} parent=31 // loop_body
              %v58 = vld [vmem:[%s56] sm:$0xff]
              %59 = vst [vmem:[%s57] sm:$0xff] %v58
              %v60 = vld [vmem:[%s56 + $0x8] sm:$0xff]
              %61 = vst [vmem:[%s57 + $0x20] sm:$0xff] %v60
              %v62 = vld [vmem:[%s56 + $0x10] sm:$0xff]
              %63 = vst [vmem:[%s57 + $0x40] sm:$0xff] %v62
              %v64 = vld [vmem:[%s56 + $0x18] sm:$0xff]
              %65 = vst [vmem:[%s57 + $0x60] sm:$0xff] %v64
              %v66 = vld [vmem:[%s56 + $0x20] sm:$0xff]
              %67 = vst [vmem:[%s57 + $0x80] sm:$0xff] %v66
              %v68 = vld [vmem:[%s56 + $0x28] sm:$0xff]
              %69 = vst [vmem:[%s57 + $0xa0] sm:$0xff] %v68
              %v70 = vld [vmem:[%s56 + $0x30] sm:$0xff]
              %71 = vst [vmem:[%s57 + $0xc0] sm:$0xff] %v70
              %v72 = vld [vmem:[%s56 + $0x38] sm:$0xff]
              %73 = vst [vmem:[%s57 + $0xe0] sm:$0xff] %v72
              %v74 = vld [vmem:[%s56 + $0x40] sm:$0xff]
              %75 = vst [vmem:[%s57 + $0x100] sm:$0xff] %v74
            $region37: #{x_model_forward.20} parent=31 // loop_footer
              %s55 = sadd.s32 1, %s51
            $region38: #{x_model_forward.20} parent=31 // loop_footer_branch
              %50 = sbr.rel target = $region34
            $region39: #{x_model_forward.20} parent=31 // loop_exit
              _
          $region32: #{x_model_forward.20} parent=16 // pred_fallthru
            _
          // Predicated region
          $region40: #{x_model_forward.20} parent=16 // pred_check
            _
          $region41: #{x_model_forward.20} parent=16 // pred_check_branch
            %77 = sbr.rel target = $region43
          $region42: #{x_model_forward.20} parent=16 // pred_region
            _
          $region43: #{x_model_forward.20} parent=16 // pred_fallthru
            _
        $region17: #{x_model_forward.20} parent=12 // pred_fallthru
          _
        // Predicated region
        $region18: #{x_model_forward.20} parent=12 // pred_check
          _
        $region19: #{x_model_forward.20} parent=12 // pred_check_branch
          %19 = sbr.rel target = $region21
        $region20: #{x_model_forward.20} parent=12 // pred_region
          %s21 = ssub.s32 256, 1
          loop: start=0, step=1, limit=1
          $region22: #{x_model_forward.20} parent=20 // loop_pre_header
            _
          $region23: #{x_model_forward.20} parent=20 // loop_header
            %s23 = sphi 0, %s27
            %p24 = scmp.ge.s32.totalorder %s23, 1
            %s28 = sphi %s1, %s1
            %s29 = sphi [#allocation2], [#allocation2]
          $region24: #{x_model_forward.20} parent=20 // loop_header_branch
            %26 = sbr.rel (%p24) target = $region28
          $region25: #{x_model_forward.20} parent=20 // loop_body
            %v30 = vld [vmem:[%s28] sm:%s21]
            %31 = vst [vmem:[%s29] sm:%s21] %v30
            %v32 = vld [vmem:[%s28 + $0x8] sm:%s21]
            %33 = vst [vmem:[%s29 + $0x20] sm:%s21] %v32
            %v34 = vld [vmem:[%s28 + $0x10] sm:%s21]
            %35 = vst [vmem:[%s29 + $0x40] sm:%s21] %v34
            %v36 = vld [vmem:[%s28 + $0x18] sm:%s21]
            %37 = vst [vmem:[%s29 + $0x60] sm:%s21] %v36
            %v38 = vld [vmem:[%s28 + $0x20] sm:%s21]
            %39 = vst [vmem:[%s29 + $0x80] sm:%s21] %v38
            %v40 = vld [vmem:[%s28 + $0x28] sm:%s21]
            %41 = vst [vmem:[%s29 + $0xa0] sm:%s21] %v40
            %v42 = vld [vmem:[%s28 + $0x30] sm:%s21]
            %43 = vst [vmem:[%s29 + $0xc0] sm:%s21] %v42
            %v44 = vld [vmem:[%s28 + $0x38] sm:%s21]
            %45 = vst [vmem:[%s29 + $0xe0] sm:%s21] %v44
            %v46 = vld [vmem:[%s28 + $0x40] sm:%s21]
            %47 = vst [vmem:[%s29 + $0x100] sm:%s21] %v46
          $region26: #{x_model_forward.20} parent=20 // loop_footer
            %s27 = sadd.s32 1, %s23
          $region27: #{x_model_forward.20} parent=20 // loop_footer_branch
            %22 = sbr.rel target = $region23
          $region28: #{x_model_forward.20} parent=20 // loop_exit
            _
        $region21: #{x_model_forward.20} parent=12 // pred_fallthru
          _
      $region13: #{x_model_forward.20} parent=8 // pred_fallthru
        _
      %78 = vnop
    $region9: #{x_model_forward.20} parent=1 // pred_fallthru
      _
    // Predicated region
    $region44: #{x_model_forward.20} parent=1 // pred_check
      _
    $region45: #{x_model_forward.20} parent=1 // pred_check_branch
      %80 = sbr.rel (0) target = $region47
    $region46: #{x_model_forward.20} parent=1 // pred_region
      _
    $region47: #{x_model_forward.20} parent=1 // pred_fallthru
      _
    // Predicated region
    $region48: #{x_model_forward.20} parent=1 // pred_check
      _
    $region49: #{x_model_forward.20} parent=1 // pred_check_branch
      %82 = sbr.rel (0) target = $region51
    $region50: #{x_model_forward.20} parent=1 // pred_region
      _
    $region51: #{x_model_forward.20} parent=1 // pred_fallthru
      _
    // Predicated region
    $region52: #{x_model_forward.20} parent=1 // pred_check
      _
    $region53: #{x_model_forward.20} parent=1 // pred_check_branch
      %84 = sbr.rel (0) target = $region55
    $region54: #{x_model_forward.20} parent=1 // pred_region
      _
    $region55: #{x_model_forward.20} parent=1 // pred_fallthru
      _
    // Predicated region
    $region56: #{x_model_forward.20} parent=1 // pred_check
      _
    $region57: #{x_model_forward.20} parent=1 // pred_check_branch
      %86 = sbr.rel (0) target = $region59
    $region58: #{x_model_forward.20} parent=1 // pred_region
      _
    $region59: #{x_model_forward.20} parent=1 // pred_fallthru
      _
    %v87 = vld [vmem:[#allocation2] sm:$0xff]
    %v88 = vld [vmem:[#allocation2 + $0x8] sm:$0xff]
    %v89 = vld [vmem:[#allocation2 + $0x10] sm:$0xff]
    %v90 = vld [vmem:[#allocation2 + $0x18] sm:$0xff]
    %s91 = scalar_lea.vmem [#allocation2], 32
    %v92 = vld [vmem:[%s91] sm:$0xff]
    %v93 = vld [vmem:[%s91 + $0x8] sm:$0xff]
    %v94 = vld [vmem:[%s91 + $0x10] sm:$0xff]
    %v95 = vld [vmem:[%s91 + $0x18] sm:$0xff]
    %v96 = vmax.f32 %v87, %v92
    %v97 = vmax.f32 %v88, %v93
    %v98 = vmax.f32 %v89, %v94
    %v99 = vmax.f32 %v90, %v95
    %s100 = scalar_lea.vmem [#allocation2], 64
    %v101 = vld [vmem:[%s100] sm:$0xff]
    %v102 = vld [vmem:[%s100 + $0x8] sm:$0xff]
    %v103 = vld [vmem:[%s100 + $0x10] sm:$0xff]
    %v104 = vld [vmem:[%s100 + $0x18] sm:$0xff]
    %v105 = vmax.f32 %v96, %v101
    %v106 = vmax.f32 %v97, %v102
    %v107 = vmax.f32 %v98, %v103
    %v108 = vmax.f32 %v99, %v104
    %s109 = scalar_lea.vmem [#allocation2], 96
    %v110 = vld [vmem:[%s109] sm:$0xff]
    %v111 = vld [vmem:[%s109 + $0x8] sm:$0xff]
    %v112 = vld [vmem:[%s109 + $0x10] sm:$0xff]
    %v113 = vld [vmem:[%s109 + $0x18] sm:$0xff]
    %v114 = vmax.f32 %v105, %v110
    %v115 = vmax.f32 %v106, %v111
    %v116 = vmax.f32 %v107, %v112
    %v117 = vmax.f32 %v108, %v113
    %s118 = scalar_lea.vmem [#allocation2], 128
    %v119 = vld [vmem:[%s118] sm:$0xff]
    %v120 = vld [vmem:[%s118 + $0x8] sm:$0xff]
    %v121 = vld [vmem:[%s118 + $0x10] sm:$0xff]
    %v122 = vld [vmem:[%s118 + $0x18] sm:$0xff]
    %v123 = vmax.f32 %v114, %v119
    %v124 = vmax.f32 %v115, %v120
    %v125 = vmax.f32 %v116, %v121
    %v126 = vmax.f32 %v117, %v122
    %s127 = scalar_lea.vmem [#allocation2], 160
    %v128 = vld [vmem:[%s127] sm:$0xff]
    %v129 = vld [vmem:[%s127 + $0x8] sm:$0xff]
    %v130 = vld [vmem:[%s127 + $0x10] sm:$0xff]
    %v131 = vld [vmem:[%s127 + $0x18] sm:$0xff]
    %v132 = vmax.f32 %v123, %v128
    %v133 = vmax.f32 %v124, %v129
    %v134 = vmax.f32 %v125, %v130
    %v135 = vmax.f32 %v126, %v131
    %s136 = scalar_lea.vmem [#allocation2], 192
    %v137 = vld [vmem:[%s136] sm:$0xff]
    %v138 = vld [vmem:[%s136 + $0x8] sm:$0xff]
    %v139 = vld [vmem:[%s136 + $0x10] sm:$0xff]
    %v140 = vld [vmem:[%s136 + $0x18] sm:$0xff]
    %v141 = vmax.f32 %v132, %v137
    %v142 = vmax.f32 %v133, %v138
    %v143 = vmax.f32 %v134, %v139
    %v144 = vmax.f32 %v135, %v140
    %s145 = scalar_lea.vmem [#allocation2], 224
    %v146 = vld [vmem:[%s145] sm:$0xff]
    %v147 = vld [vmem:[%s145 + $0x8] sm:$0xff]
    %v148 = vld [vmem:[%s145 + $0x10] sm:$0xff]
    %v149 = vld [vmem:[%s145 + $0x18] sm:$0xff]
    %v150 = vmax.f32 %v141, %v146
    %v151 = vmax.f32 %v142, %v147
    %v152 = vmax.f32 %v143, %v148
    %v153 = vmax.f32 %v144, %v149
    %s154 = scalar_lea.vmem [#allocation2], 256
    %v155 = vld [vmem:[%s154] sm:$0xff]
    %v156 = vld [vmem:[%s154 + $0x8] sm:$0xff]
    %v157 = vld [vmem:[%s154 + $0x10] sm:$0xff]
    %v158 = vld [vmem:[%s154 + $0x18] sm:$0xff]
    %v159 = vmax.f32 %v150, %v155
    %v160 = vmax.f32 %v151, %v156
    %v161 = vmax.f32 %v152, %v157
    %v162 = vmax.f32 %v153, %v158
    %v163 = vld [vmem:[%s0] sm:$0xff]
    %v164 = vld [vmem:[%s0 + $0x8] sm:$0xff]
    %v165 = vld [vmem:[%s0 + $0x10] sm:$0xff]
    %v166 = vld [vmem:[%s0 + $0x18] sm:$0xff]
    %v167 = vld [vmem:[%s2] sm:$0xff]
    %v168 = vld [vmem:[%s2 + $0x8] sm:$0xff]
    %v169 = vld [vmem:[%s2 + $0x10] sm:$0xff]
    %v170 = vld [vmem:[%s2 + $0x18] sm:$0xff]
    %v171 = vld [vmem:[%s2 + $0x20] sm:$0xff]
    %v172 = vld [vmem:[%s2 + $0x28] sm:$0xff]
    %v173 = vld [vmem:[%s2 + $0x30] sm:$0xff]
    %v174 = vld [vmem:[%s2 + $0x38] sm:$0xff]
    %v175 = vld [vmem:[%s3] sm:$0xff]
    %v176 = vld [vmem:[%s3 + $0x8] sm:$0xff]
    %v177 = vld [vmem:[%s3 + $0x10] sm:$0xff]
    %v178 = vld [vmem:[%s3 + $0x18] sm:$0xff]
    %v179 = vld [vmem:[%s3 + $0x20] sm:$0xff]
    %v180 = vld [vmem:[%s3 + $0x28] sm:$0xff]
    %v181 = vld [vmem:[%s3 + $0x30] sm:$0xff]
    %v182 = vld [vmem:[%s3 + $0x38] sm:$0xff]
    %vm183 = vcmask 523264
    %v185 = vsel %vm183, %v159, 0
    %v188 = vsel %vm183, %v160, 0
    %v191 = vsel %vm183, %v161, 0
    %v194 = vsel %vm183, %v162, 0
    %196 = vmatprep.subr.mxu0 0.0
    %197 = vmatpush1.msra.mxu0 0.0
    %198 = vmatprep.subr.mxu0 0.0
    %199 = vmatpush1.msra.mxu0 0.0
    %200 = vmatprep.subr.mxu0 0.0
    %201 = vmatpush1.msra.mxu0 0.0
    %202 = vmatprep.subr.mxu0 0.0
    %203 = vmatpush1.msra.mxu0 0.0
    %204 = vmatprep.subr.mxu0 0.0
    %205 = vmatpush1.msra.mxu0 0.0
    %206 = vmatprep.subr.mxu0 0.0
    %207 = vmatpush1.msra.mxu0 0.0
    %208 = vmatprep.subr.mxu0 0.0
    %209 = vmatpush1.msra.mxu0 0.0
    %210 = vmatprep.subr.mxu0 0.0
    %211 = vmatpush1.msra.mxu0 0.0
    %212 = vmatprep.subr.mxu0 0.0
    %213 = vmatpush1.msra.mxu0 %v182
    %214 = vmatprep.subr.mxu0 0.0
    %215 = vmatpush1.msra.mxu0 %v181
    %216 = vmatprep.subr.mxu0 0.0
    %217 = vmatpush1.msra.mxu0 %v180
    %218 = vmatprep.subr.mxu0 0.0
    %219 = vmatpush1.msra.mxu0 %v179
    %220 = vmatprep.subr.mxu0 0.0
    %221 = vmatpush1.msra.mxu0 %v178
    %222 = vmatprep.subr.mxu0 0.0
    %223 = vmatpush1.msra.mxu0 %v177
    %224 = vmatprep.subr.mxu0 0.0
    %225 = vmatpush1.msra.mxu0 %v176
    %226 = vmatprep.subr.mxu0 0.0
    %227 = vmatpush1.msra.mxu0 %v175
    %228 = vmatprep.subr.mxu0 0.0
    %229 = vmatpush2.msra.mxu0 0.0
    %230 = vmatprep.subr.mxu0 0.0
    %231 = vmatpush2.msra.mxu0 0.0
    %232 = vmatprep.subr.mxu0 0.0
    %233 = vmatpush2.msra.mxu0 0.0
    %234 = vmatprep.subr.mxu0 0.0
    %235 = vmatpush2.msra.mxu0 0.0
    %236 = vmatprep.subr.mxu0 0.0
    %237 = vmatpush2.msra.mxu0 0.0
    %238 = vmatprep.subr.mxu0 0.0
    %239 = vmatpush2.msra.mxu0 0.0
    %240 = vmatprep.subr.mxu0 0.0
    %241 = vmatpush2.msra.mxu0 0.0
    %242 = vmatprep.subr.mxu0 0.0
    %243 = vmatpush2.msra.mxu0 0.0
    %244 = vmatprep.subr.mxu0 0.0
    %245 = vmatpush2.msra.mxu0 0.0
    %246 = vmatprep.subr.mxu0 0.0
    %247 = vmatpush2.msra.mxu0 0.0
    %248 = vmatprep.subr.mxu0 0.0
    %249 = vmatpush2.msra.mxu0 0.0
    %250 = vmatprep.subr.mxu0 0.0
    %251 = vmatpush2.msra.mxu0 0.0
    %252 = vmatprep.subr.mxu0 0.0
    %253 = vmatpush2.msra.mxu0 0.0
    %254 = vmatprep.subr.mxu0 0.0
    %255 = vmatpush2.msra.mxu0 0.0
    %256 = vmatprep.subr.mxu0 0.0
    %257 = vmatpush2.msra.mxu0 0.0
    %258 = vmatprep.subr.mxu0 0.0
    %259 = vmatpush2.msra.mxu0 0.0
    %260 = vmatprep.mubr.f32.mxu0 0.0
    %261 = vmatmul.mubr.f32.gmra.mxu0 %v185
    %v262 = vpop.f32.mrf.mxu0
    %v263 = vadd.f32 0.0, %v262
    %v264 = vpop.f32.mrf.mxu0
    %265 = vmatprep.mubr.f32.mxu0 0.0
    %266 = vmatmul.mubr.f32.gmra.mxu0 %v188
    %v267 = vpop.f32.mrf.mxu0
    %v268 = vadd.f32 0.0, %v267
    %v269 = vpop.f32.mrf.mxu0
    %270 = vmatprep.mubr.f32.mxu0 0.0
    %271 = vmatmul.mubr.f32.gmra.mxu0 %v191
    %v272 = vpop.f32.mrf.mxu0
    %v273 = vadd.f32 0.0, %v272
    %v274 = vpop.f32.mrf.mxu0
    %275 = vmatprep.mubr.f32.mxu0 0.0
    %276 = vmatmul.mubr.f32.gmra.mxu0 %v194
    %v277 = vpop.f32.mrf.mxu0
    %v278 = vadd.f32 0.0, %v277
    %v279 = vpop.f32.mrf.mxu0
    %280 = vdwg.mxu0
    %v282 = vsel %vm183, %v163, 0
    %v285 = vsel %vm183, %v164, 0
    %v288 = vsel %vm183, %v165, 0
    %v291 = vsel %vm183, %v166, 0
    %293 = vmatprep.subr.mxu0 0.0
    %294 = vmatpush1.msra.mxu0 0.0
    %295 = vmatprep.subr.mxu0 0.0
    %296 = vmatpush1.msra.mxu0 0.0
    %297 = vmatprep.subr.mxu0 0.0
    %298 = vmatpush1.msra.mxu0 0.0
    %299 = vmatprep.subr.mxu0 0.0
    %300 = vmatpush1.msra.mxu0 0.0
    %301 = vmatprep.subr.mxu0 0.0
    %302 = vmatpush1.msra.mxu0 0.0
    %303 = vmatprep.subr.mxu0 0.0
    %304 = vmatpush1.msra.mxu0 0.0
    %305 = vmatprep.subr.mxu0 0.0
    %306 = vmatpush1.msra.mxu0 0.0
    %307 = vmatprep.subr.mxu0 0.0
    %308 = vmatpush1.msra.mxu0 0.0
    %309 = vmatprep.subr.mxu0 0.0
    %310 = vmatpush1.msra.mxu0 %v174
    %311 = vmatprep.subr.mxu0 0.0
    %312 = vmatpush1.msra.mxu0 %v173
    %313 = vmatprep.subr.mxu0 0.0
    %314 = vmatpush1.msra.mxu0 %v172
    %315 = vmatprep.subr.mxu0 0.0
    %316 = vmatpush1.msra.mxu0 %v171
    %317 = vmatprep.subr.mxu0 0.0
    %318 = vmatpush1.msra.mxu0 %v170
    %319 = vmatprep.subr.mxu0 0.0
    %320 = vmatpush1.msra.mxu0 %v169
    %321 = vmatprep.subr.mxu0 0.0
    %322 = vmatpush1.msra.mxu0 %v168
    %323 = vmatprep.subr.mxu0 0.0
    %324 = vmatpush1.msra.mxu0 %v167
    %325 = vmatprep.subr.mxu0 0.0
    %326 = vmatpush2.msra.mxu0 0.0
    %327 = vmatprep.subr.mxu0 0.0
    %328 = vmatpush2.msra.mxu0 0.0
    %329 = vmatprep.subr.mxu0 0.0
    %330 = vmatpush2.msra.mxu0 0.0
    %331 = vmatprep.subr.mxu0 0.0
    %332 = vmatpush2.msra.mxu0 0.0
    %333 = vmatprep.subr.mxu0 0.0
    %334 = vmatpush2.msra.mxu0 0.0
    %335 = vmatprep.subr.mxu0 0.0
    %336 = vmatpush2.msra.mxu0 0.0
    %337 = vmatprep.subr.mxu0 0.0
    %338 = vmatpush2.msra.mxu0 0.0
    %339 = vmatprep.subr.mxu0 0.0
    %340 = vmatpush2.msra.mxu0 0.0
    %341 = vmatprep.subr.mxu0 0.0
    %342 = vmatpush2.msra.mxu0 0.0
    %343 = vmatprep.subr.mxu0 0.0
    %344 = vmatpush2.msra.mxu0 0.0
    %345 = vmatprep.subr.mxu0 0.0
    %346 = vmatpush2.msra.mxu0 0.0
    %347 = vmatprep.subr.mxu0 0.0
    %348 = vmatpush2.msra.mxu0 0.0
    %349 = vmatprep.subr.mxu0 0.0
    %350 = vmatpush2.msra.mxu0 0.0
    %351 = vmatprep.subr.mxu0 0.0
    %352 = vmatpush2.msra.mxu0 0.0
    %353 = vmatprep.subr.mxu0 0.0
    %354 = vmatpush2.msra.mxu0 0.0
    %355 = vmatprep.subr.mxu0 0.0
    %356 = vmatpush2.msra.mxu0 0.0
    %357 = vmatprep.mubr.f32.mxu0 0.0
    %358 = vmatmul.mubr.f32.gmra.mxu0 %v282
    %v359 = vpop.f32.mrf.mxu0
    %v360 = vadd.f32 %v263, %v359
    %v361 = vpop.f32.mrf.mxu0
    %362 = vmatprep.mubr.f32.mxu0 0.0
    %363 = vmatmul.mubr.f32.gmra.mxu0 %v285
    %v364 = vpop.f32.mrf.mxu0
    %v365 = vadd.f32 %v268, %v364
    %v366 = vpop.f32.mrf.mxu0
    %367 = vmatprep.mubr.f32.mxu0 0.0
    %368 = vmatmul.mubr.f32.gmra.mxu0 %v288
    %v369 = vpop.f32.mrf.mxu0
    %v370 = vadd.f32 %v273, %v369
    %v371 = vpop.f32.mrf.mxu0
    %372 = vmatprep.mubr.f32.mxu0 0.0
    %373 = vmatmul.mubr.f32.gmra.mxu0 %v291
    %v374 = vpop.f32.mrf.mxu0
    %v375 = vadd.f32 %v278, %v374
    %v376 = vpop.f32.mrf.mxu0
    %377 = vdwg.mxu0
    %v378 = vld [vmem:[%s4] sm:$0x1]
    %v380 = vlaneseq
    %v381 = vshrl.u32 %v380, 7
    %v382 = vsub.s32 0, %v381
    %v383 = vrot.slane %v378, %v382
    %v385 = vadd.f32 %v360, %v383
    %v386 = vadd.f32 %v365, %v383
    %v387 = vadd.f32 %v370, %v383
    %v388 = vadd.f32 %v375, %v383
    %v389 = vmax.f32 %v385, 0.0
    %v390 = vmax.f32 %v386, 0.0
    %v391 = vmax.f32 %v387, 0.0
    %v392 = vmax.f32 %v388, 0.0
    %vm393 = vcmask 424960
    %394 = vst.msk [vmem:[#allocation3] sm:$0xff] %vm393, %v389
    %395 = vst.msk [vmem:[#allocation3 + $0x8] sm:$0xff] %vm393, %v390
    %396 = vst.msk [vmem:[#allocation3 + $0x10] sm:$0xff] %vm393, %v391
    %397 = vst.msk [vmem:[#allocation3 + $0x18] sm:$0xff] %vm393, %v392
    // Predicated region
    $region60: #{x_model_forward.20} parent=1 // pred_check
      _
    $region61: #{x_model_forward.20} parent=1 // pred_check_branch
      %399 = sbr.rel (0) target = $region63
    $region62: #{x_model_forward.20} parent=1 // pred_region
      // Predicated region
      $region64: #{x_model_forward.20} parent=62 // pred_check
        _
      $region65: #{x_model_forward.20} parent=62 // pred_check_branch
        %401 = sbr.rel (0) target = $region67
      $region66: #{x_model_forward.20} parent=62 // pred_region
        // Predicated region
        $region68: #{x_model_forward.20} parent=66 // pred_check
          _
        $region69: #{x_model_forward.20} parent=66 // pred_check_branch
          %403 = sbr.rel (0) target = $region71
        $region70: #{x_model_forward.20} parent=66 // pred_region
          // Predicated region
          $region83: #{x_model_forward.20} parent=70 // pred_check
            _
          $region84: #{x_model_forward.20} parent=70 // pred_check_branch
            %419 = sbr.rel (0) target = $region86
          $region85: #{x_model_forward.20} parent=70 // pred_region
            loop: start=0, step=1, limit=1
            $region87: #{x_model_forward.20} parent=85 // loop_pre_header
              _
            $region88: #{x_model_forward.20} parent=85 // loop_header
              %s421 = sphi 0, %s425
              %p422 = scmp.ge.s32.totalorder %s421, 1
              %s426 = sphi [#allocation3], [#allocation3]
              %s427 = sphi %s5, %s5
            $region89: #{x_model_forward.20} parent=85 // loop_header_branch
              %424 = sbr.rel (%p422) target = $region93
            $region90: #{x_model_forward.20} parent=85 // loop_body
              %v428 = vld [vmem:[%s426] sm:$0xff]
              %429 = vst [vmem:[%s427] sm:$0xff] %v428
            $region91: #{x_model_forward.20} parent=85 // loop_footer
              %s425 = sadd.s32 1, %s421
            $region92: #{x_model_forward.20} parent=85 // loop_footer_branch
              %420 = sbr.rel target = $region88
            $region93: #{x_model_forward.20} parent=85 // loop_exit
              _
          $region86: #{x_model_forward.20} parent=70 // pred_fallthru
            _
          // Predicated region
          $region94: #{x_model_forward.20} parent=70 // pred_check
            _
          $region95: #{x_model_forward.20} parent=70 // pred_check_branch
            %431 = sbr.rel target = $region97
          $region96: #{x_model_forward.20} parent=70 // pred_region
            _
          $region97: #{x_model_forward.20} parent=70 // pred_fallthru
            _
        $region71: #{x_model_forward.20} parent=66 // pred_fallthru
          _
        // Predicated region
        $region72: #{x_model_forward.20} parent=66 // pred_check
          _
        $region73: #{x_model_forward.20} parent=66 // pred_check_branch
          %405 = sbr.rel target = $region75
        $region74: #{x_model_forward.20} parent=66 // pred_region
          %s407 = ssub.s32 256, 1
          loop: start=0, step=1, limit=1
          $region76: #{x_model_forward.20} parent=74 // loop_pre_header
            _
          $region77: #{x_model_forward.20} parent=74 // loop_header
            %s409 = sphi 0, %s413
            %p410 = scmp.ge.s32.totalorder %s409, 1
            %s414 = sphi [#allocation3], [#allocation3]
            %s415 = sphi %s5, %s5
          $region78: #{x_model_forward.20} parent=74 // loop_header_branch
            %412 = sbr.rel (%p410) target = $region82
          $region79: #{x_model_forward.20} parent=74 // loop_body
            %v416 = vld [vmem:[%s414] sm:%s407]
            %417 = vst [vmem:[%s415] sm:%s407] %v416
          $region80: #{x_model_forward.20} parent=74 // loop_footer
            %s413 = sadd.s32 1, %s409
          $region81: #{x_model_forward.20} parent=74 // loop_footer_branch
            %408 = sbr.rel target = $region77
          $region82: #{x_model_forward.20} parent=74 // loop_exit
            _
        $region75: #{x_model_forward.20} parent=66 // pred_fallthru
          _
      $region67: #{x_model_forward.20} parent=62 // pred_fallthru
        _
      %432 = vnop
    $region63: #{x_model_forward.20} parent=1 // pred_fallthru
      _
    // Predicated region
    $region98: #{x_model_forward.20} parent=1 // pred_check
      _
    $region99: #{x_model_forward.20} parent=1 // pred_check_branch
      %434 = sbr.rel (0) target = $region101
    $region100: #{x_model_forward.20} parent=1 // pred_region
      _
    $region101: #{x_model_forward.20} parent=1 // pred_fallthru
      _

// kernel: x_model_forward.21
$region0: #{x_model_forward.21}
  #allocation0 [shape = 'u32[]', space=smem, size = 0x4, offset = 0x4, fixed_abs, tag = 'smem constant byte address 0x4 - core index']
  #allocation1 [shape = 'u32[144,128]{1,0:T(1,128)}', space=vmem, size = 0x12000, scoped, tag = 'internal scratch']
  %s0 = inlined_call_operand.vmem [shape: bf16[8,216], index: 0, kind: input, shape index: {}]
  %s1 = inlined_call_operand.vmem [shape: bf16[8,100], index: 1, kind: input, shape index: {}]
  %s2 = inlined_call_operand.vmem [shape: bf16[216,40], index: 2, kind: input, shape index: {}]
  %s3 = inlined_call_operand.vmem [shape: bf16[100,40], index: 3, kind: input, shape index: {}]
  %s4 = inlined_call_operand.vmem [shape: f32[1,40], index: 4, kind: input, shape index: {}]
  %s5 = inlined_call_operand.vmem [shape: f32[8,40], index: 5, kind: output, shape index: {}]
  %s6 = sld [smem:[#allocation0]]
  $region64: #{x_model_forward.21} parent=0
    _
  %s8 = ssub.s32 1, %s6
  %s9 = scalar_select 0, %s8, %s6
  $region1: #{x_model_forward.21} parent=0
    #allocation2 [shape = 'u8[16384]{0}', space=vmem, size = 0x4000, scoped, tag = 'output window, operand 0, single buffered']
    // Predicated region
    $region2: #{x_model_forward.21} parent=1 // pred_check
      _
    $region3: #{x_model_forward.21} parent=1 // pred_check_branch
      %11 = sbr.rel (0) target = $region5
    $region4: #{x_model_forward.21} parent=1 // pred_region
      _
    $region5: #{x_model_forward.21} parent=1 // pred_fallthru
      _
    // Predicated region
    $region6: #{x_model_forward.21} parent=1 // pred_check
      _
    $region7: #{x_model_forward.21} parent=1 // pred_check_branch
      %13 = sbr.rel (0) target = $region9
    $region8: #{x_model_forward.21} parent=1 // pred_region
      _
    $region9: #{x_model_forward.21} parent=1 // pred_fallthru
      _
    // Predicated region
    $region10: #{x_model_forward.21} parent=1 // pred_check
      _
    $region11: #{x_model_forward.21} parent=1 // pred_check_branch
      %15 = sbr.rel (0) target = $region13
    $region12: #{x_model_forward.21} parent=1 // pred_region
      _
    $region13: #{x_model_forward.21} parent=1 // pred_fallthru
      _
    // Predicated region
    $region14: #{x_model_forward.21} parent=1 // pred_check
      _
    $region15: #{x_model_forward.21} parent=1 // pred_check_branch
      %17 = sbr.rel (0) target = $region17
    $region16: #{x_model_forward.21} parent=1 // pred_region
      _
    $region17: #{x_model_forward.21} parent=1 // pred_fallthru
      _
    // Predicated region
    $region18: #{x_model_forward.21} parent=1 // pred_check
      _
    $region19: #{x_model_forward.21} parent=1 // pred_check_branch
      %19 = sbr.rel (0) target = $region21
    $region20: #{x_model_forward.21} parent=1 // pred_region
      _
    $region21: #{x_model_forward.21} parent=1 // pred_fallthru
      _
    %v21 = vld [vmem:[%s0] sm:$0xff]
    %v22 = vld [vmem:[%s0 + $0x8] sm:$0xff]
    %v23 = vld [vmem:[%s0 + $0x10] sm:$0xff]
    %v24 = vld [vmem:[%s0 + $0x18] sm:$0xff]
    %v25 = vld [vmem:[%s2] sm:$0xf]
    %v26 = vld [vmem:[%s2 + $0x4] sm:$0xf]
    %v27 = vld [vmem:[%s2 + $0x8] sm:$0xf]
    %v28 = vld [vmem:[%s2 + $0xc] sm:$0xf]
    %v29 = vld [vmem:[%s2 + $0x10] sm:$0xf]
    %v30 = vld [vmem:[%s2 + $0x14] sm:$0xf]
    %v31 = vld [vmem:[%s2 + $0x18] sm:$0xf]
    %v32 = vld [vmem:[%s2 + $0x1c] sm:$0xf]
    %v33 = vld [vmem:[%s2 + $0x20] sm:$0xf]
    %v34 = vld [vmem:[%s2 + $0x24] sm:$0xf]
    %v35 = vld [vmem:[%s2 + $0x28] sm:$0xf]
    %v36 = vld [vmem:[%s2 + $0x2c] sm:$0xf]
    %v37 = vld [vmem:[%s2 + $0x30] sm:$0xf]
    %v38 = vld [vmem:[%s2 + $0x34] sm:$0xf]
    %v39 = vld [vmem:[%s2 + $0x38] sm:$0xf]
    %v40 = vld [vmem:[%s2 + $0x3c] sm:$0xf]
    %v41 = vld [vmem:[%s2 + $0x40] sm:$0xf]
    %v42 = vld [vmem:[%s2 + $0x44] sm:$0xf]
    %v43 = vld [vmem:[%s2 + $0x48] sm:$0xf]
    %v44 = vld [vmem:[%s2 + $0x4c] sm:$0xf]
    %v45 = vld [vmem:[%s2 + $0x50] sm:$0xf]
    %v46 = vld [vmem:[%s2 + $0x54] sm:$0xf]
    %v47 = vld [vmem:[%s2 + $0x58] sm:$0xf]
    %v48 = vld [vmem:[%s2 + $0x5c] sm:$0xf]
    %v49 = vld [vmem:[%s2 + $0x60] sm:$0xf]
    %v50 = vld [vmem:[%s2 + $0x64] sm:$0xf]
    %v51 = vld [vmem:[%s2 + $0x68] sm:$0xf]
    %v52 = vld [vmem:[%s1] sm:$0xf]
    %v53 = vld [vmem:[%s1 + $0x4] sm:$0xf]
    %v54 = vld [vmem:[%s1 + $0x8] sm:$0xf]
    %v55 = vld [vmem:[%s1 + $0xc] sm:$0xf]
    %v56 = vld [vmem:[%s3] sm:$0xf]
    %v57 = vld [vmem:[%s3 + $0x4] sm:$0xf]
    %v58 = vld [vmem:[%s3 + $0x8] sm:$0xf]
    %v59 = vld [vmem:[%s3 + $0xc] sm:$0xf]
    %v60 = vld [vmem:[%s3 + $0x10] sm:$0xf]
    %v61 = vld [vmem:[%s3 + $0x14] sm:$0xf]
    %v62 = vld [vmem:[%s3 + $0x18] sm:$0xf]
    %v63 = vld [vmem:[%s3 + $0x1c] sm:$0xf]
    %v64 = vld [vmem:[%s3 + $0x20] sm:$0xf]
    %v65 = vld [vmem:[%s3 + $0x24] sm:$0xf]
    %v66 = vld [vmem:[%s3 + $0x28] sm:$0xf]
    %v67 = vld [vmem:[%s3 + $0x2c] sm:$0xf]
    %v68 = vld [vmem:[%s3 + $0x30] sm:$0x3]
    %v73 = vunpack.c.l.b16 %v52
    %v74 = vunpack.c.l.b16 %v53
    %v75 = vunpack.c.l.b16 %v54
    %v76 = vunpack.c.l.b16 %v55
    %v77 = vpack.c.b16 %v74, %v73
    %v78 = vpack.c.b16 %v76, %v75
    %v92 = vunpack.c.l.b16 %v56
    %v93 = vunpack.c.l.b16 %v57
    %v94 = vunpack.c.l.b16 %v58
    %v95 = vunpack.c.l.b16 %v59
    %v96 = vunpack.c.l.b16 %v60
    %v97 = vunpack.c.l.b16 %v61
    %v98 = vunpack.c.l.b16 %v62
    %v99 = vunpack.c.l.b16 %v63
    %v100 = vunpack.c.l.b16 %v64
    %v101 = vunpack.c.l.b16 %v65
    %v102 = vunpack.c.l.b16 %v66
    %v103 = vunpack.c.l.b16 %v67
    %v104 = vunpack.c.l.b16 %v68
    %v105 = vpack.c.b16 %v93, %v92
    %v106 = vpack.c.b16 %v95, %v94
    %v107 = vpack.c.b16 %v97, %v96
    %v108 = vpack.c.b16 %v99, %v98
    %v109 = vpack.c.b16 %v101, %v100
    %v110 = vpack.c.b16 %v103, %v102
    %v111 = vpack.c.b16 %v104, %v104
    %vm118 = vcmask 818176
    %v120 = vsel %vm118, %v77, 0
    %v123 = vsel %vm118, %v78, 0
    %vm125 = vcmask 1041408
    %v127 = vsel %vm125, %v111, 0
    %129 = vmatprep.subr.bf16.mxu0 0
    %130 = vmatpush1.bf16.msra.mxu0 0
    %131 = vmatprep.subr.bf16.mxu0 0
    %132 = vmatpush1.bf16.msra.mxu0 %v127
    %133 = vmatprep.subr.bf16.mxu0 0
    %134 = vmatpush1.bf16.msra.mxu0 %v110
    %135 = vmatprep.subr.bf16.mxu0 0
    %136 = vmatpush1.bf16.msra.mxu0 %v109
    %137 = vmatprep.subr.bf16.mxu0 0
    %138 = vmatpush1.bf16.msra.mxu0 %v108
    %139 = vmatprep.subr.bf16.mxu0 0
    %140 = vmatpush1.bf16.msra.mxu0 %v107
    %141 = vmatprep.subr.bf16.mxu0 0
    %142 = vmatpush1.bf16.msra.mxu0 %v106
    %143 = vmatprep.subr.bf16.mxu0 0
    %144 = vmatpush1.bf16.msra.mxu0 %v105
    %145 = vmatprep.subr.bf16.mxu0 0
    %146 = vmatpush2.bf16.msra.mxu0 0
    %147 = vmatprep.subr.bf16.mxu0 0
    %148 = vmatpush2.bf16.msra.mxu0 0
    %149 = vmatprep.subr.bf16.mxu0 0
    %150 = vmatpush2.bf16.msra.mxu0 0
    %151 = vmatprep.subr.bf16.mxu0 0
    %152 = vmatpush2.bf16.msra.mxu0 0
    %153 = vmatprep.subr.bf16.mxu0 0
    %154 = vmatpush2.bf16.msra.mxu0 0
    %155 = vmatprep.subr.bf16.mxu0 0
    %156 = vmatpush2.bf16.msra.mxu0 0
    %157 = vmatprep.subr.bf16.mxu0 0
    %158 = vmatpush2.bf16.msra.mxu0 0
    %159 = vmatprep.subr.bf16.mxu0 0
    %160 = vmatpush2.bf16.msra.mxu0 0
    %161 = vmatprep.mubr.bf16.mxu0 0
    %162 = vmatmul.mubr.bf16.gmra.mxu0 %v120
    %v163 = vpop.f32.mrf.mxu0
    %v164 = vadd.f32 0.0, %v163
    %v165 = vpop.f32.mrf.mxu0
    %v166 = vpop.f32.mrf.mxu0
    %v167 = vadd.f32 0.0, %v166
    %v168 = vpop.f32.mrf.mxu0
    %169 = vmatprep.mubr.bf16.mxu0 0
    %170 = vmatmul.mubr.bf16.gmra.mxu0 %v123
    %v171 = vpop.f32.mrf.mxu0
    %v172 = vadd.f32 0.0, %v171
    %v173 = vpop.f32.mrf.mxu0
    %v174 = vpop.f32.mrf.mxu0
    %v175 = vadd.f32 0.0, %v174
    %v176 = vpop.f32.mrf.mxu0
    %177 = vdwg.mxu0
    %v182 = vunpack.c.l.b16 %v21
    %v183 = vunpack.c.h.b16 %v21
    %v184 = vunpack.c.l.b16 %v22
    %v185 = vunpack.c.h.b16 %v22
    %v186 = vunpack.c.l.b16 %v23
    %v187 = vunpack.c.h.b16 %v23
    %v188 = vunpack.c.l.b16 %v24
    %v189 = vunpack.c.h.b16 %v24
    %v190 = vpack.c.b16 %v184, %v182
    %v191 = vpack.c.b16 %v185, %v183
    %v192 = vpack.c.b16 %v188, %v186
    %v193 = vpack.c.b16 %v189, %v187
    %v223 = vunpack.c.l.b16 %v25
    %v224 = vunpack.c.l.b16 %v26
    %v225 = vunpack.c.l.b16 %v27
    %v226 = vunpack.c.l.b16 %v28
    %v227 = vunpack.c.l.b16 %v29
    %v228 = vunpack.c.l.b16 %v30
    %v229 = vunpack.c.l.b16 %v31
    %v230 = vunpack.c.l.b16 %v32
    %v231 = vunpack.c.l.b16 %v33
    %v232 = vunpack.c.l.b16 %v34
    %v233 = vunpack.c.l.b16 %v35
    %v234 = vunpack.c.l.b16 %v36
    %v235 = vunpack.c.l.b16 %v37
    %v236 = vunpack.c.l.b16 %v38
    %v237 = vunpack.c.l.b16 %v39
    %v238 = vunpack.c.l.b16 %v40
    %v239 = vunpack.c.l.b16 %v41
    %v240 = vunpack.c.l.b16 %v42
    %v241 = vunpack.c.l.b16 %v43
    %v242 = vunpack.c.l.b16 %v44
    %v243 = vunpack.c.l.b16 %v45
    %v244 = vunpack.c.l.b16 %v46
    %v245 = vunpack.c.l.b16 %v47
    %v246 = vunpack.c.l.b16 %v48
    %v247 = vunpack.c.l.b16 %v49
    %v248 = vunpack.c.l.b16 %v50
    %v249 = vunpack.c.l.b16 %v51
    %v250 = vpack.c.b16 %v224, %v223
    %v251 = vpack.c.b16 %v226, %v225
    %v252 = vpack.c.b16 %v228, %v227
    %v253 = vpack.c.b16 %v230, %v229
    %v254 = vpack.c.b16 %v232, %v231
    %v255 = vpack.c.b16 %v234, %v233
    %v256 = vpack.c.b16 %v236, %v235
    %v257 = vpack.c.b16 %v238, %v237
    %v258 = vpack.c.b16 %v240, %v239
    %v259 = vpack.c.b16 %v242, %v241
    %v260 = vpack.c.b16 %v244, %v243
    %v261 = vpack.c.b16 %v246, %v245
    %v262 = vpack.c.b16 %v248, %v247
    %v263 = vpack.c.b16 %v249, %v249
    %vm277 = vcmask 719872
    %v279 = vsel %vm277, %v191, 0
    %v282 = vsel %vm277, %v193, 0
    %vm284 = vcmask 1043456
    %v286 = vsel %vm284, %v263, 0
    %288 = vmatprep.subr.bf16.mxu0 0
    %289 = vmatpush1.bf16.msra.mxu0 %v257
    %290 = vmatprep.subr.bf16.mxu0 0
    %291 = vmatpush1.bf16.msra.mxu0 %v256
    %292 = vmatprep.subr.bf16.mxu0 0
    %293 = vmatpush1.bf16.msra.mxu0 %v255
    %294 = vmatprep.subr.bf16.mxu0 0
    %295 = vmatpush1.bf16.msra.mxu0 %v254
    %296 = vmatprep.subr.bf16.mxu0 0
    %297 = vmatpush1.bf16.msra.mxu0 %v253
    %298 = vmatprep.subr.bf16.mxu0 0
    %299 = vmatpush1.bf16.msra.mxu0 %v252
    %300 = vmatprep.subr.bf16.mxu0 0
    %301 = vmatpush1.bf16.msra.mxu0 %v251
    %302 = vmatprep.subr.bf16.mxu0 0
    %303 = vmatpush1.bf16.msra.mxu0 %v250
    %304 = vmatprep.subr.bf16.mxu0 0
    %305 = vmatpush2.bf16.msra.mxu0 0
    %306 = vmatprep.subr.bf16.mxu0 0
    %307 = vmatpush2.bf16.msra.mxu0 0
    %308 = vmatprep.subr.bf16.mxu0 0
    %309 = vmatpush2.bf16.msra.mxu0 %v286
    %310 = vmatprep.subr.bf16.mxu0 0
    %311 = vmatpush2.bf16.msra.mxu0 %v262
    %312 = vmatprep.subr.bf16.mxu0 0
    %313 = vmatpush2.bf16.msra.mxu0 %v261
    %314 = vmatprep.subr.bf16.mxu0 0
    %315 = vmatpush2.bf16.msra.mxu0 %v260
    %316 = vmatprep.subr.bf16.mxu0 0
    %317 = vmatpush2.bf16.msra.mxu0 %v259
    %318 = vmatprep.subr.bf16.mxu0 0
    %319 = vmatpush2.bf16.msra.mxu0 %v258
    %320 = vmatprep.mubr.bf16.mxu0 %v279
    %321 = vmatmul.mubr.bf16.gmra.mxu0 %v190
    %v322 = vpop.f32.mrf.mxu0
    %v323 = vadd.f32 %v164, %v322
    %v324 = vpop.f32.mrf.mxu0
    %v325 = vpop.f32.mrf.mxu0
    %v326 = vadd.f32 %v167, %v325
    %v327 = vpop.f32.mrf.mxu0
    %328 = vmatprep.mubr.bf16.mxu0 %v282
    %329 = vmatmul.mubr.bf16.gmra.mxu0 %v192
    %v330 = vpop.f32.mrf.mxu0
    %v331 = vadd.f32 %v172, %v330
    %v332 = vpop.f32.mrf.mxu0
    %v333 = vpop.f32.mrf.mxu0
    %v334 = vadd.f32 %v175, %v333
    %v335 = vpop.f32.mrf.mxu0
    %336 = vdwg.mxu0
    %v337 = vld [vmem:[%s4] sm:$0x1]
    %v339 = vlaneseq
    %v340 = vshrl.u32 %v339, 7
    %v341 = vsub.s32 0, %v340
    %v342 = vrot.slane %v337, %v341
    %v344 = vadd.f32 %v323, %v342
    %v345 = vadd.f32 %v326, %v342
    %v346 = vadd.f32 %v331, %v342
    %v347 = vadd.f32 %v334, %v342
    %v348 = vmax.f32 %v344, 0.0
    %v349 = vmax.f32 %v345, 0.0
    %v350 = vmax.f32 %v346, 0.0
    %v351 = vmax.f32 %v347, 0.0
    %vm352 = vcmask 326656
    %353 = vst.msk [vmem:[#allocation2] sm:$0xff] %vm352, %v348
    %354 = vst.msk [vmem:[#allocation2 + $0x8] sm:$0xff] %vm352, %v349
    %355 = vst.msk [vmem:[#allocation2 + $0x10] sm:$0xff] %vm352, %v350
    %356 = vst.msk [vmem:[#allocation2 + $0x18] sm:$0xff] %vm352, %v351
    // Predicated region
    $region22: #{x_model_forward.21} parent=1 // pred_check
      _
    $region23: #{x_model_forward.21} parent=1 // pred_check_branch
      %358 = sbr.rel (0) target = $region25
    $region24: #{x_model_forward.21} parent=1 // pred_region
      // Predicated region
      $region26: #{x_model_forward.21} parent=24 // pred_check
        _
      $region27: #{x_model_forward.21} parent=24 // pred_check_branch
        %360 = sbr.rel (0) target = $region29
      $region28: #{x_model_forward.21} parent=24 // pred_region
        // Predicated region
        $region30: #{x_model_forward.21} parent=28 // pred_check
          _
        $region31: #{x_model_forward.21} parent=28 // pred_check_branch
          %362 = sbr.rel (0) target = $region33
        $region32: #{x_model_forward.21} parent=28 // pred_region
          // Predicated region
          $region45: #{x_model_forward.21} parent=32 // pred_check
            _
          $region46: #{x_model_forward.21} parent=32 // pred_check_branch
            %378 = sbr.rel (0) target = $region48
          $region47: #{x_model_forward.21} parent=32 // pred_region
            loop: start=0, step=1, limit=1
            $region49: #{x_model_forward.21} parent=47 // loop_pre_header
              _
            $region50: #{x_model_forward.21} parent=47 // loop_header
              %s380 = sphi 0, %s384
              %p381 = scmp.ge.s32.totalorder %s380, 1
              %s385 = sphi [#allocation2], [#allocation2]
              %s386 = sphi %s5, %s5
            $region51: #{x_model_forward.21} parent=47 // loop_header_branch
              %383 = sbr.rel (%p381) target = $region55
            $region52: #{x_model_forward.21} parent=47 // loop_body
              %v387 = vld [vmem:[%s385] sm:$0xff]
              %388 = vst [vmem:[%s386] sm:$0xff] %v387
            $region53: #{x_model_forward.21} parent=47 // loop_footer
              %s384 = sadd.s32 1, %s380
            $region54: #{x_model_forward.21} parent=47 // loop_footer_branch
              %379 = sbr.rel target = $region50
            $region55: #{x_model_forward.21} parent=47 // loop_exit
              _
          $region48: #{x_model_forward.21} parent=32 // pred_fallthru
            _
          // Predicated region
          $region56: #{x_model_forward.21} parent=32 // pred_check
            _
          $region57: #{x_model_forward.21} parent=32 // pred_check_branch
            %390 = sbr.rel target = $region59
          $region58: #{x_model_forward.21} parent=32 // pred_region
            _
          $region59: #{x_model_forward.21} parent=32 // pred_fallthru
            _
        $region33: #{x_model_forward.21} parent=28 // pred_fallthru
          _
        // Predicated region
        $region34: #{x_model_forward.21} parent=28 // pred_check
          _
        $region35: #{x_model_forward.21} parent=28 // pred_check_branch
          %364 = sbr.rel target = $region37
        $region36: #{x_model_forward.21} parent=28 // pred_region
          %s366 = ssub.s32 256, 1
          loop: start=0, step=1, limit=1
          $region38: #{x_model_forward.21} parent=36 // loop_pre_header
            _
          $region39: #{x_model_forward.21} parent=36 // loop_header
            %s368 = sphi 0, %s372
            %p369 = scmp.ge.s32.totalorder %s368, 1
            %s373 = sphi [#allocation2], [#allocation2]
            %s374 = sphi %s5, %s5
          $region40: #{x_model_forward.21} parent=36 // loop_header_branch
            %371 = sbr.rel (%p369) target = $region44
          $region41: #{x_model_forward.21} parent=36 // loop_body
            %v375 = vld [vmem:[%s373] sm:%s366]
            %376 = vst [vmem:[%s374] sm:%s366] %v375
          $region42: #{x_model_forward.21} parent=36 // loop_footer
            %s372 = sadd.s32 1, %s368
          $region43: #{x_model_forward.21} parent=36 // loop_footer_branch
            %367 = sbr.rel target = $region39
          $region44: #{x_model_forward.21} parent=36 // loop_exit
            _
        $region37: #{x_model_forward.21} parent=28 // pred_fallthru
          _
      $region29: #{x_model_forward.21} parent=24 // pred_fallthru
        _
      %391 = vnop
    $region25: #{x_model_forward.21} parent=1 // pred_fallthru
      _
    // Predicated region
    $region60: #{x_model_forward.21} parent=1 // pred_check
      _
    $region61: #{x_model_forward.21} parent=1 // pred_check_branch
      %393 = sbr.rel (0) target = $region63
    $region62: #{x_model_forward.21} parent=1 // pred_region
      _
    $region63: #{x_model_forward.21} parent=1 // pred_fallthru
      _

</llo_original>
